<compile_context>
chip_gen: v7x
topology: tpu7x:2x2x1
jax: 0.10.0
libtpu: 0.0.40
codegen_flags: <defaults>
</compile_context>

<pallas_src>
import functools
import math

import jax
import jax.numpy as jnp
from jax import lax
from jax.experimental import pallas as pl
from jax.experimental.pallas import tpu as pltpu


MAMBA_KEYS = ("w_in", "w_conv", "conv_b", "w_proj", "dt_b", "A_se", "D", "w_out")
_CONV_PAD = 8     # zero-pad rows around conv scratch (>= d_conv-1, multiple of 8)
_CHUNK = 8        # scan steps per unrolled chunk (one sublane group)


# ------------------------------ small helpers ------------------------------

def _round_up(v, m):
    return (v + m - 1) // m * m


def _padded_bytes(shape, itemsize=4):
    """VMEM footprint of an array once padded to (8, 128) tiles."""
    if len(shape) == 0:
        return itemsize
    if len(shape) == 1:
        return _round_up(int(shape[0]), 128) * itemsize
    lead = 1
    for s in shape[:-2]:
        lead *= int(s)
    return (lead * _round_up(int(shape[-2]), 8)
            * _round_up(int(shape[-1]), 128) * itemsize)


def _sigmoid(v):
    # approx reciprocal -> EUP slot; fine for inference (review note).
    return pl.reciprocal(1.0 + jnp.exp(-v), approx=True)


def _silu(v):
    return v * _sigmoid(v)


def _layernorm(h, gamma, beta, eps):
    mu = jnp.mean(h, axis=-1, keepdims=True)
    var = jnp.mean(jnp.square(h - mu), axis=-1, keepdims=True)
    return (h - mu) * lax.rsqrt(var + eps) * gamma + beta


def _softplus(v):
    # numerically stable softplus (same 20.0 threshold as torch.nn.Softplus)
    return jnp.where(v > 20.0, v, jnp.log(1.0 + jnp.exp(jnp.minimum(v, 20.0))))


# ----------------------------- Pallas kernels ------------------------------

def filter_kernel(x_ref, f_ref, i_ref, wr_ref, wi_ref, g_ref, b_ref, o_ref, *, eps):
    # FilterLayer: stacked real-DFT matmuls (one forward [cf;sf], one inverse
    # [ci|si]), complex weight, residual + LayerNorm.  Dropout = identity.
    bt = x_ref.shape[0]
    kp = wr_ref.shape[0]
    wr = wr_ref[...]
    wi = wi_ref[...]
    for b in range(bt):                                              # static
        x = x_ref[b]                                                 # (L, D) f32
        xb = x.astype(jnp.bfloat16)
        xs = jnp.dot(f_ref[...], xb,
                     preferred_element_type=jnp.float32)             # (2Kp, D) = [xr; xi]
        xr = xs[:kp]                                                 # sublane-aligned slices
        xi = xs[kp:]
        ys = jnp.concatenate([xr * wr - xi * wi, xr * wi + xi * wr], axis=0)
        seq = jnp.dot(i_ref[...], ys.astype(jnp.bfloat16),
                      preferred_element_type=jnp.float32)             # (L, D)
        o_ref[b] = _layernorm(seq + x, g_ref[...], b_ref[...], eps)


def glu_kernel(x_ref, w1_ref, b1_ref, w2_ref, b2_ref, g_ref, beta_ref, o_ref, *, eps):
    bt, L, dm = x_ref.shape
    x = x_ref[...].reshape(bt * L, dm)
    xb = x.astype(jnp.bfloat16)
    # fused fc1 = [value | gate]  (single (D, 2D) matmul, lane-dense output)
    vg = jnp.dot(xb, w1_ref[...], preferred_element_type=jnp.float32) + b1_ref[...]
    value = vg[:, :dm]
    gate = vg[:, dm:]
    gated = value * _sigmoid(gate)
    gated = jnp.dot(gated.astype(jnp.bfloat16), w2_ref[...],
                    preferred_element_type=jnp.float32) + b2_ref[...]
    o_ref[...] = _layernorm(gated + x, g_ref[...], beta_ref[...], eps
                            ).reshape(bt, L, dm)                      # dropout = identity


def _mamba_direction(xb, bt, L, p, reverse, scr):
    """One Mamba block on Bt flattened sequences (bt*L, d_model) in bf16.
    reverse=True realizes mamba(flip(x)) followed by flip by reversing the
    conv taps and the scan direction in-place (no activation flips)."""
    (w_in_ref, w_conv_ref, conv_b_ref, w_proj_ref, dt_b_ref,
     a_ref, d_ref, w_out_ref) = p
    pad_ref, xact_ref, dt_ref, bc_ref, y_ref = scr
    E = w_in_ref.shape[1] // 2
    S = a_ref.shape[0]
    d_conv = w_conv_ref.shape[0]
    pcv = d_conv - 1

    # --- fused in_proj -> [x | z] (one wide MXU matmul) ----------------------
    xz = jnp.dot(xb, w_in_ref[...], preferred_element_type=jnp.float32)  # (bt*L, 2E)
    x_in = xz[:, :E]
    z = xz[:, E:]

    # --- depthwise conv: causal (fwd) / anti-causal, flipped taps (bwd) ------
    # Only the pad rows are zeroed (interior is fully overwritten each time);
    # PAD=8 keeps the dominant (j = d_conv-1) tap sublane-aligned.
    pad_ref[:, :_CONV_PAD, :] = jnp.zeros((bt, _CONV_PAD, E), jnp.float32)
    pad_ref[:, _CONV_PAD + L:, :] = jnp.zeros((bt, _CONV_PAD, E), jnp.float32)
    pad_ref[:, _CONV_PAD:_CONV_PAD + L, :] = x_in.reshape(bt, L, E)
    wc = w_conv_ref[...]                                                 # (d_conv, E)
    acc = None
    for j in range(d_conv):
        off = (_CONV_PAD - pcv + j) if not reverse else (_CONV_PAD + pcv - j)
        term = pad_ref[:, off:off + L, :] * wc[j]
        acc = term if acc is None else acc + term
    x_act = _silu(acc.reshape(bt * L, E) + conv_b_ref[...])              # (bt*L, E) f32

    # --- fused x_proj/dt_proj: one (E, E+2S) weight -> [dt_pre | B | C] ------
    xab = x_act.astype(jnp.bfloat16)
    proj = jnp.dot(xab, w_proj_ref[...],
                   preferred_element_type=jnp.float32)                   # (bt*L, E+2S)
    dt = _softplus(proj[:, :E] + dt_b_ref[...])                          # f32 dt path

    # --- stage scan inputs in VMEM (aligned 8-row chunk loads; B|C packed) ---
    xact_ref[...] = x_act.reshape(bt, L, E)
    dt_ref[...] = dt.reshape(bt, L, E)
    bc_ref[...] = proj[:, E:].reshape(bt, L, 2 * S)

    A_b = jnp.broadcast_to(a_ref[...][None], (bt, S, E))   # hoisted out of the scan
    nc = L // _CHUNK

    def chunk_body(c, h):
        cc = (nc - 1 - c) if reverse else c
        r0 = pl.multiple_of(cc * _CHUNK, _CHUNK)
        u_c = xact_ref[:, pl.ds(r0, _CHUNK), :]                          # (bt, 8, E)
        dt_c = dt_ref[:, pl.ds(r0, _CHUNK), :]                           # (bt, 8, E)
        bc_c = bc_ref[:, pl.ds(r0, _CHUNK), :]                           # (bt, 8, 2S)
        dtu_c = dt_c * u_c
        y_rows = [None] * _CHUNK
        steps = range(_CHUNK - 1, -1, -1) if reverse else range(_CHUNK)
        for t in steps:
            # Per-step tensors that do NOT depend on h, computed just-in-time:
            # one EUP exp + broadcast multiplies (no tiny masked matmuls); the
            # LLO scheduler hoists them ahead of the serial h chain as vreg
            # pressure permits.
            dA = jnp.exp(dt_c[:, t, :][:, None, :] * A_b)                # (bt, S, E)
            dBu = bc_c[:, t, :S][:, :, None] * dtu_c[:, t, :][:, None, :]
            h = dA * h + dBu
            # y_t = sum_s C_t[s] * h[s, :]  (VPU mul + XLU sublane reduce)
            y_rows[t] = jnp.sum(bc_c[:, t, S:][:, :, None] * h, axis=1)  # (bt, E)
        y_ref[:, pl.ds(r0, _CHUNK), :] = jnp.stack(y_rows, axis=1)       # aligned store
        return h

    lax.fori_loop(0, nc, chunk_body, jnp.zeros((bt, S, E), jnp.float32))

    # --- epilogue: D skip, z gating, output projection -----------------------
    y = (y_ref[...].reshape(bt * L, E)
         + xact_ref[...].reshape(bt * L, E) * d_ref[...])                # (bt*L, E)
    y = y * _silu(z)
    return jnp.dot(y.astype(jnp.bfloat16), w_out_ref[...],
                   preferred_element_type=jnp.float32)                   # (bt*L, d_model)


def bimamba_layer_kernel(x_ref, *refs, ln_eps):
    # Fused per-layer kernel: forward Mamba + LN, backward Mamba + LN, sum.
    # (Post-fix the binding unit is expected to be the serial scan, not MXU.)
    n = len(MAMBA_KEYS)
    fwd = refs[:n]
    bwd = refs[n:2 * n]
    g_f, b_f, g_b, b_b = refs[2 * n:2 * n + 4]
    o_ref = refs[2 * n + 4]
    scr = refs[2 * n + 5:]

    bt, L, dm = x_ref.shape
    x = x_ref[...].reshape(bt * L, dm)                                   # f32
    xb = x.astype(jnp.bfloat16)

    out_f = _mamba_direction(xb, bt, L, fwd, False, scr)
    o_ref[...] = _layernorm(out_f + x, g_f[...], b_f[...], ln_eps).reshape(bt, L, dm)

    out_b = _mamba_direction(xb, bt, L, bwd, True, scr)
    o_ref[...] = o_ref[...] + _layernorm(out_b + x, g_b[...], b_b[...],
                                         ln_eps).reshape(bt, L, dm)


# ----------------------------- pallas_call glue -----------------------------

def _choose_bt(B, L, target_rows=256, min_grid=2):
    """Pick sequences-per-grid-step: fill MXU rows (Bt*L <= target_rows) while
    keeping >= min_grid grid steps so multi-TensorCore chips stay pipelined."""
    bt = 1
    for cand in range(2, B + 1):
        if B % cand == 0 and cand * L <= target_rows and B // cand >= min_grid:
            bt = cand
    return bt


def _batched_pallas(kernel, x, consts, scratch_shapes=(), bt=1, scratch_bytes=0):
    """Grid over batch blocks of bt sequences ("parallel" -> TC sharding);
    consts get full-array resident blocks.  vmem_limit is derived from the
    tile-padded block/const/scratch sizes (clamped for v7x's 64 MiB VMEM)."""
    B, L, D = x.shape
    assert B % bt == 0

    def cspec(a):
        nd = a.ndim
        return pl.BlockSpec(a.shape, lambda b, _nd=nd: (0,) * _nd)

    blk_bytes = _padded_bytes((bt, L, D), 4)
    const_bytes = sum(_padded_bytes(a.shape, a.dtype.itemsize) for a in consts)
    vmem = int(min(max(4 * blk_bytes + 2 * const_bytes + scratch_bytes + (6 << 20),
                       16 << 20), 56 << 20))

    return pl.pallas_call(
        kernel,
        out_shape=jax.ShapeDtypeStruct((B, L, D), jnp.float32),
        grid=(B // bt,),
        in_specs=[pl.BlockSpec((bt, L, D), lambda b: (b, 0, 0))]
                 + [cspec(a) for a in consts],
        out_specs=pl.BlockSpec((bt, L, D), lambda b: (b, 0, 0)),
        scratch_shapes=list(scratch_shapes),
        compiler_params=pltpu.CompilerParams(
            dimension_semantics=("parallel",),
            vmem_limit_bytes=vmem),
    )(x, *consts)


def filter_layer(x, p, bt):
    consts = [p["fstk"], p["istk"], p["wr"], p["wi"], p["gamma"], p["beta"]]
    k = functools.partial(filter_kernel, eps=1e-12)
    return _batched_pallas(k, x, consts, bt=bt)


def glu(x, p, bt):
    consts = [p["w1"], p["b1"], p["w2"], p["b2"], p["gamma"], p["beta"]]
    k = functools.partial(glu_kernel, eps=1e-12)
    return _batched_pallas(k, x, consts, bt=bt)


def bimamba_layer(x, pf, pb, lnf, lnb, bt):
    B, L, D = x.shape
    assert L % _CHUNK == 0, "sequence length must be a multiple of 8"
    E = pf["w_in"].shape[1] // 2
    S = pf["A_se"].shape[0]
    consts = ([pf[key] for key in MAMBA_KEYS]
              + [pb[key] for key in MAMBA_KEYS]
              + [lnf["gamma"], lnf["beta"], lnb["gamma"], lnb["beta"]])
    scratch_defs = [
        ((bt, L + 2 * _CONV_PAD, E), jnp.float32),   # zero-padded conv input
        ((bt, L, E), jnp.float32),                   # x_act (scan u + D skip)
        ((bt, L, E), jnp.float32),                   # softplus(dt)
        ((bt, L, 2 * S), jnp.float32),               # [B | C] packed
        ((bt, L, E), jnp.float32),                   # scan output y
    ]
    scratch = [pltpu.VMEM(s, d) for s, d in scratch_defs]
    sbytes = sum(_padded_bytes(s, 4) for s, _ in scratch_defs)
    k = functools.partial(bimamba_layer_kernel, ln_eps=1e-5)
    return _batched_pallas(k, x, consts, scratch_shapes=scratch, bt=bt,
                           scratch_bytes=sbytes)


def bimamba_forward(x, params):
    # BiMambaLayer.forward semantics (eval mode: all Dropout layers identity).
    # TODO(synk): multi_query_transformer_block is built in __init__ but never
    # called in BiMambaLayer.forward, so it is intentionally not implemented.
    B, L, _ = x.shape
    bt = _choose_bt(B, L)
    x = filter_layer(x, params["filter"], bt)
    for pf, pb, lnf, lnb in zip(params["mamba_f"], params["mamba_b"],
                                params["ln_f"], params["ln_b"]):
        x = bimamba_layer(x, pf, pb, lnf, lnb, bt)
    return glu(x, params["glu"], bt)


# ----------------------------- parameter setup -----------------------------

def make_filter_params(key, L, D):
    """Stacked real-DFT matrices realizing rfft/irfft (norm='ortho') along the
    seq axis, zero-padded so the xr/xi split lands on a sublane boundary."""
    K = L // 2 + 1
    Kp = _round_up(K, 8)
    t = jnp.arange(L, dtype=jnp.float32)
    k = jnp.arange(K, dtype=jnp.float32)
    scale = 1.0 / math.sqrt(L)
    ang_f = 2.0 * math.pi * k[:, None] * t[None, :] / L                  # (K, L)
    cf = jnp.cos(ang_f) * scale
    sf = -jnp.sin(ang_f) * scale
    idx = jnp.arange(K)
    is_edge = (idx == 0)
    if L % 2 == 0:
        is_edge = is_edge | (idx == L // 2)
    ck = jnp.where(is_edge, 1.0, 2.0)                                    # Hermitian fold
    ang_i = 2.0 * math.pi * t[:, None] * k[None, :] / L                  # (L, K)
    ci = ck[None, :] * jnp.cos(ang_i) * scale
    si = -ck[None, :] * jnp.sin(ang_i) * scale
    pad_r = lambda m: jnp.pad(m, ((0, Kp - K), (0, 0)))
    pad_c = lambda m: jnp.pad(m, ((0, 0), (0, Kp - K)))
    fstk = jnp.concatenate([pad_r(cf), pad_r(sf)], axis=0).astype(jnp.bfloat16)  # (2Kp, L)
    istk = jnp.concatenate([pad_c(ci), pad_c(si)], axis=1).astype(jnp.bfloat16)  # (L, 2Kp)
    cw = 0.02 * jax.random.normal(key, (K, D, 2), jnp.float32)
    return {"fstk": fstk, "istk": istk,
            "wr": pad_r(cw[:, :, 0]), "wi": pad_r(cw[:, :, 1]),
            "gamma": jnp.ones((1, D), jnp.float32),
            "beta": jnp.zeros((1, D), jnp.float32)}


def make_glu_params(key, D):
    k1, k2, k3 = jax.random.split(key, 3)
    w1v = 0.02 * jax.random.normal(k1, (D, D), jnp.float32)
    w1g = 0.02 * jax.random.normal(k2, (D, D), jnp.float32)
    w2 = 0.02 * jax.random.normal(k3, (D, D), jnp.float32)
    return {"w1": jnp.concatenate([w1v, w1g], axis=1).astype(jnp.bfloat16),  # fc1 fused
            "b1": jnp.zeros((1, 2 * D), jnp.float32),
            "w2": w2.astype(jnp.bfloat16),
            "b2": jnp.zeros((1, D), jnp.float32),
            "gamma": jnp.ones((1, D), jnp.float32),
            "beta": jnp.zeros((1, D), jnp.float32)}


def init_params(key, *, d_model, d_state, d_conv, expand, num_layers,
                max_seq_length):
    assert d_conv - 1 <= _CONV_PAD
    bf = jnp.bfloat16
    d_inner = expand * d_model
    dt_rank = math.ceil(d_model / 16)
    keys = jax.random.split(key, 2 + 2 * num_layers)

    def ln():
        return {"gamma": jnp.ones((1, d_model), jnp.float32),
                "beta": jnp.zeros((1, d_model), jnp.float32)}

    def init_mamba(k):
        ks = jax.random.split(k, 9)
        w_in_x = 0.02 * jax.random.normal(ks[0], (d_model, d_inner), jnp.float32)
        w_in_z = 0.02 * jax.random.normal(ks[1], (d_model, d_inner), jnp.float32)
        w_conv = 0.02 * jax.random.normal(ks[2], (d_conv, d_inner), jnp.float32)
        conv_b = 0.02 * jax.random.normal(ks[3], (1, d_inner), jnp.float32)
        w_xdt = 0.02 * jax.random.normal(ks[4], (d_inner, dt_rank), jnp.float32)
        w_xB = 0.02 * jax.random.normal(ks[5], (d_inner, d_state), jnp.float32)
        w_xC = 0.02 * jax.random.normal(ks[6], (d_inner, d_state), jnp.float32)
        w_dt = 0.02 * jax.random.normal(ks[7], (dt_rank, d_inner), jnp.float32)
        w_out = 0.02 * jax.random.normal(ks[8], (d_inner, d_model), jnp.float32)
        return {
            # in_proj fused to [x | z]
            "w_in": jnp.concatenate([w_in_x, w_in_z], axis=1).astype(bf),
            "w_conv": w_conv,
            "conv_b": conv_b,
            # x_proj/dt_proj fused (dt low-rank folded offline in f32): [dt|B|C]
            "w_proj": jnp.concatenate([w_xdt @ w_dt, w_xB, w_xC], axis=1).astype(bf),
            "dt_b": jnp.full((1, d_inner), 0.01, jnp.float32),
            # A = -exp(A_log), A_log = log(arange(1, d_state+1)) (mamba_ssm default)
            "A_se": -jnp.tile(jnp.arange(1, d_state + 1, dtype=jnp.float32)[:, None],
                              (1, d_inner)),
            "D": jnp.ones((1, d_inner), jnp.float32),
            "w_out": w_out.astype(bf),
        }

    params = {
        "filter": make_filter_params(keys[0], max_seq_length, d_model),
        "glu": make_glu_params(keys[1], d_model),
        "mamba_f": [], "mamba_b": [], "ln_f": [], "ln_b": [],
    }
    for i in range(num_layers):
        params["mamba_f"].append(init_mamba(keys[2 + 2 * i]))
        params["mamba_b"].append(init_mamba(keys[3 + 2 * i]))
        params["ln_f"].append(ln())
        params["ln_b"].append(ln())
    return params


if __name__ == "__main__":
    B = 2
    max_seq_length = 16
    d_model, d_state, d_conv, expand = 32, 8, 4, 2
    num_layers = 2

    key = jax.random.PRNGKey(0)
    kp, kx = jax.random.split(key)
    params = init_params(kp, d_model=d_model, d_state=d_state, d_conv=d_conv,
                         expand=expand, num_layers=num_layers,
                         max_seq_length=max_seq_length)

    x = jax.random.normal(kx, (B, max_seq_length, d_model), jnp.float32)

    fwd = jax.jit(bimamba_forward)
    out = fwd(x, params)
    jax.block_until_ready(out)
    assert out.shape == (B, max_seq_length, d_model)
    assert bool(jnp.all(jnp.isfinite(out)))
    print("KERNEL_OK")
</pallas_src>

<mosaic_0001>
module attributes {stable_mosaic.version = 11 : i64} {
  func.func @filter_kernel(%arg0: i32, %arg1: memref<1x16x32xf32, #tpu.memory_space<vmem>>, %arg2: memref<32x16xbf16, #tpu.memory_space<vmem>>, %arg3: memref<16x32xbf16, #tpu.memory_space<vmem>>, %arg4: memref<16x32xf32, #tpu.memory_space<vmem>>, %arg5: memref<16x32xf32, #tpu.memory_space<vmem>>, %arg6: memref<1x32xf32, #tpu.memory_space<vmem>>, %arg7: memref<1x32xf32, #tpu.memory_space<vmem>>, %arg8: memref<1x16x32xf32, #tpu.memory_space<vmem>>) attributes {dimension_semantics = [#tpu.dimension_semantics<parallel>], iteration_bounds = array<i64: 2>, scalar_prefetch = 0 : i64, scratch_operands = 0 : i64, tpu.core_type = #tpu.core_type<tc>, window_params = [{transform_indices = @transform_0, window_bounds = array<i64: 1, 16, 32>}, {pipeline_mode = #tpu.pipeline_mode<synchronous>, transform_indices = @transform_1, window_bounds = array<i64: 32, 16>}, {pipeline_mode = #tpu.pipeline_mode<synchronous>, transform_indices = @transform_2, window_bounds = array<i64: 16, 32>}, {pipeline_mode = #tpu.pipeline_mode<synchronous>, transform_indices = @transform_3, window_bounds = array<i64: 16, 32>}, {pipeline_mode = #tpu.pipeline_mode<synchronous>, transform_indices = @transform_4, window_bounds = array<i64: 16, 32>}, {pipeline_mode = #tpu.pipeline_mode<synchronous>, transform_indices = @transform_5, window_bounds = array<i64: 1, 32>}, {pipeline_mode = #tpu.pipeline_mode<synchronous>, transform_indices = @transform_6, window_bounds = array<i64: 1, 32>}, {transform_indices = @transform_7, window_bounds = array<i64: 1, 16, 32>}]} {
    %c0 = arith.constant 0 : index
    %c0_0 = arith.constant 0 : index
    %0 = vector.load %arg4[%c0, %c0_0] : memref<16x32xf32, #tpu.memory_space<vmem>>, vector<16x32xf32>
    %c0_1 = arith.constant 0 : index
    %c0_2 = arith.constant 0 : index
    %1 = vector.load %arg5[%c0_1, %c0_2] : memref<16x32xf32, #tpu.memory_space<vmem>>, vector<16x32xf32>
    %c0_3 = arith.constant 0 : index
    %c0_4 = arith.constant 0 : index
    %c0_5 = arith.constant 0 : index
    %2 = vector.load %arg1[%c0_3, %c0_4, %c0_5] : memref<1x16x32xf32, #tpu.memory_space<vmem>>, vector<1x16x32xf32>
    %3 = vector.shape_cast %2 : vector<1x16x32xf32> to vector<16x32xf32>
    %4 = arith.truncf %3 : vector<16x32xf32> to vector<16x32xbf16>
    %c0_6 = arith.constant 0 : index
    %c0_7 = arith.constant 0 : index
    %5 = vector.load %arg2[%c0_6, %c0_7] : memref<32x16xbf16, #tpu.memory_space<vmem>>, vector<32x16xbf16>
    %cst = arith.constant dense<0.000000e+00> : vector<32x32xf32>
    %6 = tpu.matmul %5, %4, %cst {dimension_numbers = #tpu.dot_dimension_numbers<[1], [0], [0], [1], [0, 0, 1, 1], [], []>} : vector<32x16xbf16>, vector<16x32xbf16>, vector<32x32xf32> -> vector<32x32xf32>
    %7 = vector.extract_strided_slice %6 {offsets = [0, 0], sizes = [16, 32], strides = [1, 1]} : vector<32x32xf32> to vector<16x32xf32>
    %8 = vector.extract_strided_slice %6 {offsets = [16, 0], sizes = [16, 32], strides = [1, 1]} : vector<32x32xf32> to vector<16x32xf32>
    %9 = arith.mulf %7, %0 : vector<16x32xf32>
    %10 = arith.mulf %8, %1 : vector<16x32xf32>
    %11 = arith.subf %9, %10 : vector<16x32xf32>
    %12 = arith.mulf %7, %1 : vector<16x32xf32>
    %13 = arith.mulf %8, %0 : vector<16x32xf32>
    %14 = arith.addf %12, %13 : vector<16x32xf32>
    %15 = tpu.concatenate %11, %14 in 0 : vector<16x32xf32>, vector<16x32xf32> -> vector<32x32xf32>
    %c0_8 = arith.constant 0 : index
    %c0_9 = arith.constant 0 : index
    %16 = vector.load %arg3[%c0_8, %c0_9] : memref<16x32xbf16, #tpu.memory_space<vmem>>, vector<16x32xbf16>
    %17 = arith.truncf %15 : vector<32x32xf32> to vector<32x32xbf16>
    %cst_10 = arith.constant dense<0.000000e+00> : vector<16x32xf32>
    %18 = tpu.matmul %16, %17, %cst_10 {dimension_numbers = #tpu.dot_dimension_numbers<[1], [0], [0], [1], [0, 0, 1, 1], [], []>} : vector<16x32xbf16>, vector<32x32xbf16>, vector<16x32xf32> -> vector<16x32xf32>
    %19 = arith.addf %18, %3 : vector<16x32xf32>
    %c0_11 = arith.constant 0 : index
    %c0_12 = arith.constant 0 : index
    %20 = vector.load %arg6[%c0_11, %c0_12] : memref<1x32xf32, #tpu.memory_space<vmem>>, vector<1x32xf32>
    %c0_13 = arith.constant 0 : index
    %c0_14 = arith.constant 0 : index
    %21 = vector.load %arg7[%c0_13, %c0_14] : memref<1x32xf32, #tpu.memory_space<vmem>>, vector<1x32xf32>
    %cst_15 = arith.constant dense<0.000000e+00> : vector<16xf32>
    %22 = vector.multi_reduction <add>, %19, %cst_15 [1] : vector<16x32xf32> to vector<16xf32>
    %23 = vector.shape_cast %22 : vector<16xf32> to vector<16x1xf32>
    %cst_16 = arith.constant 3.200000e+01 : f32
    %24 = vector.broadcast %cst_16 : f32 to vector<16x1xf32>
    %25 = arith.divf %23, %24 : vector<16x1xf32>
    %26 = vector.broadcast %25 : vector<16x1xf32> to vector<16x32xf32>
    %27 = arith.subf %19, %26 : vector<16x32xf32>
    %28 = arith.mulf %27, %27 : vector<16x32xf32>
    %cst_17 = arith.constant dense<0.000000e+00> : vector<16xf32>
    %29 = vector.multi_reduction <add>, %28, %cst_17 [1] : vector<16x32xf32> to vector<16xf32>
    %30 = vector.shape_cast %29 : vector<16xf32> to vector<16x1xf32>
    %cst_18 = arith.constant 3.200000e+01 : f32
    %31 = vector.broadcast %cst_18 : f32 to vector<16x1xf32>
    %32 = arith.divf %30, %31 : vector<16x1xf32>
    %33 = vector.broadcast %25 : vector<16x1xf32> to vector<16x32xf32>
    %34 = arith.subf %19, %33 : vector<16x32xf32>
    %cst_19 = arith.constant 9.99999996E-13 : f32
    %35 = vector.broadcast %cst_19 : f32 to vector<16x1xf32>
    %36 = arith.addf %32, %35 : vector<16x1xf32>
    %37 = math.rsqrt %36 : vector<16x1xf32>
    %38 = vector.broadcast %37 : vector<16x1xf32> to vector<16x32xf32>
    %39 = arith.mulf %34, %38 : vector<16x32xf32>
    %40 = vector.broadcast %20 : vector<1x32xf32> to vector<16x32xf32>
    %41 = arith.mulf %39, %40 : vector<16x32xf32>
    %42 = vector.broadcast %21 : vector<1x32xf32> to vector<16x32xf32>
    %43 = arith.addf %41, %42 : vector<16x32xf32>
    %c0_20 = arith.constant 0 : index
    %c0_21 = arith.constant 0 : index
    %c0_22 = arith.constant 0 : index
    %44 = vector.load %arg8[%c0_20, %c0_21, %c0_22] : memref<1x16x32xf32, #tpu.memory_space<vmem>>, vector<1x16x32xf32>
    %45 = vector.shape_cast %44 : vector<1x16x32xf32> to vector<16x32xf32>
    %46 = vector.shape_cast %43 : vector<16x32xf32> to vector<1x16x32xf32>
    tpu.vector_store %arg8[%c0_20, %c0_21, %c0_22], %46 {strides = array<i32>} : memref<1x16x32xf32, #tpu.memory_space<vmem>>, vector<1x16x32xf32>,
    return
  }
  func.func @transform_0(%arg0: i32) -> (i32, i32, i32) {
    %c0_i32 = arith.constant 0 : i32
    %c0_i32_0 = arith.constant 0 : i32
    %c0_i32_1 = arith.constant 0 : i32
    return %arg0, %c0_i32, %c0_i32_0 : i32, i32, i32
  }
  func.func @transform_1(%arg0: i32) -> (i32, i32) {
    %c0_i32 = arith.constant 0 : i32
    %c0_i32_0 = arith.constant 0 : i32
    %c0_i32_1 = arith.constant 0 : i32
    return %c0_i32, %c0_i32_0 : i32, i32
  }
  func.func @transform_2(%arg0: i32) -> (i32, i32) {
    %c0_i32 = arith.constant 0 : i32
    %c0_i32_0 = arith.constant 0 : i32
    %c0_i32_1 = arith.constant 0 : i32
    return %c0_i32, %c0_i32_0 : i32, i32
  }
  func.func @transform_3(%arg0: i32) -> (i32, i32) {
    %c0_i32 = arith.constant 0 : i32
    %c0_i32_0 = arith.constant 0 : i32
    %c0_i32_1 = arith.constant 0 : i32
    return %c0_i32, %c0_i32_0 : i32, i32
  }
  func.func @transform_4(%arg0: i32) -> (i32, i32) {
    %c0_i32 = arith.constant 0 : i32
    %c0_i32_0 = arith.constant 0 : i32
    %c0_i32_1 = arith.constant 0 : i32
    return %c0_i32, %c0_i32_0 : i32, i32
  }
  func.func @transform_5(%arg0: i32) -> (i32, i32) {
    %c0_i32 = arith.constant 0 : i32
    %c0_i32_0 = arith.constant 0 : i32
    %c0_i32_1 = arith.constant 0 : i32
    return %c0_i32, %c0_i32_0 : i32, i32
  }
  func.func @transform_6(%arg0: i32) -> (i32, i32) {
    %c0_i32 = arith.constant 0 : i32
    %c0_i32_0 = arith.constant 0 : i32
    %c0_i32_1 = arith.constant 0 : i32
    return %c0_i32, %c0_i32_0 : i32, i32
  }
  func.func @transform_7(%arg0: i32) -> (i32, i32, i32) {
    %c0_i32 = arith.constant 0 : i32
    %c0_i32_0 = arith.constant 0 : i32
    %c0_i32_1 = arith.constant 0 : i32
    return %arg0, %c0_i32, %c0_i32_0 : i32, i32, i32
  }
}

module attributes {stable_mosaic.version = 11 : i64} {
  func.func @bimamba_layer_kernel(%arg0: i32, %arg1: memref<1x16x32xf32, #tpu.memory_space<vmem>>, %arg2: memref<32x128xbf16, #tpu.memory_space<vmem>>, %arg3: memref<4x64xf32, #tpu.memory_space<vmem>>, %arg4: memref<1x64xf32, #tpu.memory_space<vmem>>, %arg5: memref<64x80xbf16, #tpu.memory_space<vmem>>, %arg6: memref<1x64xf32, #tpu.memory_space<vmem>>, %arg7: memref<8x64xf32, #tpu.memory_space<vmem>>, %arg8: memref<1x64xf32, #tpu.memory_space<vmem>>, %arg9: memref<64x32xbf16, #tpu.memory_space<vmem>>, %arg10: memref<32x128xbf16, #tpu.memory_space<vmem>>, %arg11: memref<4x64xf32, #tpu.memory_space<vmem>>, %arg12: memref<1x64xf32, #tpu.memory_space<vmem>>, %arg13: memref<64x80xbf16, #tpu.memory_space<vmem>>, %arg14: memref<1x64xf32, #tpu.memory_space<vmem>>, %arg15: memref<8x64xf32, #tpu.memory_space<vmem>>, %arg16: memref<1x64xf32, #tpu.memory_space<vmem>>, %arg17: memref<64x32xbf16, #tpu.memory_space<vmem>>, %arg18: memref<1x32xf32, #tpu.memory_space<vmem>>, %arg19: memref<1x32xf32, #tpu.memory_space<vmem>>, %arg20: memref<1x32xf32, #tpu.memory_space<vmem>>, %arg21: memref<1x32xf32, #tpu.memory_space<vmem>>, %arg22: memref<1x16x32xf32, #tpu.memory_space<vmem>>, %arg23: memref<1x32x64xf32, #tpu.memory_space<vmem>>, %arg24: memref<1x16x64xf32, #tpu.memory_space<vmem>>, %arg25: memref<1x16x64xf32, #tpu.memory_space<vmem>>, %arg26: memref<1x16x16xf32, #tpu.memory_space<vmem>>, %arg27: memref<1x16x64xf32, #tpu.memory_space<vmem>>) attributes {dimension_semantics = [#tpu.dimension_semantics<parallel>], iteration_bounds = array<i64: 2>, scalar_prefetch = 0 : i64, scratch_operands = 5 : i64, tpu.core_type = #tpu.core_type<tc>, window_params = [{transform_indices = @transform_0, window_bounds = array<i64: 1, 16, 32>}, {pipeline_mode = #tpu.pipeline_mode<synchronous>, transform_indices = @transform_1, window_bounds = array<i64: 32, 128>}, {pipeline_mode = #tpu.pipeline_mode<synchronous>, transform_indices = @transform_2, window_bounds = array<i64: 4, 64>}, {pipeline_mode = #tpu.pipeline_mode<synchronous>, transform_indices = @transform_3, window_bounds = array<i64: 1, 64>}, {pipeline_mode = #tpu.pipeline_mode<synchronous>, transform_indices = @transform_4, window_bounds = array<i64: 64, 80>}, {pipeline_mode = #tpu.pipeline_mode<synchronous>, transform_indices = @transform_5, window_bounds = array<i64: 1, 64>}, {pipeline_mode = #tpu.pipeline_mode<synchronous>, transform_indices = @transform_6, window_bounds = array<i64: 8, 64>}, {pipeline_mode = #tpu.pipeline_mode<synchronous>, transform_indices = @transform_7, window_bounds = array<i64: 1, 64>}, {pipeline_mode = #tpu.pipeline_mode<synchronous>, transform_indices = @transform_8, window_bounds = array<i64: 64, 32>}, {pipeline_mode = #tpu.pipeline_mode<synchronous>, transform_indices = @transform_9, window_bounds = array<i64: 32, 128>}, {pipeline_mode = #tpu.pipeline_mode<synchronous>, transform_indices = @transform_10, window_bounds = array<i64: 4, 64>}, {pipeline_mode = #tpu.pipeline_mode<synchronous>, transform_indices = @transform_11, window_bounds = array<i64: 1, 64>}, {pipeline_mode = #tpu.pipeline_mode<synchronous>, transform_indices = @transform_12, window_bounds = array<i64: 64, 80>}, {pipeline_mode = #tpu.pipeline_mode<synchronous>, transform_indices = @transform_13, window_bounds = array<i64: 1, 64>}, {pipeline_mode = #tpu.pipeline_mode<synchronous>, transform_indices = @transform_14, window_bounds = array<i64: 8, 64>}, {pipeline_mode = #tpu.pipeline_mode<synchronous>, transform_indices = @transform_15, window_bounds = array<i64: 1, 64>}, {pipeline_mode = #tpu.pipeline_mode<synchronous>, transform_indices = @transform_16, window_bounds = array<i64: 64, 32>}, {pipeline_mode = #tpu.pipeline_mode<synchronous>, transform_indices = @transform_17, window_bounds = array<i64: 1, 32>}, {pipeline_mode = #tpu.pipeline_mode<synchronous>, transform_indices = @transform_18, window_bounds = array<i64: 1, 32>}, {pipeline_mode = #tpu.pipeline_mode<synchronous>, transform_indices = @transform_19, window_bounds = array<i64: 1, 32>}, {pipeline_mode = #tpu.pipeline_mode<synchronous>, transform_indices = @transform_20, window_bounds = array<i64: 1, 32>}, {transform_indices = @transform_21, window_bounds = array<i64: 1, 16, 32>}]} {
    %c0 = arith.constant 0 : index
    %c0_0 = arith.constant 0 : index
    %c0_1 = arith.constant 0 : index
    %0 = vector.load %arg1[%c0, %c0_0, %c0_1] : memref<1x16x32xf32, #tpu.memory_space<vmem>>, vector<1x16x32xf32>
    %1 = vector.shape_cast %0 : vector<1x16x32xf32> to vector<16x32xf32>
    %2 = arith.truncf %1 : vector<16x32xf32> to vector<16x32xbf16>
    %c0_2 = arith.constant 0 : index
    %c0_3 = arith.constant 0 : index
    %3 = vector.load %arg2[%c0_2, %c0_3] : memref<32x128xbf16, #tpu.memory_space<vmem>>, vector<32x128xbf16>
    %cst = arith.constant dense<0.000000e+00> : vector<16x128xf32>
    %4 = tpu.matmul %2, %3, %cst {dimension_numbers = #tpu.dot_dimension_numbers<[1], [0], [0], [1], [0, 0, 1, 1], [], []>} : vector<16x32xbf16>, vector<32x128xbf16>, vector<16x128xf32> -> vector<16x128xf32>
    %5 = vector.extract_strided_slice %4 {offsets = [0, 0], sizes = [16, 64], strides = [1, 1]} : vector<16x128xf32> to vector<16x64xf32>
    %6 = vector.extract_strided_slice %4 {offsets = [0, 64], sizes = [16, 64], strides = [1, 1]} : vector<16x128xf32> to vector<16x64xf32>
    %cst_4 = arith.constant 0.000000e+00 : f32
    %7 = vector.broadcast %cst_4 : f32 to vector<1x8x64xf32>
    %c0_5 = arith.constant 0 : index
    %c0_6 = arith.constant 0 : index
    %c0_7 = arith.constant 0 : index
    %8 = vector.load %arg23[%c0_5, %c0_6, %c0_7] : memref<1x32x64xf32, #tpu.memory_space<vmem>>, vector<1x8x64xf32>
    tpu.vector_store %arg23[%c0_5, %c0_6, %c0_7], %7 {strides = array<i32>} : memref<1x32x64xf32, #tpu.memory_space<vmem>>, vector<1x8x64xf32>,
    %cst_8 = arith.constant 0.000000e+00 : f32
    %9 = vector.broadcast %cst_8 : f32 to vector<1x8x64xf32>
    %c0_9 = arith.constant 0 : index
    %c24 = arith.constant 24 : index
    %c0_10 = arith.constant 0 : index
    %10 = vector.load %arg23[%c0_9, %c24, %c0_10] : memref<1x32x64xf32, #tpu.memory_space<vmem>>, vector<1x8x64xf32>
    tpu.vector_store %arg23[%c0_9, %c24, %c0_10], %9 {strides = array<i32>} : memref<1x32x64xf32, #tpu.memory_space<vmem>>, vector<1x8x64xf32>,
    %11 = vector.shape_cast %5 : vector<16x64xf32> to vector<1x16x64xf32>
    %c0_11 = arith.constant 0 : index
    %c8 = arith.constant 8 : index
    %c0_12 = arith.constant 0 : index
    %12 = vector.load %arg23[%c0_11, %c8, %c0_12] : memref<1x32x64xf32, #tpu.memory_space<vmem>>, vector<1x16x64xf32>
    tpu.vector_store %arg23[%c0_11, %c8, %c0_12], %11 {strides = array<i32>} : memref<1x32x64xf32, #tpu.memory_space<vmem>>, vector<1x16x64xf32>,
    %c0_13 = arith.constant 0 : index
    %c0_14 = arith.constant 0 : index
    %13 = vector.load %arg3[%c0_13, %c0_14] : memref<4x64xf32, #tpu.memory_space<vmem>>, vector<4x64xf32>
    %c0_15 = arith.constant 0 : index
    %c5 = arith.constant 5 : index
    %c0_16 = arith.constant 0 : index
    %14 = vector.load %arg23[%c0_15, %c5, %c0_16] : memref<1x32x64xf32, #tpu.memory_space<vmem>>, vector<1x16x64xf32>
    %15 = vector.extract_strided_slice %13 {offsets = [0, 0], sizes = [1, 64], strides = [1, 1]} : vector<4x64xf32> to vector<1x64xf32>
    %16 = vector.shape_cast %15 : vector<1x64xf32> to vector<64xf32>
    %17 = vector.shape_cast %16 : vector<64xf32> to vector<1x1x64xf32>
    %18 = vector.broadcast %17 : vector<1x1x64xf32> to vector<1x16x64xf32>
    %19 = arith.mulf %14, %18 : vector<1x16x64xf32>
    %c0_17 = arith.constant 0 : index
    %c6 = arith.constant 6 : index
    %c0_18 = arith.constant 0 : index
    %20 = vector.load %arg23[%c0_17, %c6, %c0_18] : memref<1x32x64xf32, #tpu.memory_space<vmem>>, vector<1x16x64xf32>
    %21 = vector.extract_strided_slice %13 {offsets = [1, 0], sizes = [1, 64], strides = [1, 1]} : vector<4x64xf32> to vector<1x64xf32>
    %22 = vector.shape_cast %21 : vector<1x64xf32> to vector<64xf32>
    %23 = vector.shape_cast %22 : vector<64xf32> to vector<1x1x64xf32>
    %24 = vector.broadcast %23 : vector<1x1x64xf32> to vector<1x16x64xf32>
    %25 = arith.mulf %20, %24 : vector<1x16x64xf32>
    %26 = arith.addf %19, %25 : vector<1x16x64xf32>
    %c0_19 = arith.constant 0 : index
    %c7 = arith.constant 7 : index
    %c0_20 = arith.constant 0 : index
    %27 = vector.load %arg23[%c0_19, %c7, %c0_20] : memref<1x32x64xf32, #tpu.memory_space<vmem>>, vector<1x16x64xf32>
    %28 = vector.extract_strided_slice %13 {offsets = [2, 0], sizes = [1, 64], strides = [1, 1]} : vector<4x64xf32> to vector<1x64xf32>
    %29 = vector.shape_cast %28 : vector<1x64xf32> to vector<64xf32>
    %30 = vector.shape_cast %29 : vector<64xf32> to vector<1x1x64xf32>
    %31 = vector.broadcast %30 : vector<1x1x64xf32> to vector<1x16x64xf32>
    %32 = arith.mulf %27, %31 : vector<1x16x64xf32>
    %33 = arith.addf %26, %32 : vector<1x16x64xf32>
    %c0_21 = arith.constant 0 : index
    %c8_22 = arith.constant 8 : index
    %c0_23 = arith.constant 0 : index
    %34 = vector.load %arg23[%c0_21, %c8_22, %c0_23] : memref<1x32x64xf32, #tpu.memory_space<vmem>>, vector<1x16x64xf32>
    %35 = vector.extract_strided_slice %13 {offsets = [3, 0], sizes = [1, 64], strides = [1, 1]} : vector<4x64xf32> to vector<1x64xf32>
    %36 = vector.shape_cast %35 : vector<1x64xf32> to vector<64xf32>
    %37 = vector.shape_cast %36 : vector<64xf32> to vector<1x1x64xf32>
    %38 = vector.broadcast %37 : vector<1x1x64xf32> to vector<1x16x64xf32>
    %39 = arith.mulf %34, %38 : vector<1x16x64xf32>
    %40 = arith.addf %33, %39 : vector<1x16x64xf32>
    %41 = vector.shape_cast %40 : vector<1x16x64xf32> to vector<16x64xf32>
    %c0_24 = arith.constant 0 : index
    %c0_25 = arith.constant 0 : index
    %42 = vector.load %arg4[%c0_24, %c0_25] : memref<1x64xf32, #tpu.memory_space<vmem>>, vector<1x64xf32>
    %43 = vector.broadcast %42 : vector<1x64xf32> to vector<16x64xf32>
    %44 = arith.addf %41, %43 : vector<16x64xf32>
    %cst_26 = arith.constant 0.000000e+00 : f32
    %45 = vector.broadcast %cst_26 : f32 to vector<16x64xf32>
    %46 = arith.subf %45, %44 : vector<16x64xf32>
    %47 = math.exp %46 : vector<16x64xf32>
    %cst_27 = arith.constant 1.000000e+00 : f32
    %48 = vector.broadcast %cst_27 : f32 to vector<16x64xf32>
    %49 = arith.addf %48, %47 : vector<16x64xf32>
    %50 = tpu.reciprocal %49 {approx = true} : vector<16x64xf32> -> vector<16x64xf32>
    %51 = arith.mulf %44, %50 : vector<16x64xf32>
    %52 = arith.truncf %51 : vector<16x64xf32> to vector<16x64xbf16>
    %c0_28 = arith.constant 0 : index
    %c0_29 = arith.constant 0 : index
    %53 = vector.load %arg5[%c0_28, %c0_29] : memref<64x80xbf16, #tpu.memory_space<vmem>>, vector<64x80xbf16>
    %cst_30 = arith.constant dense<0.000000e+00> : vector<16x80xf32>
    %54 = tpu.matmul %52, %53, %cst_30 {dimension_numbers = #tpu.dot_dimension_numbers<[1], [0], [0], [1], [0, 0, 1, 1], [], []>} : vector<16x64xbf16>, vector<64x80xbf16>, vector<16x80xf32> -> vector<16x80xf32>
    %55 = vector.extract_strided_slice %54 {offsets = [0, 0], sizes = [16, 64], strides = [1, 1]} : vector<16x80xf32> to vector<16x64xf32>
    %c0_31 = arith.constant 0 : index
    %c0_32 = arith.constant 0 : index
    %56 = vector.load %arg6[%c0_31, %c0_32] : memref<1x64xf32, #tpu.memory_space<vmem>>, vector<1x64xf32>
    %57 = vector.broadcast %56 : vector<1x64xf32> to vector<16x64xf32>
    %58 = arith.addf %55, %57 : vector<16x64xf32>
    %cst_33 = arith.constant 2.000000e+01 : f32
    %59 = vector.broadcast %cst_33 : f32 to vector<16x64xf32>
    %60 = arith.cmpf ogt, %58, %59 : vector<16x64xf32>
    %cst_34 = arith.constant 2.000000e+01 : f32
    %61 = vector.broadcast %cst_34 : f32 to vector<16x64xf32>
    %62 = arith.minimumf %58, %61 : vector<16x64xf32>
    %63 = math.exp %62 : vector<16x64xf32>
    %cst_35 = arith.constant 1.000000e+00 : f32
    %64 = vector.broadcast %cst_35 : f32 to vector<16x64xf32>
    %65 = arith.addf %64, %63 : vector<16x64xf32>
    %66 = math.log %65 : vector<16x64xf32>
    %67 = arith.select %60, %58, %66 : vector<16x64xi1>, vector<16x64xf32>
    %68 = vector.shape_cast %51 : vector<16x64xf32> to vector<1x16x64xf32>
    %c0_36 = arith.constant 0 : index
    %c0_37 = arith.constant 0 : index
    %c0_38 = arith.constant 0 : index
    %69 = vector.load %arg24[%c0_36, %c0_37, %c0_38] : memref<1x16x64xf32, #tpu.memory_space<vmem>>, vector<1x16x64xf32>
    tpu.vector_store %arg24[%c0_36, %c0_37, %c0_38], %68 {strides = array<i32>} : memref<1x16x64xf32, #tpu.memory_space<vmem>>, vector<1x16x64xf32>,
    %70 = vector.shape_cast %67 : vector<16x64xf32> to vector<1x16x64xf32>
    %c0_39 = arith.constant 0 : index
    %c0_40 = arith.constant 0 : index
    %c0_41 = arith.constant 0 : index
    %71 = vector.load %arg25[%c0_39, %c0_40, %c0_41] : memref<1x16x64xf32, #tpu.memory_space<vmem>>, vector<1x16x64xf32>
    tpu.vector_store %arg25[%c0_39, %c0_40, %c0_41], %70 {strides = array<i32>} : memref<1x16x64xf32, #tpu.memory_space<vmem>>, vector<1x16x64xf32>,
    %72 = vector.extract_strided_slice %54 {offsets = [0, 64], sizes = [16, 16], strides = [1, 1]} : vector<16x80xf32> to vector<16x16xf32>
    %73 = vector.shape_cast %72 : vector<16x16xf32> to vector<1x16x16xf32>
    %c0_42 = arith.constant 0 : index
    %c0_43 = arith.constant 0 : index
    %c0_44 = arith.constant 0 : index
    %74 = vector.load %arg26[%c0_42, %c0_43, %c0_44] : memref<1x16x16xf32, #tpu.memory_space<vmem>>, vector<1x16x16xf32>
    tpu.vector_store %arg26[%c0_42, %c0_43, %c0_44], %73 {strides = array<i32>} : memref<1x16x16xf32, #tpu.memory_space<vmem>>, vector<1x16x16xf32>,
    %c0_45 = arith.constant 0 : index
    %c0_46 = arith.constant 0 : index
    %75 = vector.load %arg7[%c0_45, %c0_46] : memref<8x64xf32, #tpu.memory_space<vmem>>, vector<8x64xf32>
    %76 = vector.shape_cast %75 : vector<8x64xf32> to vector<1x8x64xf32>
    %cst_47 = arith.constant 0.000000e+00 : f32
    %77 = vector.broadcast %cst_47 : f32 to vector<1x8x64xf32>
    %c0_i32 = arith.constant 0 : i32
    %c2_i32 = arith.constant 2 : i32
    %78 = arith.addi %c0_i32, %c2_i32 : i32
    %c1_i32 = arith.constant 1 : i32
    %79 = scf.for %arg28 = %c0_i32 to %78 step %c1_i32 iter_args(%arg29 = %77) -> (vector<1x8x64xf32>)  : i32 {
      %c8_i32 = arith.constant 8 : i32
      %251 = arith.muli %arg28, %c8_i32 : i32
      %252 = tpu.assume_multiple %251, 8 : i32
      %c0_155 = arith.constant 0 : index
      %253 = arith.index_cast %252 : i32 to index
      %c0_156 = arith.constant 0 : index
      %254 = vector.load %arg24[%c0_155, %253, %c0_156] : memref<1x16x64xf32, #tpu.memory_space<vmem>>, vector<1x8x64xf32>
      %c0_157 = arith.constant 0 : index
      %255 = arith.index_cast %252 : i32 to index
      %c0_158 = arith.constant 0 : index
      %256 = vector.load %arg25[%c0_157, %255, %c0_158] : memref<1x16x64xf32, #tpu.memory_space<vmem>>, vector<1x8x64xf32>
      %c0_159 = arith.constant 0 : index
      %257 = arith.index_cast %252 : i32 to index
      %c0_160 = arith.constant 0 : index
      %258 = vector.load %arg26[%c0_159, %257, %c0_160] : memref<1x16x16xf32, #tpu.memory_space<vmem>>, vector<1x8x16xf32>
      %259 = arith.mulf %256, %254 : vector<1x8x64xf32>
      %260 = vector.extract_strided_slice %256 {offsets = [0, 0, 0], sizes = [1, 1, 64], strides = [1, 1, 1]} : vector<1x8x64xf32> to vector<1x1x64xf32>
      %261 = vector.shape_cast %260 : vector<1x1x64xf32> to vector<1x64xf32>
      %262 = vector.shape_cast %261 : vector<1x64xf32> to vector<1x1x64xf32>
      %263 = vector.broadcast %262 : vector<1x1x64xf32> to vector<1x8x64xf32>
      %264 = arith.mulf %263, %76 : vector<1x8x64xf32>
      %265 = math.exp %264 : vector<1x8x64xf32>
      %266 = vector.extract_strided_slice %258 {offsets = [0, 0, 0], sizes = [1, 1, 8], strides = [1, 1, 1]} : vector<1x8x16xf32> to vector<1x1x8xf32>
      %267 = vector.shape_cast %266 : vector<1x1x8xf32> to vector<1x8xf32>
      %268 = vector.shape_cast %267 : vector<1x8xf32> to vector<1x8x1xf32>
      %269 = vector.extract_strided_slice %259 {offsets = [0, 0, 0], sizes = [1, 1, 64], strides = [1, 1, 1]} : vector<1x8x64xf32> to vector<1x1x64xf32>
      %270 = vector.shape_cast %269 : vector<1x1x64xf32> to vector<1x64xf32>
      %271 = vector.shape_cast %270 : vector<1x64xf32> to vector<1x1x64xf32>
      %272 = vector.broadcast %268 : vector<1x8x1xf32> to vector<1x8x64xf32>
      %273 = vector.broadcast %271 : vector<1x1x64xf32> to vector<1x8x64xf32>
      %274 = arith.mulf %272, %273 : vector<1x8x64xf32>
      %275 = arith.mulf %265, %arg29 : vector<1x8x64xf32>
      %276 = arith.addf %275, %274 : vector<1x8x64xf32>
      %277 = vector.extract_strided_slice %258 {offsets = [0, 0, 8], sizes = [1, 1, 8], strides = [1, 1, 1]} : vector<1x8x16xf32> to vector<1x1x8xf32>
      %278 = vector.shape_cast %277 : vector<1x1x8xf32> to vector<1x8xf32>
      %279 = vector.shape_cast %278 : vector<1x8xf32> to vector<1x8x1xf32>
      %280 = vector.broadcast %279 : vector<1x8x1xf32> to vector<1x8x64xf32>
      %281 = arith.mulf %280, %276 : vector<1x8x64xf32>
      %cst_161 = arith.constant dense<0.000000e+00> : vector<1x64xf32>
      %282 = vector.multi_reduction <add>, %281, %cst_161 [1] : vector<1x8x64xf32> to vector<1x64xf32>
      %283 = vector.extract_strided_slice %256 {offsets = [0, 1, 0], sizes = [1, 1, 64], strides = [1, 1, 1]} : vector<1x8x64xf32> to vector<1x1x64xf32>
      %284 = vector.shape_cast %283 : vector<1x1x64xf32> to vector<1x64xf32>
      %285 = vector.shape_cast %284 : vector<1x64xf32> to vector<1x1x64xf32>
      %286 = vector.broadcast %285 : vector<1x1x64xf32> to vector<1x8x64xf32>
      %287 = arith.mulf %286, %76 : vector<1x8x64xf32>
      %288 = math.exp %287 : vector<1x8x64xf32>
      %289 = vector.extract_strided_slice %258 {offsets = [0, 1, 0], sizes = [1, 1, 8], strides = [1, 1, 1]} : vector<1x8x16xf32> to vector<1x1x8xf32>
      %290 = vector.shape_cast %289 : vector<1x1x8xf32> to vector<1x8xf32>
      %291 = vector.shape_cast %290 : vector<1x8xf32> to vector<1x8x1xf32>
      %292 = vector.extract_strided_slice %259 {offsets = [0, 1, 0], sizes = [1, 1, 64], strides = [1, 1, 1]} : vector<1x8x64xf32> to vector<1x1x64xf32>
      %293 = vector.shape_cast %292 : vector<1x1x64xf32> to vector<1x64xf32>
      %294 = vector.shape_cast %293 : vector<1x64xf32> to vector<1x1x64xf32>
      %295 = vector.broadcast %291 : vector<1x8x1xf32> to vector<1x8x64xf32>
      %296 = vector.broadcast %294 : vector<1x1x64xf32> to vector<1x8x64xf32>
      %297 = arith.mulf %295, %296 : vector<1x8x64xf32>
      %298 = arith.mulf %288, %276 : vector<1x8x64xf32>
      %299 = arith.addf %298, %297 : vector<1x8x64xf32>
      %300 = vector.extract_strided_slice %258 {offsets = [0, 1, 8], sizes = [1, 1, 8], strides = [1, 1, 1]} : vector<1x8x16xf32> to vector<1x1x8xf32>
      %301 = vector.shape_cast %300 : vector<1x1x8xf32> to vector<1x8xf32>
      %302 = vector.shape_cast %301 : vector<1x8xf32> to vector<1x8x1xf32>
      %303 = vector.broadcast %302 : vector<1x8x1xf32> to vector<1x8x64xf32>
      %304 = arith.mulf %303, %299 : vector<1x8x64xf32>
      %cst_162 = arith.constant dense<0.000000e+00> : vector<1x64xf32>
      %305 = vector.multi_reduction <add>, %304, %cst_162 [1] : vector<1x8x64xf32> to vector<1x64xf32>
      %306 = vector.extract_strided_slice %256 {offsets = [0, 2, 0], sizes = [1, 1, 64], strides = [1, 1, 1]} : vector<1x8x64xf32> to vector<1x1x64xf32>
      %307 = vector.shape_cast %306 : vector<1x1x64xf32> to vector<1x64xf32>
      %308 = vector.shape_cast %307 : vector<1x64xf32> to vector<1x1x64xf32>
      %309 = vector.broadcast %308 : vector<1x1x64xf32> to vector<1x8x64xf32>
      %310 = arith.mulf %309, %76 : vector<1x8x64xf32>
      %311 = math.exp %310 : vector<1x8x64xf32>
      %312 = vector.extract_strided_slice %258 {offsets = [0, 2, 0], sizes = [1, 1, 8], strides = [1, 1, 1]} : vector<1x8x16xf32> to vector<1x1x8xf32>
      %313 = vector.shape_cast %312 : vector<1x1x8xf32> to vector<1x8xf32>
      %314 = vector.shape_cast %313 : vector<1x8xf32> to vector<1x8x1xf32>
      %315 = vector.extract_strided_slice %259 {offsets = [0, 2, 0], sizes = [1, 1, 64], strides = [1, 1, 1]} : vector<1x8x64xf32> to vector<1x1x64xf32>
      %316 = vector.shape_cast %315 : vector<1x1x64xf32> to vector<1x64xf32>
      %317 = vector.shape_cast %316 : vector<1x64xf32> to vector<1x1x64xf32>
      %318 = vector.broadcast %314 : vector<1x8x1xf32> to vector<1x8x64xf32>
      %319 = vector.broadcast %317 : vector<1x1x64xf32> to vector<1x8x64xf32>
      %320 = arith.mulf %318, %319 : vector<1x8x64xf32>
      %321 = arith.mulf %311, %299 : vector<1x8x64xf32>
      %322 = arith.addf %321, %320 : vector<1x8x64xf32>
      %323 = vector.extract_strided_slice %258 {offsets = [0, 2, 8], sizes = [1, 1, 8], strides = [1, 1, 1]} : vector<1x8x16xf32> to vector<1x1x8xf32>
      %324 = vector.shape_cast %323 : vector<1x1x8xf32> to vector<1x8xf32>
      %325 = vector.shape_cast %324 : vector<1x8xf32> to vector<1x8x1xf32>
      %326 = vector.broadcast %325 : vector<1x8x1xf32> to vector<1x8x64xf32>
      %327 = arith.mulf %326, %322 : vector<1x8x64xf32>
      %cst_163 = arith.constant dense<0.000000e+00> : vector<1x64xf32>
      %328 = vector.multi_reduction <add>, %327, %cst_163 [1] : vector<1x8x64xf32> to vector<1x64xf32>
      %329 = vector.extract_strided_slice %256 {offsets = [0, 3, 0], sizes = [1, 1, 64], strides = [1, 1, 1]} : vector<1x8x64xf32> to vector<1x1x64xf32>
      %330 = vector.shape_cast %329 : vector<1x1x64xf32> to vector<1x64xf32>
      %331 = vector.shape_cast %330 : vector<1x64xf32> to vector<1x1x64xf32>
      %332 = vector.broadcast %331 : vector<1x1x64xf32> to vector<1x8x64xf32>
      %333 = arith.mulf %332, %76 : vector<1x8x64xf32>
      %334 = math.exp %333 : vector<1x8x64xf32>
      %335 = vector.extract_strided_slice %258 {offsets = [0, 3, 0], sizes = [1, 1, 8], strides = [1, 1, 1]} : vector<1x8x16xf32> to vector<1x1x8xf32>
      %336 = vector.shape_cast %335 : vector<1x1x8xf32> to vector<1x8xf32>
      %337 = vector.shape_cast %336 : vector<1x8xf32> to vector<1x8x1xf32>
      %338 = vector.extract_strided_slice %259 {offsets = [0, 3, 0], sizes = [1, 1, 64], strides = [1, 1, 1]} : vector<1x8x64xf32> to vector<1x1x64xf32>
      %339 = vector.shape_cast %338 : vector<1x1x64xf32> to vector<1x64xf32>
      %340 = vector.shape_cast %339 : vector<1x64xf32> to vector<1x1x64xf32>
      %341 = vector.broadcast %337 : vector<1x8x1xf32> to vector<1x8x64xf32>
      %342 = vector.broadcast %340 : vector<1x1x64xf32> to vector<1x8x64xf32>
      %343 = arith.mulf %341, %342 : vector<1x8x64xf32>
      %344 = arith.mulf %334, %322 : vector<1x8x64xf32>
      %345 = arith.addf %344, %343 : vector<1x8x64xf32>
      %346 = vector.extract_strided_slice %258 {offsets = [0, 3, 8], sizes = [1, 1, 8], strides = [1, 1, 1]} : vector<1x8x16xf32> to vector<1x1x8xf32>
      %347 = vector.shape_cast %346 : vector<1x1x8xf32> to vector<1x8xf32>
      %348 = vector.shape_cast %347 : vector<1x8xf32> to vector<1x8x1xf32>
      %349 = vector.broadcast %348 : vector<1x8x1xf32> to vector<1x8x64xf32>
      %350 = arith.mulf %349, %345 : vector<1x8x64xf32>
      %cst_164 = arith.constant dense<0.000000e+00> : vector<1x64xf32>
      %351 = vector.multi_reduction <add>, %350, %cst_164 [1] : vector<1x8x64xf32> to vector<1x64xf32>
      %352 = vector.extract_strided_slice %256 {offsets = [0, 4, 0], sizes = [1, 1, 64], strides = [1, 1, 1]} : vector<1x8x64xf32> to vector<1x1x64xf32>
      %353 = vector.shape_cast %352 : vector<1x1x64xf32> to vector<1x64xf32>
      %354 = vector.shape_cast %353 : vector<1x64xf32> to vector<1x1x64xf32>
      %355 = vector.broadcast %354 : vector<1x1x64xf32> to vector<1x8x64xf32>
      %356 = arith.mulf %355, %76 : vector<1x8x64xf32>
      %357 = math.exp %356 : vector<1x8x64xf32>
      %358 = vector.extract_strided_slice %258 {offsets = [0, 4, 0], sizes = [1, 1, 8], strides = [1, 1, 1]} : vector<1x8x16xf32> to vector<1x1x8xf32>
      %359 = vector.shape_cast %358 : vector<1x1x8xf32> to vector<1x8xf32>
      %360 = vector.shape_cast %359 : vector<1x8xf32> to vector<1x8x1xf32>
      %361 = vector.extract_strided_slice %259 {offsets = [0, 4, 0], sizes = [1, 1, 64], strides = [1, 1, 1]} : vector<1x8x64xf32> to vector<1x1x64xf32>
      %362 = vector.shape_cast %361 : vector<1x1x64xf32> to vector<1x64xf32>
      %363 = vector.shape_cast %362 : vector<1x64xf32> to vector<1x1x64xf32>
      %364 = vector.broadcast %360 : vector<1x8x1xf32> to vector<1x8x64xf32>
      %365 = vector.broadcast %363 : vector<1x1x64xf32> to vector<1x8x64xf32>
      %366 = arith.mulf %364, %365 : vector<1x8x64xf32>
      %367 = arith.mulf %357, %345 : vector<1x8x64xf32>
      %368 = arith.addf %367, %366 : vector<1x8x64xf32>
      %369 = vector.extract_strided_slice %258 {offsets = [0, 4, 8], sizes = [1, 1, 8], strides = [1, 1, 1]} : vector<1x8x16xf32> to vector<1x1x8xf32>
      %370 = vector.shape_cast %369 : vector<1x1x8xf32> to vector<1x8xf32>
      %371 = vector.shape_cast %370 : vector<1x8xf32> to vector<1x8x1xf32>
      %372 = vector.broadcast %371 : vector<1x8x1xf32> to vector<1x8x64xf32>
      %373 = arith.mulf %372, %368 : vector<1x8x64xf32>
      %cst_165 = arith.constant dense<0.000000e+00> : vector<1x64xf32>
      %374 = vector.multi_reduction <add>, %373, %cst_165 [1] : vector<1x8x64xf32> to vector<1x64xf32>
      %375 = vector.extract_strided_slice %256 {offsets = [0, 5, 0], sizes = [1, 1, 64], strides = [1, 1, 1]} : vector<1x8x64xf32> to vector<1x1x64xf32>
      %376 = vector.shape_cast %375 : vector<1x1x64xf32> to vector<1x64xf32>
      %377 = vector.shape_cast %376 : vector<1x64xf32> to vector<1x1x64xf32>
      %378 = vector.broadcast %377 : vector<1x1x64xf32> to vector<1x8x64xf32>
      %379 = arith.mulf %378, %76 : vector<1x8x64xf32>
      %380 = math.exp %379 : vector<1x8x64xf32>
      %381 = vector.extract_strided_slice %258 {offsets = [0, 5, 0], sizes = [1, 1, 8], strides = [1, 1, 1]} : vector<1x8x16xf32> to vector<1x1x8xf32>
      %382 = vector.shape_cast %381 : vector<1x1x8xf32> to vector<1x8xf32>
      %383 = vector.shape_cast %382 : vector<1x8xf32> to vector<1x8x1xf32>
      %384 = vector.extract_strided_slice %259 {offsets = [0, 5, 0], sizes = [1, 1, 64], strides = [1, 1, 1]} : vector<1x8x64xf32> to vector<1x1x64xf32>
      %385 = vector.shape_cast %384 : vector<1x1x64xf32> to vector<1x64xf32>
      %386 = vector.shape_cast %385 : vector<1x64xf32> to vector<1x1x64xf32>
      %387 = vector.broadcast %383 : vector<1x8x1xf32> to vector<1x8x64xf32>
      %388 = vector.broadcast %386 : vector<1x1x64xf32> to vector<1x8x64xf32>
      %389 = arith.mulf %387, %388 : vector<1x8x64xf32>
      %390 = arith.mulf %380, %368 : vector<1x8x64xf32>
      %391 = arith.addf %390, %389 : vector<1x8x64xf32>
      %392 = vector.extract_strided_slice %258 {offsets = [0, 5, 8], sizes = [1, 1, 8], strides = [1, 1, 1]} : vector<1x8x16xf32> to vector<1x1x8xf32>
      %393 = vector.shape_cast %392 : vector<1x1x8xf32> to vector<1x8xf32>
      %394 = vector.shape_cast %393 : vector<1x8xf32> to vector<1x8x1xf32>
      %395 = vector.broadcast %394 : vector<1x8x1xf32> to vector<1x8x64xf32>
      %396 = arith.mulf %395, %391 : vector<1x8x64xf32>
      %cst_166 = arith.constant dense<0.000000e+00> : vector<1x64xf32>
      %397 = vector.multi_reduction <add>, %396, %cst_166 [1] : vector<1x8x64xf32> to vector<1x64xf32>
      %398 = vector.extract_strided_slice %256 {offsets = [0, 6, 0], sizes = [1, 1, 64], strides = [1, 1, 1]} : vector<1x8x64xf32> to vector<1x1x64xf32>
      %399 = vector.shape_cast %398 : vector<1x1x64xf32> to vector<1x64xf32>
      %400 = vector.shape_cast %399 : vector<1x64xf32> to vector<1x1x64xf32>
      %401 = vector.broadcast %400 : vector<1x1x64xf32> to vector<1x8x64xf32>
      %402 = arith.mulf %401, %76 : vector<1x8x64xf32>
      %403 = math.exp %402 : vector<1x8x64xf32>
      %404 = vector.extract_strided_slice %258 {offsets = [0, 6, 0], sizes = [1, 1, 8], strides = [1, 1, 1]} : vector<1x8x16xf32> to vector<1x1x8xf32>
      %405 = vector.shape_cast %404 : vector<1x1x8xf32> to vector<1x8xf32>
      %406 = vector.shape_cast %405 : vector<1x8xf32> to vector<1x8x1xf32>
      %407 = vector.extract_strided_slice %259 {offsets = [0, 6, 0], sizes = [1, 1, 64], strides = [1, 1, 1]} : vector<1x8x64xf32> to vector<1x1x64xf32>
      %408 = vector.shape_cast %407 : vector<1x1x64xf32> to vector<1x64xf32>
      %409 = vector.shape_cast %408 : vector<1x64xf32> to vector<1x1x64xf32>
      %410 = vector.broadcast %406 : vector<1x8x1xf32> to vector<1x8x64xf32>
      %411 = vector.broadcast %409 : vector<1x1x64xf32> to vector<1x8x64xf32>
      %412 = arith.mulf %410, %411 : vector<1x8x64xf32>
      %413 = arith.mulf %403, %391 : vector<1x8x64xf32>
      %414 = arith.addf %413, %412 : vector<1x8x64xf32>
      %415 = vector.extract_strided_slice %258 {offsets = [0, 6, 8], sizes = [1, 1, 8], strides = [1, 1, 1]} : vector<1x8x16xf32> to vector<1x1x8xf32>
      %416 = vector.shape_cast %415 : vector<1x1x8xf32> to vector<1x8xf32>
      %417 = vector.shape_cast %416 : vector<1x8xf32> to vector<1x8x1xf32>
      %418 = vector.broadcast %417 : vector<1x8x1xf32> to vector<1x8x64xf32>
      %419 = arith.mulf %418, %414 : vector<1x8x64xf32>
      %cst_167 = arith.constant dense<0.000000e+00> : vector<1x64xf32>
      %420 = vector.multi_reduction <add>, %419, %cst_167 [1] : vector<1x8x64xf32> to vector<1x64xf32>
      %421 = vector.extract_strided_slice %256 {offsets = [0, 7, 0], sizes = [1, 1, 64], strides = [1, 1, 1]} : vector<1x8x64xf32> to vector<1x1x64xf32>
      %422 = vector.shape_cast %421 : vector<1x1x64xf32> to vector<1x64xf32>
      %423 = vector.shape_cast %422 : vector<1x64xf32> to vector<1x1x64xf32>
      %424 = vector.broadcast %423 : vector<1x1x64xf32> to vector<1x8x64xf32>
      %425 = arith.mulf %424, %76 : vector<1x8x64xf32>
      %426 = math.exp %425 : vector<1x8x64xf32>
      %427 = vector.extract_strided_slice %258 {offsets = [0, 7, 0], sizes = [1, 1, 8], strides = [1, 1, 1]} : vector<1x8x16xf32> to vector<1x1x8xf32>
      %428 = vector.shape_cast %427 : vector<1x1x8xf32> to vector<1x8xf32>
      %429 = vector.shape_cast %428 : vector<1x8xf32> to vector<1x8x1xf32>
      %430 = vector.extract_strided_slice %259 {offsets = [0, 7, 0], sizes = [1, 1, 64], strides = [1, 1, 1]} : vector<1x8x64xf32> to vector<1x1x64xf32>
      %431 = vector.shape_cast %430 : vector<1x1x64xf32> to vector<1x64xf32>
      %432 = vector.shape_cast %431 : vector<1x64xf32> to vector<1x1x64xf32>
      %433 = vector.broadcast %429 : vector<1x8x1xf32> to vector<1x8x64xf32>
      %434 = vector.broadcast %432 : vector<1x1x64xf32> to vector<1x8x64xf32>
      %435 = arith.mulf %433, %434 : vector<1x8x64xf32>
      %436 = arith.mulf %426, %414 : vector<1x8x64xf32>
      %437 = arith.addf %436, %435 : vector<1x8x64xf32>
      %438 = vector.extract_strided_slice %258 {offsets = [0, 7, 8], sizes = [1, 1, 8], strides = [1, 1, 1]} : vector<1x8x16xf32> to vector<1x1x8xf32>
      %439 = vector.shape_cast %438 : vector<1x1x8xf32> to vector<1x8xf32>
      %440 = vector.shape_cast %439 : vector<1x8xf32> to vector<1x8x1xf32>
      %441 = vector.broadcast %440 : vector<1x8x1xf32> to vector<1x8x64xf32>
      %442 = arith.mulf %441, %437 : vector<1x8x64xf32>
      %cst_168 = arith.constant dense<0.000000e+00> : vector<1x64xf32>
      %443 = vector.multi_reduction <add>, %442, %cst_168 [1] : vector<1x8x64xf32> to vector<1x64xf32>
      %444 = vector.shape_cast %282 : vector<1x64xf32> to vector<1x1x64xf32>
      %445 = vector.shape_cast %305 : vector<1x64xf32> to vector<1x1x64xf32>
      %446 = vector.shape_cast %328 : vector<1x64xf32> to vector<1x1x64xf32>
      %447 = vector.shape_cast %351 : vector<1x64xf32> to vector<1x1x64xf32>
      %448 = vector.shape_cast %374 : vector<1x64xf32> to vector<1x1x64xf32>
      %449 = vector.shape_cast %397 : vector<1x64xf32> to vector<1x1x64xf32>
      %450 = vector.shape_cast %420 : vector<1x64xf32> to vector<1x1x64xf32>
      %451 = vector.shape_cast %443 : vector<1x64xf32> to vector<1x1x64xf32>
      %452 = tpu.concatenate %444, %445, %446, %447, %448, %449, %450, %451 in 1 : vector<1x1x64xf32>, vector<1x1x64xf32>, vector<1x1x64xf32>, vector<1x1x64xf32>, vector<1x1x64xf32>, vector<1x1x64xf32>, vector<1x1x64xf32>, vector<1x1x64xf32> -> vector<1x8x64xf32>
      %c0_169 = arith.constant 0 : index
      %453 = arith.index_cast %252 : i32 to index
      %c0_170 = arith.constant 0 : index
      %454 = vector.load %arg27[%c0_169, %453, %c0_170] : memref<1x16x64xf32, #tpu.memory_space<vmem>>, vector<1x8x64xf32>
      tpu.vector_store %arg27[%c0_169, %453, %c0_170], %452 {strides = array<i32>} : memref<1x16x64xf32, #tpu.memory_space<vmem>>, vector<1x8x64xf32>,
      scf.yield %437 : vector<1x8x64xf32>
    }
    %c2_i32_48 = arith.constant 2 : i32
    %c0_49 = arith.constant 0 : index
    %c0_50 = arith.constant 0 : index
    %c0_51 = arith.constant 0 : index
    %80 = vector.load %arg27[%c0_49, %c0_50, %c0_51] : memref<1x16x64xf32, #tpu.memory_space<vmem>>, vector<1x16x64xf32>
    %81 = vector.shape_cast %80 : vector<1x16x64xf32> to vector<16x64xf32>
    %c0_52 = arith.constant 0 : index
    %c0_53 = arith.constant 0 : index
    %c0_54 = arith.constant 0 : index
    %82 = vector.load %arg24[%c0_52, %c0_53, %c0_54] : memref<1x16x64xf32, #tpu.memory_space<vmem>>, vector<1x16x64xf32>
    %83 = vector.shape_cast %82 : vector<1x16x64xf32> to vector<16x64xf32>
    %c0_55 = arith.constant 0 : index
    %c0_56 = arith.constant 0 : index
    %84 = vector.load %arg8[%c0_55, %c0_56] : memref<1x64xf32, #tpu.memory_space<vmem>>, vector<1x64xf32>
    %85 = vector.broadcast %84 : vector<1x64xf32> to vector<16x64xf32>
    %86 = arith.mulf %83, %85 : vector<16x64xf32>
    %87 = arith.addf %81, %86 : vector<16x64xf32>
    %cst_57 = arith.constant 0.000000e+00 : f32
    %88 = vector.broadcast %cst_57 : f32 to vector<16x64xf32>
    %89 = arith.subf %88, %6 : vector<16x64xf32>
    %90 = math.exp %89 : vector<16x64xf32>
    %cst_58 = arith.constant 1.000000e+00 : f32
    %91 = vector.broadcast %cst_58 : f32 to vector<16x64xf32>
    %92 = arith.addf %91, %90 : vector<16x64xf32>
    %93 = tpu.reciprocal %92 {approx = true} : vector<16x64xf32> -> vector<16x64xf32>
    %94 = arith.mulf %6, %93 : vector<16x64xf32>
    %95 = arith.mulf %87, %94 : vector<16x64xf32>
    %96 = arith.truncf %95 : vector<16x64xf32> to vector<16x64xbf16>
    %c0_59 = arith.constant 0 : index
    %c0_60 = arith.constant 0 : index
    %97 = vector.load %arg9[%c0_59, %c0_60] : memref<64x32xbf16, #tpu.memory_space<vmem>>, vector<64x32xbf16>
    %cst_61 = arith.constant dense<0.000000e+00> : vector<16x32xf32>
    %98 = tpu.matmul %96, %97, %cst_61 {dimension_numbers = #tpu.dot_dimension_numbers<[1], [0], [0], [1], [0, 0, 1, 1], [], []>} : vector<16x64xbf16>, vector<64x32xbf16>, vector<16x32xf32> -> vector<16x32xf32>
    %99 = arith.addf %98, %1 : vector<16x32xf32>
    %c0_62 = arith.constant 0 : index
    %c0_63 = arith.constant 0 : index
    %100 = vector.load %arg18[%c0_62, %c0_63] : memref<1x32xf32, #tpu.memory_space<vmem>>, vector<1x32xf32>
    %c0_64 = arith.constant 0 : index
    %c0_65 = arith.constant 0 : index
    %101 = vector.load %arg19[%c0_64, %c0_65] : memref<1x32xf32, #tpu.memory_space<vmem>>, vector<1x32xf32>
    %cst_66 = arith.constant dense<0.000000e+00> : vector<16xf32>
    %102 = vector.multi_reduction <add>, %99, %cst_66 [1] : vector<16x32xf32> to vector<16xf32>
    %103 = vector.shape_cast %102 : vector<16xf32> to vector<16x1xf32>
    %cst_67 = arith.constant 3.200000e+01 : f32
    %104 = vector.broadcast %cst_67 : f32 to vector<16x1xf32>
    %105 = arith.divf %103, %104 : vector<16x1xf32>
    %106 = vector.broadcast %105 : vector<16x1xf32> to vector<16x32xf32>
    %107 = arith.subf %99, %106 : vector<16x32xf32>
    %108 = arith.mulf %107, %107 : vector<16x32xf32>
    %cst_68 = arith.constant dense<0.000000e+00> : vector<16xf32>
    %109 = vector.multi_reduction <add>, %108, %cst_68 [1] : vector<16x32xf32> to vector<16xf32>
    %110 = vector.shape_cast %109 : vector<16xf32> to vector<16x1xf32>
    %cst_69 = arith.constant 3.200000e+01 : f32
    %111 = vector.broadcast %cst_69 : f32 to vector<16x1xf32>
    %112 = arith.divf %110, %111 : vector<16x1xf32>
    %113 = vector.broadcast %105 : vector<16x1xf32> to vector<16x32xf32>
    %114 = arith.subf %99, %113 : vector<16x32xf32>
    %cst_70 = arith.constant 9.99999974E-6 : f32
    %115 = vector.broadcast %cst_70 : f32 to vector<16x1xf32>
    %116 = arith.addf %112, %115 : vector<16x1xf32>
    %117 = math.rsqrt %116 : vector<16x1xf32>
    %118 = vector.broadcast %117 : vector<16x1xf32> to vector<16x32xf32>
    %119 = arith.mulf %114, %118 : vector<16x32xf32>
    %120 = vector.broadcast %100 : vector<1x32xf32> to vector<16x32xf32>
    %121 = arith.mulf %119, %120 : vector<16x32xf32>
    %122 = vector.broadcast %101 : vector<1x32xf32> to vector<16x32xf32>
    %123 = arith.addf %121, %122 : vector<16x32xf32>
    %124 = vector.shape_cast %123 : vector<16x32xf32> to vector<1x16x32xf32>
    %c0_71 = arith.constant 0 : index
    %c0_72 = arith.constant 0 : index
    %c0_73 = arith.constant 0 : index
    %125 = vector.load %arg22[%c0_71, %c0_72, %c0_73] : memref<1x16x32xf32, #tpu.memory_space<vmem>>, vector<1x16x32xf32>
    tpu.vector_store %arg22[%c0_71, %c0_72, %c0_73], %124 {strides = array<i32>} : memref<1x16x32xf32, #tpu.memory_space<vmem>>, vector<1x16x32xf32>,
    %c0_74 = arith.constant 0 : index
    %c0_75 = arith.constant 0 : index
    %126 = vector.load %arg10[%c0_74, %c0_75] : memref<32x128xbf16, #tpu.memory_space<vmem>>, vector<32x128xbf16>
    %cst_76 = arith.constant dense<0.000000e+00> : vector<16x128xf32>
    %127 = tpu.matmul %2, %126, %cst_76 {dimension_numbers = #tpu.dot_dimension_numbers<[1], [0], [0], [1], [0, 0, 1, 1], [], []>} : vector<16x32xbf16>, vector<32x128xbf16>, vector<16x128xf32> -> vector<16x128xf32>
    %128 = vector.extract_strided_slice %127 {offsets = [0, 0], sizes = [16, 64], strides = [1, 1]} : vector<16x128xf32> to vector<16x64xf32>
    %129 = vector.extract_strided_slice %127 {offsets = [0, 64], sizes = [16, 64], strides = [1, 1]} : vector<16x128xf32> to vector<16x64xf32>
    %cst_77 = arith.constant 0.000000e+00 : f32
    %130 = vector.broadcast %cst_77 : f32 to vector<1x8x64xf32>
    %c0_78 = arith.constant 0 : index
    %c0_79 = arith.constant 0 : index
    %c0_80 = arith.constant 0 : index
    %131 = vector.load %arg23[%c0_78, %c0_79, %c0_80] : memref<1x32x64xf32, #tpu.memory_space<vmem>>, vector<1x8x64xf32>
    tpu.vector_store %arg23[%c0_78, %c0_79, %c0_80], %130 {strides = array<i32>} : memref<1x32x64xf32, #tpu.memory_space<vmem>>, vector<1x8x64xf32>,
    %cst_81 = arith.constant 0.000000e+00 : f32
    %132 = vector.broadcast %cst_81 : f32 to vector<1x8x64xf32>
    %c0_82 = arith.constant 0 : index
    %c24_83 = arith.constant 24 : index
    %c0_84 = arith.constant 0 : index
    %133 = vector.load %arg23[%c0_82, %c24_83, %c0_84] : memref<1x32x64xf32, #tpu.memory_space<vmem>>, vector<1x8x64xf32>
    tpu.vector_store %arg23[%c0_82, %c24_83, %c0_84], %132 {strides = array<i32>} : memref<1x32x64xf32, #tpu.memory_space<vmem>>, vector<1x8x64xf32>,
    %134 = vector.shape_cast %128 : vector<16x64xf32> to vector<1x16x64xf32>
    %c0_85 = arith.constant 0 : index
    %c8_86 = arith.constant 8 : index
    %c0_87 = arith.constant 0 : index
    %135 = vector.load %arg23[%c0_85, %c8_86, %c0_87] : memref<1x32x64xf32, #tpu.memory_space<vmem>>, vector<1x16x64xf32>
    tpu.vector_store %arg23[%c0_85, %c8_86, %c0_87], %134 {strides = array<i32>} : memref<1x32x64xf32, #tpu.memory_space<vmem>>, vector<1x16x64xf32>,
    %c0_88 = arith.constant 0 : index
    %c0_89 = arith.constant 0 : index
    %136 = vector.load %arg11[%c0_88, %c0_89] : memref<4x64xf32, #tpu.memory_space<vmem>>, vector<4x64xf32>
    %c0_90 = arith.constant 0 : index
    %c11 = arith.constant 11 : index
    %c0_91 = arith.constant 0 : index
    %137 = vector.load %arg23[%c0_90, %c11, %c0_91] : memref<1x32x64xf32, #tpu.memory_space<vmem>>, vector<1x16x64xf32>
    %138 = vector.extract_strided_slice %136 {offsets = [0, 0], sizes = [1, 64], strides = [1, 1]} : vector<4x64xf32> to vector<1x64xf32>
    %139 = vector.shape_cast %138 : vector<1x64xf32> to vector<64xf32>
    %140 = vector.shape_cast %139 : vector<64xf32> to vector<1x1x64xf32>
    %141 = vector.broadcast %140 : vector<1x1x64xf32> to vector<1x16x64xf32>
    %142 = arith.mulf %137, %141 : vector<1x16x64xf32>
    %c0_92 = arith.constant 0 : index
    %c10 = arith.constant 10 : index
    %c0_93 = arith.constant 0 : index
    %143 = vector.load %arg23[%c0_92, %c10, %c0_93] : memref<1x32x64xf32, #tpu.memory_space<vmem>>, vector<1x16x64xf32>
    %144 = vector.extract_strided_slice %136 {offsets = [1, 0], sizes = [1, 64], strides = [1, 1]} : vector<4x64xf32> to vector<1x64xf32>
    %145 = vector.shape_cast %144 : vector<1x64xf32> to vector<64xf32>
    %146 = vector.shape_cast %145 : vector<64xf32> to vector<1x1x64xf32>
    %147 = vector.broadcast %146 : vector<1x1x64xf32> to vector<1x16x64xf32>
    %148 = arith.mulf %143, %147 : vector<1x16x64xf32>
    %149 = arith.addf %142, %148 : vector<1x16x64xf32>
    %c0_94 = arith.constant 0 : index
    %c9 = arith.constant 9 : index
    %c0_95 = arith.constant 0 : index
    %150 = vector.load %arg23[%c0_94, %c9, %c0_95] : memref<1x32x64xf32, #tpu.memory_space<vmem>>, vector<1x16x64xf32>
    %151 = vector.extract_strided_slice %136 {offsets = [2, 0], sizes = [1, 64], strides = [1, 1]} : vector<4x64xf32> to vector<1x64xf32>
    %152 = vector.shape_cast %151 : vector<1x64xf32> to vector<64xf32>
    %153 = vector.shape_cast %152 : vector<64xf32> to vector<1x1x64xf32>
    %154 = vector.broadcast %153 : vector<1x1x64xf32> to vector<1x16x64xf32>
    %155 = arith.mulf %150, %154 : vector<1x16x64xf32>
    %156 = arith.addf %149, %155 : vector<1x16x64xf32>
    %c0_96 = arith.constant 0 : index
    %c8_97 = arith.constant 8 : index
    %c0_98 = arith.constant 0 : index
    %157 = vector.load %arg23[%c0_96, %c8_97, %c0_98] : memref<1x32x64xf32, #tpu.memory_space<vmem>>, vector<1x16x64xf32>
    %158 = vector.extract_strided_slice %136 {offsets = [3, 0], sizes = [1, 64], strides = [1, 1]} : vector<4x64xf32> to vector<1x64xf32>
    %159 = vector.shape_cast %158 : vector<1x64xf32> to vector<64xf32>
    %160 = vector.shape_cast %159 : vector<64xf32> to vector<1x1x64xf32>
    %161 = vector.broadcast %160 : vector<1x1x64xf32> to vector<1x16x64xf32>
    %162 = arith.mulf %157, %161 : vector<1x16x64xf32>
    %163 = arith.addf %156, %162 : vector<1x16x64xf32>
    %164 = vector.shape_cast %163 : vector<1x16x64xf32> to vector<16x64xf32>
    %c0_99 = arith.constant 0 : index
    %c0_100 = arith.constant 0 : index
    %165 = vector.load %arg12[%c0_99, %c0_100] : memref<1x64xf32, #tpu.memory_space<vmem>>, vector<1x64xf32>
    %166 = vector.broadcast %165 : vector<1x64xf32> to vector<16x64xf32>
    %167 = arith.addf %164, %166 : vector<16x64xf32>
    %cst_101 = arith.constant 0.000000e+00 : f32
    %168 = vector.broadcast %cst_101 : f32 to vector<16x64xf32>
    %169 = arith.subf %168, %167 : vector<16x64xf32>
    %170 = math.exp %169 : vector<16x64xf32>
    %cst_102 = arith.constant 1.000000e+00 : f32
    %171 = vector.broadcast %cst_102 : f32 to vector<16x64xf32>
    %172 = arith.addf %171, %170 : vector<16x64xf32>
    %173 = tpu.reciprocal %172 {approx = true} : vector<16x64xf32> -> vector<16x64xf32>
    %174 = arith.mulf %167, %173 : vector<16x64xf32>
    %175 = arith.truncf %174 : vector<16x64xf32> to vector<16x64xbf16>
    %c0_103 = arith.constant 0 : index
    %c0_104 = arith.constant 0 : index
    %176 = vector.load %arg13[%c0_103, %c0_104] : memref<64x80xbf16, #tpu.memory_space<vmem>>, vector<64x80xbf16>
    %cst_105 = arith.constant dense<0.000000e+00> : vector<16x80xf32>
    %177 = tpu.matmul %175, %176, %cst_105 {dimension_numbers = #tpu.dot_dimension_numbers<[1], [0], [0], [1], [0, 0, 1, 1], [], []>} : vector<16x64xbf16>, vector<64x80xbf16>, vector<16x80xf32> -> vector<16x80xf32>
    %178 = vector.extract_strided_slice %177 {offsets = [0, 0], sizes = [16, 64], strides = [1, 1]} : vector<16x80xf32> to vector<16x64xf32>
    %c0_106 = arith.constant 0 : index
    %c0_107 = arith.constant 0 : index
    %179 = vector.load %arg14[%c0_106, %c0_107] : memref<1x64xf32, #tpu.memory_space<vmem>>, vector<1x64xf32>
    %180 = vector.broadcast %179 : vector<1x64xf32> to vector<16x64xf32>
    %181 = arith.addf %178, %180 : vector<16x64xf32>
    %cst_108 = arith.constant 2.000000e+01 : f32
    %182 = vector.broadcast %cst_108 : f32 to vector<16x64xf32>
    %183 = arith.cmpf ogt, %181, %182 : vector<16x64xf32>
    %cst_109 = arith.constant 2.000000e+01 : f32
    %184 = vector.broadcast %cst_109 : f32 to vector<16x64xf32>
    %185 = arith.minimumf %181, %184 : vector<16x64xf32>
    %186 = math.exp %185 : vector<16x64xf32>
    %cst_110 = arith.constant 1.000000e+00 : f32
    %187 = vector.broadcast %cst_110 : f32 to vector<16x64xf32>
    %188 = arith.addf %187, %186 : vector<16x64xf32>
    %189 = math.log %188 : vector<16x64xf32>
    %190 = arith.select %183, %181, %189 : vector<16x64xi1>, vector<16x64xf32>
    %191 = vector.shape_cast %174 : vector<16x64xf32> to vector<1x16x64xf32>
    %c0_111 = arith.constant 0 : index
    %c0_112 = arith.constant 0 : index
    %c0_113 = arith.constant 0 : index
    %192 = vector.load %arg24[%c0_111, %c0_112, %c0_113] : memref<1x16x64xf32, #tpu.memory_space<vmem>>, vector<1x16x64xf32>
    tpu.vector_store %arg24[%c0_111, %c0_112, %c0_113], %191 {strides = array<i32>} : memref<1x16x64xf32, #tpu.memory_space<vmem>>, vector<1x16x64xf32>,
    %193 = vector.shape_cast %190 : vector<16x64xf32> to vector<1x16x64xf32>
    %c0_114 = arith.constant 0 : index
    %c0_115 = arith.constant 0 : index
    %c0_116 = arith.constant 0 : index
    %194 = vector.load %arg25[%c0_114, %c0_115, %c0_116] : memref<1x16x64xf32, #tpu.memory_space<vmem>>, vector<1x16x64xf32>
    tpu.vector_store %arg25[%c0_114, %c0_115, %c0_116], %193 {strides = array<i32>} : memref<1x16x64xf32, #tpu.memory_space<vmem>>, vector<1x16x64xf32>,
    %195 = vector.extract_strided_slice %177 {offsets = [0, 64], sizes = [16, 16], strides = [1, 1]} : vector<16x80xf32> to vector<16x16xf32>
    %196 = vector.shape_cast %195 : vector<16x16xf32> to vector<1x16x16xf32>
    %c0_117 = arith.constant 0 : index
    %c0_118 = arith.constant 0 : index
    %c0_119 = arith.constant 0 : index
    %197 = vector.load %arg26[%c0_117, %c0_118, %c0_119] : memref<1x16x16xf32, #tpu.memory_space<vmem>>, vector<1x16x16xf32>
    tpu.vector_store %arg26[%c0_117, %c0_118, %c0_119], %196 {strides = array<i32>} : memref<1x16x16xf32, #tpu.memory_space<vmem>>, vector<1x16x16xf32>,
    %c0_120 = arith.constant 0 : index
    %c0_121 = arith.constant 0 : index
    %198 = vector.load %arg15[%c0_120, %c0_121] : memref<8x64xf32, #tpu.memory_space<vmem>>, vector<8x64xf32>
    %199 = vector.shape_cast %198 : vector<8x64xf32> to vector<1x8x64xf32>
    %cst_122 = arith.constant 0.000000e+00 : f32
    %200 = vector.broadcast %cst_122 : f32 to vector<1x8x64xf32>
    %c0_i32_123 = arith.constant 0 : i32
    %c2_i32_124 = arith.constant 2 : i32
    %201 = arith.addi %c0_i32_123, %c2_i32_124 : i32
    %c1_i32_125 = arith.constant 1 : i32
    %202 = scf.for %arg28 = %c0_i32_123 to %201 step %c1_i32_125 iter_args(%arg29 = %200) -> (vector<1x8x64xf32>)  : i32 {
      %c1_i32_155 = arith.constant 1 : i32
      %251 = arith.subi %c1_i32_155, %arg28 : i32
      %c8_i32 = arith.constant 8 : i32
      %252 = arith.muli %251, %c8_i32 : i32
      %253 = tpu.assume_multiple %252, 8 : i32
      %c0_156 = arith.constant 0 : index
      %254 = arith.index_cast %253 : i32 to index
      %c0_157 = arith.constant 0 : index
      %255 = vector.load %arg24[%c0_156, %254, %c0_157] : memref<1x16x64xf32, #tpu.memory_space<vmem>>, vector<1x8x64xf32>
      %c0_158 = arith.constant 0 : index
      %256 = arith.index_cast %253 : i32 to index
      %c0_159 = arith.constant 0 : index
      %257 = vector.load %arg25[%c0_158, %256, %c0_159] : memref<1x16x64xf32, #tpu.memory_space<vmem>>, vector<1x8x64xf32>
      %c0_160 = arith.constant 0 : index
      %258 = arith.index_cast %253 : i32 to index
      %c0_161 = arith.constant 0 : index
      %259 = vector.load %arg26[%c0_160, %258, %c0_161] : memref<1x16x16xf32, #tpu.memory_space<vmem>>, vector<1x8x16xf32>
      %260 = arith.mulf %257, %255 : vector<1x8x64xf32>
      %261 = vector.extract_strided_slice %257 {offsets = [0, 7, 0], sizes = [1, 1, 64], strides = [1, 1, 1]} : vector<1x8x64xf32> to vector<1x1x64xf32>
      %262 = vector.shape_cast %261 : vector<1x1x64xf32> to vector<1x64xf32>
      %263 = vector.shape_cast %262 : vector<1x64xf32> to vector<1x1x64xf32>
      %264 = vector.broadcast %263 : vector<1x1x64xf32> to vector<1x8x64xf32>
      %265 = arith.mulf %264, %199 : vector<1x8x64xf32>
      %266 = math.exp %265 : vector<1x8x64xf32>
      %267 = vector.extract_strided_slice %259 {offsets = [0, 7, 0], sizes = [1, 1, 8], strides = [1, 1, 1]} : vector<1x8x16xf32> to vector<1x1x8xf32>
      %268 = vector.shape_cast %267 : vector<1x1x8xf32> to vector<1x8xf32>
      %269 = vector.shape_cast %268 : vector<1x8xf32> to vector<1x8x1xf32>
      %270 = vector.extract_strided_slice %260 {offsets = [0, 7, 0], sizes = [1, 1, 64], strides = [1, 1, 1]} : vector<1x8x64xf32> to vector<1x1x64xf32>
      %271 = vector.shape_cast %270 : vector<1x1x64xf32> to vector<1x64xf32>
      %272 = vector.shape_cast %271 : vector<1x64xf32> to vector<1x1x64xf32>
      %273 = vector.broadcast %269 : vector<1x8x1xf32> to vector<1x8x64xf32>
      %274 = vector.broadcast %272 : vector<1x1x64xf32> to vector<1x8x64xf32>
      %275 = arith.mulf %273, %274 : vector<1x8x64xf32>
      %276 = arith.mulf %266, %arg29 : vector<1x8x64xf32>
      %277 = arith.addf %276, %275 : vector<1x8x64xf32>
      %278 = vector.extract_strided_slice %259 {offsets = [0, 7, 8], sizes = [1, 1, 8], strides = [1, 1, 1]} : vector<1x8x16xf32> to vector<1x1x8xf32>
      %279 = vector.shape_cast %278 : vector<1x1x8xf32> to vector<1x8xf32>
      %280 = vector.shape_cast %279 : vector<1x8xf32> to vector<1x8x1xf32>
      %281 = vector.broadcast %280 : vector<1x8x1xf32> to vector<1x8x64xf32>
      %282 = arith.mulf %281, %277 : vector<1x8x64xf32>
      %cst_162 = arith.constant dense<0.000000e+00> : vector<1x64xf32>
      %283 = vector.multi_reduction <add>, %282, %cst_162 [1] : vector<1x8x64xf32> to vector<1x64xf32>
      %284 = vector.extract_strided_slice %257 {offsets = [0, 6, 0], sizes = [1, 1, 64], strides = [1, 1, 1]} : vector<1x8x64xf32> to vector<1x1x64xf32>
      %285 = vector.shape_cast %284 : vector<1x1x64xf32> to vector<1x64xf32>
      %286 = vector.shape_cast %285 : vector<1x64xf32> to vector<1x1x64xf32>
      %287 = vector.broadcast %286 : vector<1x1x64xf32> to vector<1x8x64xf32>
      %288 = arith.mulf %287, %199 : vector<1x8x64xf32>
      %289 = math.exp %288 : vector<1x8x64xf32>
      %290 = vector.extract_strided_slice %259 {offsets = [0, 6, 0], sizes = [1, 1, 8], strides = [1, 1, 1]} : vector<1x8x16xf32> to vector<1x1x8xf32>
      %291 = vector.shape_cast %290 : vector<1x1x8xf32> to vector<1x8xf32>
      %292 = vector.shape_cast %291 : vector<1x8xf32> to vector<1x8x1xf32>
      %293 = vector.extract_strided_slice %260 {offsets = [0, 6, 0], sizes = [1, 1, 64], strides = [1, 1, 1]} : vector<1x8x64xf32> to vector<1x1x64xf32>
      %294 = vector.shape_cast %293 : vector<1x1x64xf32> to vector<1x64xf32>
      %295 = vector.shape_cast %294 : vector<1x64xf32> to vector<1x1x64xf32>
      %296 = vector.broadcast %292 : vector<1x8x1xf32> to vector<1x8x64xf32>
      %297 = vector.broadcast %295 : vector<1x1x64xf32> to vector<1x8x64xf32>
      %298 = arith.mulf %296, %297 : vector<1x8x64xf32>
      %299 = arith.mulf %289, %277 : vector<1x8x64xf32>
      %300 = arith.addf %299, %298 : vector<1x8x64xf32>
      %301 = vector.extract_strided_slice %259 {offsets = [0, 6, 8], sizes = [1, 1, 8], strides = [1, 1, 1]} : vector<1x8x16xf32> to vector<1x1x8xf32>
      %302 = vector.shape_cast %301 : vector<1x1x8xf32> to vector<1x8xf32>
      %303 = vector.shape_cast %302 : vector<1x8xf32> to vector<1x8x1xf32>
      %304 = vector.broadcast %303 : vector<1x8x1xf32> to vector<1x8x64xf32>
      %305 = arith.mulf %304, %300 : vector<1x8x64xf32>
      %cst_163 = arith.constant dense<0.000000e+00> : vector<1x64xf32>
      %306 = vector.multi_reduction <add>, %305, %cst_163 [1] : vector<1x8x64xf32> to vector<1x64xf32>
      %307 = vector.extract_strided_slice %257 {offsets = [0, 5, 0], sizes = [1, 1, 64], strides = [1, 1, 1]} : vector<1x8x64xf32> to vector<1x1x64xf32>
      %308 = vector.shape_cast %307 : vector<1x1x64xf32> to vector<1x64xf32>
      %309 = vector.shape_cast %308 : vector<1x64xf32> to vector<1x1x64xf32>
      %310 = vector.broadcast %309 : vector<1x1x64xf32> to vector<1x8x64xf32>
      %311 = arith.mulf %310, %199 : vector<1x8x64xf32>
      %312 = math.exp %311 : vector<1x8x64xf32>
      %313 = vector.extract_strided_slice %259 {offsets = [0, 5, 0], sizes = [1, 1, 8], strides = [1, 1, 1]} : vector<1x8x16xf32> to vector<1x1x8xf32>
      %314 = vector.shape_cast %313 : vector<1x1x8xf32> to vector<1x8xf32>
      %315 = vector.shape_cast %314 : vector<1x8xf32> to vector<1x8x1xf32>
      %316 = vector.extract_strided_slice %260 {offsets = [0, 5, 0], sizes = [1, 1, 64], strides = [1, 1, 1]} : vector<1x8x64xf32> to vector<1x1x64xf32>
      %317 = vector.shape_cast %316 : vector<1x1x64xf32> to vector<1x64xf32>
      %318 = vector.shape_cast %317 : vector<1x64xf32> to vector<1x1x64xf32>
      %319 = vector.broadcast %315 : vector<1x8x1xf32> to vector<1x8x64xf32>
      %320 = vector.broadcast %318 : vector<1x1x64xf32> to vector<1x8x64xf32>
      %321 = arith.mulf %319, %320 : vector<1x8x64xf32>
      %322 = arith.mulf %312, %300 : vector<1x8x64xf32>
      %323 = arith.addf %322, %321 : vector<1x8x64xf32>
      %324 = vector.extract_strided_slice %259 {offsets = [0, 5, 8], sizes = [1, 1, 8], strides = [1, 1, 1]} : vector<1x8x16xf32> to vector<1x1x8xf32>
      %325 = vector.shape_cast %324 : vector<1x1x8xf32> to vector<1x8xf32>
      %326 = vector.shape_cast %325 : vector<1x8xf32> to vector<1x8x1xf32>
      %327 = vector.broadcast %326 : vector<1x8x1xf32> to vector<1x8x64xf32>
      %328 = arith.mulf %327, %323 : vector<1x8x64xf32>
      %cst_164 = arith.constant dense<0.000000e+00> : vector<1x64xf32>
      %329 = vector.multi_reduction <add>, %328, %cst_164 [1] : vector<1x8x64xf32> to vector<1x64xf32>
      %330 = vector.extract_strided_slice %257 {offsets = [0, 4, 0], sizes = [1, 1, 64], strides = [1, 1, 1]} : vector<1x8x64xf32> to vector<1x1x64xf32>
      %331 = vector.shape_cast %330 : vector<1x1x64xf32> to vector<1x64xf32>
      %332 = vector.shape_cast %331 : vector<1x64xf32> to vector<1x1x64xf32>
      %333 = vector.broadcast %332 : vector<1x1x64xf32> to vector<1x8x64xf32>
      %334 = arith.mulf %333, %199 : vector<1x8x64xf32>
      %335 = math.exp %334 : vector<1x8x64xf32>
      %336 = vector.extract_strided_slice %259 {offsets = [0, 4, 0], sizes = [1, 1, 8], strides = [1, 1, 1]} : vector<1x8x16xf32> to vector<1x1x8xf32>
      %337 = vector.shape_cast %336 : vector<1x1x8xf32> to vector<1x8xf32>
      %338 = vector.shape_cast %337 : vector<1x8xf32> to vector<1x8x1xf32>
      %339 = vector.extract_strided_slice %260 {offsets = [0, 4, 0], sizes = [1, 1, 64], strides = [1, 1, 1]} : vector<1x8x64xf32> to vector<1x1x64xf32>
      %340 = vector.shape_cast %339 : vector<1x1x64xf32> to vector<1x64xf32>
      %341 = vector.shape_cast %340 : vector<1x64xf32> to vector<1x1x64xf32>
      %342 = vector.broadcast %338 : vector<1x8x1xf32> to vector<1x8x64xf32>
      %343 = vector.broadcast %341 : vector<1x1x64xf32> to vector<1x8x64xf32>
      %344 = arith.mulf %342, %343 : vector<1x8x64xf32>
      %345 = arith.mulf %335, %323 : vector<1x8x64xf32>
      %346 = arith.addf %345, %344 : vector<1x8x64xf32>
      %347 = vector.extract_strided_slice %259 {offsets = [0, 4, 8], sizes = [1, 1, 8], strides = [1, 1, 1]} : vector<1x8x16xf32> to vector<1x1x8xf32>
      %348 = vector.shape_cast %347 : vector<1x1x8xf32> to vector<1x8xf32>
      %349 = vector.shape_cast %348 : vector<1x8xf32> to vector<1x8x1xf32>
      %350 = vector.broadcast %349 : vector<1x8x1xf32> to vector<1x8x64xf32>
      %351 = arith.mulf %350, %346 : vector<1x8x64xf32>
      %cst_165 = arith.constant dense<0.000000e+00> : vector<1x64xf32>
      %352 = vector.multi_reduction <add>, %351, %cst_165 [1] : vector<1x8x64xf32> to vector<1x64xf32>
      %353 = vector.extract_strided_slice %257 {offsets = [0, 3, 0], sizes = [1, 1, 64], strides = [1, 1, 1]} : vector<1x8x64xf32> to vector<1x1x64xf32>
      %354 = vector.shape_cast %353 : vector<1x1x64xf32> to vector<1x64xf32>
      %355 = vector.shape_cast %354 : vector<1x64xf32> to vector<1x1x64xf32>
      %356 = vector.broadcast %355 : vector<1x1x64xf32> to vector<1x8x64xf32>
      %357 = arith.mulf %356, %199 : vector<1x8x64xf32>
      %358 = math.exp %357 : vector<1x8x64xf32>
      %359 = vector.extract_strided_slice %259 {offsets = [0, 3, 0], sizes = [1, 1, 8], strides = [1, 1, 1]} : vector<1x8x16xf32> to vector<1x1x8xf32>
      %360 = vector.shape_cast %359 : vector<1x1x8xf32> to vector<1x8xf32>
      %361 = vector.shape_cast %360 : vector<1x8xf32> to vector<1x8x1xf32>
      %362 = vector.extract_strided_slice %260 {offsets = [0, 3, 0], sizes = [1, 1, 64], strides = [1, 1, 1]} : vector<1x8x64xf32> to vector<1x1x64xf32>
      %363 = vector.shape_cast %362 : vector<1x1x64xf32> to vector<1x64xf32>
      %364 = vector.shape_cast %363 : vector<1x64xf32> to vector<1x1x64xf32>
      %365 = vector.broadcast %361 : vector<1x8x1xf32> to vector<1x8x64xf32>
      %366 = vector.broadcast %364 : vector<1x1x64xf32> to vector<1x8x64xf32>
      %367 = arith.mulf %365, %366 : vector<1x8x64xf32>
      %368 = arith.mulf %358, %346 : vector<1x8x64xf32>
      %369 = arith.addf %368, %367 : vector<1x8x64xf32>
      %370 = vector.extract_strided_slice %259 {offsets = [0, 3, 8], sizes = [1, 1, 8], strides = [1, 1, 1]} : vector<1x8x16xf32> to vector<1x1x8xf32>
      %371 = vector.shape_cast %370 : vector<1x1x8xf32> to vector<1x8xf32>
      %372 = vector.shape_cast %371 : vector<1x8xf32> to vector<1x8x1xf32>
      %373 = vector.broadcast %372 : vector<1x8x1xf32> to vector<1x8x64xf32>
      %374 = arith.mulf %373, %369 : vector<1x8x64xf32>
      %cst_166 = arith.constant dense<0.000000e+00> : vector<1x64xf32>
      %375 = vector.multi_reduction <add>, %374, %cst_166 [1] : vector<1x8x64xf32> to vector<1x64xf32>
      %376 = vector.extract_strided_slice %257 {offsets = [0, 2, 0], sizes = [1, 1, 64], strides = [1, 1, 1]} : vector<1x8x64xf32> to vector<1x1x64xf32>
      %377 = vector.shape_cast %376 : vector<1x1x64xf32> to vector<1x64xf32>
      %378 = vector.shape_cast %377 : vector<1x64xf32> to vector<1x1x64xf32>
      %379 = vector.broadcast %378 : vector<1x1x64xf32> to vector<1x8x64xf32>
      %380 = arith.mulf %379, %199 : vector<1x8x64xf32>
      %381 = math.exp %380 : vector<1x8x64xf32>
      %382 = vector.extract_strided_slice %259 {offsets = [0, 2, 0], sizes = [1, 1, 8], strides = [1, 1, 1]} : vector<1x8x16xf32> to vector<1x1x8xf32>
      %383 = vector.shape_cast %382 : vector<1x1x8xf32> to vector<1x8xf32>
      %384 = vector.shape_cast %383 : vector<1x8xf32> to vector<1x8x1xf32>
      %385 = vector.extract_strided_slice %260 {offsets = [0, 2, 0], sizes = [1, 1, 64], strides = [1, 1, 1]} : vector<1x8x64xf32> to vector<1x1x64xf32>
      %386 = vector.shape_cast %385 : vector<1x1x64xf32> to vector<1x64xf32>
      %387 = vector.shape_cast %386 : vector<1x64xf32> to vector<1x1x64xf32>
      %388 = vector.broadcast %384 : vector<1x8x1xf32> to vector<1x8x64xf32>
      %389 = vector.broadcast %387 : vector<1x1x64xf32> to vector<1x8x64xf32>
      %390 = arith.mulf %388, %389 : vector<1x8x64xf32>
      %391 = arith.mulf %381, %369 : vector<1x8x64xf32>
      %392 = arith.addf %391, %390 : vector<1x8x64xf32>
      %393 = vector.extract_strided_slice %259 {offsets = [0, 2, 8], sizes = [1, 1, 8], strides = [1, 1, 1]} : vector<1x8x16xf32> to vector<1x1x8xf32>
      %394 = vector.shape_cast %393 : vector<1x1x8xf32> to vector<1x8xf32>
      %395 = vector.shape_cast %394 : vector<1x8xf32> to vector<1x8x1xf32>
      %396 = vector.broadcast %395 : vector<1x8x1xf32> to vector<1x8x64xf32>
      %397 = arith.mulf %396, %392 : vector<1x8x64xf32>
      %cst_167 = arith.constant dense<0.000000e+00> : vector<1x64xf32>
      %398 = vector.multi_reduction <add>, %397, %cst_167 [1] : vector<1x8x64xf32> to vector<1x64xf32>
      %399 = vector.extract_strided_slice %257 {offsets = [0, 1, 0], sizes = [1, 1, 64], strides = [1, 1, 1]} : vector<1x8x64xf32> to vector<1x1x64xf32>
      %400 = vector.shape_cast %399 : vector<1x1x64xf32> to vector<1x64xf32>
      %401 = vector.shape_cast %400 : vector<1x64xf32> to vector<1x1x64xf32>
      %402 = vector.broadcast %401 : vector<1x1x64xf32> to vector<1x8x64xf32>
      %403 = arith.mulf %402, %199 : vector<1x8x64xf32>
      %404 = math.exp %403 : vector<1x8x64xf32>
      %405 = vector.extract_strided_slice %259 {offsets = [0, 1, 0], sizes = [1, 1, 8], strides = [1, 1, 1]} : vector<1x8x16xf32> to vector<1x1x8xf32>
      %406 = vector.shape_cast %405 : vector<1x1x8xf32> to vector<1x8xf32>
      %407 = vector.shape_cast %406 : vector<1x8xf32> to vector<1x8x1xf32>
      %408 = vector.extract_strided_slice %260 {offsets = [0, 1, 0], sizes = [1, 1, 64], strides = [1, 1, 1]} : vector<1x8x64xf32> to vector<1x1x64xf32>
      %409 = vector.shape_cast %408 : vector<1x1x64xf32> to vector<1x64xf32>
      %410 = vector.shape_cast %409 : vector<1x64xf32> to vector<1x1x64xf32>
      %411 = vector.broadcast %407 : vector<1x8x1xf32> to vector<1x8x64xf32>
      %412 = vector.broadcast %410 : vector<1x1x64xf32> to vector<1x8x64xf32>
      %413 = arith.mulf %411, %412 : vector<1x8x64xf32>
      %414 = arith.mulf %404, %392 : vector<1x8x64xf32>
      %415 = arith.addf %414, %413 : vector<1x8x64xf32>
      %416 = vector.extract_strided_slice %259 {offsets = [0, 1, 8], sizes = [1, 1, 8], strides = [1, 1, 1]} : vector<1x8x16xf32> to vector<1x1x8xf32>
      %417 = vector.shape_cast %416 : vector<1x1x8xf32> to vector<1x8xf32>
      %418 = vector.shape_cast %417 : vector<1x8xf32> to vector<1x8x1xf32>
      %419 = vector.broadcast %418 : vector<1x8x1xf32> to vector<1x8x64xf32>
      %420 = arith.mulf %419, %415 : vector<1x8x64xf32>
      %cst_168 = arith.constant dense<0.000000e+00> : vector<1x64xf32>
      %421 = vector.multi_reduction <add>, %420, %cst_168 [1] : vector<1x8x64xf32> to vector<1x64xf32>
      %422 = vector.extract_strided_slice %257 {offsets = [0, 0, 0], sizes = [1, 1, 64], strides = [1, 1, 1]} : vector<1x8x64xf32> to vector<1x1x64xf32>
      %423 = vector.shape_cast %422 : vector<1x1x64xf32> to vector<1x64xf32>
      %424 = vector.shape_cast %423 : vector<1x64xf32> to vector<1x1x64xf32>
      %425 = vector.broadcast %424 : vector<1x1x64xf32> to vector<1x8x64xf32>
      %426 = arith.mulf %425, %199 : vector<1x8x64xf32>
      %427 = math.exp %426 : vector<1x8x64xf32>
      %428 = vector.extract_strided_slice %259 {offsets = [0, 0, 0], sizes = [1, 1, 8], strides = [1, 1, 1]} : vector<1x8x16xf32> to vector<1x1x8xf32>
      %429 = vector.shape_cast %428 : vector<1x1x8xf32> to vector<1x8xf32>
      %430 = vector.shape_cast %429 : vector<1x8xf32> to vector<1x8x1xf32>
      %431 = vector.extract_strided_slice %260 {offsets = [0, 0, 0], sizes = [1, 1, 64], strides = [1, 1, 1]} : vector<1x8x64xf32> to vector<1x1x64xf32>
      %432 = vector.shape_cast %431 : vector<1x1x64xf32> to vector<1x64xf32>
      %433 = vector.shape_cast %432 : vector<1x64xf32> to vector<1x1x64xf32>
      %434 = vector.broadcast %430 : vector<1x8x1xf32> to vector<1x8x64xf32>
      %435 = vector.broadcast %433 : vector<1x1x64xf32> to vector<1x8x64xf32>
      %436 = arith.mulf %434, %435 : vector<1x8x64xf32>
      %437 = arith.mulf %427, %415 : vector<1x8x64xf32>
      %438 = arith.addf %437, %436 : vector<1x8x64xf32>
      %439 = vector.extract_strided_slice %259 {offsets = [0, 0, 8], sizes = [1, 1, 8], strides = [1, 1, 1]} : vector<1x8x16xf32> to vector<1x1x8xf32>
      %440 = vector.shape_cast %439 : vector<1x1x8xf32> to vector<1x8xf32>
      %441 = vector.shape_cast %440 : vector<1x8xf32> to vector<1x8x1xf32>
      %442 = vector.broadcast %441 : vector<1x8x1xf32> to vector<1x8x64xf32>
      %443 = arith.mulf %442, %438 : vector<1x8x64xf32>
      %cst_169 = arith.constant dense<0.000000e+00> : vector<1x64xf32>
      %444 = vector.multi_reduction <add>, %443, %cst_169 [1] : vector<1x8x64xf32> to vector<1x64xf32>
      %445 = vector.shape_cast %444 : vector<1x64xf32> to vector<1x1x64xf32>
      %446 = vector.shape_cast %421 : vector<1x64xf32> to vector<1x1x64xf32>
      %447 = vector.shape_cast %398 : vector<1x64xf32> to vector<1x1x64xf32>
      %448 = vector.shape_cast %375 : vector<1x64xf32> to vector<1x1x64xf32>
      %449 = vector.shape_cast %352 : vector<1x64xf32> to vector<1x1x64xf32>
      %450 = vector.shape_cast %329 : vector<1x64xf32> to vector<1x1x64xf32>
      %451 = vector.shape_cast %306 : vector<1x64xf32> to vector<1x1x64xf32>
      %452 = vector.shape_cast %283 : vector<1x64xf32> to vector<1x1x64xf32>
      %453 = tpu.concatenate %445, %446, %447, %448, %449, %450, %451, %452 in 1 : vector<1x1x64xf32>, vector<1x1x64xf32>, vector<1x1x64xf32>, vector<1x1x64xf32>, vector<1x1x64xf32>, vector<1x1x64xf32>, vector<1x1x64xf32>, vector<1x1x64xf32> -> vector<1x8x64xf32>
      %c0_170 = arith.constant 0 : index
      %454 = arith.index_cast %253 : i32 to index
      %c0_171 = arith.constant 0 : index
      %455 = vector.load %arg27[%c0_170, %454, %c0_171] : memref<1x16x64xf32, #tpu.memory_space<vmem>>, vector<1x8x64xf32>
      tpu.vector_store %arg27[%c0_170, %454, %c0_171], %453 {strides = array<i32>} : memref<1x16x64xf32, #tpu.memory_space<vmem>>, vector<1x8x64xf32>,
      scf.yield %438 : vector<1x8x64xf32>
    }
    %c2_i32_126 = arith.constant 2 : i32
    %c0_127 = arith.constant 0 : index
    %c0_128 = arith.constant 0 : index
    %c0_129 = arith.constant 0 : index
    %203 = vector.load %arg27[%c0_127, %c0_128, %c0_129] : memref<1x16x64xf32, #tpu.memory_space<vmem>>, vector<1x16x64xf32>
    %204 = vector.shape_cast %203 : vector<1x16x64xf32> to vector<16x64xf32>
    %c0_130 = arith.constant 0 : index
    %c0_131 = arith.constant 0 : index
    %c0_132 = arith.constant 0 : index
    %205 = vector.load %arg24[%c0_130, %c0_131, %c0_132] : memref<1x16x64xf32, #tpu.memory_space<vmem>>, vector<1x16x64xf32>
    %206 = vector.shape_cast %205 : vector<1x16x64xf32> to vector<16x64xf32>
    %c0_133 = arith.constant 0 : index
    %c0_134 = arith.constant 0 : index
    %207 = vector.load %arg16[%c0_133, %c0_134] : memref<1x64xf32, #tpu.memory_space<vmem>>, vector<1x64xf32>
    %208 = vector.broadcast %207 : vector<1x64xf32> to vector<16x64xf32>
    %209 = arith.mulf %206, %208 : vector<16x64xf32>
    %210 = arith.addf %204, %209 : vector<16x64xf32>
    %cst_135 = arith.constant 0.000000e+00 : f32
    %211 = vector.broadcast %cst_135 : f32 to vector<16x64xf32>
    %212 = arith.subf %211, %129 : vector<16x64xf32>
    %213 = math.exp %212 : vector<16x64xf32>
    %cst_136 = arith.constant 1.000000e+00 : f32
    %214 = vector.broadcast %cst_136 : f32 to vector<16x64xf32>
    %215 = arith.addf %214, %213 : vector<16x64xf32>
    %216 = tpu.reciprocal %215 {approx = true} : vector<16x64xf32> -> vector<16x64xf32>
    %217 = arith.mulf %129, %216 : vector<16x64xf32>
    %218 = arith.mulf %210, %217 : vector<16x64xf32>
    %219 = arith.truncf %218 : vector<16x64xf32> to vector<16x64xbf16>
    %c0_137 = arith.constant 0 : index
    %c0_138 = arith.constant 0 : index
    %220 = vector.load %arg17[%c0_137, %c0_138] : memref<64x32xbf16, #tpu.memory_space<vmem>>, vector<64x32xbf16>
    %cst_139 = arith.constant dense<0.000000e+00> : vector<16x32xf32>
    %221 = tpu.matmul %219, %220, %cst_139 {dimension_numbers = #tpu.dot_dimension_numbers<[1], [0], [0], [1], [0, 0, 1, 1], [], []>} : vector<16x64xbf16>, vector<64x32xbf16>, vector<16x32xf32> -> vector<16x32xf32>
    %c0_140 = arith.constant 0 : index
    %c0_141 = arith.constant 0 : index
    %c0_142 = arith.constant 0 : index
    %222 = vector.load %arg22[%c0_140, %c0_141, %c0_142] : memref<1x16x32xf32, #tpu.memory_space<vmem>>, vector<1x16x32xf32>
    %223 = arith.addf %221, %1 : vector<16x32xf32>
    %c0_143 = arith.constant 0 : index
    %c0_144 = arith.constant 0 : index
    %224 = vector.load %arg20[%c0_143, %c0_144] : memref<1x32xf32, #tpu.memory_space<vmem>>, vector<1x32xf32>
    %c0_145 = arith.constant 0 : index
    %c0_146 = arith.constant 0 : index
    %225 = vector.load %arg21[%c0_145, %c0_146] : memref<1x32xf32, #tpu.memory_space<vmem>>, vector<1x32xf32>
    %cst_147 = arith.constant dense<0.000000e+00> : vector<16xf32>
    %226 = vector.multi_reduction <add>, %223, %cst_147 [1] : vector<16x32xf32> to vector<16xf32>
    %227 = vector.shape_cast %226 : vector<16xf32> to vector<16x1xf32>
    %cst_148 = arith.constant 3.200000e+01 : f32
    %228 = vector.broadcast %cst_148 : f32 to vector<16x1xf32>
    %229 = arith.divf %227, %228 : vector<16x1xf32>
    %230 = vector.broadcast %229 : vector<16x1xf32> to vector<16x32xf32>
    %231 = arith.subf %223, %230 : vector<16x32xf32>
    %232 = arith.mulf %231, %231 : vector<16x32xf32>
    %cst_149 = arith.constant dense<0.000000e+00> : vector<16xf32>
    %233 = vector.multi_reduction <add>, %232, %cst_149 [1] : vector<16x32xf32> to vector<16xf32>
    %234 = vector.shape_cast %233 : vector<16xf32> to vector<16x1xf32>
    %cst_150 = arith.constant 3.200000e+01 : f32
    %235 = vector.broadcast %cst_150 : f32 to vector<16x1xf32>
    %236 = arith.divf %234, %235 : vector<16x1xf32>
    %237 = vector.broadcast %229 : vector<16x1xf32> to vector<16x32xf32>
    %238 = arith.subf %223, %237 : vector<16x32xf32>
    %cst_151 = arith.constant 9.99999974E-6 : f32
    %239 = vector.broadcast %cst_151 : f32 to vector<16x1xf32>
    %240 = arith.addf %236, %239 : vector<16x1xf32>
    %241 = math.rsqrt %240 : vector<16x1xf32>
    %242 = vector.broadcast %241 : vector<16x1xf32> to vector<16x32xf32>
    %243 = arith.mulf %238, %242 : vector<16x32xf32>
    %244 = vector.broadcast %224 : vector<1x32xf32> to vector<16x32xf32>
    %245 = arith.mulf %243, %244 : vector<16x32xf32>
    %246 = vector.broadcast %225 : vector<1x32xf32> to vector<16x32xf32>
    %247 = arith.addf %245, %246 : vector<16x32xf32>
    %248 = vector.shape_cast %247 : vector<16x32xf32> to vector<1x16x32xf32>
    %249 = arith.addf %222, %248 : vector<1x16x32xf32>
    %c0_152 = arith.constant 0 : index
    %c0_153 = arith.constant 0 : index
    %c0_154 = arith.constant 0 : index
    %250 = vector.load %arg22[%c0_152, %c0_153, %c0_154] : memref<1x16x32xf32, #tpu.memory_space<vmem>>, vector<1x16x32xf32>
    tpu.vector_store %arg22[%c0_152, %c0_153, %c0_154], %249 {strides = array<i32>} : memref<1x16x32xf32, #tpu.memory_space<vmem>>, vector<1x16x32xf32>,
    return
  }
  func.func @transform_0(%arg0: i32) -> (i32, i32, i32) {
    %c0_i32 = arith.constant 0 : i32
    %c0_i32_0 = arith.constant 0 : i32
    %c0_i32_1 = arith.constant 0 : i32
    return %arg0, %c0_i32, %c0_i32_0 : i32, i32, i32
  }
  func.func @transform_1(%arg0: i32) -> (i32, i32) {
    %c0_i32 = arith.constant 0 : i32
    %c0_i32_0 = arith.constant 0 : i32
    %c0_i32_1 = arith.constant 0 : i32
    return %c0_i32, %c0_i32_0 : i32, i32
  }
  func.func @transform_2(%arg0: i32) -> (i32, i32) {
    %c0_i32 = arith.constant 0 : i32
    %c0_i32_0 = arith.constant 0 : i32
    %c0_i32_1 = arith.constant 0 : i32
    return %c0_i32, %c0_i32_0 : i32, i32
  }
  func.func @transform_3(%arg0: i32) -> (i32, i32) {
    %c0_i32 = arith.constant 0 : i32
    %c0_i32_0 = arith.constant 0 : i32
    %c0_i32_1 = arith.constant 0 : i32
    return %c0_i32, %c0_i32_0 : i32, i32
  }
  func.func @transform_4(%arg0: i32) -> (i32, i32) {
    %c0_i32 = arith.constant 0 : i32
    %c0_i32_0 = arith.constant 0 : i32
    %c0_i32_1 = arith.constant 0 : i32
    return %c0_i32, %c0_i32_0 : i32, i32
  }
  func.func @transform_5(%arg0: i32) -> (i32, i32) {
    %c0_i32 = arith.constant 0 : i32
    %c0_i32_0 = arith.constant 0 : i32
    %c0_i32_1 = arith.constant 0 : i32
    return %c0_i32, %c0_i32_0 : i32, i32
  }
  func.func @transform_6(%arg0: i32) -> (i32, i32) {
    %c0_i32 = arith.constant 0 : i32
    %c0_i32_0 = arith.constant 0 : i32
    %c0_i32_1 = arith.constant 0 : i32
    return %c0_i32, %c0_i32_0 : i32, i32
  }
  func.func @transform_7(%arg0: i32) -> (i32, i32) {
    %c0_i32 = arith.constant 0 : i32
    %c0_i32_0 = arith.constant 0 : i32
    %c0_i32_1 = arith.constant 0 : i32
    return %c0_i32, %c0_i32_0 : i32, i32
  }
  func.func @transform_8(%arg0: i32) -> (i32, i32) {
    %c0_i32 = arith.constant 0 : i32
    %c0_i32_0 = arith.constant 0 : i32
    %c0_i32_1 = arith.constant 0 : i32
    return %c0_i32, %c0_i32_0 : i32, i32
  }
  func.func @transform_9(%arg0: i32) -> (i32, i32) {
    %c0_i32 = arith.constant 0 : i32
    %c0_i32_0 = arith.constant 0 : i32
    %c0_i32_1 = arith.constant 0 : i32
    return %c0_i32, %c0_i32_0 : i32, i32
  }
  func.func @transform_10(%arg0: i32) -> (i32, i32) {
    %c0_i32 = arith.constant 0 : i32
    %c0_i32_0 = arith.constant 0 : i32
    %c0_i32_1 = arith.constant 0 : i32
    return %c0_i32, %c0_i32_0 : i32, i32
  }
  func.func @transform_11(%arg0: i32) -> (i32, i32) {
    %c0_i32 = arith.constant 0 : i32
    %c0_i32_0 = arith.constant 0 : i32
    %c0_i32_1 = arith.constant 0 : i32
    return %c0_i32, %c0_i32_0 : i32, i32
  }
  func.func @transform_12(%arg0: i32) -> (i32, i32) {
    %c0_i32 = arith.constant 0 : i32
    %c0_i32_0 = arith.constant 0 : i32
    %c0_i32_1 = arith.constant 0 : i32
    return %c0_i32, %c0_i32_0 : i32, i32
  }
  func.func @transform_13(%arg0: i32) -> (i32, i32) {
    %c0_i32 = arith.constant 0 : i32
    %c0_i32_0 = arith.constant 0 : i32
    %c0_i32_1 = arith.constant 0 : i32
    return %c0_i32, %c0_i32_0 : i32, i32
  }
  func.func @transform_14(%arg0: i32) -> (i32, i32) {
    %c0_i32 = arith.constant 0 : i32
    %c0_i32_0 = arith.constant 0 : i32
    %c0_i32_1 = arith.constant 0 : i32
    return %c0_i32, %c0_i32_0 : i32, i32
  }
  func.func @transform_15(%arg0: i32) -> (i32, i32) {
    %c0_i32 = arith.constant 0 : i32
    %c0_i32_0 = arith.constant 0 : i32
    %c0_i32_1 = arith.constant 0 : i32
    return %c0_i32, %c0_i32_0 : i32, i32
  }
  func.func @transform_16(%arg0: i32) -> (i32, i32) {
    %c0_i32 = arith.constant 0 : i32
    %c0_i32_0 = arith.constant 0 : i32
    %c0_i32_1 = arith.constant 0 : i32
    return %c0_i32, %c0_i32_0 : i32, i32
  }
  func.func @transform_17(%arg0: i32) -> (i32, i32) {
    %c0_i32 = arith.constant 0 : i32
    %c0_i32_0 = arith.constant 0 : i32
    %c0_i32_1 = arith.constant 0 : i32
    return %c0_i32, %c0_i32_0 : i32, i32
  }
  func.func @transform_18(%arg0: i32) -> (i32, i32) {
    %c0_i32 = arith.constant 0 : i32
    %c0_i32_0 = arith.constant 0 : i32
    %c0_i32_1 = arith.constant 0 : i32
    return %c0_i32, %c0_i32_0 : i32, i32
  }
  func.func @transform_19(%arg0: i32) -> (i32, i32) {
    %c0_i32 = arith.constant 0 : i32
    %c0_i32_0 = arith.constant 0 : i32
    %c0_i32_1 = arith.constant 0 : i32
    return %c0_i32, %c0_i32_0 : i32, i32
  }
  func.func @transform_20(%arg0: i32) -> (i32, i32) {
    %c0_i32 = arith.constant 0 : i32
    %c0_i32_0 = arith.constant 0 : i32
    %c0_i32_1 = arith.constant 0 : i32
    return %c0_i32, %c0_i32_0 : i32, i32
  }
  func.func @transform_21(%arg0: i32) -> (i32, i32, i32) {
    %c0_i32 = arith.constant 0 : i32
    %c0_i32_0 = arith.constant 0 : i32
    %c0_i32_1 = arith.constant 0 : i32
    return %arg0, %c0_i32, %c0_i32_0 : i32, i32, i32
  }
}

module attributes {stable_mosaic.version = 11 : i64} {
  func.func @glu_kernel(%arg0: i32, %arg1: memref<1x16x32xf32, #tpu.memory_space<vmem>>, %arg2: memref<32x64xbf16, #tpu.memory_space<vmem>>, %arg3: memref<1x64xf32, #tpu.memory_space<vmem>>, %arg4: memref<32x32xbf16, #tpu.memory_space<vmem>>, %arg5: memref<1x32xf32, #tpu.memory_space<vmem>>, %arg6: memref<1x32xf32, #tpu.memory_space<vmem>>, %arg7: memref<1x32xf32, #tpu.memory_space<vmem>>, %arg8: memref<1x16x32xf32, #tpu.memory_space<vmem>>) attributes {dimension_semantics = [#tpu.dimension_semantics<parallel>], iteration_bounds = array<i64: 2>, scalar_prefetch = 0 : i64, scratch_operands = 0 : i64, tpu.core_type = #tpu.core_type<tc>, window_params = [{transform_indices = @transform_0, window_bounds = array<i64: 1, 16, 32>}, {pipeline_mode = #tpu.pipeline_mode<synchronous>, transform_indices = @transform_1, window_bounds = array<i64: 32, 64>}, {pipeline_mode = #tpu.pipeline_mode<synchronous>, transform_indices = @transform_2, window_bounds = array<i64: 1, 64>}, {pipeline_mode = #tpu.pipeline_mode<synchronous>, transform_indices = @transform_3, window_bounds = array<i64: 32, 32>}, {pipeline_mode = #tpu.pipeline_mode<synchronous>, transform_indices = @transform_4, window_bounds = array<i64: 1, 32>}, {pipeline_mode = #tpu.pipeline_mode<synchronous>, transform_indices = @transform_5, window_bounds = array<i64: 1, 32>}, {pipeline_mode = #tpu.pipeline_mode<synchronous>, transform_indices = @transform_6, window_bounds = array<i64: 1, 32>}, {transform_indices = @transform_7, window_bounds = array<i64: 1, 16, 32>}]} {
    %c0 = arith.constant 0 : index
    %c0_0 = arith.constant 0 : index
    %c0_1 = arith.constant 0 : index
    %0 = vector.load %arg1[%c0, %c0_0, %c0_1] : memref<1x16x32xf32, #tpu.memory_space<vmem>>, vector<1x16x32xf32>
    %1 = vector.shape_cast %0 : vector<1x16x32xf32> to vector<16x32xf32>
    %2 = arith.truncf %1 : vector<16x32xf32> to vector<16x32xbf16>
    %c0_2 = arith.constant 0 : index
    %c0_3 = arith.constant 0 : index
    %3 = vector.load %arg2[%c0_2, %c0_3] : memref<32x64xbf16, #tpu.memory_space<vmem>>, vector<32x64xbf16>
    %cst = arith.constant dense<0.000000e+00> : vector<16x64xf32>
    %4 = tpu.matmul %2, %3, %cst {dimension_numbers = #tpu.dot_dimension_numbers<[1], [0], [0], [1], [0, 0, 1, 1], [], []>} : vector<16x32xbf16>, vector<32x64xbf16>, vector<16x64xf32> -> vector<16x64xf32>
    %c0_4 = arith.constant 0 : index
    %c0_5 = arith.constant 0 : index
    %5 = vector.load %arg3[%c0_4, %c0_5] : memref<1x64xf32, #tpu.memory_space<vmem>>, vector<1x64xf32>
    %6 = vector.broadcast %5 : vector<1x64xf32> to vector<16x64xf32>
    %7 = arith.addf %4, %6 : vector<16x64xf32>
    %8 = vector.extract_strided_slice %7 {offsets = [0, 0], sizes = [16, 32], strides = [1, 1]} : vector<16x64xf32> to vector<16x32xf32>
    %9 = vector.extract_strided_slice %7 {offsets = [0, 32], sizes = [16, 32], strides = [1, 1]} : vector<16x64xf32> to vector<16x32xf32>
    %cst_6 = arith.constant 0.000000e+00 : f32
    %10 = vector.broadcast %cst_6 : f32 to vector<16x32xf32>
    %11 = arith.subf %10, %9 : vector<16x32xf32>
    %12 = math.exp %11 : vector<16x32xf32>
    %cst_7 = arith.constant 1.000000e+00 : f32
    %13 = vector.broadcast %cst_7 : f32 to vector<16x32xf32>
    %14 = arith.addf %13, %12 : vector<16x32xf32>
    %15 = tpu.reciprocal %14 {approx = true} : vector<16x32xf32> -> vector<16x32xf32>
    %16 = arith.mulf %8, %15 : vector<16x32xf32>
    %17 = arith.truncf %16 : vector<16x32xf32> to vector<16x32xbf16>
    %c0_8 = arith.constant 0 : index
    %c0_9 = arith.constant 0 : index
    %18 = vector.load %arg4[%c0_8, %c0_9] : memref<32x32xbf16, #tpu.memory_space<vmem>>, vector<32x32xbf16>
    %cst_10 = arith.constant dense<0.000000e+00> : vector<16x32xf32>
    %19 = tpu.matmul %17, %18, %cst_10 {dimension_numbers = #tpu.dot_dimension_numbers<[1], [0], [0], [1], [0, 0, 1, 1], [], []>} : vector<16x32xbf16>, vector<32x32xbf16>, vector<16x32xf32> -> vector<16x32xf32>
    %c0_11 = arith.constant 0 : index
    %c0_12 = arith.constant 0 : index
    %20 = vector.load %arg5[%c0_11, %c0_12] : memref<1x32xf32, #tpu.memory_space<vmem>>, vector<1x32xf32>
    %21 = vector.broadcast %20 : vector<1x32xf32> to vector<16x32xf32>
    %22 = arith.addf %19, %21 : vector<16x32xf32>
    %23 = arith.addf %22, %1 : vector<16x32xf32>
    %c0_13 = arith.constant 0 : index
    %c0_14 = arith.constant 0 : index
    %24 = vector.load %arg6[%c0_13, %c0_14] : memref<1x32xf32, #tpu.memory_space<vmem>>, vector<1x32xf32>
    %c0_15 = arith.constant 0 : index
    %c0_16 = arith.constant 0 : index
    %25 = vector.load %arg7[%c0_15, %c0_16] : memref<1x32xf32, #tpu.memory_space<vmem>>, vector<1x32xf32>
    %cst_17 = arith.constant dense<0.000000e+00> : vector<16xf32>
    %26 = vector.multi_reduction <add>, %23, %cst_17 [1] : vector<16x32xf32> to vector<16xf32>
    %27 = vector.shape_cast %26 : vector<16xf32> to vector<16x1xf32>
    %cst_18 = arith.constant 3.200000e+01 : f32
    %28 = vector.broadcast %cst_18 : f32 to vector<16x1xf32>
    %29 = arith.divf %27, %28 : vector<16x1xf32>
    %30 = vector.broadcast %29 : vector<16x1xf32> to vector<16x32xf32>
    %31 = arith.subf %23, %30 : vector<16x32xf32>
    %32 = arith.mulf %31, %31 : vector<16x32xf32>
    %cst_19 = arith.constant dense<0.000000e+00> : vector<16xf32>
    %33 = vector.multi_reduction <add>, %32, %cst_19 [1] : vector<16x32xf32> to vector<16xf32>
    %34 = vector.shape_cast %33 : vector<16xf32> to vector<16x1xf32>
    %cst_20 = arith.constant 3.200000e+01 : f32
    %35 = vector.broadcast %cst_20 : f32 to vector<16x1xf32>
    %36 = arith.divf %34, %35 : vector<16x1xf32>
    %37 = vector.broadcast %29 : vector<16x1xf32> to vector<16x32xf32>
    %38 = arith.subf %23, %37 : vector<16x32xf32>
    %cst_21 = arith.constant 9.99999996E-13 : f32
    %39 = vector.broadcast %cst_21 : f32 to vector<16x1xf32>
    %40 = arith.addf %36, %39 : vector<16x1xf32>
    %41 = math.rsqrt %40 : vector<16x1xf32>
    %42 = vector.broadcast %41 : vector<16x1xf32> to vector<16x32xf32>
    %43 = arith.mulf %38, %42 : vector<16x32xf32>
    %44 = vector.broadcast %24 : vector<1x32xf32> to vector<16x32xf32>
    %45 = arith.mulf %43, %44 : vector<16x32xf32>
    %46 = vector.broadcast %25 : vector<1x32xf32> to vector<16x32xf32>
    %47 = arith.addf %45, %46 : vector<16x32xf32>
    %48 = vector.shape_cast %47 : vector<16x32xf32> to vector<1x16x32xf32>
    %c0_22 = arith.constant 0 : index
    %c0_23 = arith.constant 0 : index
    %c0_24 = arith.constant 0 : index
    %49 = vector.load %arg8[%c0_22, %c0_23, %c0_24] : memref<1x16x32xf32, #tpu.memory_space<vmem>>, vector<1x16x32xf32>
    tpu.vector_store %arg8[%c0_22, %c0_23, %c0_24], %48 {strides = array<i32>} : memref<1x16x32xf32, #tpu.memory_space<vmem>>, vector<1x16x32xf32>,
    return
  }
  func.func @transform_0(%arg0: i32) -> (i32, i32, i32) {
    %c0_i32 = arith.constant 0 : i32
    %c0_i32_0 = arith.constant 0 : i32
    %c0_i32_1 = arith.constant 0 : i32
    return %arg0, %c0_i32, %c0_i32_0 : i32, i32, i32
  }
  func.func @transform_1(%arg0: i32) -> (i32, i32) {
    %c0_i32 = arith.constant 0 : i32
    %c0_i32_0 = arith.constant 0 : i32
    %c0_i32_1 = arith.constant 0 : i32
    return %c0_i32, %c0_i32_0 : i32, i32
  }
  func.func @transform_2(%arg0: i32) -> (i32, i32) {
    %c0_i32 = arith.constant 0 : i32
    %c0_i32_0 = arith.constant 0 : i32
    %c0_i32_1 = arith.constant 0 : i32
    return %c0_i32, %c0_i32_0 : i32, i32
  }
  func.func @transform_3(%arg0: i32) -> (i32, i32) {
    %c0_i32 = arith.constant 0 : i32
    %c0_i32_0 = arith.constant 0 : i32
    %c0_i32_1 = arith.constant 0 : i32
    return %c0_i32, %c0_i32_0 : i32, i32
  }
  func.func @transform_4(%arg0: i32) -> (i32, i32) {
    %c0_i32 = arith.constant 0 : i32
    %c0_i32_0 = arith.constant 0 : i32
    %c0_i32_1 = arith.constant 0 : i32
    return %c0_i32, %c0_i32_0 : i32, i32
  }
  func.func @transform_5(%arg0: i32) -> (i32, i32) {
    %c0_i32 = arith.constant 0 : i32
    %c0_i32_0 = arith.constant 0 : i32
    %c0_i32_1 = arith.constant 0 : i32
    return %c0_i32, %c0_i32_0 : i32, i32
  }
  func.func @transform_6(%arg0: i32) -> (i32, i32) {
    %c0_i32 = arith.constant 0 : i32
    %c0_i32_0 = arith.constant 0 : i32
    %c0_i32_1 = arith.constant 0 : i32
    return %c0_i32, %c0_i32_0 : i32, i32
  }
  func.func @transform_7(%arg0: i32) -> (i32, i32, i32) {
    %c0_i32 = arith.constant 0 : i32
    %c0_i32_0 = arith.constant 0 : i32
    %c0_i32_1 = arith.constant 0 : i32
    return %arg0, %c0_i32, %c0_i32_0 : i32, i32, i32
  }
}

module attributes {stable_mosaic.version = 11 : i64} {
  func.func @bimamba_layer_kernel(%arg0: i32, %arg1: memref<1x16x32xf32, #tpu.memory_space<vmem>>, %arg2: memref<32x128xbf16, #tpu.memory_space<vmem>>, %arg3: memref<4x64xf32, #tpu.memory_space<vmem>>, %arg4: memref<1x64xf32, #tpu.memory_space<vmem>>, %arg5: memref<64x80xbf16, #tpu.memory_space<vmem>>, %arg6: memref<1x64xf32, #tpu.memory_space<vmem>>, %arg7: memref<8x64xf32, #tpu.memory_space<vmem>>, %arg8: memref<1x64xf32, #tpu.memory_space<vmem>>, %arg9: memref<64x32xbf16, #tpu.memory_space<vmem>>, %arg10: memref<32x128xbf16, #tpu.memory_space<vmem>>, %arg11: memref<4x64xf32, #tpu.memory_space<vmem>>, %arg12: memref<1x64xf32, #tpu.memory_space<vmem>>, %arg13: memref<64x80xbf16, #tpu.memory_space<vmem>>, %arg14: memref<1x64xf32, #tpu.memory_space<vmem>>, %arg15: memref<8x64xf32, #tpu.memory_space<vmem>>, %arg16: memref<1x64xf32, #tpu.memory_space<vmem>>, %arg17: memref<64x32xbf16, #tpu.memory_space<vmem>>, %arg18: memref<1x32xf32, #tpu.memory_space<vmem>>, %arg19: memref<1x32xf32, #tpu.memory_space<vmem>>, %arg20: memref<1x32xf32, #tpu.memory_space<vmem>>, %arg21: memref<1x32xf32, #tpu.memory_space<vmem>>, %arg22: memref<1x16x32xf32, #tpu.memory_space<vmem>>, %arg23: memref<1x32x64xf32, #tpu.memory_space<vmem>>, %arg24: memref<1x16x64xf32, #tpu.memory_space<vmem>>, %arg25: memref<1x16x64xf32, #tpu.memory_space<vmem>>, %arg26: memref<1x16x16xf32, #tpu.memory_space<vmem>>, %arg27: memref<1x16x64xf32, #tpu.memory_space<vmem>>) attributes {dimension_semantics = [#tpu.dimension_semantics<parallel>], iteration_bounds = array<i64: 2>, scalar_prefetch = 0 : i64, scratch_operands = 5 : i64, tpu.core_type = #tpu.core_type<tc>, window_params = [{transform_indices = @transform_0, window_bounds = array<i64: 1, 16, 32>}, {pipeline_mode = #tpu.pipeline_mode<synchronous>, transform_indices = @transform_1, window_bounds = array<i64: 32, 128>}, {pipeline_mode = #tpu.pipeline_mode<synchronous>, transform_indices = @transform_2, window_bounds = array<i64: 4, 64>}, {pipeline_mode = #tpu.pipeline_mode<synchronous>, transform_indices = @transform_3, window_bounds = array<i64: 1, 64>}, {pipeline_mode = #tpu.pipeline_mode<synchronous>, transform_indices = @transform_4, window_bounds = array<i64: 64, 80>}, {pipeline_mode = #tpu.pipeline_mode<synchronous>, transform_indices = @transform_5, window_bounds = array<i64: 1, 64>}, {pipeline_mode = #tpu.pipeline_mode<synchronous>, transform_indices = @transform_6, window_bounds = array<i64: 8, 64>}, {pipeline_mode = #tpu.pipeline_mode<synchronous>, transform_indices = @transform_7, window_bounds = array<i64: 1, 64>}, {pipeline_mode = #tpu.pipeline_mode<synchronous>, transform_indices = @transform_8, window_bounds = array<i64: 64, 32>}, {pipeline_mode = #tpu.pipeline_mode<synchronous>, transform_indices = @transform_9, window_bounds = array<i64: 32, 128>}, {pipeline_mode = #tpu.pipeline_mode<synchronous>, transform_indices = @transform_10, window_bounds = array<i64: 4, 64>}, {pipeline_mode = #tpu.pipeline_mode<synchronous>, transform_indices = @transform_11, window_bounds = array<i64: 1, 64>}, {pipeline_mode = #tpu.pipeline_mode<synchronous>, transform_indices = @transform_12, window_bounds = array<i64: 64, 80>}, {pipeline_mode = #tpu.pipeline_mode<synchronous>, transform_indices = @transform_13, window_bounds = array<i64: 1, 64>}, {pipeline_mode = #tpu.pipeline_mode<synchronous>, transform_indices = @transform_14, window_bounds = array<i64: 8, 64>}, {pipeline_mode = #tpu.pipeline_mode<synchronous>, transform_indices = @transform_15, window_bounds = array<i64: 1, 64>}, {pipeline_mode = #tpu.pipeline_mode<synchronous>, transform_indices = @transform_16, window_bounds = array<i64: 64, 32>}, {pipeline_mode = #tpu.pipeline_mode<synchronous>, transform_indices = @transform_17, window_bounds = array<i64: 1, 32>}, {pipeline_mode = #tpu.pipeline_mode<synchronous>, transform_indices = @transform_18, window_bounds = array<i64: 1, 32>}, {pipeline_mode = #tpu.pipeline_mode<synchronous>, transform_indices = @transform_19, window_bounds = array<i64: 1, 32>}, {pipeline_mode = #tpu.pipeline_mode<synchronous>, transform_indices = @transform_20, window_bounds = array<i64: 1, 32>}, {transform_indices = @transform_21, window_bounds = array<i64: 1, 16, 32>}]} {
    %c0 = arith.constant 0 : index
    %c0_0 = arith.constant 0 : index
    %c0_1 = arith.constant 0 : index
    %0 = vector.load %arg1[%c0, %c0_0, %c0_1] : memref<1x16x32xf32, #tpu.memory_space<vmem>>, vector<1x16x32xf32>
    %1 = vector.shape_cast %0 : vector<1x16x32xf32> to vector<16x32xf32>
    %2 = arith.truncf %1 : vector<16x32xf32> to vector<16x32xbf16>
    %c0_2 = arith.constant 0 : index
    %c0_3 = arith.constant 0 : index
    %3 = vector.load %arg2[%c0_2, %c0_3] : memref<32x128xbf16, #tpu.memory_space<vmem>>, vector<32x128xbf16>
    %cst = arith.constant dense<0.000000e+00> : vector<16x128xf32>
    %4 = tpu.matmul %2, %3, %cst {dimension_numbers = #tpu.dot_dimension_numbers<[1], [0], [0], [1], [0, 0, 1, 1], [], []>} : vector<16x32xbf16>, vector<32x128xbf16>, vector<16x128xf32> -> vector<16x128xf32>
    %5 = vector.extract_strided_slice %4 {offsets = [0, 0], sizes = [16, 64], strides = [1, 1]} : vector<16x128xf32> to vector<16x64xf32>
    %6 = vector.extract_strided_slice %4 {offsets = [0, 64], sizes = [16, 64], strides = [1, 1]} : vector<16x128xf32> to vector<16x64xf32>
    %cst_4 = arith.constant 0.000000e+00 : f32
    %7 = vector.broadcast %cst_4 : f32 to vector<1x8x64xf32>
    %c0_5 = arith.constant 0 : index
    %c0_6 = arith.constant 0 : index
    %c0_7 = arith.constant 0 : index
    %8 = vector.load %arg23[%c0_5, %c0_6, %c0_7] : memref<1x32x64xf32, #tpu.memory_space<vmem>>, vector<1x8x64xf32>
    tpu.vector_store %arg23[%c0_5, %c0_6, %c0_7], %7 {strides = array<i32>} : memref<1x32x64xf32, #tpu.memory_space<vmem>>, vector<1x8x64xf32>,
    %cst_8 = arith.constant 0.000000e+00 : f32
    %9 = vector.broadcast %cst_8 : f32 to vector<1x8x64xf32>
    %c0_9 = arith.constant 0 : index
    %c24 = arith.constant 24 : index
    %c0_10 = arith.constant 0 : index
    %10 = vector.load %arg23[%c0_9, %c24, %c0_10] : memref<1x32x64xf32, #tpu.memory_space<vmem>>, vector<1x8x64xf32>
    tpu.vector_store %arg23[%c0_9, %c24, %c0_10], %9 {strides = array<i32>} : memref<1x32x64xf32, #tpu.memory_space<vmem>>, vector<1x8x64xf32>,
    %11 = vector.shape_cast %5 : vector<16x64xf32> to vector<1x16x64xf32>
    %c0_11 = arith.constant 0 : index
    %c8 = arith.constant 8 : index
    %c0_12 = arith.constant 0 : index
    %12 = vector.load %arg23[%c0_11, %c8, %c0_12] : memref<1x32x64xf32, #tpu.memory_space<vmem>>, vector<1x16x64xf32>
    tpu.vector_store %arg23[%c0_11, %c8, %c0_12], %11 {strides = array<i32>} : memref<1x32x64xf32, #tpu.memory_space<vmem>>, vector<1x16x64xf32>,
    %c0_13 = arith.constant 0 : index
    %c0_14 = arith.constant 0 : index
    %13 = vector.load %arg3[%c0_13, %c0_14] : memref<4x64xf32, #tpu.memory_space<vmem>>, vector<4x64xf32>
    %c0_15 = arith.constant 0 : index
    %c5 = arith.constant 5 : index
    %c0_16 = arith.constant 0 : index
    %14 = vector.load %arg23[%c0_15, %c5, %c0_16] : memref<1x32x64xf32, #tpu.memory_space<vmem>>, vector<1x16x64xf32>
    %15 = vector.extract_strided_slice %13 {offsets = [0, 0], sizes = [1, 64], strides = [1, 1]} : vector<4x64xf32> to vector<1x64xf32>
    %16 = vector.shape_cast %15 : vector<1x64xf32> to vector<64xf32>
    %17 = vector.shape_cast %16 : vector<64xf32> to vector<1x1x64xf32>
    %18 = vector.broadcast %17 : vector<1x1x64xf32> to vector<1x16x64xf32>
    %19 = arith.mulf %14, %18 : vector<1x16x64xf32>
    %c0_17 = arith.constant 0 : index
    %c6 = arith.constant 6 : index
    %c0_18 = arith.constant 0 : index
    %20 = vector.load %arg23[%c0_17, %c6, %c0_18] : memref<1x32x64xf32, #tpu.memory_space<vmem>>, vector<1x16x64xf32>
    %21 = vector.extract_strided_slice %13 {offsets = [1, 0], sizes = [1, 64], strides = [1, 1]} : vector<4x64xf32> to vector<1x64xf32>
    %22 = vector.shape_cast %21 : vector<1x64xf32> to vector<64xf32>
    %23 = vector.shape_cast %22 : vector<64xf32> to vector<1x1x64xf32>
    %24 = vector.broadcast %23 : vector<1x1x64xf32> to vector<1x16x64xf32>
    %25 = arith.mulf %20, %24 : vector<1x16x64xf32>
    %26 = arith.addf %19, %25 : vector<1x16x64xf32>
    %c0_19 = arith.constant 0 : index
    %c7 = arith.constant 7 : index
    %c0_20 = arith.constant 0 : index
    %27 = vector.load %arg23[%c0_19, %c7, %c0_20] : memref<1x32x64xf32, #tpu.memory_space<vmem>>, vector<1x16x64xf32>
    %28 = vector.extract_strided_slice %13 {offsets = [2, 0], sizes = [1, 64], strides = [1, 1]} : vector<4x64xf32> to vector<1x64xf32>
    %29 = vector.shape_cast %28 : vector<1x64xf32> to vector<64xf32>
    %30 = vector.shape_cast %29 : vector<64xf32> to vector<1x1x64xf32>
    %31 = vector.broadcast %30 : vector<1x1x64xf32> to vector<1x16x64xf32>
    %32 = arith.mulf %27, %31 : vector<1x16x64xf32>
    %33 = arith.addf %26, %32 : vector<1x16x64xf32>
    %c0_21 = arith.constant 0 : index
    %c8_22 = arith.constant 8 : index
    %c0_23 = arith.constant 0 : index
    %34 = vector.load %arg23[%c0_21, %c8_22, %c0_23] : memref<1x32x64xf32, #tpu.memory_space<vmem>>, vector<1x16x64xf32>
    %35 = vector.extract_strided_slice %13 {offsets = [3, 0], sizes = [1, 64], strides = [1, 1]} : vector<4x64xf32> to vector<1x64xf32>
    %36 = vector.shape_cast %35 : vector<1x64xf32> to vector<64xf32>
    %37 = vector.shape_cast %36 : vector<64xf32> to vector<1x1x64xf32>
    %38 = vector.broadcast %37 : vector<1x1x64xf32> to vector<1x16x64xf32>
    %39 = arith.mulf %34, %38 : vector<1x16x64xf32>
    %40 = arith.addf %33, %39 : vector<1x16x64xf32>
    %41 = vector.shape_cast %40 : vector<1x16x64xf32> to vector<16x64xf32>
    %c0_24 = arith.constant 0 : index
    %c0_25 = arith.constant 0 : index
    %42 = vector.load %arg4[%c0_24, %c0_25] : memref<1x64xf32, #tpu.memory_space<vmem>>, vector<1x64xf32>
    %43 = vector.broadcast %42 : vector<1x64xf32> to vector<16x64xf32>
    %44 = arith.addf %41, %43 : vector<16x64xf32>
    %cst_26 = arith.constant 0.000000e+00 : f32
    %45 = vector.broadcast %cst_26 : f32 to vector<16x64xf32>
    %46 = arith.subf %45, %44 : vector<16x64xf32>
    %47 = math.exp %46 : vector<16x64xf32>
    %cst_27 = arith.constant 1.000000e+00 : f32
    %48 = vector.broadcast %cst_27 : f32 to vector<16x64xf32>
    %49 = arith.addf %48, %47 : vector<16x64xf32>
    %50 = tpu.reciprocal %49 {approx = true} : vector<16x64xf32> -> vector<16x64xf32>
    %51 = arith.mulf %44, %50 : vector<16x64xf32>
    %52 = arith.truncf %51 : vector<16x64xf32> to vector<16x64xbf16>
    %c0_28 = arith.constant 0 : index
    %c0_29 = arith.constant 0 : index
    %53 = vector.load %arg5[%c0_28, %c0_29] : memref<64x80xbf16, #tpu.memory_space<vmem>>, vector<64x80xbf16>
    %cst_30 = arith.constant dense<0.000000e+00> : vector<16x80xf32>
    %54 = tpu.matmul %52, %53, %cst_30 {dimension_numbers = #tpu.dot_dimension_numbers<[1], [0], [0], [1], [0, 0, 1, 1], [], []>} : vector<16x64xbf16>, vector<64x80xbf16>, vector<16x80xf32> -> vector<16x80xf32>
    %55 = vector.extract_strided_slice %54 {offsets = [0, 0], sizes = [16, 64], strides = [1, 1]} : vector<16x80xf32> to vector<16x64xf32>
    %c0_31 = arith.constant 0 : index
    %c0_32 = arith.constant 0 : index
    %56 = vector.load %arg6[%c0_31, %c0_32] : memref<1x64xf32, #tpu.memory_space<vmem>>, vector<1x64xf32>
    %57 = vector.broadcast %56 : vector<1x64xf32> to vector<16x64xf32>
    %58 = arith.addf %55, %57 : vector<16x64xf32>
    %cst_33 = arith.constant 2.000000e+01 : f32
    %59 = vector.broadcast %cst_33 : f32 to vector<16x64xf32>
    %60 = arith.cmpf ogt, %58, %59 : vector<16x64xf32>
    %cst_34 = arith.constant 2.000000e+01 : f32
    %61 = vector.broadcast %cst_34 : f32 to vector<16x64xf32>
    %62 = arith.minimumf %58, %61 : vector<16x64xf32>
    %63 = math.exp %62 : vector<16x64xf32>
    %cst_35 = arith.constant 1.000000e+00 : f32
    %64 = vector.broadcast %cst_35 : f32 to vector<16x64xf32>
    %65 = arith.addf %64, %63 : vector<16x64xf32>
    %66 = math.log %65 : vector<16x64xf32>
    %67 = arith.select %60, %58, %66 : vector<16x64xi1>, vector<16x64xf32>
    %68 = vector.shape_cast %51 : vector<16x64xf32> to vector<1x16x64xf32>
    %c0_36 = arith.constant 0 : index
    %c0_37 = arith.constant 0 : index
    %c0_38 = arith.constant 0 : index
    %69 = vector.load %arg24[%c0_36, %c0_37, %c0_38] : memref<1x16x64xf32, #tpu.memory_space<vmem>>, vector<1x16x64xf32>
    tpu.vector_store %arg24[%c0_36, %c0_37, %c0_38], %68 {strides = array<i32>} : memref<1x16x64xf32, #tpu.memory_space<vmem>>, vector<1x16x64xf32>,
    %70 = vector.shape_cast %67 : vector<16x64xf32> to vector<1x16x64xf32>
    %c0_39 = arith.constant 0 : index
    %c0_40 = arith.constant 0 : index
    %c0_41 = arith.constant 0 : index
    %71 = vector.load %arg25[%c0_39, %c0_40, %c0_41] : memref<1x16x64xf32, #tpu.memory_space<vmem>>, vector<1x16x64xf32>
    tpu.vector_store %arg25[%c0_39, %c0_40, %c0_41], %70 {strides = array<i32>} : memref<1x16x64xf32, #tpu.memory_space<vmem>>, vector<1x16x64xf32>,
    %72 = vector.extract_strided_slice %54 {offsets = [0, 64], sizes = [16, 16], strides = [1, 1]} : vector<16x80xf32> to vector<16x16xf32>
    %73 = vector.shape_cast %72 : vector<16x16xf32> to vector<1x16x16xf32>
    %c0_42 = arith.constant 0 : index
    %c0_43 = arith.constant 0 : index
    %c0_44 = arith.constant 0 : index
    %74 = vector.load %arg26[%c0_42, %c0_43, %c0_44] : memref<1x16x16xf32, #tpu.memory_space<vmem>>, vector<1x16x16xf32>
    tpu.vector_store %arg26[%c0_42, %c0_43, %c0_44], %73 {strides = array<i32>} : memref<1x16x16xf32, #tpu.memory_space<vmem>>, vector<1x16x16xf32>,
    %c0_45 = arith.constant 0 : index
    %c0_46 = arith.constant 0 : index
    %75 = vector.load %arg7[%c0_45, %c0_46] : memref<8x64xf32, #tpu.memory_space<vmem>>, vector<8x64xf32>
    %76 = vector.shape_cast %75 : vector<8x64xf32> to vector<1x8x64xf32>
    %cst_47 = arith.constant 0.000000e+00 : f32
    %77 = vector.broadcast %cst_47 : f32 to vector<1x8x64xf32>
    %c0_i32 = arith.constant 0 : i32
    %c2_i32 = arith.constant 2 : i32
    %78 = arith.addi %c0_i32, %c2_i32 : i32
    %c1_i32 = arith.constant 1 : i32
    %79 = scf.for %arg28 = %c0_i32 to %78 step %c1_i32 iter_args(%arg29 = %77) -> (vector<1x8x64xf32>)  : i32 {
      %c8_i32 = arith.constant 8 : i32
      %251 = arith.muli %arg28, %c8_i32 : i32
      %252 = tpu.assume_multiple %251, 8 : i32
      %c0_155 = arith.constant 0 : index
      %253 = arith.index_cast %252 : i32 to index
      %c0_156 = arith.constant 0 : index
      %254 = vector.load %arg24[%c0_155, %253, %c0_156] : memref<1x16x64xf32, #tpu.memory_space<vmem>>, vector<1x8x64xf32>
      %c0_157 = arith.constant 0 : index
      %255 = arith.index_cast %252 : i32 to index
      %c0_158 = arith.constant 0 : index
      %256 = vector.load %arg25[%c0_157, %255, %c0_158] : memref<1x16x64xf32, #tpu.memory_space<vmem>>, vector<1x8x64xf32>
      %c0_159 = arith.constant 0 : index
      %257 = arith.index_cast %252 : i32 to index
      %c0_160 = arith.constant 0 : index
      %258 = vector.load %arg26[%c0_159, %257, %c0_160] : memref<1x16x16xf32, #tpu.memory_space<vmem>>, vector<1x8x16xf32>
      %259 = arith.mulf %256, %254 : vector<1x8x64xf32>
      %260 = vector.extract_strided_slice %256 {offsets = [0, 0, 0], sizes = [1, 1, 64], strides = [1, 1, 1]} : vector<1x8x64xf32> to vector<1x1x64xf32>
      %261 = vector.shape_cast %260 : vector<1x1x64xf32> to vector<1x64xf32>
      %262 = vector.shape_cast %261 : vector<1x64xf32> to vector<1x1x64xf32>
      %263 = vector.broadcast %262 : vector<1x1x64xf32> to vector<1x8x64xf32>
      %264 = arith.mulf %263, %76 : vector<1x8x64xf32>
      %265 = math.exp %264 : vector<1x8x64xf32>
      %266 = vector.extract_strided_slice %258 {offsets = [0, 0, 0], sizes = [1, 1, 8], strides = [1, 1, 1]} : vector<1x8x16xf32> to vector<1x1x8xf32>
      %267 = vector.shape_cast %266 : vector<1x1x8xf32> to vector<1x8xf32>
      %268 = vector.shape_cast %267 : vector<1x8xf32> to vector<1x8x1xf32>
      %269 = vector.extract_strided_slice %259 {offsets = [0, 0, 0], sizes = [1, 1, 64], strides = [1, 1, 1]} : vector<1x8x64xf32> to vector<1x1x64xf32>
      %270 = vector.shape_cast %269 : vector<1x1x64xf32> to vector<1x64xf32>
      %271 = vector.shape_cast %270 : vector<1x64xf32> to vector<1x1x64xf32>
      %272 = vector.broadcast %268 : vector<1x8x1xf32> to vector<1x8x64xf32>
      %273 = vector.broadcast %271 : vector<1x1x64xf32> to vector<1x8x64xf32>
      %274 = arith.mulf %272, %273 : vector<1x8x64xf32>
      %275 = arith.mulf %265, %arg29 : vector<1x8x64xf32>
      %276 = arith.addf %275, %274 : vector<1x8x64xf32>
      %277 = vector.extract_strided_slice %258 {offsets = [0, 0, 8], sizes = [1, 1, 8], strides = [1, 1, 1]} : vector<1x8x16xf32> to vector<1x1x8xf32>
      %278 = vector.shape_cast %277 : vector<1x1x8xf32> to vector<1x8xf32>
      %279 = vector.shape_cast %278 : vector<1x8xf32> to vector<1x8x1xf32>
      %280 = vector.broadcast %279 : vector<1x8x1xf32> to vector<1x8x64xf32>
      %281 = arith.mulf %280, %276 : vector<1x8x64xf32>
      %cst_161 = arith.constant dense<0.000000e+00> : vector<1x64xf32>
      %282 = vector.multi_reduction <add>, %281, %cst_161 [1] : vector<1x8x64xf32> to vector<1x64xf32>
      %283 = vector.extract_strided_slice %256 {offsets = [0, 1, 0], sizes = [1, 1, 64], strides = [1, 1, 1]} : vector<1x8x64xf32> to vector<1x1x64xf32>
      %284 = vector.shape_cast %283 : vector<1x1x64xf32> to vector<1x64xf32>
      %285 = vector.shape_cast %284 : vector<1x64xf32> to vector<1x1x64xf32>
      %286 = vector.broadcast %285 : vector<1x1x64xf32> to vector<1x8x64xf32>
      %287 = arith.mulf %286, %76 : vector<1x8x64xf32>
      %288 = math.exp %287 : vector<1x8x64xf32>
      %289 = vector.extract_strided_slice %258 {offsets = [0, 1, 0], sizes = [1, 1, 8], strides = [1, 1, 1]} : vector<1x8x16xf32> to vector<1x1x8xf32>
      %290 = vector.shape_cast %289 : vector<1x1x8xf32> to vector<1x8xf32>
      %291 = vector.shape_cast %290 : vector<1x8xf32> to vector<1x8x1xf32>
      %292 = vector.extract_strided_slice %259 {offsets = [0, 1, 0], sizes = [1, 1, 64], strides = [1, 1, 1]} : vector<1x8x64xf32> to vector<1x1x64xf32>
      %293 = vector.shape_cast %292 : vector<1x1x64xf32> to vector<1x64xf32>
      %294 = vector.shape_cast %293 : vector<1x64xf32> to vector<1x1x64xf32>
      %295 = vector.broadcast %291 : vector<1x8x1xf32> to vector<1x8x64xf32>
      %296 = vector.broadcast %294 : vector<1x1x64xf32> to vector<1x8x64xf32>
      %297 = arith.mulf %295, %296 : vector<1x8x64xf32>
      %298 = arith.mulf %288, %276 : vector<1x8x64xf32>
      %299 = arith.addf %298, %297 : vector<1x8x64xf32>
      %300 = vector.extract_strided_slice %258 {offsets = [0, 1, 8], sizes = [1, 1, 8], strides = [1, 1, 1]} : vector<1x8x16xf32> to vector<1x1x8xf32>
      %301 = vector.shape_cast %300 : vector<1x1x8xf32> to vector<1x8xf32>
      %302 = vector.shape_cast %301 : vector<1x8xf32> to vector<1x8x1xf32>
      %303 = vector.broadcast %302 : vector<1x8x1xf32> to vector<1x8x64xf32>
      %304 = arith.mulf %303, %299 : vector<1x8x64xf32>
      %cst_162 = arith.constant dense<0.000000e+00> : vector<1x64xf32>
      %305 = vector.multi_reduction <add>, %304, %cst_162 [1] : vector<1x8x64xf32> to vector<1x64xf32>
      %306 = vector.extract_strided_slice %256 {offsets = [0, 2, 0], sizes = [1, 1, 64], strides = [1, 1, 1]} : vector<1x8x64xf32> to vector<1x1x64xf32>
      %307 = vector.shape_cast %306 : vector<1x1x64xf32> to vector<1x64xf32>
      %308 = vector.shape_cast %307 : vector<1x64xf32> to vector<1x1x64xf32>
      %309 = vector.broadcast %308 : vector<1x1x64xf32> to vector<1x8x64xf32>
      %310 = arith.mulf %309, %76 : vector<1x8x64xf32>
      %311 = math.exp %310 : vector<1x8x64xf32>
      %312 = vector.extract_strided_slice %258 {offsets = [0, 2, 0], sizes = [1, 1, 8], strides = [1, 1, 1]} : vector<1x8x16xf32> to vector<1x1x8xf32>
      %313 = vector.shape_cast %312 : vector<1x1x8xf32> to vector<1x8xf32>
      %314 = vector.shape_cast %313 : vector<1x8xf32> to vector<1x8x1xf32>
      %315 = vector.extract_strided_slice %259 {offsets = [0, 2, 0], sizes = [1, 1, 64], strides = [1, 1, 1]} : vector<1x8x64xf32> to vector<1x1x64xf32>
      %316 = vector.shape_cast %315 : vector<1x1x64xf32> to vector<1x64xf32>
      %317 = vector.shape_cast %316 : vector<1x64xf32> to vector<1x1x64xf32>
      %318 = vector.broadcast %314 : vector<1x8x1xf32> to vector<1x8x64xf32>
      %319 = vector.broadcast %317 : vector<1x1x64xf32> to vector<1x8x64xf32>
      %320 = arith.mulf %318, %319 : vector<1x8x64xf32>
      %321 = arith.mulf %311, %299 : vector<1x8x64xf32>
      %322 = arith.addf %321, %320 : vector<1x8x64xf32>
      %323 = vector.extract_strided_slice %258 {offsets = [0, 2, 8], sizes = [1, 1, 8], strides = [1, 1, 1]} : vector<1x8x16xf32> to vector<1x1x8xf32>
      %324 = vector.shape_cast %323 : vector<1x1x8xf32> to vector<1x8xf32>
      %325 = vector.shape_cast %324 : vector<1x8xf32> to vector<1x8x1xf32>
      %326 = vector.broadcast %325 : vector<1x8x1xf32> to vector<1x8x64xf32>
      %327 = arith.mulf %326, %322 : vector<1x8x64xf32>
      %cst_163 = arith.constant dense<0.000000e+00> : vector<1x64xf32>
      %328 = vector.multi_reduction <add>, %327, %cst_163 [1] : vector<1x8x64xf32> to vector<1x64xf32>
      %329 = vector.extract_strided_slice %256 {offsets = [0, 3, 0], sizes = [1, 1, 64], strides = [1, 1, 1]} : vector<1x8x64xf32> to vector<1x1x64xf32>
      %330 = vector.shape_cast %329 : vector<1x1x64xf32> to vector<1x64xf32>
      %331 = vector.shape_cast %330 : vector<1x64xf32> to vector<1x1x64xf32>
      %332 = vector.broadcast %331 : vector<1x1x64xf32> to vector<1x8x64xf32>
      %333 = arith.mulf %332, %76 : vector<1x8x64xf32>
      %334 = math.exp %333 : vector<1x8x64xf32>
      %335 = vector.extract_strided_slice %258 {offsets = [0, 3, 0], sizes = [1, 1, 8], strides = [1, 1, 1]} : vector<1x8x16xf32> to vector<1x1x8xf32>
      %336 = vector.shape_cast %335 : vector<1x1x8xf32> to vector<1x8xf32>
      %337 = vector.shape_cast %336 : vector<1x8xf32> to vector<1x8x1xf32>
      %338 = vector.extract_strided_slice %259 {offsets = [0, 3, 0], sizes = [1, 1, 64], strides = [1, 1, 1]} : vector<1x8x64xf32> to vector<1x1x64xf32>
      %339 = vector.shape_cast %338 : vector<1x1x64xf32> to vector<1x64xf32>
      %340 = vector.shape_cast %339 : vector<1x64xf32> to vector<1x1x64xf32>
      %341 = vector.broadcast %337 : vector<1x8x1xf32> to vector<1x8x64xf32>
      %342 = vector.broadcast %340 : vector<1x1x64xf32> to vector<1x8x64xf32>
      %343 = arith.mulf %341, %342 : vector<1x8x64xf32>
      %344 = arith.mulf %334, %322 : vector<1x8x64xf32>
      %345 = arith.addf %344, %343 : vector<1x8x64xf32>
      %346 = vector.extract_strided_slice %258 {offsets = [0, 3, 8], sizes = [1, 1, 8], strides = [1, 1, 1]} : vector<1x8x16xf32> to vector<1x1x8xf32>
      %347 = vector.shape_cast %346 : vector<1x1x8xf32> to vector<1x8xf32>
      %348 = vector.shape_cast %347 : vector<1x8xf32> to vector<1x8x1xf32>
      %349 = vector.broadcast %348 : vector<1x8x1xf32> to vector<1x8x64xf32>
      %350 = arith.mulf %349, %345 : vector<1x8x64xf32>
      %cst_164 = arith.constant dense<0.000000e+00> : vector<1x64xf32>
      %351 = vector.multi_reduction <add>, %350, %cst_164 [1] : vector<1x8x64xf32> to vector<1x64xf32>
      %352 = vector.extract_strided_slice %256 {offsets = [0, 4, 0], sizes = [1, 1, 64], strides = [1, 1, 1]} : vector<1x8x64xf32> to vector<1x1x64xf32>
      %353 = vector.shape_cast %352 : vector<1x1x64xf32> to vector<1x64xf32>
      %354 = vector.shape_cast %353 : vector<1x64xf32> to vector<1x1x64xf32>
      %355 = vector.broadcast %354 : vector<1x1x64xf32> to vector<1x8x64xf32>
      %356 = arith.mulf %355, %76 : vector<1x8x64xf32>
      %357 = math.exp %356 : vector<1x8x64xf32>
      %358 = vector.extract_strided_slice %258 {offsets = [0, 4, 0], sizes = [1, 1, 8], strides = [1, 1, 1]} : vector<1x8x16xf32> to vector<1x1x8xf32>
      %359 = vector.shape_cast %358 : vector<1x1x8xf32> to vector<1x8xf32>
      %360 = vector.shape_cast %359 : vector<1x8xf32> to vector<1x8x1xf32>
      %361 = vector.extract_strided_slice %259 {offsets = [0, 4, 0], sizes = [1, 1, 64], strides = [1, 1, 1]} : vector<1x8x64xf32> to vector<1x1x64xf32>
      %362 = vector.shape_cast %361 : vector<1x1x64xf32> to vector<1x64xf32>
      %363 = vector.shape_cast %362 : vector<1x64xf32> to vector<1x1x64xf32>
      %364 = vector.broadcast %360 : vector<1x8x1xf32> to vector<1x8x64xf32>
      %365 = vector.broadcast %363 : vector<1x1x64xf32> to vector<1x8x64xf32>
      %366 = arith.mulf %364, %365 : vector<1x8x64xf32>
      %367 = arith.mulf %357, %345 : vector<1x8x64xf32>
      %368 = arith.addf %367, %366 : vector<1x8x64xf32>
      %369 = vector.extract_strided_slice %258 {offsets = [0, 4, 8], sizes = [1, 1, 8], strides = [1, 1, 1]} : vector<1x8x16xf32> to vector<1x1x8xf32>
      %370 = vector.shape_cast %369 : vector<1x1x8xf32> to vector<1x8xf32>
      %371 = vector.shape_cast %370 : vector<1x8xf32> to vector<1x8x1xf32>
      %372 = vector.broadcast %371 : vector<1x8x1xf32> to vector<1x8x64xf32>
      %373 = arith.mulf %372, %368 : vector<1x8x64xf32>
      %cst_165 = arith.constant dense<0.000000e+00> : vector<1x64xf32>
      %374 = vector.multi_reduction <add>, %373, %cst_165 [1] : vector<1x8x64xf32> to vector<1x64xf32>
      %375 = vector.extract_strided_slice %256 {offsets = [0, 5, 0], sizes = [1, 1, 64], strides = [1, 1, 1]} : vector<1x8x64xf32> to vector<1x1x64xf32>
      %376 = vector.shape_cast %375 : vector<1x1x64xf32> to vector<1x64xf32>
      %377 = vector.shape_cast %376 : vector<1x64xf32> to vector<1x1x64xf32>
      %378 = vector.broadcast %377 : vector<1x1x64xf32> to vector<1x8x64xf32>
      %379 = arith.mulf %378, %76 : vector<1x8x64xf32>
      %380 = math.exp %379 : vector<1x8x64xf32>
      %381 = vector.extract_strided_slice %258 {offsets = [0, 5, 0], sizes = [1, 1, 8], strides = [1, 1, 1]} : vector<1x8x16xf32> to vector<1x1x8xf32>
      %382 = vector.shape_cast %381 : vector<1x1x8xf32> to vector<1x8xf32>
      %383 = vector.shape_cast %382 : vector<1x8xf32> to vector<1x8x1xf32>
      %384 = vector.extract_strided_slice %259 {offsets = [0, 5, 0], sizes = [1, 1, 64], strides = [1, 1, 1]} : vector<1x8x64xf32> to vector<1x1x64xf32>
      %385 = vector.shape_cast %384 : vector<1x1x64xf32> to vector<1x64xf32>
      %386 = vector.shape_cast %385 : vector<1x64xf32> to vector<1x1x64xf32>
      %387 = vector.broadcast %383 : vector<1x8x1xf32> to vector<1x8x64xf32>
      %388 = vector.broadcast %386 : vector<1x1x64xf32> to vector<1x8x64xf32>
      %389 = arith.mulf %387, %388 : vector<1x8x64xf32>
      %390 = arith.mulf %380, %368 : vector<1x8x64xf32>
      %391 = arith.addf %390, %389 : vector<1x8x64xf32>
      %392 = vector.extract_strided_slice %258 {offsets = [0, 5, 8], sizes = [1, 1, 8], strides = [1, 1, 1]} : vector<1x8x16xf32> to vector<1x1x8xf32>
      %393 = vector.shape_cast %392 : vector<1x1x8xf32> to vector<1x8xf32>
      %394 = vector.shape_cast %393 : vector<1x8xf32> to vector<1x8x1xf32>
      %395 = vector.broadcast %394 : vector<1x8x1xf32> to vector<1x8x64xf32>
      %396 = arith.mulf %395, %391 : vector<1x8x64xf32>
      %cst_166 = arith.constant dense<0.000000e+00> : vector<1x64xf32>
      %397 = vector.multi_reduction <add>, %396, %cst_166 [1] : vector<1x8x64xf32> to vector<1x64xf32>
      %398 = vector.extract_strided_slice %256 {offsets = [0, 6, 0], sizes = [1, 1, 64], strides = [1, 1, 1]} : vector<1x8x64xf32> to vector<1x1x64xf32>
      %399 = vector.shape_cast %398 : vector<1x1x64xf32> to vector<1x64xf32>
      %400 = vector.shape_cast %399 : vector<1x64xf32> to vector<1x1x64xf32>
      %401 = vector.broadcast %400 : vector<1x1x64xf32> to vector<1x8x64xf32>
      %402 = arith.mulf %401, %76 : vector<1x8x64xf32>
      %403 = math.exp %402 : vector<1x8x64xf32>
      %404 = vector.extract_strided_slice %258 {offsets = [0, 6, 0], sizes = [1, 1, 8], strides = [1, 1, 1]} : vector<1x8x16xf32> to vector<1x1x8xf32>
      %405 = vector.shape_cast %404 : vector<1x1x8xf32> to vector<1x8xf32>
      %406 = vector.shape_cast %405 : vector<1x8xf32> to vector<1x8x1xf32>
      %407 = vector.extract_strided_slice %259 {offsets = [0, 6, 0], sizes = [1, 1, 64], strides = [1, 1, 1]} : vector<1x8x64xf32> to vector<1x1x64xf32>
      %408 = vector.shape_cast %407 : vector<1x1x64xf32> to vector<1x64xf32>
      %409 = vector.shape_cast %408 : vector<1x64xf32> to vector<1x1x64xf32>
      %410 = vector.broadcast %406 : vector<1x8x1xf32> to vector<1x8x64xf32>
      %411 = vector.broadcast %409 : vector<1x1x64xf32> to vector<1x8x64xf32>
      %412 = arith.mulf %410, %411 : vector<1x8x64xf32>
      %413 = arith.mulf %403, %391 : vector<1x8x64xf32>
      %414 = arith.addf %413, %412 : vector<1x8x64xf32>
      %415 = vector.extract_strided_slice %258 {offsets = [0, 6, 8], sizes = [1, 1, 8], strides = [1, 1, 1]} : vector<1x8x16xf32> to vector<1x1x8xf32>
      %416 = vector.shape_cast %415 : vector<1x1x8xf32> to vector<1x8xf32>
      %417 = vector.shape_cast %416 : vector<1x8xf32> to vector<1x8x1xf32>
      %418 = vector.broadcast %417 : vector<1x8x1xf32> to vector<1x8x64xf32>
      %419 = arith.mulf %418, %414 : vector<1x8x64xf32>
      %cst_167 = arith.constant dense<0.000000e+00> : vector<1x64xf32>
      %420 = vector.multi_reduction <add>, %419, %cst_167 [1] : vector<1x8x64xf32> to vector<1x64xf32>
      %421 = vector.extract_strided_slice %256 {offsets = [0, 7, 0], sizes = [1, 1, 64], strides = [1, 1, 1]} : vector<1x8x64xf32> to vector<1x1x64xf32>
      %422 = vector.shape_cast %421 : vector<1x1x64xf32> to vector<1x64xf32>
      %423 = vector.shape_cast %422 : vector<1x64xf32> to vector<1x1x64xf32>
      %424 = vector.broadcast %423 : vector<1x1x64xf32> to vector<1x8x64xf32>
      %425 = arith.mulf %424, %76 : vector<1x8x64xf32>
      %426 = math.exp %425 : vector<1x8x64xf32>
      %427 = vector.extract_strided_slice %258 {offsets = [0, 7, 0], sizes = [1, 1, 8], strides = [1, 1, 1]} : vector<1x8x16xf32> to vector<1x1x8xf32>
      %428 = vector.shape_cast %427 : vector<1x1x8xf32> to vector<1x8xf32>
      %429 = vector.shape_cast %428 : vector<1x8xf32> to vector<1x8x1xf32>
      %430 = vector.extract_strided_slice %259 {offsets = [0, 7, 0], sizes = [1, 1, 64], strides = [1, 1, 1]} : vector<1x8x64xf32> to vector<1x1x64xf32>
      %431 = vector.shape_cast %430 : vector<1x1x64xf32> to vector<1x64xf32>
      %432 = vector.shape_cast %431 : vector<1x64xf32> to vector<1x1x64xf32>
      %433 = vector.broadcast %429 : vector<1x8x1xf32> to vector<1x8x64xf32>
      %434 = vector.broadcast %432 : vector<1x1x64xf32> to vector<1x8x64xf32>
      %435 = arith.mulf %433, %434 : vector<1x8x64xf32>
      %436 = arith.mulf %426, %414 : vector<1x8x64xf32>
      %437 = arith.addf %436, %435 : vector<1x8x64xf32>
      %438 = vector.extract_strided_slice %258 {offsets = [0, 7, 8], sizes = [1, 1, 8], strides = [1, 1, 1]} : vector<1x8x16xf32> to vector<1x1x8xf32>
      %439 = vector.shape_cast %438 : vector<1x1x8xf32> to vector<1x8xf32>
      %440 = vector.shape_cast %439 : vector<1x8xf32> to vector<1x8x1xf32>
      %441 = vector.broadcast %440 : vector<1x8x1xf32> to vector<1x8x64xf32>
      %442 = arith.mulf %441, %437 : vector<1x8x64xf32>
      %cst_168 = arith.constant dense<0.000000e+00> : vector<1x64xf32>
      %443 = vector.multi_reduction <add>, %442, %cst_168 [1] : vector<1x8x64xf32> to vector<1x64xf32>
      %444 = vector.shape_cast %282 : vector<1x64xf32> to vector<1x1x64xf32>
      %445 = vector.shape_cast %305 : vector<1x64xf32> to vector<1x1x64xf32>
      %446 = vector.shape_cast %328 : vector<1x64xf32> to vector<1x1x64xf32>
      %447 = vector.shape_cast %351 : vector<1x64xf32> to vector<1x1x64xf32>
      %448 = vector.shape_cast %374 : vector<1x64xf32> to vector<1x1x64xf32>
      %449 = vector.shape_cast %397 : vector<1x64xf32> to vector<1x1x64xf32>
      %450 = vector.shape_cast %420 : vector<1x64xf32> to vector<1x1x64xf32>
      %451 = vector.shape_cast %443 : vector<1x64xf32> to vector<1x1x64xf32>
      %452 = tpu.concatenate %444, %445, %446, %447, %448, %449, %450, %451 in 1 : vector<1x1x64xf32>, vector<1x1x64xf32>, vector<1x1x64xf32>, vector<1x1x64xf32>, vector<1x1x64xf32>, vector<1x1x64xf32>, vector<1x1x64xf32>, vector<1x1x64xf32> -> vector<1x8x64xf32>
      %c0_169 = arith.constant 0 : index
      %453 = arith.index_cast %252 : i32 to index
      %c0_170 = arith.constant 0 : index
      %454 = vector.load %arg27[%c0_169, %453, %c0_170] : memref<1x16x64xf32, #tpu.memory_space<vmem>>, vector<1x8x64xf32>
      tpu.vector_store %arg27[%c0_169, %453, %c0_170], %452 {strides = array<i32>} : memref<1x16x64xf32, #tpu.memory_space<vmem>>, vector<1x8x64xf32>,
      scf.yield %437 : vector<1x8x64xf32>
    }
    %c2_i32_48 = arith.constant 2 : i32
    %c0_49 = arith.constant 0 : index
    %c0_50 = arith.constant 0 : index
    %c0_51 = arith.constant 0 : index
    %80 = vector.load %arg27[%c0_49, %c0_50, %c0_51] : memref<1x16x64xf32, #tpu.memory_space<vmem>>, vector<1x16x64xf32>
    %81 = vector.shape_cast %80 : vector<1x16x64xf32> to vector<16x64xf32>
    %c0_52 = arith.constant 0 : index
    %c0_53 = arith.constant 0 : index
    %c0_54 = arith.constant 0 : index
    %82 = vector.load %arg24[%c0_52, %c0_53, %c0_54] : memref<1x16x64xf32, #tpu.memory_space<vmem>>, vector<1x16x64xf32>
    %83 = vector.shape_cast %82 : vector<1x16x64xf32> to vector<16x64xf32>
    %c0_55 = arith.constant 0 : index
    %c0_56 = arith.constant 0 : index
    %84 = vector.load %arg8[%c0_55, %c0_56] : memref<1x64xf32, #tpu.memory_space<vmem>>, vector<1x64xf32>
    %85 = vector.broadcast %84 : vector<1x64xf32> to vector<16x64xf32>
    %86 = arith.mulf %83, %85 : vector<16x64xf32>
    %87 = arith.addf %81, %86 : vector<16x64xf32>
    %cst_57 = arith.constant 0.000000e+00 : f32
    %88 = vector.broadcast %cst_57 : f32 to vector<16x64xf32>
    %89 = arith.subf %88, %6 : vector<16x64xf32>
    %90 = math.exp %89 : vector<16x64xf32>
    %cst_58 = arith.constant 1.000000e+00 : f32
    %91 = vector.broadcast %cst_58 : f32 to vector<16x64xf32>
    %92 = arith.addf %91, %90 : vector<16x64xf32>
    %93 = tpu.reciprocal %92 {approx = true} : vector<16x64xf32> -> vector<16x64xf32>
    %94 = arith.mulf %6, %93 : vector<16x64xf32>
    %95 = arith.mulf %87, %94 : vector<16x64xf32>
    %96 = arith.truncf %95 : vector<16x64xf32> to vector<16x64xbf16>
    %c0_59 = arith.constant 0 : index
    %c0_60 = arith.constant 0 : index
    %97 = vector.load %arg9[%c0_59, %c0_60] : memref<64x32xbf16, #tpu.memory_space<vmem>>, vector<64x32xbf16>
    %cst_61 = arith.constant dense<0.000000e+00> : vector<16x32xf32>
    %98 = tpu.matmul %96, %97, %cst_61 {dimension_numbers = #tpu.dot_dimension_numbers<[1], [0], [0], [1], [0, 0, 1, 1], [], []>} : vector<16x64xbf16>, vector<64x32xbf16>, vector<16x32xf32> -> vector<16x32xf32>
    %99 = arith.addf %98, %1 : vector<16x32xf32>
    %c0_62 = arith.constant 0 : index
    %c0_63 = arith.constant 0 : index
    %100 = vector.load %arg18[%c0_62, %c0_63] : memref<1x32xf32, #tpu.memory_space<vmem>>, vector<1x32xf32>
    %c0_64 = arith.constant 0 : index
    %c0_65 = arith.constant 0 : index
    %101 = vector.load %arg19[%c0_64, %c0_65] : memref<1x32xf32, #tpu.memory_space<vmem>>, vector<1x32xf32>
    %cst_66 = arith.constant dense<0.000000e+00> : vector<16xf32>
    %102 = vector.multi_reduction <add>, %99, %cst_66 [1] : vector<16x32xf32> to vector<16xf32>
    %103 = vector.shape_cast %102 : vector<16xf32> to vector<16x1xf32>
    %cst_67 = arith.constant 3.200000e+01 : f32
    %104 = vector.broadcast %cst_67 : f32 to vector<16x1xf32>
    %105 = arith.divf %103, %104 : vector<16x1xf32>
    %106 = vector.broadcast %105 : vector<16x1xf32> to vector<16x32xf32>
    %107 = arith.subf %99, %106 : vector<16x32xf32>
    %108 = arith.mulf %107, %107 : vector<16x32xf32>
    %cst_68 = arith.constant dense<0.000000e+00> : vector<16xf32>
    %109 = vector.multi_reduction <add>, %108, %cst_68 [1] : vector<16x32xf32> to vector<16xf32>
    %110 = vector.shape_cast %109 : vector<16xf32> to vector<16x1xf32>
    %cst_69 = arith.constant 3.200000e+01 : f32
    %111 = vector.broadcast %cst_69 : f32 to vector<16x1xf32>
    %112 = arith.divf %110, %111 : vector<16x1xf32>
    %113 = vector.broadcast %105 : vector<16x1xf32> to vector<16x32xf32>
    %114 = arith.subf %99, %113 : vector<16x32xf32>
    %cst_70 = arith.constant 9.99999974E-6 : f32
    %115 = vector.broadcast %cst_70 : f32 to vector<16x1xf32>
    %116 = arith.addf %112, %115 : vector<16x1xf32>
    %117 = math.rsqrt %116 : vector<16x1xf32>
    %118 = vector.broadcast %117 : vector<16x1xf32> to vector<16x32xf32>
    %119 = arith.mulf %114, %118 : vector<16x32xf32>
    %120 = vector.broadcast %100 : vector<1x32xf32> to vector<16x32xf32>
    %121 = arith.mulf %119, %120 : vector<16x32xf32>
    %122 = vector.broadcast %101 : vector<1x32xf32> to vector<16x32xf32>
    %123 = arith.addf %121, %122 : vector<16x32xf32>
    %124 = vector.shape_cast %123 : vector<16x32xf32> to vector<1x16x32xf32>
    %c0_71 = arith.constant 0 : index
    %c0_72 = arith.constant 0 : index
    %c0_73 = arith.constant 0 : index
    %125 = vector.load %arg22[%c0_71, %c0_72, %c0_73] : memref<1x16x32xf32, #tpu.memory_space<vmem>>, vector<1x16x32xf32>
    tpu.vector_store %arg22[%c0_71, %c0_72, %c0_73], %124 {strides = array<i32>} : memref<1x16x32xf32, #tpu.memory_space<vmem>>, vector<1x16x32xf32>,
    %c0_74 = arith.constant 0 : index
    %c0_75 = arith.constant 0 : index
    %126 = vector.load %arg10[%c0_74, %c0_75] : memref<32x128xbf16, #tpu.memory_space<vmem>>, vector<32x128xbf16>
    %cst_76 = arith.constant dense<0.000000e+00> : vector<16x128xf32>
    %127 = tpu.matmul %2, %126, %cst_76 {dimension_numbers = #tpu.dot_dimension_numbers<[1], [0], [0], [1], [0, 0, 1, 1], [], []>} : vector<16x32xbf16>, vector<32x128xbf16>, vector<16x128xf32> -> vector<16x128xf32>
    %128 = vector.extract_strided_slice %127 {offsets = [0, 0], sizes = [16, 64], strides = [1, 1]} : vector<16x128xf32> to vector<16x64xf32>
    %129 = vector.extract_strided_slice %127 {offsets = [0, 64], sizes = [16, 64], strides = [1, 1]} : vector<16x128xf32> to vector<16x64xf32>
    %cst_77 = arith.constant 0.000000e+00 : f32
    %130 = vector.broadcast %cst_77 : f32 to vector<1x8x64xf32>
    %c0_78 = arith.constant 0 : index
    %c0_79 = arith.constant 0 : index
    %c0_80 = arith.constant 0 : index
    %131 = vector.load %arg23[%c0_78, %c0_79, %c0_80] : memref<1x32x64xf32, #tpu.memory_space<vmem>>, vector<1x8x64xf32>
    tpu.vector_store %arg23[%c0_78, %c0_79, %c0_80], %130 {strides = array<i32>} : memref<1x32x64xf32, #tpu.memory_space<vmem>>, vector<1x8x64xf32>,
    %cst_81 = arith.constant 0.000000e+00 : f32
    %132 = vector.broadcast %cst_81 : f32 to vector<1x8x64xf32>
    %c0_82 = arith.constant 0 : index
    %c24_83 = arith.constant 24 : index
    %c0_84 = arith.constant 0 : index
    %133 = vector.load %arg23[%c0_82, %c24_83, %c0_84] : memref<1x32x64xf32, #tpu.memory_space<vmem>>, vector<1x8x64xf32>
    tpu.vector_store %arg23[%c0_82, %c24_83, %c0_84], %132 {strides = array<i32>} : memref<1x32x64xf32, #tpu.memory_space<vmem>>, vector<1x8x64xf32>,
    %134 = vector.shape_cast %128 : vector<16x64xf32> to vector<1x16x64xf32>
    %c0_85 = arith.constant 0 : index
    %c8_86 = arith.constant 8 : index
    %c0_87 = arith.constant 0 : index
    %135 = vector.load %arg23[%c0_85, %c8_86, %c0_87] : memref<1x32x64xf32, #tpu.memory_space<vmem>>, vector<1x16x64xf32>
    tpu.vector_store %arg23[%c0_85, %c8_86, %c0_87], %134 {strides = array<i32>} : memref<1x32x64xf32, #tpu.memory_space<vmem>>, vector<1x16x64xf32>,
    %c0_88 = arith.constant 0 : index
    %c0_89 = arith.constant 0 : index
    %136 = vector.load %arg11[%c0_88, %c0_89] : memref<4x64xf32, #tpu.memory_space<vmem>>, vector<4x64xf32>
    %c0_90 = arith.constant 0 : index
    %c11 = arith.constant 11 : index
    %c0_91 = arith.constant 0 : index
    %137 = vector.load %arg23[%c0_90, %c11, %c0_91] : memref<1x32x64xf32, #tpu.memory_space<vmem>>, vector<1x16x64xf32>
    %138 = vector.extract_strided_slice %136 {offsets = [0, 0], sizes = [1, 64], strides = [1, 1]} : vector<4x64xf32> to vector<1x64xf32>
    %139 = vector.shape_cast %138 : vector<1x64xf32> to vector<64xf32>
    %140 = vector.shape_cast %139 : vector<64xf32> to vector<1x1x64xf32>
    %141 = vector.broadcast %140 : vector<1x1x64xf32> to vector<1x16x64xf32>
    %142 = arith.mulf %137, %141 : vector<1x16x64xf32>
    %c0_92 = arith.constant 0 : index
    %c10 = arith.constant 10 : index
    %c0_93 = arith.constant 0 : index
    %143 = vector.load %arg23[%c0_92, %c10, %c0_93] : memref<1x32x64xf32, #tpu.memory_space<vmem>>, vector<1x16x64xf32>
    %144 = vector.extract_strided_slice %136 {offsets = [1, 0], sizes = [1, 64], strides = [1, 1]} : vector<4x64xf32> to vector<1x64xf32>
    %145 = vector.shape_cast %144 : vector<1x64xf32> to vector<64xf32>
    %146 = vector.shape_cast %145 : vector<64xf32> to vector<1x1x64xf32>
    %147 = vector.broadcast %146 : vector<1x1x64xf32> to vector<1x16x64xf32>
    %148 = arith.mulf %143, %147 : vector<1x16x64xf32>
    %149 = arith.addf %142, %148 : vector<1x16x64xf32>
    %c0_94 = arith.constant 0 : index
    %c9 = arith.constant 9 : index
    %c0_95 = arith.constant 0 : index
    %150 = vector.load %arg23[%c0_94, %c9, %c0_95] : memref<1x32x64xf32, #tpu.memory_space<vmem>>, vector<1x16x64xf32>
    %151 = vector.extract_strided_slice %136 {offsets = [2, 0], sizes = [1, 64], strides = [1, 1]} : vector<4x64xf32> to vector<1x64xf32>
    %152 = vector.shape_cast %151 : vector<1x64xf32> to vector<64xf32>
    %153 = vector.shape_cast %152 : vector<64xf32> to vector<1x1x64xf32>
    %154 = vector.broadcast %153 : vector<1x1x64xf32> to vector<1x16x64xf32>
    %155 = arith.mulf %150, %154 : vector<1x16x64xf32>
    %156 = arith.addf %149, %155 : vector<1x16x64xf32>
    %c0_96 = arith.constant 0 : index
    %c8_97 = arith.constant 8 : index
    %c0_98 = arith.constant 0 : index
    %157 = vector.load %arg23[%c0_96, %c8_97, %c0_98] : memref<1x32x64xf32, #tpu.memory_space<vmem>>, vector<1x16x64xf32>
    %158 = vector.extract_strided_slice %136 {offsets = [3, 0], sizes = [1, 64], strides = [1, 1]} : vector<4x64xf32> to vector<1x64xf32>
    %159 = vector.shape_cast %158 : vector<1x64xf32> to vector<64xf32>
    %160 = vector.shape_cast %159 : vector<64xf32> to vector<1x1x64xf32>
    %161 = vector.broadcast %160 : vector<1x1x64xf32> to vector<1x16x64xf32>
    %162 = arith.mulf %157, %161 : vector<1x16x64xf32>
    %163 = arith.addf %156, %162 : vector<1x16x64xf32>
    %164 = vector.shape_cast %163 : vector<1x16x64xf32> to vector<16x64xf32>
    %c0_99 = arith.constant 0 : index
    %c0_100 = arith.constant 0 : index
    %165 = vector.load %arg12[%c0_99, %c0_100] : memref<1x64xf32, #tpu.memory_space<vmem>>, vector<1x64xf32>
    %166 = vector.broadcast %165 : vector<1x64xf32> to vector<16x64xf32>
    %167 = arith.addf %164, %166 : vector<16x64xf32>
    %cst_101 = arith.constant 0.000000e+00 : f32
    %168 = vector.broadcast %cst_101 : f32 to vector<16x64xf32>
    %169 = arith.subf %168, %167 : vector<16x64xf32>
    %170 = math.exp %169 : vector<16x64xf32>
    %cst_102 = arith.constant 1.000000e+00 : f32
    %171 = vector.broadcast %cst_102 : f32 to vector<16x64xf32>
    %172 = arith.addf %171, %170 : vector<16x64xf32>
    %173 = tpu.reciprocal %172 {approx = true} : vector<16x64xf32> -> vector<16x64xf32>
    %174 = arith.mulf %167, %173 : vector<16x64xf32>
    %175 = arith.truncf %174 : vector<16x64xf32> to vector<16x64xbf16>
    %c0_103 = arith.constant 0 : index
    %c0_104 = arith.constant 0 : index
    %176 = vector.load %arg13[%c0_103, %c0_104] : memref<64x80xbf16, #tpu.memory_space<vmem>>, vector<64x80xbf16>
    %cst_105 = arith.constant dense<0.000000e+00> : vector<16x80xf32>
    %177 = tpu.matmul %175, %176, %cst_105 {dimension_numbers = #tpu.dot_dimension_numbers<[1], [0], [0], [1], [0, 0, 1, 1], [], []>} : vector<16x64xbf16>, vector<64x80xbf16>, vector<16x80xf32> -> vector<16x80xf32>
    %178 = vector.extract_strided_slice %177 {offsets = [0, 0], sizes = [16, 64], strides = [1, 1]} : vector<16x80xf32> to vector<16x64xf32>
    %c0_106 = arith.constant 0 : index
    %c0_107 = arith.constant 0 : index
    %179 = vector.load %arg14[%c0_106, %c0_107] : memref<1x64xf32, #tpu.memory_space<vmem>>, vector<1x64xf32>
    %180 = vector.broadcast %179 : vector<1x64xf32> to vector<16x64xf32>
    %181 = arith.addf %178, %180 : vector<16x64xf32>
    %cst_108 = arith.constant 2.000000e+01 : f32
    %182 = vector.broadcast %cst_108 : f32 to vector<16x64xf32>
    %183 = arith.cmpf ogt, %181, %182 : vector<16x64xf32>
    %cst_109 = arith.constant 2.000000e+01 : f32
    %184 = vector.broadcast %cst_109 : f32 to vector<16x64xf32>
    %185 = arith.minimumf %181, %184 : vector<16x64xf32>
    %186 = math.exp %185 : vector<16x64xf32>
    %cst_110 = arith.constant 1.000000e+00 : f32
    %187 = vector.broadcast %cst_110 : f32 to vector<16x64xf32>
    %188 = arith.addf %187, %186 : vector<16x64xf32>
    %189 = math.log %188 : vector<16x64xf32>
    %190 = arith.select %183, %181, %189 : vector<16x64xi1>, vector<16x64xf32>
    %191 = vector.shape_cast %174 : vector<16x64xf32> to vector<1x16x64xf32>
    %c0_111 = arith.constant 0 : index
    %c0_112 = arith.constant 0 : index
    %c0_113 = arith.constant 0 : index
    %192 = vector.load %arg24[%c0_111, %c0_112, %c0_113] : memref<1x16x64xf32, #tpu.memory_space<vmem>>, vector<1x16x64xf32>
    tpu.vector_store %arg24[%c0_111, %c0_112, %c0_113], %191 {strides = array<i32>} : memref<1x16x64xf32, #tpu.memory_space<vmem>>, vector<1x16x64xf32>,
    %193 = vector.shape_cast %190 : vector<16x64xf32> to vector<1x16x64xf32>
    %c0_114 = arith.constant 0 : index
    %c0_115 = arith.constant 0 : index
    %c0_116 = arith.constant 0 : index
    %194 = vector.load %arg25[%c0_114, %c0_115, %c0_116] : memref<1x16x64xf32, #tpu.memory_space<vmem>>, vector<1x16x64xf32>
    tpu.vector_store %arg25[%c0_114, %c0_115, %c0_116], %193 {strides = array<i32>} : memref<1x16x64xf32, #tpu.memory_space<vmem>>, vector<1x16x64xf32>,
    %195 = vector.extract_strided_slice %177 {offsets = [0, 64], sizes = [16, 16], strides = [1, 1]} : vector<16x80xf32> to vector<16x16xf32>
    %196 = vector.shape_cast %195 : vector<16x16xf32> to vector<1x16x16xf32>
    %c0_117 = arith.constant 0 : index
    %c0_118 = arith.constant 0 : index
    %c0_119 = arith.constant 0 : index
    %197 = vector.load %arg26[%c0_117, %c0_118, %c0_119] : memref<1x16x16xf32, #tpu.memory_space<vmem>>, vector<1x16x16xf32>
    tpu.vector_store %arg26[%c0_117, %c0_118, %c0_119], %196 {strides = array<i32>} : memref<1x16x16xf32, #tpu.memory_space<vmem>>, vector<1x16x16xf32>,
    %c0_120 = arith.constant 0 : index
    %c0_121 = arith.constant 0 : index
    %198 = vector.load %arg15[%c0_120, %c0_121] : memref<8x64xf32, #tpu.memory_space<vmem>>, vector<8x64xf32>
    %199 = vector.shape_cast %198 : vector<8x64xf32> to vector<1x8x64xf32>
    %cst_122 = arith.constant 0.000000e+00 : f32
    %200 = vector.broadcast %cst_122 : f32 to vector<1x8x64xf32>
    %c0_i32_123 = arith.constant 0 : i32
    %c2_i32_124 = arith.constant 2 : i32
    %201 = arith.addi %c0_i32_123, %c2_i32_124 : i32
    %c1_i32_125 = arith.constant 1 : i32
    %202 = scf.for %arg28 = %c0_i32_123 to %201 step %c1_i32_125 iter_args(%arg29 = %200) -> (vector<1x8x64xf32>)  : i32 {
      %c1_i32_155 = arith.constant 1 : i32
      %251 = arith.subi %c1_i32_155, %arg28 : i32
      %c8_i32 = arith.constant 8 : i32
      %252 = arith.muli %251, %c8_i32 : i32
      %253 = tpu.assume_multiple %252, 8 : i32
      %c0_156 = arith.constant 0 : index
      %254 = arith.index_cast %253 : i32 to index
      %c0_157 = arith.constant 0 : index
      %255 = vector.load %arg24[%c0_156, %254, %c0_157] : memref<1x16x64xf32, #tpu.memory_space<vmem>>, vector<1x8x64xf32>
      %c0_158 = arith.constant 0 : index
      %256 = arith.index_cast %253 : i32 to index
      %c0_159 = arith.constant 0 : index
      %257 = vector.load %arg25[%c0_158, %256, %c0_159] : memref<1x16x64xf32, #tpu.memory_space<vmem>>, vector<1x8x64xf32>
      %c0_160 = arith.constant 0 : index
      %258 = arith.index_cast %253 : i32 to index
      %c0_161 = arith.constant 0 : index
      %259 = vector.load %arg26[%c0_160, %258, %c0_161] : memref<1x16x16xf32, #tpu.memory_space<vmem>>, vector<1x8x16xf32>
      %260 = arith.mulf %257, %255 : vector<1x8x64xf32>
      %261 = vector.extract_strided_slice %257 {offsets = [0, 7, 0], sizes = [1, 1, 64], strides = [1, 1, 1]} : vector<1x8x64xf32> to vector<1x1x64xf32>
      %262 = vector.shape_cast %261 : vector<1x1x64xf32> to vector<1x64xf32>
      %263 = vector.shape_cast %262 : vector<1x64xf32> to vector<1x1x64xf32>
      %264 = vector.broadcast %263 : vector<1x1x64xf32> to vector<1x8x64xf32>
      %265 = arith.mulf %264, %199 : vector<1x8x64xf32>
      %266 = math.exp %265 : vector<1x8x64xf32>
      %267 = vector.extract_strided_slice %259 {offsets = [0, 7, 0], sizes = [1, 1, 8], strides = [1, 1, 1]} : vector<1x8x16xf32> to vector<1x1x8xf32>
      %268 = vector.shape_cast %267 : vector<1x1x8xf32> to vector<1x8xf32>
      %269 = vector.shape_cast %268 : vector<1x8xf32> to vector<1x8x1xf32>
      %270 = vector.extract_strided_slice %260 {offsets = [0, 7, 0], sizes = [1, 1, 64], strides = [1, 1, 1]} : vector<1x8x64xf32> to vector<1x1x64xf32>
      %271 = vector.shape_cast %270 : vector<1x1x64xf32> to vector<1x64xf32>
      %272 = vector.shape_cast %271 : vector<1x64xf32> to vector<1x1x64xf32>
      %273 = vector.broadcast %269 : vector<1x8x1xf32> to vector<1x8x64xf32>
      %274 = vector.broadcast %272 : vector<1x1x64xf32> to vector<1x8x64xf32>
      %275 = arith.mulf %273, %274 : vector<1x8x64xf32>
      %276 = arith.mulf %266, %arg29 : vector<1x8x64xf32>
      %277 = arith.addf %276, %275 : vector<1x8x64xf32>
      %278 = vector.extract_strided_slice %259 {offsets = [0, 7, 8], sizes = [1, 1, 8], strides = [1, 1, 1]} : vector<1x8x16xf32> to vector<1x1x8xf32>
      %279 = vector.shape_cast %278 : vector<1x1x8xf32> to vector<1x8xf32>
      %280 = vector.shape_cast %279 : vector<1x8xf32> to vector<1x8x1xf32>
      %281 = vector.broadcast %280 : vector<1x8x1xf32> to vector<1x8x64xf32>
      %282 = arith.mulf %281, %277 : vector<1x8x64xf32>
      %cst_162 = arith.constant dense<0.000000e+00> : vector<1x64xf32>
      %283 = vector.multi_reduction <add>, %282, %cst_162 [1] : vector<1x8x64xf32> to vector<1x64xf32>
      %284 = vector.extract_strided_slice %257 {offsets = [0, 6, 0], sizes = [1, 1, 64], strides = [1, 1, 1]} : vector<1x8x64xf32> to vector<1x1x64xf32>
      %285 = vector.shape_cast %284 : vector<1x1x64xf32> to vector<1x64xf32>
      %286 = vector.shape_cast %285 : vector<1x64xf32> to vector<1x1x64xf32>
      %287 = vector.broadcast %286 : vector<1x1x64xf32> to vector<1x8x64xf32>
      %288 = arith.mulf %287, %199 : vector<1x8x64xf32>
      %289 = math.exp %288 : vector<1x8x64xf32>
      %290 = vector.extract_strided_slice %259 {offsets = [0, 6, 0], sizes = [1, 1, 8], strides = [1, 1, 1]} : vector<1x8x16xf32> to vector<1x1x8xf32>
      %291 = vector.shape_cast %290 : vector<1x1x8xf32> to vector<1x8xf32>
      %292 = vector.shape_cast %291 : vector<1x8xf32> to vector<1x8x1xf32>
      %293 = vector.extract_strided_slice %260 {offsets = [0, 6, 0], sizes = [1, 1, 64], strides = [1, 1, 1]} : vector<1x8x64xf32> to vector<1x1x64xf32>
      %294 = vector.shape_cast %293 : vector<1x1x64xf32> to vector<1x64xf32>
      %295 = vector.shape_cast %294 : vector<1x64xf32> to vector<1x1x64xf32>
      %296 = vector.broadcast %292 : vector<1x8x1xf32> to vector<1x8x64xf32>
      %297 = vector.broadcast %295 : vector<1x1x64xf32> to vector<1x8x64xf32>
      %298 = arith.mulf %296, %297 : vector<1x8x64xf32>
      %299 = arith.mulf %289, %277 : vector<1x8x64xf32>
      %300 = arith.addf %299, %298 : vector<1x8x64xf32>
      %301 = vector.extract_strided_slice %259 {offsets = [0, 6, 8], sizes = [1, 1, 8], strides = [1, 1, 1]} : vector<1x8x16xf32> to vector<1x1x8xf32>
      %302 = vector.shape_cast %301 : vector<1x1x8xf32> to vector<1x8xf32>
      %303 = vector.shape_cast %302 : vector<1x8xf32> to vector<1x8x1xf32>
      %304 = vector.broadcast %303 : vector<1x8x1xf32> to vector<1x8x64xf32>
      %305 = arith.mulf %304, %300 : vector<1x8x64xf32>
      %cst_163 = arith.constant dense<0.000000e+00> : vector<1x64xf32>
      %306 = vector.multi_reduction <add>, %305, %cst_163 [1] : vector<1x8x64xf32> to vector<1x64xf32>
      %307 = vector.extract_strided_slice %257 {offsets = [0, 5, 0], sizes = [1, 1, 64], strides = [1, 1, 1]} : vector<1x8x64xf32> to vector<1x1x64xf32>
      %308 = vector.shape_cast %307 : vector<1x1x64xf32> to vector<1x64xf32>
      %309 = vector.shape_cast %308 : vector<1x64xf32> to vector<1x1x64xf32>
      %310 = vector.broadcast %309 : vector<1x1x64xf32> to vector<1x8x64xf32>
      %311 = arith.mulf %310, %199 : vector<1x8x64xf32>
      %312 = math.exp %311 : vector<1x8x64xf32>
      %313 = vector.extract_strided_slice %259 {offsets = [0, 5, 0], sizes = [1, 1, 8], strides = [1, 1, 1]} : vector<1x8x16xf32> to vector<1x1x8xf32>
      %314 = vector.shape_cast %313 : vector<1x1x8xf32> to vector<1x8xf32>
      %315 = vector.shape_cast %314 : vector<1x8xf32> to vector<1x8x1xf32>
      %316 = vector.extract_strided_slice %260 {offsets = [0, 5, 0], sizes = [1, 1, 64], strides = [1, 1, 1]} : vector<1x8x64xf32> to vector<1x1x64xf32>
      %317 = vector.shape_cast %316 : vector<1x1x64xf32> to vector<1x64xf32>
      %318 = vector.shape_cast %317 : vector<1x64xf32> to vector<1x1x64xf32>
      %319 = vector.broadcast %315 : vector<1x8x1xf32> to vector<1x8x64xf32>
      %320 = vector.broadcast %318 : vector<1x1x64xf32> to vector<1x8x64xf32>
      %321 = arith.mulf %319, %320 : vector<1x8x64xf32>
      %322 = arith.mulf %312, %300 : vector<1x8x64xf32>
      %323 = arith.addf %322, %321 : vector<1x8x64xf32>
      %324 = vector.extract_strided_slice %259 {offsets = [0, 5, 8], sizes = [1, 1, 8], strides = [1, 1, 1]} : vector<1x8x16xf32> to vector<1x1x8xf32>
      %325 = vector.shape_cast %324 : vector<1x1x8xf32> to vector<1x8xf32>
      %326 = vector.shape_cast %325 : vector<1x8xf32> to vector<1x8x1xf32>
      %327 = vector.broadcast %326 : vector<1x8x1xf32> to vector<1x8x64xf32>
      %328 = arith.mulf %327, %323 : vector<1x8x64xf32>
      %cst_164 = arith.constant dense<0.000000e+00> : vector<1x64xf32>
      %329 = vector.multi_reduction <add>, %328, %cst_164 [1] : vector<1x8x64xf32> to vector<1x64xf32>
      %330 = vector.extract_strided_slice %257 {offsets = [0, 4, 0], sizes = [1, 1, 64], strides = [1, 1, 1]} : vector<1x8x64xf32> to vector<1x1x64xf32>
      %331 = vector.shape_cast %330 : vector<1x1x64xf32> to vector<1x64xf32>
      %332 = vector.shape_cast %331 : vector<1x64xf32> to vector<1x1x64xf32>
      %333 = vector.broadcast %332 : vector<1x1x64xf32> to vector<1x8x64xf32>
      %334 = arith.mulf %333, %199 : vector<1x8x64xf32>
      %335 = math.exp %334 : vector<1x8x64xf32>
      %336 = vector.extract_strided_slice %259 {offsets = [0, 4, 0], sizes = [1, 1, 8], strides = [1, 1, 1]} : vector<1x8x16xf32> to vector<1x1x8xf32>
      %337 = vector.shape_cast %336 : vector<1x1x8xf32> to vector<1x8xf32>
      %338 = vector.shape_cast %337 : vector<1x8xf32> to vector<1x8x1xf32>
      %339 = vector.extract_strided_slice %260 {offsets = [0, 4, 0], sizes = [1, 1, 64], strides = [1, 1, 1]} : vector<1x8x64xf32> to vector<1x1x64xf32>
      %340 = vector.shape_cast %339 : vector<1x1x64xf32> to vector<1x64xf32>
      %341 = vector.shape_cast %340 : vector<1x64xf32> to vector<1x1x64xf32>
      %342 = vector.broadcast %338 : vector<1x8x1xf32> to vector<1x8x64xf32>
      %343 = vector.broadcast %341 : vector<1x1x64xf32> to vector<1x8x64xf32>
      %344 = arith.mulf %342, %343 : vector<1x8x64xf32>
      %345 = arith.mulf %335, %323 : vector<1x8x64xf32>
      %346 = arith.addf %345, %344 : vector<1x8x64xf32>
      %347 = vector.extract_strided_slice %259 {offsets = [0, 4, 8], sizes = [1, 1, 8], strides = [1, 1, 1]} : vector<1x8x16xf32> to vector<1x1x8xf32>
      %348 = vector.shape_cast %347 : vector<1x1x8xf32> to vector<1x8xf32>
      %349 = vector.shape_cast %348 : vector<1x8xf32> to vector<1x8x1xf32>
      %350 = vector.broadcast %349 : vector<1x8x1xf32> to vector<1x8x64xf32>
      %351 = arith.mulf %350, %346 : vector<1x8x64xf32>
      %cst_165 = arith.constant dense<0.000000e+00> : vector<1x64xf32>
      %352 = vector.multi_reduction <add>, %351, %cst_165 [1] : vector<1x8x64xf32> to vector<1x64xf32>
      %353 = vector.extract_strided_slice %257 {offsets = [0, 3, 0], sizes = [1, 1, 64], strides = [1, 1, 1]} : vector<1x8x64xf32> to vector<1x1x64xf32>
      %354 = vector.shape_cast %353 : vector<1x1x64xf32> to vector<1x64xf32>
      %355 = vector.shape_cast %354 : vector<1x64xf32> to vector<1x1x64xf32>
      %356 = vector.broadcast %355 : vector<1x1x64xf32> to vector<1x8x64xf32>
      %357 = arith.mulf %356, %199 : vector<1x8x64xf32>
      %358 = math.exp %357 : vector<1x8x64xf32>
      %359 = vector.extract_strided_slice %259 {offsets = [0, 3, 0], sizes = [1, 1, 8], strides = [1, 1, 1]} : vector<1x8x16xf32> to vector<1x1x8xf32>
      %360 = vector.shape_cast %359 : vector<1x1x8xf32> to vector<1x8xf32>
      %361 = vector.shape_cast %360 : vector<1x8xf32> to vector<1x8x1xf32>
      %362 = vector.extract_strided_slice %260 {offsets = [0, 3, 0], sizes = [1, 1, 64], strides = [1, 1, 1]} : vector<1x8x64xf32> to vector<1x1x64xf32>
      %363 = vector.shape_cast %362 : vector<1x1x64xf32> to vector<1x64xf32>
      %364 = vector.shape_cast %363 : vector<1x64xf32> to vector<1x1x64xf32>
      %365 = vector.broadcast %361 : vector<1x8x1xf32> to vector<1x8x64xf32>
      %366 = vector.broadcast %364 : vector<1x1x64xf32> to vector<1x8x64xf32>
      %367 = arith.mulf %365, %366 : vector<1x8x64xf32>
      %368 = arith.mulf %358, %346 : vector<1x8x64xf32>
      %369 = arith.addf %368, %367 : vector<1x8x64xf32>
      %370 = vector.extract_strided_slice %259 {offsets = [0, 3, 8], sizes = [1, 1, 8], strides = [1, 1, 1]} : vector<1x8x16xf32> to vector<1x1x8xf32>
      %371 = vector.shape_cast %370 : vector<1x1x8xf32> to vector<1x8xf32>
      %372 = vector.shape_cast %371 : vector<1x8xf32> to vector<1x8x1xf32>
      %373 = vector.broadcast %372 : vector<1x8x1xf32> to vector<1x8x64xf32>
      %374 = arith.mulf %373, %369 : vector<1x8x64xf32>
      %cst_166 = arith.constant dense<0.000000e+00> : vector<1x64xf32>
      %375 = vector.multi_reduction <add>, %374, %cst_166 [1] : vector<1x8x64xf32> to vector<1x64xf32>
      %376 = vector.extract_strided_slice %257 {offsets = [0, 2, 0], sizes = [1, 1, 64], strides = [1, 1, 1]} : vector<1x8x64xf32> to vector<1x1x64xf32>
      %377 = vector.shape_cast %376 : vector<1x1x64xf32> to vector<1x64xf32>
      %378 = vector.shape_cast %377 : vector<1x64xf32> to vector<1x1x64xf32>
      %379 = vector.broadcast %378 : vector<1x1x64xf32> to vector<1x8x64xf32>
      %380 = arith.mulf %379, %199 : vector<1x8x64xf32>
      %381 = math.exp %380 : vector<1x8x64xf32>
      %382 = vector.extract_strided_slice %259 {offsets = [0, 2, 0], sizes = [1, 1, 8], strides = [1, 1, 1]} : vector<1x8x16xf32> to vector<1x1x8xf32>
      %383 = vector.shape_cast %382 : vector<1x1x8xf32> to vector<1x8xf32>
      %384 = vector.shape_cast %383 : vector<1x8xf32> to vector<1x8x1xf32>
      %385 = vector.extract_strided_slice %260 {offsets = [0, 2, 0], sizes = [1, 1, 64], strides = [1, 1, 1]} : vector<1x8x64xf32> to vector<1x1x64xf32>
      %386 = vector.shape_cast %385 : vector<1x1x64xf32> to vector<1x64xf32>
      %387 = vector.shape_cast %386 : vector<1x64xf32> to vector<1x1x64xf32>
      %388 = vector.broadcast %384 : vector<1x8x1xf32> to vector<1x8x64xf32>
      %389 = vector.broadcast %387 : vector<1x1x64xf32> to vector<1x8x64xf32>
      %390 = arith.mulf %388, %389 : vector<1x8x64xf32>
      %391 = arith.mulf %381, %369 : vector<1x8x64xf32>
      %392 = arith.addf %391, %390 : vector<1x8x64xf32>
      %393 = vector.extract_strided_slice %259 {offsets = [0, 2, 8], sizes = [1, 1, 8], strides = [1, 1, 1]} : vector<1x8x16xf32> to vector<1x1x8xf32>
      %394 = vector.shape_cast %393 : vector<1x1x8xf32> to vector<1x8xf32>
      %395 = vector.shape_cast %394 : vector<1x8xf32> to vector<1x8x1xf32>
      %396 = vector.broadcast %395 : vector<1x8x1xf32> to vector<1x8x64xf32>
      %397 = arith.mulf %396, %392 : vector<1x8x64xf32>
      %cst_167 = arith.constant dense<0.000000e+00> : vector<1x64xf32>
      %398 = vector.multi_reduction <add>, %397, %cst_167 [1] : vector<1x8x64xf32> to vector<1x64xf32>
      %399 = vector.extract_strided_slice %257 {offsets = [0, 1, 0], sizes = [1, 1, 64], strides = [1, 1, 1]} : vector<1x8x64xf32> to vector<1x1x64xf32>
      %400 = vector.shape_cast %399 : vector<1x1x64xf32> to vector<1x64xf32>
      %401 = vector.shape_cast %400 : vector<1x64xf32> to vector<1x1x64xf32>
      %402 = vector.broadcast %401 : vector<1x1x64xf32> to vector<1x8x64xf32>
      %403 = arith.mulf %402, %199 : vector<1x8x64xf32>
      %404 = math.exp %403 : vector<1x8x64xf32>
      %405 = vector.extract_strided_slice %259 {offsets = [0, 1, 0], sizes = [1, 1, 8], strides = [1, 1, 1]} : vector<1x8x16xf32> to vector<1x1x8xf32>
      %406 = vector.shape_cast %405 : vector<1x1x8xf32> to vector<1x8xf32>
      %407 = vector.shape_cast %406 : vector<1x8xf32> to vector<1x8x1xf32>
      %408 = vector.extract_strided_slice %260 {offsets = [0, 1, 0], sizes = [1, 1, 64], strides = [1, 1, 1]} : vector<1x8x64xf32> to vector<1x1x64xf32>
      %409 = vector.shape_cast %408 : vector<1x1x64xf32> to vector<1x64xf32>
      %410 = vector.shape_cast %409 : vector<1x64xf32> to vector<1x1x64xf32>
      %411 = vector.broadcast %407 : vector<1x8x1xf32> to vector<1x8x64xf32>
      %412 = vector.broadcast %410 : vector<1x1x64xf32> to vector<1x8x64xf32>
      %413 = arith.mulf %411, %412 : vector<1x8x64xf32>
      %414 = arith.mulf %404, %392 : vector<1x8x64xf32>
      %415 = arith.addf %414, %413 : vector<1x8x64xf32>
      %416 = vector.extract_strided_slice %259 {offsets = [0, 1, 8], sizes = [1, 1, 8], strides = [1, 1, 1]} : vector<1x8x16xf32> to vector<1x1x8xf32>
      %417 = vector.shape_cast %416 : vector<1x1x8xf32> to vector<1x8xf32>
      %418 = vector.shape_cast %417 : vector<1x8xf32> to vector<1x8x1xf32>
      %419 = vector.broadcast %418 : vector<1x8x1xf32> to vector<1x8x64xf32>
      %420 = arith.mulf %419, %415 : vector<1x8x64xf32>
      %cst_168 = arith.constant dense<0.000000e+00> : vector<1x64xf32>
      %421 = vector.multi_reduction <add>, %420, %cst_168 [1] : vector<1x8x64xf32> to vector<1x64xf32>
      %422 = vector.extract_strided_slice %257 {offsets = [0, 0, 0], sizes = [1, 1, 64], strides = [1, 1, 1]} : vector<1x8x64xf32> to vector<1x1x64xf32>
      %423 = vector.shape_cast %422 : vector<1x1x64xf32> to vector<1x64xf32>
      %424 = vector.shape_cast %423 : vector<1x64xf32> to vector<1x1x64xf32>
      %425 = vector.broadcast %424 : vector<1x1x64xf32> to vector<1x8x64xf32>
      %426 = arith.mulf %425, %199 : vector<1x8x64xf32>
      %427 = math.exp %426 : vector<1x8x64xf32>
      %428 = vector.extract_strided_slice %259 {offsets = [0, 0, 0], sizes = [1, 1, 8], strides = [1, 1, 1]} : vector<1x8x16xf32> to vector<1x1x8xf32>
      %429 = vector.shape_cast %428 : vector<1x1x8xf32> to vector<1x8xf32>
      %430 = vector.shape_cast %429 : vector<1x8xf32> to vector<1x8x1xf32>
      %431 = vector.extract_strided_slice %260 {offsets = [0, 0, 0], sizes = [1, 1, 64], strides = [1, 1, 1]} : vector<1x8x64xf32> to vector<1x1x64xf32>
      %432 = vector.shape_cast %431 : vector<1x1x64xf32> to vector<1x64xf32>
      %433 = vector.shape_cast %432 : vector<1x64xf32> to vector<1x1x64xf32>
      %434 = vector.broadcast %430 : vector<1x8x1xf32> to vector<1x8x64xf32>
      %435 = vector.broadcast %433 : vector<1x1x64xf32> to vector<1x8x64xf32>
      %436 = arith.mulf %434, %435 : vector<1x8x64xf32>
      %437 = arith.mulf %427, %415 : vector<1x8x64xf32>
      %438 = arith.addf %437, %436 : vector<1x8x64xf32>
      %439 = vector.extract_strided_slice %259 {offsets = [0, 0, 8], sizes = [1, 1, 8], strides = [1, 1, 1]} : vector<1x8x16xf32> to vector<1x1x8xf32>
      %440 = vector.shape_cast %439 : vector<1x1x8xf32> to vector<1x8xf32>
      %441 = vector.shape_cast %440 : vector<1x8xf32> to vector<1x8x1xf32>
      %442 = vector.broadcast %441 : vector<1x8x1xf32> to vector<1x8x64xf32>
      %443 = arith.mulf %442, %438 : vector<1x8x64xf32>
      %cst_169 = arith.constant dense<0.000000e+00> : vector<1x64xf32>
      %444 = vector.multi_reduction <add>, %443, %cst_169 [1] : vector<1x8x64xf32> to vector<1x64xf32>
      %445 = vector.shape_cast %444 : vector<1x64xf32> to vector<1x1x64xf32>
      %446 = vector.shape_cast %421 : vector<1x64xf32> to vector<1x1x64xf32>
      %447 = vector.shape_cast %398 : vector<1x64xf32> to vector<1x1x64xf32>
      %448 = vector.shape_cast %375 : vector<1x64xf32> to vector<1x1x64xf32>
      %449 = vector.shape_cast %352 : vector<1x64xf32> to vector<1x1x64xf32>
      %450 = vector.shape_cast %329 : vector<1x64xf32> to vector<1x1x64xf32>
      %451 = vector.shape_cast %306 : vector<1x64xf32> to vector<1x1x64xf32>
      %452 = vector.shape_cast %283 : vector<1x64xf32> to vector<1x1x64xf32>
      %453 = tpu.concatenate %445, %446, %447, %448, %449, %450, %451, %452 in 1 : vector<1x1x64xf32>, vector<1x1x64xf32>, vector<1x1x64xf32>, vector<1x1x64xf32>, vector<1x1x64xf32>, vector<1x1x64xf32>, vector<1x1x64xf32>, vector<1x1x64xf32> -> vector<1x8x64xf32>
      %c0_170 = arith.constant 0 : index
      %454 = arith.index_cast %253 : i32 to index
      %c0_171 = arith.constant 0 : index
      %455 = vector.load %arg27[%c0_170, %454, %c0_171] : memref<1x16x64xf32, #tpu.memory_space<vmem>>, vector<1x8x64xf32>
      tpu.vector_store %arg27[%c0_170, %454, %c0_171], %453 {strides = array<i32>} : memref<1x16x64xf32, #tpu.memory_space<vmem>>, vector<1x8x64xf32>,
      scf.yield %438 : vector<1x8x64xf32>
    }
    %c2_i32_126 = arith.constant 2 : i32
    %c0_127 = arith.constant 0 : index
    %c0_128 = arith.constant 0 : index
    %c0_129 = arith.constant 0 : index
    %203 = vector.load %arg27[%c0_127, %c0_128, %c0_129] : memref<1x16x64xf32, #tpu.memory_space<vmem>>, vector<1x16x64xf32>
    %204 = vector.shape_cast %203 : vector<1x16x64xf32> to vector<16x64xf32>
    %c0_130 = arith.constant 0 : index
    %c0_131 = arith.constant 0 : index
    %c0_132 = arith.constant 0 : index
    %205 = vector.load %arg24[%c0_130, %c0_131, %c0_132] : memref<1x16x64xf32, #tpu.memory_space<vmem>>, vector<1x16x64xf32>
    %206 = vector.shape_cast %205 : vector<1x16x64xf32> to vector<16x64xf32>
    %c0_133 = arith.constant 0 : index
    %c0_134 = arith.constant 0 : index
    %207 = vector.load %arg16[%c0_133, %c0_134] : memref<1x64xf32, #tpu.memory_space<vmem>>, vector<1x64xf32>
    %208 = vector.broadcast %207 : vector<1x64xf32> to vector<16x64xf32>
    %209 = arith.mulf %206, %208 : vector<16x64xf32>
    %210 = arith.addf %204, %209 : vector<16x64xf32>
    %cst_135 = arith.constant 0.000000e+00 : f32
    %211 = vector.broadcast %cst_135 : f32 to vector<16x64xf32>
    %212 = arith.subf %211, %129 : vector<16x64xf32>
    %213 = math.exp %212 : vector<16x64xf32>
    %cst_136 = arith.constant 1.000000e+00 : f32
    %214 = vector.broadcast %cst_136 : f32 to vector<16x64xf32>
    %215 = arith.addf %214, %213 : vector<16x64xf32>
    %216 = tpu.reciprocal %215 {approx = true} : vector<16x64xf32> -> vector<16x64xf32>
    %217 = arith.mulf %129, %216 : vector<16x64xf32>
    %218 = arith.mulf %210, %217 : vector<16x64xf32>
    %219 = arith.truncf %218 : vector<16x64xf32> to vector<16x64xbf16>
    %c0_137 = arith.constant 0 : index
    %c0_138 = arith.constant 0 : index
    %220 = vector.load %arg17[%c0_137, %c0_138] : memref<64x32xbf16, #tpu.memory_space<vmem>>, vector<64x32xbf16>
    %cst_139 = arith.constant dense<0.000000e+00> : vector<16x32xf32>
    %221 = tpu.matmul %219, %220, %cst_139 {dimension_numbers = #tpu.dot_dimension_numbers<[1], [0], [0], [1], [0, 0, 1, 1], [], []>} : vector<16x64xbf16>, vector<64x32xbf16>, vector<16x32xf32> -> vector<16x32xf32>
    %c0_140 = arith.constant 0 : index
    %c0_141 = arith.constant 0 : index
    %c0_142 = arith.constant 0 : index
    %222 = vector.load %arg22[%c0_140, %c0_141, %c0_142] : memref<1x16x32xf32, #tpu.memory_space<vmem>>, vector<1x16x32xf32>
    %223 = arith.addf %221, %1 : vector<16x32xf32>
    %c0_143 = arith.constant 0 : index
    %c0_144 = arith.constant 0 : index
    %224 = vector.load %arg20[%c0_143, %c0_144] : memref<1x32xf32, #tpu.memory_space<vmem>>, vector<1x32xf32>
    %c0_145 = arith.constant 0 : index
    %c0_146 = arith.constant 0 : index
    %225 = vector.load %arg21[%c0_145, %c0_146] : memref<1x32xf32, #tpu.memory_space<vmem>>, vector<1x32xf32>
    %cst_147 = arith.constant dense<0.000000e+00> : vector<16xf32>
    %226 = vector.multi_reduction <add>, %223, %cst_147 [1] : vector<16x32xf32> to vector<16xf32>
    %227 = vector.shape_cast %226 : vector<16xf32> to vector<16x1xf32>
    %cst_148 = arith.constant 3.200000e+01 : f32
    %228 = vector.broadcast %cst_148 : f32 to vector<16x1xf32>
    %229 = arith.divf %227, %228 : vector<16x1xf32>
    %230 = vector.broadcast %229 : vector<16x1xf32> to vector<16x32xf32>
    %231 = arith.subf %223, %230 : vector<16x32xf32>
    %232 = arith.mulf %231, %231 : vector<16x32xf32>
    %cst_149 = arith.constant dense<0.000000e+00> : vector<16xf32>
    %233 = vector.multi_reduction <add>, %232, %cst_149 [1] : vector<16x32xf32> to vector<16xf32>
    %234 = vector.shape_cast %233 : vector<16xf32> to vector<16x1xf32>
    %cst_150 = arith.constant 3.200000e+01 : f32
    %235 = vector.broadcast %cst_150 : f32 to vector<16x1xf32>
    %236 = arith.divf %234, %235 : vector<16x1xf32>
    %237 = vector.broadcast %229 : vector<16x1xf32> to vector<16x32xf32>
    %238 = arith.subf %223, %237 : vector<16x32xf32>
    %cst_151 = arith.constant 9.99999974E-6 : f32
    %239 = vector.broadcast %cst_151 : f32 to vector<16x1xf32>
    %240 = arith.addf %236, %239 : vector<16x1xf32>
    %241 = math.rsqrt %240 : vector<16x1xf32>
    %242 = vector.broadcast %241 : vector<16x1xf32> to vector<16x32xf32>
    %243 = arith.mulf %238, %242 : vector<16x32xf32>
    %244 = vector.broadcast %224 : vector<1x32xf32> to vector<16x32xf32>
    %245 = arith.mulf %243, %244 : vector<16x32xf32>
    %246 = vector.broadcast %225 : vector<1x32xf32> to vector<16x32xf32>
    %247 = arith.addf %245, %246 : vector<16x32xf32>
    %248 = vector.shape_cast %247 : vector<16x32xf32> to vector<1x16x32xf32>
    %249 = arith.addf %222, %248 : vector<1x16x32xf32>
    %c0_152 = arith.constant 0 : index
    %c0_153 = arith.constant 0 : index
    %c0_154 = arith.constant 0 : index
    %250 = vector.load %arg22[%c0_152, %c0_153, %c0_154] : memref<1x16x32xf32, #tpu.memory_space<vmem>>, vector<1x16x32xf32>
    tpu.vector_store %arg22[%c0_152, %c0_153, %c0_154], %249 {strides = array<i32>} : memref<1x16x32xf32, #tpu.memory_space<vmem>>, vector<1x16x32xf32>,
    return
  }
  func.func @transform_0(%arg0: i32) -> (i32, i32, i32) {
    %c0_i32 = arith.constant 0 : i32
    %c0_i32_0 = arith.constant 0 : i32
    %c0_i32_1 = arith.constant 0 : i32
    return %arg0, %c0_i32, %c0_i32_0 : i32, i32, i32
  }
  func.func @transform_1(%arg0: i32) -> (i32, i32) {
    %c0_i32 = arith.constant 0 : i32
    %c0_i32_0 = arith.constant 0 : i32
    %c0_i32_1 = arith.constant 0 : i32
    return %c0_i32, %c0_i32_0 : i32, i32
  }
  func.func @transform_2(%arg0: i32) -> (i32, i32) {
    %c0_i32 = arith.constant 0 : i32
    %c0_i32_0 = arith.constant 0 : i32
    %c0_i32_1 = arith.constant 0 : i32
    return %c0_i32, %c0_i32_0 : i32, i32
  }
  func.func @transform_3(%arg0: i32) -> (i32, i32) {
    %c0_i32 = arith.constant 0 : i32
    %c0_i32_0 = arith.constant 0 : i32
    %c0_i32_1 = arith.constant 0 : i32
    return %c0_i32, %c0_i32_0 : i32, i32
  }
  func.func @transform_4(%arg0: i32) -> (i32, i32) {
    %c0_i32 = arith.constant 0 : i32
    %c0_i32_0 = arith.constant 0 : i32
    %c0_i32_1 = arith.constant 0 : i32
    return %c0_i32, %c0_i32_0 : i32, i32
  }
  func.func @transform_5(%arg0: i32) -> (i32, i32) {
    %c0_i32 = arith.constant 0 : i32
    %c0_i32_0 = arith.constant 0 : i32
    %c0_i32_1 = arith.constant 0 : i32
    return %c0_i32, %c0_i32_0 : i32, i32
  }
  func.func @transform_6(%arg0: i32) -> (i32, i32) {
    %c0_i32 = arith.constant 0 : i32
    %c0_i32_0 = arith.constant 0 : i32
    %c0_i32_1 = arith.constant 0 : i32
    return %c0_i32, %c0_i32_0 : i32, i32
  }
  func.func @transform_7(%arg0: i32) -> (i32, i32) {
    %c0_i32 = arith.constant 0 : i32
    %c0_i32_0 = arith.constant 0 : i32
    %c0_i32_1 = arith.constant 0 : i32
    return %c0_i32, %c0_i32_0 : i32, i32
  }
  func.func @transform_8(%arg0: i32) -> (i32, i32) {
    %c0_i32 = arith.constant 0 : i32
    %c0_i32_0 = arith.constant 0 : i32
    %c0_i32_1 = arith.constant 0 : i32
    return %c0_i32, %c0_i32_0 : i32, i32
  }
  func.func @transform_9(%arg0: i32) -> (i32, i32) {
    %c0_i32 = arith.constant 0 : i32
    %c0_i32_0 = arith.constant 0 : i32
    %c0_i32_1 = arith.constant 0 : i32
    return %c0_i32, %c0_i32_0 : i32, i32
  }
  func.func @transform_10(%arg0: i32) -> (i32, i32) {
    %c0_i32 = arith.constant 0 : i32
    %c0_i32_0 = arith.constant 0 : i32
    %c0_i32_1 = arith.constant 0 : i32
    return %c0_i32, %c0_i32_0 : i32, i32
  }
  func.func @transform_11(%arg0: i32) -> (i32, i32) {
    %c0_i32 = arith.constant 0 : i32
    %c0_i32_0 = arith.constant 0 : i32
    %c0_i32_1 = arith.constant 0 : i32
    return %c0_i32, %c0_i32_0 : i32, i32
  }
  func.func @transform_12(%arg0: i32) -> (i32, i32) {
    %c0_i32 = arith.constant 0 : i32
    %c0_i32_0 = arith.constant 0 : i32
    %c0_i32_1 = arith.constant 0 : i32
    return %c0_i32, %c0_i32_0 : i32, i32
  }
  func.func @transform_13(%arg0: i32) -> (i32, i32) {
    %c0_i32 = arith.constant 0 : i32
    %c0_i32_0 = arith.constant 0 : i32
    %c0_i32_1 = arith.constant 0 : i32
    return %c0_i32, %c0_i32_0 : i32, i32
  }
  func.func @transform_14(%arg0: i32) -> (i32, i32) {
    %c0_i32 = arith.constant 0 : i32
    %c0_i32_0 = arith.constant 0 : i32
    %c0_i32_1 = arith.constant 0 : i32
    return %c0_i32, %c0_i32_0 : i32, i32
  }
  func.func @transform_15(%arg0: i32) -> (i32, i32) {
    %c0_i32 = arith.constant 0 : i32
    %c0_i32_0 = arith.constant 0 : i32
    %c0_i32_1 = arith.constant 0 : i32
    return %c0_i32, %c0_i32_0 : i32, i32
  }
  func.func @transform_16(%arg0: i32) -> (i32, i32) {
    %c0_i32 = arith.constant 0 : i32
    %c0_i32_0 = arith.constant 0 : i32
    %c0_i32_1 = arith.constant 0 : i32
    return %c0_i32, %c0_i32_0 : i32, i32
  }
  func.func @transform_17(%arg0: i32) -> (i32, i32) {
    %c0_i32 = arith.constant 0 : i32
    %c0_i32_0 = arith.constant 0 : i32
    %c0_i32_1 = arith.constant 0 : i32
    return %c0_i32, %c0_i32_0 : i32, i32
  }
  func.func @transform_18(%arg0: i32) -> (i32, i32) {
    %c0_i32 = arith.constant 0 : i32
    %c0_i32_0 = arith.constant 0 : i32
    %c0_i32_1 = arith.constant 0 : i32
    return %c0_i32, %c0_i32_0 : i32, i32
  }
  func.func @transform_19(%arg0: i32) -> (i32, i32) {
    %c0_i32 = arith.constant 0 : i32
    %c0_i32_0 = arith.constant 0 : i32
    %c0_i32_1 = arith.constant 0 : i32
    return %c0_i32, %c0_i32_0 : i32, i32
  }
  func.func @transform_20(%arg0: i32) -> (i32, i32) {
    %c0_i32 = arith.constant 0 : i32
    %c0_i32_0 = arith.constant 0 : i32
    %c0_i32_1 = arith.constant 0 : i32
    return %c0_i32, %c0_i32_0 : i32, i32
  }
  func.func @transform_21(%arg0: i32) -> (i32, i32, i32) {
    %c0_i32 = arith.constant 0 : i32
    %c0_i32_0 = arith.constant 0 : i32
    %c0_i32_1 = arith.constant 0 : i32
    return %arg0, %c0_i32, %c0_i32_0 : i32, i32, i32
  }
}

</mosaic_0001>

<llo_original>
// kernel: bimamba_forward.4
$region0: #{bimamba_forward.4}
  #allocation0 [shape = 'u32[]', space=smem, size = 0x4, offset = 0x4, fixed_abs, tag = 'smem constant byte address 0x4 - core index']
  #allocation1 [shape = 'u32[144,128]{1,0:T(1,128)}', space=vmem, size = 0x12000, scoped, tag = 'internal scratch']
  %s0 = inlined_call_operand.vmem [shape: f32[2,16,32], index: 0, kind: input, shape index: {}]
  %s1 = inlined_call_operand.vmem [shape: bf16[32,16], index: 1, kind: input, shape index: {}]
  %s2 = inlined_call_operand.vmem [shape: bf16[16,32], index: 2, kind: input, shape index: {}]
  %s3 = inlined_call_operand.vmem [shape: f32[16,32], index: 3, kind: input, shape index: {}]
  %s4 = inlined_call_operand.vmem [shape: f32[16,32], index: 4, kind: input, shape index: {}]
  %s5 = inlined_call_operand.vmem [shape: f32[1,32], index: 5, kind: input, shape index: {}]
  %s6 = inlined_call_operand.vmem [shape: f32[1,32], index: 6, kind: input, shape index: {}]
  %s7 = inlined_call_operand.vmem [shape: f32[2,16,32], index: 7, kind: output, shape index: {}]
  %s8 = sld [smem:[#allocation0]]
  $region61: #{bimamba_forward.4} parent=0
    _
  %s10 = ssub.s32 1, %s8
  %s11 = scalar_select 0, %s10, %s8
  loop: start=0, step=1, limit=4
  $region2: #{bimamba_forward.4} parent=0 // loop_pre_header
    _
  $region3: #{bimamba_forward.4} parent=0 // loop_header
    %s13 = sphi 0, %s17
    %p14 = scmp.ge.s32.totalorder %s13, 4
    %s23 = sphi 0, %s25
    %s26 = sphi 0, %s23
    %s27 = sphi 0, %s26
    %s43 = sphi 0, %s27
    %s47 = sphi 0, %s47
    %s49 = sphi 0, %s47
    %s50 = sphi 0, %s49
    %s64 = sphi 0, %s50
    %s68 = sphi 0, %s68
    %s70 = sphi 0, %s68
    %s71 = sphi 0, %s70
    %s85 = sphi 0, %s71
    %s89 = sphi 0, %s89
    %s91 = sphi 0, %s89
    %s92 = sphi 0, %s91
    %s106 = sphi 0, %s92
    %s110 = sphi 0, %s110
    %s112 = sphi 0, %s110
    %s113 = sphi 0, %s112
    %s127 = sphi 0, %s113
    %s131 = sphi 0, %s131
    %s133 = sphi 0, %s131
    %s134 = sphi 0, %s133
    %s148 = sphi 0, %s134
    %s152 = sphi 0, %s152
    %s154 = sphi 0, %s152
    %s155 = sphi 0, %s154
    %s169 = sphi 0, %s155
    %s175 = sphi 0, %s177
    %s178 = sphi 0, %s175
    %s179 = sphi 0, %s178
    %s195 = sphi 0, %s179
  $region4: #{bimamba_forward.4} parent=0 // loop_header_branch
    %16 = sbr.rel (%p14) target = $region8
  $region5: #{bimamba_forward.4} parent=0 // loop_body
    %s18 = ssub.s32 %s13, 1
    %s19 = ssub.s32 %s13, 2
    %s20 = sadd.s32 %s13, 1
    %s21 = ssub.s32 %s13, %s20
    %p22 = scmp.eq.s32.totalorder %s21, 0
    %s24 = sadd.s32 %s23, 1
    %s25 = scalar_select %p22, %s23, %s24
    %p28 = pneg %p22
    %p29 = scmp.eq.s32.totalorder %s13, 1
    %p30 = por %p28, %p29
    %p31 = scmp.ne.s32.totalorder %s23, %s26
    %p32 = scmp.eq.s32.totalorder %s13, 0
    %p33 = por %p31, %p32
    %p34 = scmp.ne.s32.totalorder %s23, %s26
    %p35 = scmp.eq.s32.totalorder %s18, 1
    %p36 = por %p34, %p35
    %p37 = scmp.ne.s32.totalorder %s26, %s27
    %p38 = scmp.eq.s32.totalorder %s18, 0
    %p39 = por %p37, %p38
    %p40 = scmp.ne.s32.totalorder %s26, %s27
    %p41 = scmp.eq.s32.totalorder %s19, 1
    %p42 = por %p40, %p41
    %p44 = scmp.ne.s32.totalorder %s27, %s43
    %p45 = scmp.eq.s32.totalorder %s19, 0
    %p46 = por %p44, %p45
    %s48 = sadd.s32 %s47, 1
    %p51 = scmp.eq.s32.totalorder %s13, 1
    %p52 = scmp.ne.s32.totalorder %s47, %s49
    %p53 = scmp.eq.s32.totalorder %s13, 0
    %p54 = por %p52, %p53
    %p55 = scmp.ne.s32.totalorder %s47, %s49
    %p56 = scmp.eq.s32.totalorder %s18, 1
    %p57 = por %p55, %p56
    %p58 = scmp.ne.s32.totalorder %s49, %s50
    %p59 = scmp.eq.s32.totalorder %s18, 0
    %p60 = por %p58, %p59
    %p61 = scmp.ne.s32.totalorder %s49, %s50
    %p62 = scmp.eq.s32.totalorder %s19, 1
    %p63 = por %p61, %p62
    %p65 = scmp.ne.s32.totalorder %s50, %s64
    %p66 = scmp.eq.s32.totalorder %s19, 0
    %p67 = por %p65, %p66
    %s69 = sadd.s32 %s68, 1
    %p72 = scmp.eq.s32.totalorder %s13, 1
    %p73 = scmp.ne.s32.totalorder %s68, %s70
    %p74 = scmp.eq.s32.totalorder %s13, 0
    %p75 = por %p73, %p74
    %p76 = scmp.ne.s32.totalorder %s68, %s70
    %p77 = scmp.eq.s32.totalorder %s18, 1
    %p78 = por %p76, %p77
    %p79 = scmp.ne.s32.totalorder %s70, %s71
    %p80 = scmp.eq.s32.totalorder %s18, 0
    %p81 = por %p79, %p80
    %p82 = scmp.ne.s32.totalorder %s70, %s71
    %p83 = scmp.eq.s32.totalorder %s19, 1
    %p84 = por %p82, %p83
    %p86 = scmp.ne.s32.totalorder %s71, %s85
    %p87 = scmp.eq.s32.totalorder %s19, 0
    %p88 = por %p86, %p87
    %s90 = sadd.s32 %s89, 1
    %p93 = scmp.eq.s32.totalorder %s13, 1
    %p94 = scmp.ne.s32.totalorder %s89, %s91
    %p95 = scmp.eq.s32.totalorder %s13, 0
    %p96 = por %p94, %p95
    %p97 = scmp.ne.s32.totalorder %s89, %s91
    %p98 = scmp.eq.s32.totalorder %s18, 1
    %p99 = por %p97, %p98
    %p100 = scmp.ne.s32.totalorder %s91, %s92
    %p101 = scmp.eq.s32.totalorder %s18, 0
    %p102 = por %p100, %p101
    %p103 = scmp.ne.s32.totalorder %s91, %s92
    %p104 = scmp.eq.s32.totalorder %s19, 1
    %p105 = por %p103, %p104
    %p107 = scmp.ne.s32.totalorder %s92, %s106
    %p108 = scmp.eq.s32.totalorder %s19, 0
    %p109 = por %p107, %p108
    %s111 = sadd.s32 %s110, 1
    %p114 = scmp.eq.s32.totalorder %s13, 1
    %p115 = scmp.ne.s32.totalorder %s110, %s112
    %p116 = scmp.eq.s32.totalorder %s13, 0
    %p117 = por %p115, %p116
    %p118 = scmp.ne.s32.totalorder %s110, %s112
    %p119 = scmp.eq.s32.totalorder %s18, 1
    %p120 = por %p118, %p119
    %p121 = scmp.ne.s32.totalorder %s112, %s113
    %p122 = scmp.eq.s32.totalorder %s18, 0
    %p123 = por %p121, %p122
    %p124 = scmp.ne.s32.totalorder %s112, %s113
    %p125 = scmp.eq.s32.totalorder %s19, 1
    %p126 = por %p124, %p125
    %p128 = scmp.ne.s32.totalorder %s113, %s127
    %p129 = scmp.eq.s32.totalorder %s19, 0
    %p130 = por %p128, %p129
    %s132 = sadd.s32 %s131, 1
    %p135 = scmp.eq.s32.totalorder %s13, 1
    %p136 = scmp.ne.s32.totalorder %s131, %s133
    %p137 = scmp.eq.s32.totalorder %s13, 0
    %p138 = por %p136, %p137
    %p139 = scmp.ne.s32.totalorder %s131, %s133
    %p140 = scmp.eq.s32.totalorder %s18, 1
    %p141 = por %p139, %p140
    %p142 = scmp.ne.s32.totalorder %s133, %s134
    %p143 = scmp.eq.s32.totalorder %s18, 0
    %p144 = por %p142, %p143
    %p145 = scmp.ne.s32.totalorder %s133, %s134
    %p146 = scmp.eq.s32.totalorder %s19, 1
    %p147 = por %p145, %p146
    %p149 = scmp.ne.s32.totalorder %s134, %s148
    %p150 = scmp.eq.s32.totalorder %s19, 0
    %p151 = por %p149, %p150
    %s153 = sadd.s32 %s152, 1
    %p156 = scmp.eq.s32.totalorder %s13, 1
    %p157 = scmp.ne.s32.totalorder %s152, %s154
    %p158 = scmp.eq.s32.totalorder %s13, 0
    %p159 = por %p157, %p158
    %p160 = scmp.ne.s32.totalorder %s152, %s154
    %p161 = scmp.eq.s32.totalorder %s18, 1
    %p162 = por %p160, %p161
    %p163 = scmp.ne.s32.totalorder %s154, %s155
    %p164 = scmp.eq.s32.totalorder %s18, 0
    %p165 = por %p163, %p164
    %p166 = scmp.ne.s32.totalorder %s154, %s155
    %p167 = scmp.eq.s32.totalorder %s19, 1
    %p168 = por %p166, %p167
    %p170 = scmp.ne.s32.totalorder %s155, %s169
    %p171 = scmp.eq.s32.totalorder %s19, 0
    %p172 = por %p170, %p171
    %s173 = ssub.s32 %s13, %s20
    %p174 = scmp.eq.s32.totalorder %s173, 0
    %s176 = sadd.s32 %s175, 1
    %s177 = scalar_select %p174, %s175, %s176
    %p180 = pneg %p174
    %p181 = scmp.eq.s32.totalorder %s13, 1
    %p182 = por %p180, %p181
    %p183 = scmp.ne.s32.totalorder %s175, %s178
    %p184 = scmp.eq.s32.totalorder %s13, 0
    %p185 = por %p183, %p184
    %p186 = scmp.ne.s32.totalorder %s175, %s178
    %p187 = scmp.eq.s32.totalorder %s18, 1
    %p188 = por %p186, %p187
    %p189 = scmp.ne.s32.totalorder %s178, %s179
    %p190 = scmp.eq.s32.totalorder %s18, 0
    %p191 = por %p189, %p190
    %p192 = scmp.ne.s32.totalorder %s178, %s179
    %p193 = scmp.eq.s32.totalorder %s19, 1
    %p194 = por %p192, %p193
    %p196 = scmp.ne.s32.totalorder %s179, %s195
    %p197 = scmp.eq.s32.totalorder %s19, 0
    %p198 = por %p196, %p197
    %p199 = scmp.le.s32.totalorder 1, %s13
    %p200 = scmp.lt.s32.totalorder %s13, 3
    %p201 = pnand %p199, %p200
    %p202 = pneg %p201
    // Predicated region
    $region9: #{bimamba_forward.4} parent=5 // pred_check
      _
    $region10: #{bimamba_forward.4} parent=5 // pred_check_branch
      %204 = sbr.rel (%p201) target = $region12
    $region11: #{bimamba_forward.4} parent=5 // pred_region
      %s205 = ssub.s32 %s13, 1
      // Predicated region
      $region13: #{bimamba_forward.4} parent=11 // pred_check
        %p206 = pneg %p60
      $region14: #{bimamba_forward.4} parent=11 // pred_check_branch
        %208 = sbr.rel (%p206) target = $region16
      $region15: #{bimamba_forward.4} parent=11 // pred_region
        _
      $region16: #{bimamba_forward.4} parent=11 // pred_fallthru
        _
      // Predicated region
      $region17: #{bimamba_forward.4} parent=11 // pred_check
        %p209 = pneg %p81
      $region18: #{bimamba_forward.4} parent=11 // pred_check_branch
        %211 = sbr.rel (%p209) target = $region20
      $region19: #{bimamba_forward.4} parent=11 // pred_region
        _
      $region20: #{bimamba_forward.4} parent=11 // pred_fallthru
        _
      // Predicated region
      $region21: #{bimamba_forward.4} parent=11 // pred_check
        %p212 = pneg %p102
      $region22: #{bimamba_forward.4} parent=11 // pred_check_branch
        %214 = sbr.rel (%p212) target = $region24
      $region23: #{bimamba_forward.4} parent=11 // pred_region
        _
      $region24: #{bimamba_forward.4} parent=11 // pred_fallthru
        _
      // Predicated region
      $region25: #{bimamba_forward.4} parent=11 // pred_check
        %p215 = pneg %p123
      $region26: #{bimamba_forward.4} parent=11 // pred_check_branch
        %217 = sbr.rel (%p215) target = $region28
      $region27: #{bimamba_forward.4} parent=11 // pred_region
        _
      $region28: #{bimamba_forward.4} parent=11 // pred_fallthru
        _
      // Predicated region
      $region29: #{bimamba_forward.4} parent=11 // pred_check
        %p218 = pneg %p144
      $region30: #{bimamba_forward.4} parent=11 // pred_check_branch
        %220 = sbr.rel (%p218) target = $region32
      $region31: #{bimamba_forward.4} parent=11 // pred_region
        _
      $region32: #{bimamba_forward.4} parent=11 // pred_fallthru
        _
      // Predicated region
      $region33: #{bimamba_forward.4} parent=11 // pred_check
        %p221 = pneg %p165
      $region34: #{bimamba_forward.4} parent=11 // pred_check_branch
        %223 = sbr.rel (%p221) target = $region36
      $region35: #{bimamba_forward.4} parent=11 // pred_region
        _
      $region36: #{bimamba_forward.4} parent=11 // pred_fallthru
        _
    $region12: #{bimamba_forward.4} parent=5 // pred_fallthru
      _
    %p224 = scmp.lt.s32.totalorder %s13, 2
    // Predicated region
    $region37: #{bimamba_forward.4} parent=5 // pred_check
      %p225 = pneg %p224
    $region38: #{bimamba_forward.4} parent=5 // pred_check_branch
      %227 = sbr.rel (%p225) target = $region40
    $region39: #{bimamba_forward.4} parent=5 // pred_region
      // Predicated region
      $region41: #{bimamba_forward.4} parent=39 // pred_check
        %p228 = pneg %p33
      $region42: #{bimamba_forward.4} parent=39 // pred_check_branch
        %230 = sbr.rel (%p228) target = $region44
      $region43: #{bimamba_forward.4} parent=39 // pred_region
        %p231 = scmp.lt.s32.totalorder %s13, 1
        %s232 = scalar_select %p231, %s13, 1
        %s233 = smul.addr %s232, 2
        %s234 = smul.addr %s233, 8
        %s235 = scalar_lea.vmem %s0, %s234
      $region44: #{bimamba_forward.4} parent=39 // pred_fallthru
        _
    $region40: #{bimamba_forward.4} parent=5 // pred_fallthru
      _
    %p236 = scmp.le.s32.totalorder 1, %s13
    %p237 = scmp.lt.s32.totalorder %s13, 3
    %p238 = pnand %p236, %p237
    %p239 = pneg %p238
    // Predicated region
    $region45: #{bimamba_forward.4} parent=5 // pred_check
      _
    $region46: #{bimamba_forward.4} parent=5 // pred_check_branch
      %241 = sbr.rel (%p238) target = $region48
    $region47: #{bimamba_forward.4} parent=5 // pred_region
      %s242 = ssub.s32 %s13, 1
      %p243 = scmp.lt.s32.totalorder %s18, 1
      %s244 = scalar_select %p243, %s18, 1
      %s245 = smul.addr %s244, 2
      %s246 = smul.addr %s245, 8
      %s247 = scalar_lea.vmem %s0, %s246
      %p248 = pneg %p39
      %p249 = pneg %p36
      %p250 = pneg %p60
      %p251 = pneg %p57
      %p252 = pneg %p81
      %p253 = pneg %p78
      %p254 = pneg %p102
      %p255 = pneg %p99
      %p256 = pneg %p123
      %p257 = pneg %p120
      %p258 = pneg %p144
      %p259 = pneg %p141
      %p260 = pneg %p165
      %p261 = pneg %p162
      %p262 = pneg %p191
      %p263 = pneg %p188
      %p264 = scmp.lt.s32.totalorder %s18, 1
      %s265 = scalar_select %p264, %s18, 1
      %s266 = smul.addr %s265, 2
      %s267 = smul.addr %s266, 8
      %s268 = scalar_lea.vmem %s7, %s267
      %p269 = scmp.lt.s32.totalorder %s18, 1
      %s270 = scalar_select %p269, %s18, 1
      %s271 = smul.addr %s270, 2
      %s272 = smul.addr %s271, 8
      %s273 = scalar_lea.vmem %s0, %s272
      %p274 = scmp.lt.s32.totalorder %s18, 1
      %s275 = scalar_select %p274, %s18, 1
      %s276 = smul.addr %s275, 2
      %s277 = smul.addr %s276, 8
      %s278 = scalar_lea.vmem %s7, %s277
      %v280 = vld [vmem:[%s3] sm:$0xff]
      %v281 = vld [vmem:[%s3 + $0x8] sm:$0xff]
      %v282 = vld [vmem:[%s4] sm:$0xff]
      %v283 = vld [vmem:[%s4 + $0x8] sm:$0xff]
      %v284 = vld [vmem:[%s273] sm:$0xff]
      %v285 = vld [vmem:[%s273 + $0x8] sm:$0xff]
      %v286 = vpack.c.bf16 %v285, %v284
      %v287 = vld [vmem:[%s1] sm:$0xf]
      %v288 = vld [vmem:[%s1 + $0x4] sm:$0xf]
      %v289 = vld [vmem:[%s1 + $0x8] sm:$0xf]
      %v290 = vld [vmem:[%s1 + $0xc] sm:$0xf]
      %v295 = vunpack.c.l.b16 %v287
      %v296 = vunpack.c.l.b16 %v288
      %v297 = vunpack.c.l.b16 %v289
      %v298 = vunpack.c.l.b16 %v290
      %v299 = vpack.c.b16 %v296, %v295
      %v300 = vpack.c.b16 %v298, %v297
      %vm301 = vcmask 130048
      %v303 = vsel %vm301, %v299, 0
      %v306 = vsel %vm301, %v300, 0
      %308 = vmatprep.subr.bf16.mxu0 0
      %309 = vmatpush1.bf16.msra.mxu0 %v286
      %310 = vmatprep.subr.bf16.mxu0 0
      %311 = vmatpush1.bf16.msra.mxu0 0
      %312 = vmatprep.subr.bf16.mxu0 0
      %313 = vmatpush1.bf16.msra.mxu0 0
      %314 = vmatprep.subr.bf16.mxu0 0
      %315 = vmatpush1.bf16.msra.mxu0 0
      %316 = vmatprep.subr.bf16.mxu0 0
      %317 = vmatpush1.bf16.msra.mxu0 0
      %318 = vmatprep.subr.bf16.mxu0 0
      %319 = vmatpush1.bf16.msra.mxu0 0
      %320 = vmatprep.subr.bf16.mxu0 0
      %321 = vmatpush1.bf16.msra.mxu0 0
      %322 = vmatprep.subr.bf16.mxu0 0
      %323 = vmatpush1.bf16.msra.mxu0 0
      %324 = vmatprep.subr.bf16.mxu0 0
      %325 = vmatpush1.bf16.msra.mxu0 0
      %326 = vmatprep.subr.bf16.mxu0 0
      %327 = vmatpush1.bf16.msra.mxu0 0
      %328 = vmatprep.subr.bf16.mxu0 0
      %329 = vmatpush1.bf16.msra.mxu0 0
      %330 = vmatprep.subr.bf16.mxu0 0
      %331 = vmatpush1.bf16.msra.mxu0 0
      %332 = vmatprep.subr.bf16.mxu0 0
      %333 = vmatpush1.bf16.msra.mxu0 0
      %334 = vmatprep.subr.bf16.mxu0 0
      %335 = vmatpush1.bf16.msra.mxu0 0
      %336 = vmatprep.subr.bf16.mxu0 0
      %337 = vmatpush1.bf16.msra.mxu0 0
      %338 = vmatprep.subr.bf16.mxu0 0
      %339 = vmatpush1.bf16.msra.mxu0 0
      %340 = vmatprep.mubr.bf16.mxu0 0
      %341 = vmatmul.mubr.bf16.gmra.mrb[0].mxu0 %v303
      %v342 = vpop.f32.mrb[0].mxu0
      %v343 = vadd.f32 0.0, %v342
      %v344 = vpop.f32.mrb[0].mxu0
      %v345 = vpop.f32.mrb[0].mxu0
      %v346 = vadd.f32 0.0, %v345
      %v347 = vpop.f32.mrb[0].mxu0
      %348 = vmatprep.mubr.bf16.mxu0 0
      %349 = vmatmul.mubr.bf16.gmra.mrb[0].mxu0 %v306
      %v350 = vpop.f32.mrb[0].mxu0
      %v351 = vadd.f32 0.0, %v350
      %v352 = vpop.f32.mrb[0].mxu0
      %v353 = vpop.f32.mrb[0].mxu0
      %v354 = vadd.f32 0.0, %v353
      %v355 = vpop.f32.mrb[0].mxu0
      %356 = vdwg.mxu0
      %v357 = vmul.f32 %v343, %v280
      %v358 = vmul.f32 %v346, %v281
      %v359 = vmul.f32 %v351, %v282
      %v360 = vmul.f32 %v354, %v283
      %v361 = vsub.f32 %v357, %v359
      %v362 = vsub.f32 %v358, %v360
      %v363 = vmul.f32 %v343, %v282
      %v364 = vmul.f32 %v346, %v283
      %v365 = vmul.f32 %v351, %v280
      %v366 = vmul.f32 %v354, %v281
      %v367 = vadd.f32 %v363, %v365
      %v368 = vadd.f32 %v364, %v366
      %v369 = vld [vmem:[%s2] sm:$0xf]
      %v370 = vld [vmem:[%s2 + $0x4] sm:$0xf]
      %v371 = vpack.c.bf16 %v362, %v361
      %v372 = vpack.c.bf16 %v368, %v367
      %v375 = vunpack.c.l.b16 %v369
      %v376 = vunpack.c.l.b16 %v370
      %v377 = vpack.c.b16 %v376, %v375
      %vm378 = vcmask 261120
      %v380 = vsel %vm378, %v377, 0
      %382 = vmatprep.subr.bf16.mxu0 0
      %383 = vmatpush1.bf16.msra.mxu0 %v371
      %384 = vmatprep.subr.bf16.mxu0 0
      %385 = vmatpush1.bf16.msra.mxu0 %v372
      %386 = vmatprep.subr.bf16.mxu0 0
      %387 = vmatpush1.bf16.msra.mxu0 0
      %388 = vmatprep.subr.bf16.mxu0 0
      %389 = vmatpush1.bf16.msra.mxu0 0
      %390 = vmatprep.subr.bf16.mxu0 0
      %391 = vmatpush1.bf16.msra.mxu0 0
      %392 = vmatprep.subr.bf16.mxu0 0
      %393 = vmatpush1.bf16.msra.mxu0 0
      %394 = vmatprep.subr.bf16.mxu0 0
      %395 = vmatpush1.bf16.msra.mxu0 0
      %396 = vmatprep.subr.bf16.mxu0 0
      %397 = vmatpush1.bf16.msra.mxu0 0
      %398 = vmatprep.subr.bf16.mxu0 0
      %399 = vmatpush1.bf16.msra.mxu0 0
      %400 = vmatprep.subr.bf16.mxu0 0
      %401 = vmatpush1.bf16.msra.mxu0 0
      %402 = vmatprep.subr.bf16.mxu0 0
      %403 = vmatpush1.bf16.msra.mxu0 0
      %404 = vmatprep.subr.bf16.mxu0 0
      %405 = vmatpush1.bf16.msra.mxu0 0
      %406 = vmatprep.subr.bf16.mxu0 0
      %407 = vmatpush1.bf16.msra.mxu0 0
      %408 = vmatprep.subr.bf16.mxu0 0
      %409 = vmatpush1.bf16.msra.mxu0 0
      %410 = vmatprep.subr.bf16.mxu0 0
      %411 = vmatpush1.bf16.msra.mxu0 0
      %412 = vmatprep.subr.bf16.mxu0 0
      %413 = vmatpush1.bf16.msra.mxu0 0
      %414 = vmatprep.mubr.bf16.mxu0 0
      %415 = vmatmul.mubr.bf16.gmra.mrb[0].mxu0 %v380
      %v416 = vpop.f32.mrb[0].mxu0
      %v417 = vadd.f32 %v284, %v416
      %v418 = vpop.f32.mrb[0].mxu0
      %v419 = vpop.f32.mrb[0].mxu0
      %v420 = vadd.f32 %v285, %v419
      %v421 = vpop.f32.mrb[0].mxu0
      %422 = vdwg.mxu0
      %v423 = vld [vmem:[%s5] sm:$0x1]
      %v424 = vld [vmem:[%s6] sm:$0x1]
      %v425 = vsel %vm378, %v417, 0.0
      %426 = vadd.xlane.f32.xlu0 %v425
      %v427 = vpop.xlane.xlu0 %426
      %v428 = vsel %vm378, %v420, 0.0
      %429 = vadd.xlane.f32.xlu0 %v428
      %v430 = vpop.xlane.xlu0 %429
      %v431 = vrcp.pop 32.0
      %v432 = vmul.f32 %v427, %v431
      %v433 = vmul.f32 %v430, %v431
      %v434 = vsub.f32 %v417, %v432
      %v435 = vsub.f32 %v420, %v433
      %v436 = vmul.f32 %v434, %v434
      %v437 = vmul.f32 %v435, %v435
      %v438 = vsel %vm378, %v436, 0.0
      %439 = vadd.xlane.f32.xlu0 %v438
      %v440 = vpop.xlane.xlu0 %439
      %v441 = vsel %vm378, %v437, 0.0
      %442 = vadd.xlane.f32.xlu0 %v441
      %v443 = vpop.xlane.xlu0 %442
      %v444 = vmul.f32 %v440, %v431
      %v445 = vmul.f32 %v443, %v431
      %v446 = vadd.f32 %v444, 1e-12
      %v447 = vadd.f32 %v445, 1e-12
      %v448 = vrsqrt.pop %v446
      %v449 = vrsqrt.pop %v447
      %v450 = vmul.f32 %v434, %v448
      %v451 = vmul.f32 %v435, %v449
      %v453 = vlaneseq
      %v454 = vshrl.u32 %v453, 7
      %v455 = vsub.s32 0, %v454
      %v456 = vrot.slane %v423, %v455
      %v458 = vmul.f32 %v450, %v456
      %v459 = vmul.f32 %v451, %v456
      %v461 = vlaneseq
      %v462 = vshrl.u32 %v461, 7
      %v463 = vsub.s32 0, %v462
      %v464 = vrot.slane %v424, %v463
      %v466 = vadd.f32 %v458, %v464
      %v467 = vadd.f32 %v459, %v464
      %468 = vst.msk [vmem:[%s278] sm:$0xff] %vm378, %v466
      %469 = vst.msk [vmem:[%s278 + $0x8] sm:$0xff] %vm378, %v467
      %p470 = scmp.lt.s32.totalorder %s18, 1
      %s471 = scalar_select %p470, %s18, 1
      %s472 = smul.addr %s471, 2
      %s473 = smul.addr %s472, 8
      %s474 = scalar_lea.vmem %s7, %s473
      // Predicated region
      $region49: #{bimamba_forward.4} parent=47 // pred_check
        %p475 = pneg %p188
      $region50: #{bimamba_forward.4} parent=47 // pred_check_branch
        %477 = sbr.rel (%p475) target = $region52
      $region51: #{bimamba_forward.4} parent=47 // pred_region
        _
      $region52: #{bimamba_forward.4} parent=47 // pred_fallthru
        _
    $region48: #{bimamba_forward.4} parent=5 // pred_fallthru
      _
    %p478 = scmp.le.s32.totalorder 2, %s13
    // Predicated region
    $region53: #{bimamba_forward.4} parent=5 // pred_check
      %p479 = pneg %p478
    $region54: #{bimamba_forward.4} parent=5 // pred_check_branch
      %481 = sbr.rel (%p479) target = $region56
    $region55: #{bimamba_forward.4} parent=5 // pred_region
      %s482 = ssub.s32 %s13, 2
      // Predicated region
      $region57: #{bimamba_forward.4} parent=55 // pred_check
        %p483 = pneg %p194
      $region58: #{bimamba_forward.4} parent=55 // pred_check_branch
        %485 = sbr.rel (%p483) target = $region60
      $region59: #{bimamba_forward.4} parent=55 // pred_region
        %p486 = scmp.lt.s32.totalorder %s19, 1
        %s487 = scalar_select %p486, %s19, 1
        %s488 = smul.addr %s487, 2
        %s489 = smul.addr %s488, 8
        %s490 = scalar_lea.vmem %s7, %s489
      $region60: #{bimamba_forward.4} parent=55 // pred_fallthru
        _
    $region56: #{bimamba_forward.4} parent=5 // pred_fallthru
      _
  $region6: #{bimamba_forward.4} parent=0 // loop_footer
    %s17 = sadd.s32 1, %s13
  $region7: #{bimamba_forward.4} parent=0 // loop_footer_branch
    %12 = sbr.rel target = $region3
  $region8: #{bimamba_forward.4} parent=0 // loop_exit
    _

// kernel: bimamba_forward.7
$region0: #{bimamba_forward.7}
  #allocation0 [shape = 'u32[]', space=smem, size = 0x4, offset = 0x4, fixed_abs, tag = 'smem constant byte address 0x4 - core index']
  #allocation1 [shape = 'u32[144,128]{1,0:T(1,128)}', space=vmem, size = 0x12000, scoped, tag = 'internal scratch']
  %s0 = inlined_call_operand.vmem [shape: f32[2,16,32], index: 0, kind: input, shape index: {}]
  %s1 = inlined_call_operand.vmem [shape: bf16[32,64], index: 1, kind: input, shape index: {}]
  %s2 = inlined_call_operand.vmem [shape: f32[1,64], index: 2, kind: input, shape index: {}]
  %s3 = inlined_call_operand.vmem [shape: bf16[32,32], index: 3, kind: input, shape index: {}]
  %s4 = inlined_call_operand.vmem [shape: f32[1,32], index: 4, kind: input, shape index: {}]
  %s5 = inlined_call_operand.vmem [shape: f32[1,32], index: 5, kind: input, shape index: {}]
  %s6 = inlined_call_operand.vmem [shape: f32[1,32], index: 6, kind: input, shape index: {}]
  %s7 = inlined_call_operand.hbm [shape: f32[2,16,32], index: 7, kind: output, shape index: {}]
  %s8 = sld [smem:[#allocation0]]
  $region61: #{bimamba_forward.7} parent=0
    _
  %s10 = ssub.s32 1, %s8
  %s11 = scalar_select 0, %s10, %s8
  $region1: #{bimamba_forward.7} parent=0
    #allocation2 [shape = 'u8[16384]{0}', space=vmem, size = 0x4000, scoped, tag = 'output window, operand 0']
    #allocation3 [shape = 's32[2]{0}', space=sflag, size = 0x8, scoped, tag = 'scoped memory for bimamba_forward.7']
    %12 = vsyncpa [#allocation3], 0
    %s13 = scalar_lea.sflag [#allocation3], 1
    %14 = vsyncpa %s13, 0
    loop: start=0, step=1, limit=4
    $region2: #{bimamba_forward.7} parent=1 // loop_pre_header
      _
    $region3: #{bimamba_forward.7} parent=1 // loop_header
      %s16 = sphi 0, %s20
      %p17 = scmp.ge.s32.totalorder %s16, 4
      %s26 = sphi 0, %s28
      %s29 = sphi 0, %s26
      %s30 = sphi 0, %s29
      %s46 = sphi 0, %s30
      %s50 = sphi 0, %s50
      %s52 = sphi 0, %s50
      %s53 = sphi 0, %s52
      %s67 = sphi 0, %s53
      %s71 = sphi 0, %s71
      %s73 = sphi 0, %s71
      %s74 = sphi 0, %s73
      %s88 = sphi 0, %s74
      %s92 = sphi 0, %s92
      %s94 = sphi 0, %s92
      %s95 = sphi 0, %s94
      %s109 = sphi 0, %s95
      %s113 = sphi 0, %s113
      %s115 = sphi 0, %s113
      %s116 = sphi 0, %s115
      %s130 = sphi 0, %s116
      %s134 = sphi 0, %s134
      %s136 = sphi 0, %s134
      %s137 = sphi 0, %s136
      %s151 = sphi 0, %s137
      %s155 = sphi 0, %s155
      %s157 = sphi 0, %s155
      %s158 = sphi 0, %s157
      %s172 = sphi 0, %s158
      %s178 = sphi 0, %s180
      %s181 = sphi 0, %s178
      %s182 = sphi 0, %s181
      %s198 = sphi 0, %s182
    $region4: #{bimamba_forward.7} parent=1 // loop_header_branch
      %19 = sbr.rel (%p17) target = $region8
    $region5: #{bimamba_forward.7} parent=1 // loop_body
      %s21 = ssub.s32 %s16, 1
      %s22 = ssub.s32 %s16, 2
      %s23 = sadd.s32 %s16, 1
      %s24 = ssub.s32 %s16, %s23
      %p25 = scmp.eq.s32.totalorder %s24, 0
      %s27 = sadd.s32 %s26, 1
      %s28 = scalar_select %p25, %s26, %s27
      %p31 = pneg %p25
      %p32 = scmp.eq.s32.totalorder %s16, 1
      %p33 = por %p31, %p32
      %p34 = scmp.ne.s32.totalorder %s26, %s29
      %p35 = scmp.eq.s32.totalorder %s16, 0
      %p36 = por %p34, %p35
      %p37 = scmp.ne.s32.totalorder %s26, %s29
      %p38 = scmp.eq.s32.totalorder %s21, 1
      %p39 = por %p37, %p38
      %p40 = scmp.ne.s32.totalorder %s29, %s30
      %p41 = scmp.eq.s32.totalorder %s21, 0
      %p42 = por %p40, %p41
      %p43 = scmp.ne.s32.totalorder %s29, %s30
      %p44 = scmp.eq.s32.totalorder %s22, 1
      %p45 = por %p43, %p44
      %p47 = scmp.ne.s32.totalorder %s30, %s46
      %p48 = scmp.eq.s32.totalorder %s22, 0
      %p49 = por %p47, %p48
      %s51 = sadd.s32 %s50, 1
      %p54 = scmp.eq.s32.totalorder %s16, 1
      %p55 = scmp.ne.s32.totalorder %s50, %s52
      %p56 = scmp.eq.s32.totalorder %s16, 0
      %p57 = por %p55, %p56
      %p58 = scmp.ne.s32.totalorder %s50, %s52
      %p59 = scmp.eq.s32.totalorder %s21, 1
      %p60 = por %p58, %p59
      %p61 = scmp.ne.s32.totalorder %s52, %s53
      %p62 = scmp.eq.s32.totalorder %s21, 0
      %p63 = por %p61, %p62
      %p64 = scmp.ne.s32.totalorder %s52, %s53
      %p65 = scmp.eq.s32.totalorder %s22, 1
      %p66 = por %p64, %p65
      %p68 = scmp.ne.s32.totalorder %s53, %s67
      %p69 = scmp.eq.s32.totalorder %s22, 0
      %p70 = por %p68, %p69
      %s72 = sadd.s32 %s71, 1
      %p75 = scmp.eq.s32.totalorder %s16, 1
      %p76 = scmp.ne.s32.totalorder %s71, %s73
      %p77 = scmp.eq.s32.totalorder %s16, 0
      %p78 = por %p76, %p77
      %p79 = scmp.ne.s32.totalorder %s71, %s73
      %p80 = scmp.eq.s32.totalorder %s21, 1
      %p81 = por %p79, %p80
      %p82 = scmp.ne.s32.totalorder %s73, %s74
      %p83 = scmp.eq.s32.totalorder %s21, 0
      %p84 = por %p82, %p83
      %p85 = scmp.ne.s32.totalorder %s73, %s74
      %p86 = scmp.eq.s32.totalorder %s22, 1
      %p87 = por %p85, %p86
      %p89 = scmp.ne.s32.totalorder %s74, %s88
      %p90 = scmp.eq.s32.totalorder %s22, 0
      %p91 = por %p89, %p90
      %s93 = sadd.s32 %s92, 1
      %p96 = scmp.eq.s32.totalorder %s16, 1
      %p97 = scmp.ne.s32.totalorder %s92, %s94
      %p98 = scmp.eq.s32.totalorder %s16, 0
      %p99 = por %p97, %p98
      %p100 = scmp.ne.s32.totalorder %s92, %s94
      %p101 = scmp.eq.s32.totalorder %s21, 1
      %p102 = por %p100, %p101
      %p103 = scmp.ne.s32.totalorder %s94, %s95
      %p104 = scmp.eq.s32.totalorder %s21, 0
      %p105 = por %p103, %p104
      %p106 = scmp.ne.s32.totalorder %s94, %s95
      %p107 = scmp.eq.s32.totalorder %s22, 1
      %p108 = por %p106, %p107
      %p110 = scmp.ne.s32.totalorder %s95, %s109
      %p111 = scmp.eq.s32.totalorder %s22, 0
      %p112 = por %p110, %p111
      %s114 = sadd.s32 %s113, 1
      %p117 = scmp.eq.s32.totalorder %s16, 1
      %p118 = scmp.ne.s32.totalorder %s113, %s115
      %p119 = scmp.eq.s32.totalorder %s16, 0
      %p120 = por %p118, %p119
      %p121 = scmp.ne.s32.totalorder %s113, %s115
      %p122 = scmp.eq.s32.totalorder %s21, 1
      %p123 = por %p121, %p122
      %p124 = scmp.ne.s32.totalorder %s115, %s116
      %p125 = scmp.eq.s32.totalorder %s21, 0
      %p126 = por %p124, %p125
      %p127 = scmp.ne.s32.totalorder %s115, %s116
      %p128 = scmp.eq.s32.totalorder %s22, 1
      %p129 = por %p127, %p128
      %p131 = scmp.ne.s32.totalorder %s116, %s130
      %p132 = scmp.eq.s32.totalorder %s22, 0
      %p133 = por %p131, %p132
      %s135 = sadd.s32 %s134, 1
      %p138 = scmp.eq.s32.totalorder %s16, 1
      %p139 = scmp.ne.s32.totalorder %s134, %s136
      %p140 = scmp.eq.s32.totalorder %s16, 0
      %p141 = por %p139, %p140
      %p142 = scmp.ne.s32.totalorder %s134, %s136
      %p143 = scmp.eq.s32.totalorder %s21, 1
      %p144 = por %p142, %p143
      %p145 = scmp.ne.s32.totalorder %s136, %s137
      %p146 = scmp.eq.s32.totalorder %s21, 0
      %p147 = por %p145, %p146
      %p148 = scmp.ne.s32.totalorder %s136, %s137
      %p149 = scmp.eq.s32.totalorder %s22, 1
      %p150 = por %p148, %p149
      %p152 = scmp.ne.s32.totalorder %s137, %s151
      %p153 = scmp.eq.s32.totalorder %s22, 0
      %p154 = por %p152, %p153
      %s156 = sadd.s32 %s155, 1
      %p159 = scmp.eq.s32.totalorder %s16, 1
      %p160 = scmp.ne.s32.totalorder %s155, %s157
      %p161 = scmp.eq.s32.totalorder %s16, 0
      %p162 = por %p160, %p161
      %p163 = scmp.ne.s32.totalorder %s155, %s157
      %p164 = scmp.eq.s32.totalorder %s21, 1
      %p165 = por %p163, %p164
      %p166 = scmp.ne.s32.totalorder %s157, %s158
      %p167 = scmp.eq.s32.totalorder %s21, 0
      %p168 = por %p166, %p167
      %p169 = scmp.ne.s32.totalorder %s157, %s158
      %p170 = scmp.eq.s32.totalorder %s22, 1
      %p171 = por %p169, %p170
      %p173 = scmp.ne.s32.totalorder %s158, %s172
      %p174 = scmp.eq.s32.totalorder %s22, 0
      %p175 = por %p173, %p174
      %s176 = ssub.s32 %s16, %s23
      %p177 = scmp.eq.s32.totalorder %s176, 0
      %s179 = sadd.s32 %s178, 1
      %s180 = scalar_select %p177, %s178, %s179
      %p183 = pneg %p177
      %p184 = scmp.eq.s32.totalorder %s16, 1
      %p185 = por %p183, %p184
      %p186 = scmp.ne.s32.totalorder %s178, %s181
      %p187 = scmp.eq.s32.totalorder %s16, 0
      %p188 = por %p186, %p187
      %p189 = scmp.ne.s32.totalorder %s178, %s181
      %p190 = scmp.eq.s32.totalorder %s21, 1
      %p191 = por %p189, %p190
      %p192 = scmp.ne.s32.totalorder %s181, %s182
      %p193 = scmp.eq.s32.totalorder %s21, 0
      %p194 = por %p192, %p193
      %p195 = scmp.ne.s32.totalorder %s181, %s182
      %p196 = scmp.eq.s32.totalorder %s22, 1
      %p197 = por %p195, %p196
      %p199 = scmp.ne.s32.totalorder %s182, %s198
      %p200 = scmp.eq.s32.totalorder %s22, 0
      %p201 = por %p199, %p200
      %p202 = scmp.le.s32.totalorder 1, %s16
      %p203 = scmp.lt.s32.totalorder %s16, 3
      %p204 = pnand %p202, %p203
      %p205 = pneg %p204
      // Predicated region
      $region9: #{bimamba_forward.7} parent=5 // pred_check
        _
      $region10: #{bimamba_forward.7} parent=5 // pred_check_branch
        %207 = sbr.rel (%p204) target = $region12
      $region11: #{bimamba_forward.7} parent=5 // pred_region
        %s208 = ssub.s32 %s16, 1
        // Predicated region
        $region13: #{bimamba_forward.7} parent=11 // pred_check
          %p209 = pneg %p63
        $region14: #{bimamba_forward.7} parent=11 // pred_check_branch
          %211 = sbr.rel (%p209) target = $region16
        $region15: #{bimamba_forward.7} parent=11 // pred_region
          _
        $region16: #{bimamba_forward.7} parent=11 // pred_fallthru
          _
        // Predicated region
        $region17: #{bimamba_forward.7} parent=11 // pred_check
          %p212 = pneg %p84
        $region18: #{bimamba_forward.7} parent=11 // pred_check_branch
          %214 = sbr.rel (%p212) target = $region20
        $region19: #{bimamba_forward.7} parent=11 // pred_region
          _
        $region20: #{bimamba_forward.7} parent=11 // pred_fallthru
          _
        // Predicated region
        $region21: #{bimamba_forward.7} parent=11 // pred_check
          %p215 = pneg %p105
        $region22: #{bimamba_forward.7} parent=11 // pred_check_branch
          %217 = sbr.rel (%p215) target = $region24
        $region23: #{bimamba_forward.7} parent=11 // pred_region
          _
        $region24: #{bimamba_forward.7} parent=11 // pred_fallthru
          _
        // Predicated region
        $region25: #{bimamba_forward.7} parent=11 // pred_check
          %p218 = pneg %p126
        $region26: #{bimamba_forward.7} parent=11 // pred_check_branch
          %220 = sbr.rel (%p218) target = $region28
        $region27: #{bimamba_forward.7} parent=11 // pred_region
          _
        $region28: #{bimamba_forward.7} parent=11 // pred_fallthru
          _
        // Predicated region
        $region29: #{bimamba_forward.7} parent=11 // pred_check
          %p221 = pneg %p147
        $region30: #{bimamba_forward.7} parent=11 // pred_check_branch
          %223 = sbr.rel (%p221) target = $region32
        $region31: #{bimamba_forward.7} parent=11 // pred_region
          _
        $region32: #{bimamba_forward.7} parent=11 // pred_fallthru
          _
        // Predicated region
        $region33: #{bimamba_forward.7} parent=11 // pred_check
          %p224 = pneg %p168
        $region34: #{bimamba_forward.7} parent=11 // pred_check_branch
          %226 = sbr.rel (%p224) target = $region36
        $region35: #{bimamba_forward.7} parent=11 // pred_region
          _
        $region36: #{bimamba_forward.7} parent=11 // pred_fallthru
          _
      $region12: #{bimamba_forward.7} parent=5 // pred_fallthru
        _
      %p227 = scmp.lt.s32.totalorder %s16, 2
      // Predicated region
      $region37: #{bimamba_forward.7} parent=5 // pred_check
        %p228 = pneg %p227
      $region38: #{bimamba_forward.7} parent=5 // pred_check_branch
        %230 = sbr.rel (%p228) target = $region40
      $region39: #{bimamba_forward.7} parent=5 // pred_region
        // Predicated region
        $region41: #{bimamba_forward.7} parent=39 // pred_check
          %p231 = pneg %p36
        $region42: #{bimamba_forward.7} parent=39 // pred_check_branch
          %233 = sbr.rel (%p231) target = $region44
        $region43: #{bimamba_forward.7} parent=39 // pred_region
          %p234 = scmp.lt.s32.totalorder %s16, 1
          %s235 = scalar_select %p234, %s16, 1
          %s236 = smul.addr %s235, 2
          %s237 = smul.addr %s236, 8
          %s238 = scalar_lea.vmem %s0, %s237
        $region44: #{bimamba_forward.7} parent=39 // pred_fallthru
          _
      $region40: #{bimamba_forward.7} parent=5 // pred_fallthru
        _
      %p239 = scmp.le.s32.totalorder 1, %s16
      %p240 = scmp.lt.s32.totalorder %s16, 3
      %p241 = pnand %p239, %p240
      %p242 = pneg %p241
      // Predicated region
      $region45: #{bimamba_forward.7} parent=5 // pred_check
        _
      $region46: #{bimamba_forward.7} parent=5 // pred_check_branch
        %244 = sbr.rel (%p241) target = $region48
      $region47: #{bimamba_forward.7} parent=5 // pred_region
        %s245 = ssub.s32 %s16, 1
        %p246 = scmp.lt.s32.totalorder %s21, 1
        %s247 = scalar_select %p246, %s21, 1
        %s248 = smul.addr %s247, 2
        %s249 = smul.addr %s248, 8
        %s250 = scalar_lea.vmem %s0, %s249
        %p251 = pneg %p42
        %p252 = pneg %p39
        %p253 = pneg %p63
        %p254 = pneg %p60
        %p255 = pneg %p84
        %p256 = pneg %p81
        %p257 = pneg %p105
        %p258 = pneg %p102
        %p259 = pneg %p126
        %p260 = pneg %p123
        %p261 = pneg %p147
        %p262 = pneg %p144
        %p263 = pneg %p168
        %p264 = pneg %p165
        %p265 = pneg %p194
        %p266 = pneg %p191
        %s267 = sand.u32 %s181, 1
        %s268 = scalar_lea.sflag [#allocation3], %s267
        %s269 = sand.u32 %s181, 1
        %s270 = smul.addr %s269, 16
        %s271 = scalar_lea.vmem [#allocation2], %s270
        %p272 = scmp.lt.s32.totalorder %s21, 1
        %s273 = scalar_select %p272, %s21, 1
        %s274 = smul.addr %s273, 2
        %s275 = smul.addr %s274, 8
        %s276 = scalar_lea.vmem %s0, %s275
        %v278 = vld [vmem:[%s276] sm:$0xff]
        %v279 = vld [vmem:[%s276 + $0x8] sm:$0xff]
        %v280 = vpack.c.bf16 %v279, %v278
        %v281 = vld [vmem:[%s1] sm:$0xf]
        %v282 = vld [vmem:[%s1 + $0x4] sm:$0xf]
        %v283 = vld [vmem:[%s1 + $0x8] sm:$0xf]
        %v284 = vld [vmem:[%s1 + $0xc] sm:$0xf]
        %v285 = vld [vmem:[%s2] sm:$0x1]
        %v287 = vlaneseq
        %v288 = vshrl.u32 %v287, 7
        %v289 = vsub.s32 0, %v288
        %v290 = vrot.slane %v285, %v289
        %v296 = vunpack.c.l.b16 %v281
        %v297 = vunpack.c.l.b16 %v282
        %v298 = vunpack.c.l.b16 %v283
        %v299 = vunpack.c.l.b16 %v284
        %v300 = vpack.c.b16 %v297, %v296
        %v301 = vpack.c.b16 %v299, %v298
        %vm304 = vcmask 261120
        %v306 = vsel %vm304, %v280, 0
        %308 = vmatprep.subr.bf16.mxu0 0
        %309 = vmatpush1.bf16.msra.mxu0 %v300
        %310 = vmatprep.subr.bf16.mxu0 0
        %311 = vmatpush1.bf16.msra.mxu0 %v301
        %312 = vmatprep.subr.bf16.mxu0 0
        %313 = vmatpush1.bf16.msra.mxu0 0
        %314 = vmatprep.subr.bf16.mxu0 0
        %315 = vmatpush1.bf16.msra.mxu0 0
        %316 = vmatprep.subr.bf16.mxu0 0
        %317 = vmatpush1.bf16.msra.mxu0 0
        %318 = vmatprep.subr.bf16.mxu0 0
        %319 = vmatpush1.bf16.msra.mxu0 0
        %320 = vmatprep.subr.bf16.mxu0 0
        %321 = vmatpush1.bf16.msra.mxu0 0
        %322 = vmatprep.subr.bf16.mxu0 0
        %323 = vmatpush1.bf16.msra.mxu0 0
        %324 = vmatprep.subr.bf16.mxu0 0
        %325 = vmatpush1.bf16.msra.mxu0 0
        %326 = vmatprep.subr.bf16.mxu0 0
        %327 = vmatpush1.bf16.msra.mxu0 0
        %328 = vmatprep.subr.bf16.mxu0 0
        %329 = vmatpush1.bf16.msra.mxu0 0
        %330 = vmatprep.subr.bf16.mxu0 0
        %331 = vmatpush1.bf16.msra.mxu0 0
        %332 = vmatprep.subr.bf16.mxu0 0
        %333 = vmatpush1.bf16.msra.mxu0 0
        %334 = vmatprep.subr.bf16.mxu0 0
        %335 = vmatpush1.bf16.msra.mxu0 0
        %336 = vmatprep.subr.bf16.mxu0 0
        %337 = vmatpush1.bf16.msra.mxu0 0
        %338 = vmatprep.subr.bf16.mxu0 0
        %339 = vmatpush1.bf16.msra.mxu0 0
        %340 = vmatprep.mubr.bf16.mxu0 0
        %341 = vmatmul.mubr.bf16.gmra.mrb[0].mxu0 %v306
        %v342 = vpop.f32.mrb[0].mxu0
        %v343 = vadd.f32 %v290, %v342
        %v344 = vpop.f32.mrb[0].mxu0
        %v345 = vpop.f32.mrb[0].mxu0
        %v346 = vadd.f32 %v290, %v345
        %v347 = vpop.f32.mrb[0].mxu0
        %348 = vdwg.mxu0
        %v349 = vsub.f32 0.0, %v343
        %v350 = vsub.f32 0.0, %v346
        %v351 = vmul.f32 %v349, 1.442695
        %v352 = vpow.pop %v351
        %v353 = vmul.f32 %v350, 1.442695
        %v354 = vpow.pop %v353
        %v355 = vadd.f32 %v352, 1.0
        %v356 = vadd.f32 %v354, 1.0
        %v357 = vrcp.pop %v355
        %v358 = vrcp.pop %v356
        %361 = vrot.lane.b32.xlu0 %v357, 96
        %v362 = vpop.permute.xlu0 %361
        %363 = vrot.lane.b32.xlu0 %v358, 96
        %v364 = vpop.permute.xlu0 %363
        %v367 = vmul.f32 %v343, %v362
        %v368 = vmul.f32 %v346, %v364
        %v369 = vpack.c.bf16 %v368, %v367
        %v370 = vld [vmem:[%s3] sm:$0xf]
        %v371 = vld [vmem:[%s3 + $0x4] sm:$0xf]
        %v372 = vld [vmem:[%s3 + $0x8] sm:$0xf]
        %v373 = vld [vmem:[%s3 + $0xc] sm:$0xf]
        %v374 = vld [vmem:[%s4] sm:$0x1]
        %v376 = vlaneseq
        %v377 = vshrl.u32 %v376, 7
        %v378 = vsub.s32 0, %v377
        %v379 = vrot.slane %v374, %v378
        %v385 = vunpack.c.l.b16 %v370
        %v386 = vunpack.c.l.b16 %v371
        %v387 = vunpack.c.l.b16 %v372
        %v388 = vunpack.c.l.b16 %v373
        %v389 = vpack.c.b16 %v386, %v385
        %v390 = vpack.c.b16 %v388, %v387
        %v394 = vsel %vm304, %v369, 0
        %396 = vmatprep.subr.bf16.mxu0 0
        %397 = vmatpush1.bf16.msra.mxu0 %v389
        %398 = vmatprep.subr.bf16.mxu0 0
        %399 = vmatpush1.bf16.msra.mxu0 %v390
        %400 = vmatprep.subr.bf16.mxu0 0
        %401 = vmatpush1.bf16.msra.mxu0 0
        %402 = vmatprep.subr.bf16.mxu0 0
        %403 = vmatpush1.bf16.msra.mxu0 0
        %404 = vmatprep.subr.bf16.mxu0 0
        %405 = vmatpush1.bf16.msra.mxu0 0
        %406 = vmatprep.subr.bf16.mxu0 0
        %407 = vmatpush1.bf16.msra.mxu0 0
        %408 = vmatprep.subr.bf16.mxu0 0
        %409 = vmatpush1.bf16.msra.mxu0 0
        %410 = vmatprep.subr.bf16.mxu0 0
        %411 = vmatpush1.bf16.msra.mxu0 0
        %412 = vmatprep.subr.bf16.mxu0 0
        %413 = vmatpush1.bf16.msra.mxu0 0
        %414 = vmatprep.subr.bf16.mxu0 0
        %415 = vmatpush1.bf16.msra.mxu0 0
        %416 = vmatprep.subr.bf16.mxu0 0
        %417 = vmatpush1.bf16.msra.mxu0 0
        %418 = vmatprep.subr.bf16.mxu0 0
        %419 = vmatpush1.bf16.msra.mxu0 0
        %420 = vmatprep.subr.bf16.mxu0 0
        %421 = vmatpush1.bf16.msra.mxu0 0
        %422 = vmatprep.subr.bf16.mxu0 0
        %423 = vmatpush1.bf16.msra.mxu0 0
        %424 = vmatprep.subr.bf16.mxu0 0
        %425 = vmatpush1.bf16.msra.mxu0 0
        %426 = vmatprep.subr.bf16.mxu0 0
        %427 = vmatpush1.bf16.msra.mxu0 0
        %428 = vmatprep.mubr.bf16.mxu0 0
        %429 = vmatmul.mubr.bf16.gmra.mrb[0].mxu0 %v394
        %v430 = vpop.f32.mrb[0].mxu0
        %v431 = vadd.f32 %v379, %v430
        %v432 = vpop.f32.mrb[0].mxu0
        %v433 = vpop.f32.mrb[0].mxu0
        %v434 = vadd.f32 %v379, %v433
        %v435 = vpop.f32.mrb[0].mxu0
        %436 = vdwg.mxu0
        %v437 = vadd.f32 %v431, %v278
        %v438 = vadd.f32 %v434, %v279
        %v439 = vld [vmem:[%s5] sm:$0x1]
        %v440 = vld [vmem:[%s6] sm:$0x1]
        %v441 = vsel %vm304, %v437, 0.0
        %442 = vadd.xlane.f32.xlu0 %v441
        %v443 = vpop.xlane.xlu0 %442
        %v444 = vsel %vm304, %v438, 0.0
        %445 = vadd.xlane.f32.xlu0 %v444
        %v446 = vpop.xlane.xlu0 %445
        %v447 = vrcp.pop 32.0
        %v448 = vmul.f32 %v443, %v447
        %v449 = vmul.f32 %v446, %v447
        %v450 = vsub.f32 %v437, %v448
        %v451 = vsub.f32 %v438, %v449
        %v452 = vmul.f32 %v450, %v450
        %v453 = vmul.f32 %v451, %v451
        %v454 = vsel %vm304, %v452, 0.0
        %455 = vadd.xlane.f32.xlu0 %v454
        %v456 = vpop.xlane.xlu0 %455
        %v457 = vsel %vm304, %v453, 0.0
        %458 = vadd.xlane.f32.xlu0 %v457
        %v459 = vpop.xlane.xlu0 %458
        %v460 = vmul.f32 %v456, %v447
        %v461 = vmul.f32 %v459, %v447
        %v462 = vadd.f32 %v460, 1e-12
        %v463 = vadd.f32 %v461, 1e-12
        %v464 = vrsqrt.pop %v462
        %v465 = vrsqrt.pop %v463
        %v466 = vmul.f32 %v450, %v464
        %v467 = vmul.f32 %v451, %v465
        %v469 = vlaneseq
        %v470 = vshrl.u32 %v469, 7
        %v471 = vsub.s32 0, %v470
        %v472 = vrot.slane %v439, %v471
        %v474 = vmul.f32 %v466, %v472
        %v475 = vmul.f32 %v467, %v472
        %v477 = vlaneseq
        %v478 = vshrl.u32 %v477, 7
        %v479 = vsub.s32 0, %v478
        %v480 = vrot.slane %v440, %v479
        %v482 = vadd.f32 %v474, %v480
        %v483 = vadd.f32 %v475, %v480
        %484 = vst.msk [vmem:[%s271] sm:$0xff] %vm304, %v482
        %485 = vst.msk [vmem:[%s271 + $0x8] sm:$0xff] %vm304, %v483
        %s486 = sand.u32 %s181, 1
        %s487 = scalar_lea.sflag [#allocation3], %s486
        %s488 = sand.u32 %s181, 1
        %s489 = smul.addr %s488, 16
        %s490 = scalar_lea.vmem [#allocation2], %s489
        // Predicated region
        $region49: #{bimamba_forward.7} parent=47 // pred_check
          %p491 = pneg %p191
        $region50: #{bimamba_forward.7} parent=47 // pred_check_branch
          %493 = sbr.rel (%p491) target = $region52
        $region51: #{bimamba_forward.7} parent=47 // pred_region
          %s495 = ssub.s32 256, 256
          %496 = vsyncadd %s487, %s495
          %s497 = smul.addr %s21, 2
          %s498 = smul.addr %s497, 128
          %s499 = scalar_lea.hbm %s7, %s498
          %s500 = sshll.u32 %s490, 4
          %s501 = int_to_ptr.vmem [resolvable:$true] %s500
          %506 = dma.vmem_to_hbm [thread:$0]  %s501, 256, %s499, %s487, 128, 128, 8
        $region52: #{bimamba_forward.7} parent=47 // pred_fallthru
          _
      $region48: #{bimamba_forward.7} parent=5 // pred_fallthru
        _
      %p507 = scmp.le.s32.totalorder 2, %s16
      // Predicated region
      $region53: #{bimamba_forward.7} parent=5 // pred_check
        %p508 = pneg %p507
      $region54: #{bimamba_forward.7} parent=5 // pred_check_branch
        %510 = sbr.rel (%p508) target = $region56
      $region55: #{bimamba_forward.7} parent=5 // pred_region
        %s511 = ssub.s32 %s16, 2
        // Predicated region
        $region57: #{bimamba_forward.7} parent=55 // pred_check
          %p512 = pneg %p197
        $region58: #{bimamba_forward.7} parent=55 // pred_check_branch
          %514 = sbr.rel (%p512) target = $region60
        $region59: #{bimamba_forward.7} parent=55 // pred_region
          %s515 = sand.u32 %s182, 1
          %s516 = scalar_lea.sflag [#allocation3], %s515
          %s517 = sand.u32 %s182, 1
          %s518 = smul.addr %s517, 16
          %s519 = scalar_lea.vmem [#allocation2], %s518
          %520 = dma.done %s516, 256
        $region60: #{bimamba_forward.7} parent=55 // pred_fallthru
          _
      $region56: #{bimamba_forward.7} parent=5 // pred_fallthru
        _
    $region6: #{bimamba_forward.7} parent=1 // loop_footer
      %s20 = sadd.s32 1, %s16
    $region7: #{bimamba_forward.7} parent=1 // loop_footer_branch
      %15 = sbr.rel target = $region3
    $region8: #{bimamba_forward.7} parent=1 // loop_exit
      _
    %521 = vsyncpa [#allocation3], 1
    %s522 = scalar_lea.sflag [#allocation3], 1
    %523 = vsyncpa %s522, 1

// kernel: bimamba_forward.5
$region0: #{bimamba_forward.5}
  #allocation0 [shape = 'u32[]', space=smem, size = 0x4, offset = 0x4, fixed_abs, tag = 'smem constant byte address 0x4 - core index']
  #allocation1 [shape = 'u32[144,128]{1,0:T(1,128)}', space=vmem, size = 0x12000, scoped, tag = 'internal scratch']
  #allocation2 [shape = 'f32[1,32,64]{2,1,0:T(8,128)}', space=vmem, size = 0x4000, scoped, tag = 'scratch operand']
  #allocation3 [shape = 'f32[1,16,64]{2,1,0:T(8,128)}', space=vmem, size = 0x2000, scoped, tag = 'scratch operand']
  #allocation4 [shape = 'f32[1,16,64]{2,1,0:T(8,128)}', space=vmem, size = 0x2000, scoped, tag = 'scratch operand']
  #allocation5 [shape = 'f32[1,16,16]{2,1,0:T(8,128)}', space=vmem, size = 0x2000, scoped, tag = 'scratch operand']
  #allocation6 [shape = 'f32[1,16,64]{2,1,0:T(8,128)}', space=vmem, size = 0x2000, scoped, tag = 'scratch operand']
  %s0 = inlined_call_operand.vmem [shape: f32[2,16,32], index: 0, kind: input, shape index: {}]
  %s1 = inlined_call_operand.vmem [shape: bf16[32,128], index: 1, kind: input, shape index: {}]
  %s2 = inlined_call_operand.vmem [shape: f32[4,64], index: 2, kind: input, shape index: {}]
  %s3 = inlined_call_operand.vmem [shape: f32[1,64], index: 3, kind: input, shape index: {}]
  %s4 = inlined_call_operand.vmem [shape: bf16[64,80], index: 4, kind: input, shape index: {}]
  %s5 = inlined_call_operand.vmem [shape: f32[1,64], index: 5, kind: input, shape index: {}]
  %s6 = inlined_call_operand.vmem [shape: f32[8,64], index: 6, kind: input, shape index: {}]
  %s7 = inlined_call_operand.vmem [shape: f32[1,64], index: 7, kind: input, shape index: {}]
  %s8 = inlined_call_operand.vmem [shape: bf16[64,32], index: 8, kind: input, shape index: {}]
  %s9 = inlined_call_operand.vmem [shape: bf16[32,128], index: 9, kind: input, shape index: {}]
  %s10 = inlined_call_operand.vmem [shape: f32[4,64], index: 10, kind: input, shape index: {}]
  %s11 = inlined_call_operand.vmem [shape: f32[1,64], index: 11, kind: input, shape index: {}]
  %s12 = inlined_call_operand.vmem [shape: bf16[64,80], index: 12, kind: input, shape index: {}]
  %s13 = inlined_call_operand.vmem [shape: f32[1,64], index: 13, kind: input, shape index: {}]
  %s14 = inlined_call_operand.vmem [shape: f32[8,64], index: 14, kind: input, shape index: {}]
  %s15 = inlined_call_operand.vmem [shape: f32[1,64], index: 15, kind: input, shape index: {}]
  %s16 = inlined_call_operand.vmem [shape: bf16[64,32], index: 16, kind: input, shape index: {}]
  %s17 = inlined_call_operand.vmem [shape: f32[1,32], index: 17, kind: input, shape index: {}]
  %s18 = inlined_call_operand.vmem [shape: f32[1,32], index: 18, kind: input, shape index: {}]
  %s19 = inlined_call_operand.vmem [shape: f32[1,32], index: 19, kind: input, shape index: {}]
  %s20 = inlined_call_operand.vmem [shape: f32[1,32], index: 20, kind: input, shape index: {}]
  %s21 = inlined_call_operand.vmem [shape: f32[2,16,32], index: 21, kind: output, shape index: {}]
  %s22 = sld [smem:[#allocation0]]
  $region131: #{bimamba_forward.5} parent=0
    _
  %s24 = ssub.s32 1, %s22
  %s25 = scalar_select 0, %s24, %s22
  loop: start=0, step=1, limit=4
  $region2: #{bimamba_forward.5} parent=0 // loop_pre_header
    _
  $region3: #{bimamba_forward.5} parent=0 // loop_header
    %s27 = sphi 0, %s31
    %p28 = scmp.ge.s32.totalorder %s27, 4
    %s37 = sphi 0, %s39
    %s40 = sphi 0, %s37
    %s41 = sphi 0, %s40
    %s57 = sphi 0, %s41
    %s61 = sphi 0, %s61
    %s63 = sphi 0, %s61
    %s64 = sphi 0, %s63
    %s78 = sphi 0, %s64
    %s82 = sphi 0, %s82
    %s84 = sphi 0, %s82
    %s85 = sphi 0, %s84
    %s99 = sphi 0, %s85
    %s103 = sphi 0, %s103
    %s105 = sphi 0, %s103
    %s106 = sphi 0, %s105
    %s120 = sphi 0, %s106
    %s124 = sphi 0, %s124
    %s126 = sphi 0, %s124
    %s127 = sphi 0, %s126
    %s141 = sphi 0, %s127
    %s145 = sphi 0, %s145
    %s147 = sphi 0, %s145
    %s148 = sphi 0, %s147
    %s162 = sphi 0, %s148
    %s166 = sphi 0, %s166
    %s168 = sphi 0, %s166
    %s169 = sphi 0, %s168
    %s183 = sphi 0, %s169
    %s187 = sphi 0, %s187
    %s189 = sphi 0, %s187
    %s190 = sphi 0, %s189
    %s204 = sphi 0, %s190
    %s208 = sphi 0, %s208
    %s210 = sphi 0, %s208
    %s211 = sphi 0, %s210
    %s225 = sphi 0, %s211
    %s229 = sphi 0, %s229
    %s231 = sphi 0, %s229
    %s232 = sphi 0, %s231
    %s246 = sphi 0, %s232
    %s250 = sphi 0, %s250
    %s252 = sphi 0, %s250
    %s253 = sphi 0, %s252
    %s267 = sphi 0, %s253
    %s271 = sphi 0, %s271
    %s273 = sphi 0, %s271
    %s274 = sphi 0, %s273
    %s288 = sphi 0, %s274
    %s292 = sphi 0, %s292
    %s294 = sphi 0, %s292
    %s295 = sphi 0, %s294
    %s309 = sphi 0, %s295
    %s313 = sphi 0, %s313
    %s315 = sphi 0, %s313
    %s316 = sphi 0, %s315
    %s330 = sphi 0, %s316
    %s334 = sphi 0, %s334
    %s336 = sphi 0, %s334
    %s337 = sphi 0, %s336
    %s351 = sphi 0, %s337
    %s355 = sphi 0, %s355
    %s357 = sphi 0, %s355
    %s358 = sphi 0, %s357
    %s372 = sphi 0, %s358
    %s376 = sphi 0, %s376
    %s378 = sphi 0, %s376
    %s379 = sphi 0, %s378
    %s393 = sphi 0, %s379
    %s397 = sphi 0, %s397
    %s399 = sphi 0, %s397
    %s400 = sphi 0, %s399
    %s414 = sphi 0, %s400
    %s418 = sphi 0, %s418
    %s420 = sphi 0, %s418
    %s421 = sphi 0, %s420
    %s435 = sphi 0, %s421
    %s439 = sphi 0, %s439
    %s441 = sphi 0, %s439
    %s442 = sphi 0, %s441
    %s456 = sphi 0, %s442
    %s460 = sphi 0, %s460
    %s462 = sphi 0, %s460
    %s463 = sphi 0, %s462
    %s477 = sphi 0, %s463
    %s483 = sphi 0, %s485
    %s486 = sphi 0, %s483
    %s487 = sphi 0, %s486
    %s503 = sphi 0, %s487
  $region4: #{bimamba_forward.5} parent=0 // loop_header_branch
    %30 = sbr.rel (%p28) target = $region8
  $region5: #{bimamba_forward.5} parent=0 // loop_body
    %s32 = ssub.s32 %s27, 1
    %s33 = ssub.s32 %s27, 2
    %s34 = sadd.s32 %s27, 1
    %s35 = ssub.s32 %s27, %s34
    %p36 = scmp.eq.s32.totalorder %s35, 0
    %s38 = sadd.s32 %s37, 1
    %s39 = scalar_select %p36, %s37, %s38
    %p42 = pneg %p36
    %p43 = scmp.eq.s32.totalorder %s27, 1
    %p44 = por %p42, %p43
    %p45 = scmp.ne.s32.totalorder %s37, %s40
    %p46 = scmp.eq.s32.totalorder %s27, 0
    %p47 = por %p45, %p46
    %p48 = scmp.ne.s32.totalorder %s37, %s40
    %p49 = scmp.eq.s32.totalorder %s32, 1
    %p50 = por %p48, %p49
    %p51 = scmp.ne.s32.totalorder %s40, %s41
    %p52 = scmp.eq.s32.totalorder %s32, 0
    %p53 = por %p51, %p52
    %p54 = scmp.ne.s32.totalorder %s40, %s41
    %p55 = scmp.eq.s32.totalorder %s33, 1
    %p56 = por %p54, %p55
    %p58 = scmp.ne.s32.totalorder %s41, %s57
    %p59 = scmp.eq.s32.totalorder %s33, 0
    %p60 = por %p58, %p59
    %s62 = sadd.s32 %s61, 1
    %p65 = scmp.eq.s32.totalorder %s27, 1
    %p66 = scmp.ne.s32.totalorder %s61, %s63
    %p67 = scmp.eq.s32.totalorder %s27, 0
    %p68 = por %p66, %p67
    %p69 = scmp.ne.s32.totalorder %s61, %s63
    %p70 = scmp.eq.s32.totalorder %s32, 1
    %p71 = por %p69, %p70
    %p72 = scmp.ne.s32.totalorder %s63, %s64
    %p73 = scmp.eq.s32.totalorder %s32, 0
    %p74 = por %p72, %p73
    %p75 = scmp.ne.s32.totalorder %s63, %s64
    %p76 = scmp.eq.s32.totalorder %s33, 1
    %p77 = por %p75, %p76
    %p79 = scmp.ne.s32.totalorder %s64, %s78
    %p80 = scmp.eq.s32.totalorder %s33, 0
    %p81 = por %p79, %p80
    %s83 = sadd.s32 %s82, 1
    %p86 = scmp.eq.s32.totalorder %s27, 1
    %p87 = scmp.ne.s32.totalorder %s82, %s84
    %p88 = scmp.eq.s32.totalorder %s27, 0
    %p89 = por %p87, %p88
    %p90 = scmp.ne.s32.totalorder %s82, %s84
    %p91 = scmp.eq.s32.totalorder %s32, 1
    %p92 = por %p90, %p91
    %p93 = scmp.ne.s32.totalorder %s84, %s85
    %p94 = scmp.eq.s32.totalorder %s32, 0
    %p95 = por %p93, %p94
    %p96 = scmp.ne.s32.totalorder %s84, %s85
    %p97 = scmp.eq.s32.totalorder %s33, 1
    %p98 = por %p96, %p97
    %p100 = scmp.ne.s32.totalorder %s85, %s99
    %p101 = scmp.eq.s32.totalorder %s33, 0
    %p102 = por %p100, %p101
    %s104 = sadd.s32 %s103, 1
    %p107 = scmp.eq.s32.totalorder %s27, 1
    %p108 = scmp.ne.s32.totalorder %s103, %s105
    %p109 = scmp.eq.s32.totalorder %s27, 0
    %p110 = por %p108, %p109
    %p111 = scmp.ne.s32.totalorder %s103, %s105
    %p112 = scmp.eq.s32.totalorder %s32, 1
    %p113 = por %p111, %p112
    %p114 = scmp.ne.s32.totalorder %s105, %s106
    %p115 = scmp.eq.s32.totalorder %s32, 0
    %p116 = por %p114, %p115
    %p117 = scmp.ne.s32.totalorder %s105, %s106
    %p118 = scmp.eq.s32.totalorder %s33, 1
    %p119 = por %p117, %p118
    %p121 = scmp.ne.s32.totalorder %s106, %s120
    %p122 = scmp.eq.s32.totalorder %s33, 0
    %p123 = por %p121, %p122
    %s125 = sadd.s32 %s124, 1
    %p128 = scmp.eq.s32.totalorder %s27, 1
    %p129 = scmp.ne.s32.totalorder %s124, %s126
    %p130 = scmp.eq.s32.totalorder %s27, 0
    %p131 = por %p129, %p130
    %p132 = scmp.ne.s32.totalorder %s124, %s126
    %p133 = scmp.eq.s32.totalorder %s32, 1
    %p134 = por %p132, %p133
    %p135 = scmp.ne.s32.totalorder %s126, %s127
    %p136 = scmp.eq.s32.totalorder %s32, 0
    %p137 = por %p135, %p136
    %p138 = scmp.ne.s32.totalorder %s126, %s127
    %p139 = scmp.eq.s32.totalorder %s33, 1
    %p140 = por %p138, %p139
    %p142 = scmp.ne.s32.totalorder %s127, %s141
    %p143 = scmp.eq.s32.totalorder %s33, 0
    %p144 = por %p142, %p143
    %s146 = sadd.s32 %s145, 1
    %p149 = scmp.eq.s32.totalorder %s27, 1
    %p150 = scmp.ne.s32.totalorder %s145, %s147
    %p151 = scmp.eq.s32.totalorder %s27, 0
    %p152 = por %p150, %p151
    %p153 = scmp.ne.s32.totalorder %s145, %s147
    %p154 = scmp.eq.s32.totalorder %s32, 1
    %p155 = por %p153, %p154
    %p156 = scmp.ne.s32.totalorder %s147, %s148
    %p157 = scmp.eq.s32.totalorder %s32, 0
    %p158 = por %p156, %p157
    %p159 = scmp.ne.s32.totalorder %s147, %s148
    %p160 = scmp.eq.s32.totalorder %s33, 1
    %p161 = por %p159, %p160
    %p163 = scmp.ne.s32.totalorder %s148, %s162
    %p164 = scmp.eq.s32.totalorder %s33, 0
    %p165 = por %p163, %p164
    %s167 = sadd.s32 %s166, 1
    %p170 = scmp.eq.s32.totalorder %s27, 1
    %p171 = scmp.ne.s32.totalorder %s166, %s168
    %p172 = scmp.eq.s32.totalorder %s27, 0
    %p173 = por %p171, %p172
    %p174 = scmp.ne.s32.totalorder %s166, %s168
    %p175 = scmp.eq.s32.totalorder %s32, 1
    %p176 = por %p174, %p175
    %p177 = scmp.ne.s32.totalorder %s168, %s169
    %p178 = scmp.eq.s32.totalorder %s32, 0
    %p179 = por %p177, %p178
    %p180 = scmp.ne.s32.totalorder %s168, %s169
    %p181 = scmp.eq.s32.totalorder %s33, 1
    %p182 = por %p180, %p181
    %p184 = scmp.ne.s32.totalorder %s169, %s183
    %p185 = scmp.eq.s32.totalorder %s33, 0
    %p186 = por %p184, %p185
    %s188 = sadd.s32 %s187, 1
    %p191 = scmp.eq.s32.totalorder %s27, 1
    %p192 = scmp.ne.s32.totalorder %s187, %s189
    %p193 = scmp.eq.s32.totalorder %s27, 0
    %p194 = por %p192, %p193
    %p195 = scmp.ne.s32.totalorder %s187, %s189
    %p196 = scmp.eq.s32.totalorder %s32, 1
    %p197 = por %p195, %p196
    %p198 = scmp.ne.s32.totalorder %s189, %s190
    %p199 = scmp.eq.s32.totalorder %s32, 0
    %p200 = por %p198, %p199
    %p201 = scmp.ne.s32.totalorder %s189, %s190
    %p202 = scmp.eq.s32.totalorder %s33, 1
    %p203 = por %p201, %p202
    %p205 = scmp.ne.s32.totalorder %s190, %s204
    %p206 = scmp.eq.s32.totalorder %s33, 0
    %p207 = por %p205, %p206
    %s209 = sadd.s32 %s208, 1
    %p212 = scmp.eq.s32.totalorder %s27, 1
    %p213 = scmp.ne.s32.totalorder %s208, %s210
    %p214 = scmp.eq.s32.totalorder %s27, 0
    %p215 = por %p213, %p214
    %p216 = scmp.ne.s32.totalorder %s208, %s210
    %p217 = scmp.eq.s32.totalorder %s32, 1
    %p218 = por %p216, %p217
    %p219 = scmp.ne.s32.totalorder %s210, %s211
    %p220 = scmp.eq.s32.totalorder %s32, 0
    %p221 = por %p219, %p220
    %p222 = scmp.ne.s32.totalorder %s210, %s211
    %p223 = scmp.eq.s32.totalorder %s33, 1
    %p224 = por %p222, %p223
    %p226 = scmp.ne.s32.totalorder %s211, %s225
    %p227 = scmp.eq.s32.totalorder %s33, 0
    %p228 = por %p226, %p227
    %s230 = sadd.s32 %s229, 1
    %p233 = scmp.eq.s32.totalorder %s27, 1
    %p234 = scmp.ne.s32.totalorder %s229, %s231
    %p235 = scmp.eq.s32.totalorder %s27, 0
    %p236 = por %p234, %p235
    %p237 = scmp.ne.s32.totalorder %s229, %s231
    %p238 = scmp.eq.s32.totalorder %s32, 1
    %p239 = por %p237, %p238
    %p240 = scmp.ne.s32.totalorder %s231, %s232
    %p241 = scmp.eq.s32.totalorder %s32, 0
    %p242 = por %p240, %p241
    %p243 = scmp.ne.s32.totalorder %s231, %s232
    %p244 = scmp.eq.s32.totalorder %s33, 1
    %p245 = por %p243, %p244
    %p247 = scmp.ne.s32.totalorder %s232, %s246
    %p248 = scmp.eq.s32.totalorder %s33, 0
    %p249 = por %p247, %p248
    %s251 = sadd.s32 %s250, 1
    %p254 = scmp.eq.s32.totalorder %s27, 1
    %p255 = scmp.ne.s32.totalorder %s250, %s252
    %p256 = scmp.eq.s32.totalorder %s27, 0
    %p257 = por %p255, %p256
    %p258 = scmp.ne.s32.totalorder %s250, %s252
    %p259 = scmp.eq.s32.totalorder %s32, 1
    %p260 = por %p258, %p259
    %p261 = scmp.ne.s32.totalorder %s252, %s253
    %p262 = scmp.eq.s32.totalorder %s32, 0
    %p263 = por %p261, %p262
    %p264 = scmp.ne.s32.totalorder %s252, %s253
    %p265 = scmp.eq.s32.totalorder %s33, 1
    %p266 = por %p264, %p265
    %p268 = scmp.ne.s32.totalorder %s253, %s267
    %p269 = scmp.eq.s32.totalorder %s33, 0
    %p270 = por %p268, %p269
    %s272 = sadd.s32 %s271, 1
    %p275 = scmp.eq.s32.totalorder %s27, 1
    %p276 = scmp.ne.s32.totalorder %s271, %s273
    %p277 = scmp.eq.s32.totalorder %s27, 0
    %p278 = por %p276, %p277
    %p279 = scmp.ne.s32.totalorder %s271, %s273
    %p280 = scmp.eq.s32.totalorder %s32, 1
    %p281 = por %p279, %p280
    %p282 = scmp.ne.s32.totalorder %s273, %s274
    %p283 = scmp.eq.s32.totalorder %s32, 0
    %p284 = por %p282, %p283
    %p285 = scmp.ne.s32.totalorder %s273, %s274
    %p286 = scmp.eq.s32.totalorder %s33, 1
    %p287 = por %p285, %p286
    %p289 = scmp.ne.s32.totalorder %s274, %s288
    %p290 = scmp.eq.s32.totalorder %s33, 0
    %p291 = por %p289, %p290
    %s293 = sadd.s32 %s292, 1
    %p296 = scmp.eq.s32.totalorder %s27, 1
    %p297 = scmp.ne.s32.totalorder %s292, %s294
    %p298 = scmp.eq.s32.totalorder %s27, 0
    %p299 = por %p297, %p298
    %p300 = scmp.ne.s32.totalorder %s292, %s294
    %p301 = scmp.eq.s32.totalorder %s32, 1
    %p302 = por %p300, %p301
    %p303 = scmp.ne.s32.totalorder %s294, %s295
    %p304 = scmp.eq.s32.totalorder %s32, 0
    %p305 = por %p303, %p304
    %p306 = scmp.ne.s32.totalorder %s294, %s295
    %p307 = scmp.eq.s32.totalorder %s33, 1
    %p308 = por %p306, %p307
    %p310 = scmp.ne.s32.totalorder %s295, %s309
    %p311 = scmp.eq.s32.totalorder %s33, 0
    %p312 = por %p310, %p311
    %s314 = sadd.s32 %s313, 1
    %p317 = scmp.eq.s32.totalorder %s27, 1
    %p318 = scmp.ne.s32.totalorder %s313, %s315
    %p319 = scmp.eq.s32.totalorder %s27, 0
    %p320 = por %p318, %p319
    %p321 = scmp.ne.s32.totalorder %s313, %s315
    %p322 = scmp.eq.s32.totalorder %s32, 1
    %p323 = por %p321, %p322
    %p324 = scmp.ne.s32.totalorder %s315, %s316
    %p325 = scmp.eq.s32.totalorder %s32, 0
    %p326 = por %p324, %p325
    %p327 = scmp.ne.s32.totalorder %s315, %s316
    %p328 = scmp.eq.s32.totalorder %s33, 1
    %p329 = por %p327, %p328
    %p331 = scmp.ne.s32.totalorder %s316, %s330
    %p332 = scmp.eq.s32.totalorder %s33, 0
    %p333 = por %p331, %p332
    %s335 = sadd.s32 %s334, 1
    %p338 = scmp.eq.s32.totalorder %s27, 1
    %p339 = scmp.ne.s32.totalorder %s334, %s336
    %p340 = scmp.eq.s32.totalorder %s27, 0
    %p341 = por %p339, %p340
    %p342 = scmp.ne.s32.totalorder %s334, %s336
    %p343 = scmp.eq.s32.totalorder %s32, 1
    %p344 = por %p342, %p343
    %p345 = scmp.ne.s32.totalorder %s336, %s337
    %p346 = scmp.eq.s32.totalorder %s32, 0
    %p347 = por %p345, %p346
    %p348 = scmp.ne.s32.totalorder %s336, %s337
    %p349 = scmp.eq.s32.totalorder %s33, 1
    %p350 = por %p348, %p349
    %p352 = scmp.ne.s32.totalorder %s337, %s351
    %p353 = scmp.eq.s32.totalorder %s33, 0
    %p354 = por %p352, %p353
    %s356 = sadd.s32 %s355, 1
    %p359 = scmp.eq.s32.totalorder %s27, 1
    %p360 = scmp.ne.s32.totalorder %s355, %s357
    %p361 = scmp.eq.s32.totalorder %s27, 0
    %p362 = por %p360, %p361
    %p363 = scmp.ne.s32.totalorder %s355, %s357
    %p364 = scmp.eq.s32.totalorder %s32, 1
    %p365 = por %p363, %p364
    %p366 = scmp.ne.s32.totalorder %s357, %s358
    %p367 = scmp.eq.s32.totalorder %s32, 0
    %p368 = por %p366, %p367
    %p369 = scmp.ne.s32.totalorder %s357, %s358
    %p370 = scmp.eq.s32.totalorder %s33, 1
    %p371 = por %p369, %p370
    %p373 = scmp.ne.s32.totalorder %s358, %s372
    %p374 = scmp.eq.s32.totalorder %s33, 0
    %p375 = por %p373, %p374
    %s377 = sadd.s32 %s376, 1
    %p380 = scmp.eq.s32.totalorder %s27, 1
    %p381 = scmp.ne.s32.totalorder %s376, %s378
    %p382 = scmp.eq.s32.totalorder %s27, 0
    %p383 = por %p381, %p382
    %p384 = scmp.ne.s32.totalorder %s376, %s378
    %p385 = scmp.eq.s32.totalorder %s32, 1
    %p386 = por %p384, %p385
    %p387 = scmp.ne.s32.totalorder %s378, %s379
    %p388 = scmp.eq.s32.totalorder %s32, 0
    %p389 = por %p387, %p388
    %p390 = scmp.ne.s32.totalorder %s378, %s379
    %p391 = scmp.eq.s32.totalorder %s33, 1
    %p392 = por %p390, %p391
    %p394 = scmp.ne.s32.totalorder %s379, %s393
    %p395 = scmp.eq.s32.totalorder %s33, 0
    %p396 = por %p394, %p395
    %s398 = sadd.s32 %s397, 1
    %p401 = scmp.eq.s32.totalorder %s27, 1
    %p402 = scmp.ne.s32.totalorder %s397, %s399
    %p403 = scmp.eq.s32.totalorder %s27, 0
    %p404 = por %p402, %p403
    %p405 = scmp.ne.s32.totalorder %s397, %s399
    %p406 = scmp.eq.s32.totalorder %s32, 1
    %p407 = por %p405, %p406
    %p408 = scmp.ne.s32.totalorder %s399, %s400
    %p409 = scmp.eq.s32.totalorder %s32, 0
    %p410 = por %p408, %p409
    %p411 = scmp.ne.s32.totalorder %s399, %s400
    %p412 = scmp.eq.s32.totalorder %s33, 1
    %p413 = por %p411, %p412
    %p415 = scmp.ne.s32.totalorder %s400, %s414
    %p416 = scmp.eq.s32.totalorder %s33, 0
    %p417 = por %p415, %p416
    %s419 = sadd.s32 %s418, 1
    %p422 = scmp.eq.s32.totalorder %s27, 1
    %p423 = scmp.ne.s32.totalorder %s418, %s420
    %p424 = scmp.eq.s32.totalorder %s27, 0
    %p425 = por %p423, %p424
    %p426 = scmp.ne.s32.totalorder %s418, %s420
    %p427 = scmp.eq.s32.totalorder %s32, 1
    %p428 = por %p426, %p427
    %p429 = scmp.ne.s32.totalorder %s420, %s421
    %p430 = scmp.eq.s32.totalorder %s32, 0
    %p431 = por %p429, %p430
    %p432 = scmp.ne.s32.totalorder %s420, %s421
    %p433 = scmp.eq.s32.totalorder %s33, 1
    %p434 = por %p432, %p433
    %p436 = scmp.ne.s32.totalorder %s421, %s435
    %p437 = scmp.eq.s32.totalorder %s33, 0
    %p438 = por %p436, %p437
    %s440 = sadd.s32 %s439, 1
    %p443 = scmp.eq.s32.totalorder %s27, 1
    %p444 = scmp.ne.s32.totalorder %s439, %s441
    %p445 = scmp.eq.s32.totalorder %s27, 0
    %p446 = por %p444, %p445
    %p447 = scmp.ne.s32.totalorder %s439, %s441
    %p448 = scmp.eq.s32.totalorder %s32, 1
    %p449 = por %p447, %p448
    %p450 = scmp.ne.s32.totalorder %s441, %s442
    %p451 = scmp.eq.s32.totalorder %s32, 0
    %p452 = por %p450, %p451
    %p453 = scmp.ne.s32.totalorder %s441, %s442
    %p454 = scmp.eq.s32.totalorder %s33, 1
    %p455 = por %p453, %p454
    %p457 = scmp.ne.s32.totalorder %s442, %s456
    %p458 = scmp.eq.s32.totalorder %s33, 0
    %p459 = por %p457, %p458
    %s461 = sadd.s32 %s460, 1
    %p464 = scmp.eq.s32.totalorder %s27, 1
    %p465 = scmp.ne.s32.totalorder %s460, %s462
    %p466 = scmp.eq.s32.totalorder %s27, 0
    %p467 = por %p465, %p466
    %p468 = scmp.ne.s32.totalorder %s460, %s462
    %p469 = scmp.eq.s32.totalorder %s32, 1
    %p470 = por %p468, %p469
    %p471 = scmp.ne.s32.totalorder %s462, %s463
    %p472 = scmp.eq.s32.totalorder %s32, 0
    %p473 = por %p471, %p472
    %p474 = scmp.ne.s32.totalorder %s462, %s463
    %p475 = scmp.eq.s32.totalorder %s33, 1
    %p476 = por %p474, %p475
    %p478 = scmp.ne.s32.totalorder %s463, %s477
    %p479 = scmp.eq.s32.totalorder %s33, 0
    %p480 = por %p478, %p479
    %s481 = ssub.s32 %s27, %s34
    %p482 = scmp.eq.s32.totalorder %s481, 0
    %s484 = sadd.s32 %s483, 1
    %s485 = scalar_select %p482, %s483, %s484
    %p488 = pneg %p482
    %p489 = scmp.eq.s32.totalorder %s27, 1
    %p490 = por %p488, %p489
    %p491 = scmp.ne.s32.totalorder %s483, %s486
    %p492 = scmp.eq.s32.totalorder %s27, 0
    %p493 = por %p491, %p492
    %p494 = scmp.ne.s32.totalorder %s483, %s486
    %p495 = scmp.eq.s32.totalorder %s32, 1
    %p496 = por %p494, %p495
    %p497 = scmp.ne.s32.totalorder %s486, %s487
    %p498 = scmp.eq.s32.totalorder %s32, 0
    %p499 = por %p497, %p498
    %p500 = scmp.ne.s32.totalorder %s486, %s487
    %p501 = scmp.eq.s32.totalorder %s33, 1
    %p502 = por %p500, %p501
    %p504 = scmp.ne.s32.totalorder %s487, %s503
    %p505 = scmp.eq.s32.totalorder %s33, 0
    %p506 = por %p504, %p505
    %p507 = scmp.le.s32.totalorder 1, %s27
    %p508 = scmp.lt.s32.totalorder %s27, 3
    %p509 = pnand %p507, %p508
    %p510 = pneg %p509
    // Predicated region
    $region9: #{bimamba_forward.5} parent=5 // pred_check
      _
    $region10: #{bimamba_forward.5} parent=5 // pred_check_branch
      %512 = sbr.rel (%p509) target = $region12
    $region11: #{bimamba_forward.5} parent=5 // pred_region
      %s513 = ssub.s32 %s27, 1
      // Predicated region
      $region13: #{bimamba_forward.5} parent=11 // pred_check
        %p514 = pneg %p74
      $region14: #{bimamba_forward.5} parent=11 // pred_check_branch
        %516 = sbr.rel (%p514) target = $region16
      $region15: #{bimamba_forward.5} parent=11 // pred_region
        _
      $region16: #{bimamba_forward.5} parent=11 // pred_fallthru
        _
      // Predicated region
      $region17: #{bimamba_forward.5} parent=11 // pred_check
        %p517 = pneg %p95
      $region18: #{bimamba_forward.5} parent=11 // pred_check_branch
        %519 = sbr.rel (%p517) target = $region20
      $region19: #{bimamba_forward.5} parent=11 // pred_region
        _
      $region20: #{bimamba_forward.5} parent=11 // pred_fallthru
        _
      // Predicated region
      $region21: #{bimamba_forward.5} parent=11 // pred_check
        %p520 = pneg %p116
      $region22: #{bimamba_forward.5} parent=11 // pred_check_branch
        %522 = sbr.rel (%p520) target = $region24
      $region23: #{bimamba_forward.5} parent=11 // pred_region
        _
      $region24: #{bimamba_forward.5} parent=11 // pred_fallthru
        _
      // Predicated region
      $region25: #{bimamba_forward.5} parent=11 // pred_check
        %p523 = pneg %p137
      $region26: #{bimamba_forward.5} parent=11 // pred_check_branch
        %525 = sbr.rel (%p523) target = $region28
      $region27: #{bimamba_forward.5} parent=11 // pred_region
        _
      $region28: #{bimamba_forward.5} parent=11 // pred_fallthru
        _
      // Predicated region
      $region29: #{bimamba_forward.5} parent=11 // pred_check
        %p526 = pneg %p158
      $region30: #{bimamba_forward.5} parent=11 // pred_check_branch
        %528 = sbr.rel (%p526) target = $region32
      $region31: #{bimamba_forward.5} parent=11 // pred_region
        _
      $region32: #{bimamba_forward.5} parent=11 // pred_fallthru
        _
      // Predicated region
      $region33: #{bimamba_forward.5} parent=11 // pred_check
        %p529 = pneg %p179
      $region34: #{bimamba_forward.5} parent=11 // pred_check_branch
        %531 = sbr.rel (%p529) target = $region36
      $region35: #{bimamba_forward.5} parent=11 // pred_region
        _
      $region36: #{bimamba_forward.5} parent=11 // pred_fallthru
        _
      // Predicated region
      $region37: #{bimamba_forward.5} parent=11 // pred_check
        %p532 = pneg %p200
      $region38: #{bimamba_forward.5} parent=11 // pred_check_branch
        %534 = sbr.rel (%p532) target = $region40
      $region39: #{bimamba_forward.5} parent=11 // pred_region
        _
      $region40: #{bimamba_forward.5} parent=11 // pred_fallthru
        _
      // Predicated region
      $region41: #{bimamba_forward.5} parent=11 // pred_check
        %p535 = pneg %p221
      $region42: #{bimamba_forward.5} parent=11 // pred_check_branch
        %537 = sbr.rel (%p535) target = $region44
      $region43: #{bimamba_forward.5} parent=11 // pred_region
        _
      $region44: #{bimamba_forward.5} parent=11 // pred_fallthru
        _
      // Predicated region
      $region45: #{bimamba_forward.5} parent=11 // pred_check
        %p538 = pneg %p242
      $region46: #{bimamba_forward.5} parent=11 // pred_check_branch
        %540 = sbr.rel (%p538) target = $region48
      $region47: #{bimamba_forward.5} parent=11 // pred_region
        _
      $region48: #{bimamba_forward.5} parent=11 // pred_fallthru
        _
      // Predicated region
      $region49: #{bimamba_forward.5} parent=11 // pred_check
        %p541 = pneg %p263
      $region50: #{bimamba_forward.5} parent=11 // pred_check_branch
        %543 = sbr.rel (%p541) target = $region52
      $region51: #{bimamba_forward.5} parent=11 // pred_region
        _
      $region52: #{bimamba_forward.5} parent=11 // pred_fallthru
        _
      // Predicated region
      $region53: #{bimamba_forward.5} parent=11 // pred_check
        %p544 = pneg %p284
      $region54: #{bimamba_forward.5} parent=11 // pred_check_branch
        %546 = sbr.rel (%p544) target = $region56
      $region55: #{bimamba_forward.5} parent=11 // pred_region
        _
      $region56: #{bimamba_forward.5} parent=11 // pred_fallthru
        _
      // Predicated region
      $region57: #{bimamba_forward.5} parent=11 // pred_check
        %p547 = pneg %p305
      $region58: #{bimamba_forward.5} parent=11 // pred_check_branch
        %549 = sbr.rel (%p547) target = $region60
      $region59: #{bimamba_forward.5} parent=11 // pred_region
        _
      $region60: #{bimamba_forward.5} parent=11 // pred_fallthru
        _
      // Predicated region
      $region61: #{bimamba_forward.5} parent=11 // pred_check
        %p550 = pneg %p326
      $region62: #{bimamba_forward.5} parent=11 // pred_check_branch
        %552 = sbr.rel (%p550) target = $region64
      $region63: #{bimamba_forward.5} parent=11 // pred_region
        _
      $region64: #{bimamba_forward.5} parent=11 // pred_fallthru
        _
      // Predicated region
      $region65: #{bimamba_forward.5} parent=11 // pred_check
        %p553 = pneg %p347
      $region66: #{bimamba_forward.5} parent=11 // pred_check_branch
        %555 = sbr.rel (%p553) target = $region68
      $region67: #{bimamba_forward.5} parent=11 // pred_region
        _
      $region68: #{bimamba_forward.5} parent=11 // pred_fallthru
        _
      // Predicated region
      $region69: #{bimamba_forward.5} parent=11 // pred_check
        %p556 = pneg %p368
      $region70: #{bimamba_forward.5} parent=11 // pred_check_branch
        %558 = sbr.rel (%p556) target = $region72
      $region71: #{bimamba_forward.5} parent=11 // pred_region
        _
      $region72: #{bimamba_forward.5} parent=11 // pred_fallthru
        _
      // Predicated region
      $region73: #{bimamba_forward.5} parent=11 // pred_check
        %p559 = pneg %p389
      $region74: #{bimamba_forward.5} parent=11 // pred_check_branch
        %561 = sbr.rel (%p559) target = $region76
      $region75: #{bimamba_forward.5} parent=11 // pred_region
        _
      $region76: #{bimamba_forward.5} parent=11 // pred_fallthru
        _
      // Predicated region
      $region77: #{bimamba_forward.5} parent=11 // pred_check
        %p562 = pneg %p410
      $region78: #{bimamba_forward.5} parent=11 // pred_check_branch
        %564 = sbr.rel (%p562) target = $region80
      $region79: #{bimamba_forward.5} parent=11 // pred_region
        _
      $region80: #{bimamba_forward.5} parent=11 // pred_fallthru
        _
      // Predicated region
      $region81: #{bimamba_forward.5} parent=11 // pred_check
        %p565 = pneg %p431
      $region82: #{bimamba_forward.5} parent=11 // pred_check_branch
        %567 = sbr.rel (%p565) target = $region84
      $region83: #{bimamba_forward.5} parent=11 // pred_region
        _
      $region84: #{bimamba_forward.5} parent=11 // pred_fallthru
        _
      // Predicated region
      $region85: #{bimamba_forward.5} parent=11 // pred_check
        %p568 = pneg %p452
      $region86: #{bimamba_forward.5} parent=11 // pred_check_branch
        %570 = sbr.rel (%p568) target = $region88
      $region87: #{bimamba_forward.5} parent=11 // pred_region
        _
      $region88: #{bimamba_forward.5} parent=11 // pred_fallthru
        _
      // Predicated region
      $region89: #{bimamba_forward.5} parent=11 // pred_check
        %p571 = pneg %p473
      $region90: #{bimamba_forward.5} parent=11 // pred_check_branch
        %573 = sbr.rel (%p571) target = $region92
      $region91: #{bimamba_forward.5} parent=11 // pred_region
        _
      $region92: #{bimamba_forward.5} parent=11 // pred_fallthru
        _
    $region12: #{bimamba_forward.5} parent=5 // pred_fallthru
      _
    %p574 = scmp.lt.s32.totalorder %s27, 2
    // Predicated region
    $region93: #{bimamba_forward.5} parent=5 // pred_check
      %p575 = pneg %p574
    $region94: #{bimamba_forward.5} parent=5 // pred_check_branch
      %577 = sbr.rel (%p575) target = $region96
    $region95: #{bimamba_forward.5} parent=5 // pred_region
      // Predicated region
      $region97: #{bimamba_forward.5} parent=95 // pred_check
        %p578 = pneg %p47
      $region98: #{bimamba_forward.5} parent=95 // pred_check_branch
        %580 = sbr.rel (%p578) target = $region100
      $region99: #{bimamba_forward.5} parent=95 // pred_region
        %p581 = scmp.lt.s32.totalorder %s27, 1
        %s582 = scalar_select %p581, %s27, 1
        %s583 = smul.addr %s582, 2
        %s584 = smul.addr %s583, 8
        %s585 = scalar_lea.vmem %s0, %s584
      $region100: #{bimamba_forward.5} parent=95 // pred_fallthru
        _
    $region96: #{bimamba_forward.5} parent=5 // pred_fallthru
      _
    %p586 = scmp.le.s32.totalorder 1, %s27
    %p587 = scmp.lt.s32.totalorder %s27, 3
    %p588 = pnand %p586, %p587
    %p589 = pneg %p588
    // Predicated region
    $region101: #{bimamba_forward.5} parent=5 // pred_check
      _
    $region102: #{bimamba_forward.5} parent=5 // pred_check_branch
      %591 = sbr.rel (%p588) target = $region104
    $region103: #{bimamba_forward.5} parent=5 // pred_region
      %s592 = ssub.s32 %s27, 1
      %p593 = scmp.lt.s32.totalorder %s32, 1
      %s594 = scalar_select %p593, %s32, 1
      %s595 = smul.addr %s594, 2
      %s596 = smul.addr %s595, 8
      %s597 = scalar_lea.vmem %s0, %s596
      %p598 = pneg %p53
      %p599 = pneg %p50
      %p600 = pneg %p74
      %p601 = pneg %p71
      %p602 = pneg %p95
      %p603 = pneg %p92
      %p604 = pneg %p116
      %p605 = pneg %p113
      %p606 = pneg %p137
      %p607 = pneg %p134
      %p608 = pneg %p158
      %p609 = pneg %p155
      %p610 = pneg %p179
      %p611 = pneg %p176
      %p612 = pneg %p200
      %p613 = pneg %p197
      %p614 = pneg %p221
      %p615 = pneg %p218
      %p616 = pneg %p242
      %p617 = pneg %p239
      %p618 = pneg %p263
      %p619 = pneg %p260
      %p620 = pneg %p284
      %p621 = pneg %p281
      %p622 = pneg %p305
      %p623 = pneg %p302
      %p624 = pneg %p326
      %p625 = pneg %p323
      %p626 = pneg %p347
      %p627 = pneg %p344
      %p628 = pneg %p368
      %p629 = pneg %p365
      %p630 = pneg %p389
      %p631 = pneg %p386
      %p632 = pneg %p410
      %p633 = pneg %p407
      %p634 = pneg %p431
      %p635 = pneg %p428
      %p636 = pneg %p452
      %p637 = pneg %p449
      %p638 = pneg %p473
      %p639 = pneg %p470
      %p640 = pneg %p499
      %p641 = pneg %p496
      %p642 = scmp.lt.s32.totalorder %s32, 1
      %s643 = scalar_select %p642, %s32, 1
      %s644 = smul.addr %s643, 2
      %s645 = smul.addr %s644, 8
      %s646 = scalar_lea.vmem %s21, %s645
      %p647 = scmp.lt.s32.totalorder %s32, 1
      %s648 = scalar_select %p647, %s32, 1
      %s649 = smul.addr %s648, 2
      %s650 = smul.addr %s649, 8
      %s651 = scalar_lea.vmem %s0, %s650
      %p652 = scmp.lt.s32.totalorder %s32, 1
      %s653 = scalar_select %p652, %s32, 1
      %s654 = smul.addr %s653, 2
      %s655 = smul.addr %s654, 8
      %s656 = scalar_lea.vmem %s21, %s655
      %v658 = vld [vmem:[%s651] sm:$0xff]
      %v659 = vld [vmem:[%s651 + $0x8] sm:$0xff]
      %v660 = vpack.c.bf16 %v659, %v658
      %v661 = vld [vmem:[%s1] sm:$0xf]
      %v662 = vld [vmem:[%s1 + $0x4] sm:$0xf]
      %v663 = vld [vmem:[%s1 + $0x8] sm:$0xf]
      %v664 = vld [vmem:[%s1 + $0xc] sm:$0xf]
      %v669 = vunpack.c.l.b16 %v661
      %v670 = vunpack.c.l.b16 %v662
      %v671 = vunpack.c.l.b16 %v663
      %v672 = vunpack.c.l.b16 %v664
      %v673 = vpack.c.b16 %v670, %v669
      %v674 = vpack.c.b16 %v672, %v671
      %vm677 = vcmask 261120
      %v679 = vsel %vm677, %v660, 0
      %681 = vmatprep.subr.bf16.mxu0 0
      %682 = vmatpush1.bf16.msra.mxu0 %v673
      %683 = vmatprep.subr.bf16.mxu0 0
      %684 = vmatpush1.bf16.msra.mxu0 %v674
      %685 = vmatprep.subr.bf16.mxu0 0
      %686 = vmatpush1.bf16.msra.mxu0 0
      %687 = vmatprep.subr.bf16.mxu0 0
      %688 = vmatpush1.bf16.msra.mxu0 0
      %689 = vmatprep.subr.bf16.mxu0 0
      %690 = vmatpush1.bf16.msra.mxu0 0
      %691 = vmatprep.subr.bf16.mxu0 0
      %692 = vmatpush1.bf16.msra.mxu0 0
      %693 = vmatprep.subr.bf16.mxu0 0
      %694 = vmatpush1.bf16.msra.mxu0 0
      %695 = vmatprep.subr.bf16.mxu0 0
      %696 = vmatpush1.bf16.msra.mxu0 0
      %697 = vmatprep.subr.bf16.mxu0 0
      %698 = vmatpush1.bf16.msra.mxu0 0
      %699 = vmatprep.subr.bf16.mxu0 0
      %700 = vmatpush1.bf16.msra.mxu0 0
      %701 = vmatprep.subr.bf16.mxu0 0
      %702 = vmatpush1.bf16.msra.mxu0 0
      %703 = vmatprep.subr.bf16.mxu0 0
      %704 = vmatpush1.bf16.msra.mxu0 0
      %705 = vmatprep.subr.bf16.mxu0 0
      %706 = vmatpush1.bf16.msra.mxu0 0
      %707 = vmatprep.subr.bf16.mxu0 0
      %708 = vmatpush1.bf16.msra.mxu0 0
      %709 = vmatprep.subr.bf16.mxu0 0
      %710 = vmatpush1.bf16.msra.mxu0 0
      %711 = vmatprep.subr.bf16.mxu0 0
      %712 = vmatpush1.bf16.msra.mxu0 0
      %713 = vmatprep.mubr.bf16.mxu0 0
      %714 = vmatmul.mubr.bf16.gmra.mrb[0].mxu0 %v679
      %v715 = vpop.f32.mrb[0].mxu0
      %v716 = vadd.f32 0.0, %v715
      %v717 = vpop.f32.mrb[0].mxu0
      %v718 = vpop.f32.mrb[0].mxu0
      %v719 = vadd.f32 0.0, %v718
      %v720 = vpop.f32.mrb[0].mxu0
      %721 = vdwg.mxu0
      %vm722 = vcmask 523264
      %723 = vst.msk [vmem:[#allocation2] sm:$0xff] %vm722, 0.0
      %724 = vst.msk [vmem:[#allocation2 + $0x18] sm:$0xff] %vm722, 0.0
      %725 = vst.msk [vmem:[#allocation2 + $0x8] sm:$0xff] %vm722, %v716
      %726 = vst.msk [vmem:[#allocation2 + $0x10] sm:$0xff] %vm722, %v719
      %v727 = vld [vmem:[%s2] sm:$0xf]
      %v728 = vld [vmem:[#allocation2 + $0x5] sm:$0xff]
      %v729 = vld [vmem:[#allocation2 + $0xd] sm:$0xff]
      %v730 = vlaneseq
      %v731 = vshrl.u32 %v730, 7
      %v732 = vsub.s32 0, %v731
      %v733 = vrot.slane %v727, %v732
      %v734 = vmul.f32 %v728, %v733
      %v735 = vmul.f32 %v729, %v733
      %v736 = vld [vmem:[#allocation2 + $0x6] sm:$0xff]
      %v737 = vld [vmem:[#allocation2 + $0xe] sm:$0xff]
      %v738 = vlaneseq
      %v739 = vshrl.u32 %v738, 7
      %v740 = vsub.s32 1, %v739
      %v741 = vrot.slane %v727, %v740
      %v742 = vmul.f32 %v736, %v741
      %v743 = vmul.f32 %v737, %v741
      %v744 = vadd.f32 %v734, %v742
      %v745 = vadd.f32 %v735, %v743
      %v746 = vld [vmem:[#allocation2 + $0x7] sm:$0xff]
      %v747 = vld [vmem:[#allocation2 + $0xf] sm:$0xff]
      %v748 = vlaneseq
      %v749 = vshrl.u32 %v748, 7
      %v750 = vsub.s32 2, %v749
      %v751 = vrot.slane %v727, %v750
      %v752 = vmul.f32 %v746, %v751
      %v753 = vmul.f32 %v747, %v751
      %v754 = vadd.f32 %v744, %v752
      %v755 = vadd.f32 %v745, %v753
      %v756 = vld [vmem:[#allocation2 + $0x8] sm:$0xff]
      %v757 = vld [vmem:[#allocation2 + $0x10] sm:$0xff]
      %v758 = vlaneseq
      %v759 = vshrl.u32 %v758, 7
      %v760 = vsub.s32 3, %v759
      %v761 = vrot.slane %v727, %v760
      %v762 = vmul.f32 %v756, %v761
      %v763 = vmul.f32 %v757, %v761
      %v764 = vadd.f32 %v754, %v762
      %v765 = vadd.f32 %v755, %v763
      %v766 = vld [vmem:[%s3] sm:$0x1]
      %v768 = vlaneseq
      %v769 = vshrl.u32 %v768, 7
      %v770 = vsub.s32 0, %v769
      %v771 = vrot.slane %v766, %v770
      %v773 = vadd.f32 %v764, %v771
      %v774 = vadd.f32 %v765, %v771
      %v775 = vsub.f32 0.0, %v773
      %v776 = vsub.f32 0.0, %v774
      %v777 = vmul.f32 %v775, 1.442695
      %v778 = vpow.pop %v777
      %v779 = vmul.f32 %v776, 1.442695
      %v780 = vpow.pop %v779
      %v781 = vadd.f32 %v778, 1.0
      %v782 = vadd.f32 %v780, 1.0
      %v783 = vrcp.pop %v781
      %v784 = vrcp.pop %v782
      %v785 = vmul.f32 %v773, %v783
      %v786 = vmul.f32 %v774, %v784
      %v787 = vpack.c.bf16 %v786, %v785
      %v788 = vld [vmem:[%s4] sm:$0xf]
      %v789 = vld [vmem:[%s4 + $0x4] sm:$0xf]
      %v790 = vld [vmem:[%s4 + $0x8] sm:$0xf]
      %v791 = vld [vmem:[%s4 + $0xc] sm:$0xf]
      %v792 = vld [vmem:[%s4 + $0x10] sm:$0xf]
      %v793 = vld [vmem:[%s4 + $0x14] sm:$0xf]
      %v794 = vld [vmem:[%s4 + $0x18] sm:$0xf]
      %v795 = vld [vmem:[%s4 + $0x1c] sm:$0xf]
      %v804 = vunpack.c.l.b16 %v788
      %v805 = vunpack.c.l.b16 %v789
      %v806 = vunpack.c.l.b16 %v790
      %v807 = vunpack.c.l.b16 %v791
      %v808 = vunpack.c.l.b16 %v792
      %v809 = vunpack.c.l.b16 %v793
      %v810 = vunpack.c.l.b16 %v794
      %v811 = vunpack.c.l.b16 %v795
      %v812 = vpack.c.b16 %v805, %v804
      %v813 = vpack.c.b16 %v807, %v806
      %v814 = vpack.c.b16 %v809, %v808
      %v815 = vpack.c.b16 %v811, %v810
      %v821 = vsel %vm722, %v787, 0
      %823 = vmatprep.subr.bf16.mxu0 0
      %824 = vmatpush1.bf16.msra.mxu0 %v812
      %825 = vmatprep.subr.bf16.mxu0 0
      %826 = vmatpush1.bf16.msra.mxu0 %v813
      %827 = vmatprep.subr.bf16.mxu0 0
      %828 = vmatpush1.bf16.msra.mxu0 %v814
      %829 = vmatprep.subr.bf16.mxu0 0
      %830 = vmatpush1.bf16.msra.mxu0 %v815
      %831 = vmatprep.subr.bf16.mxu0 0
      %832 = vmatpush1.bf16.msra.mxu0 0
      %833 = vmatprep.subr.bf16.mxu0 0
      %834 = vmatpush1.bf16.msra.mxu0 0
      %835 = vmatprep.subr.bf16.mxu0 0
      %836 = vmatpush1.bf16.msra.mxu0 0
      %837 = vmatprep.subr.bf16.mxu0 0
      %838 = vmatpush1.bf16.msra.mxu0 0
      %839 = vmatprep.subr.bf16.mxu0 0
      %840 = vmatpush1.bf16.msra.mxu0 0
      %841 = vmatprep.subr.bf16.mxu0 0
      %842 = vmatpush1.bf16.msra.mxu0 0
      %843 = vmatprep.subr.bf16.mxu0 0
      %844 = vmatpush1.bf16.msra.mxu0 0
      %845 = vmatprep.subr.bf16.mxu0 0
      %846 = vmatpush1.bf16.msra.mxu0 0
      %847 = vmatprep.subr.bf16.mxu0 0
      %848 = vmatpush1.bf16.msra.mxu0 0
      %849 = vmatprep.subr.bf16.mxu0 0
      %850 = vmatpush1.bf16.msra.mxu0 0
      %851 = vmatprep.subr.bf16.mxu0 0
      %852 = vmatpush1.bf16.msra.mxu0 0
      %853 = vmatprep.subr.bf16.mxu0 0
      %854 = vmatpush1.bf16.msra.mxu0 0
      %855 = vmatprep.mubr.bf16.mxu0 0
      %856 = vmatmul.mubr.bf16.gmra.mrb[0].mxu0 %v821
      %v857 = vpop.f32.mrb[0].mxu0
      %v858 = vadd.f32 0.0, %v857
      %v859 = vpop.f32.mrb[0].mxu0
      %v860 = vpop.f32.mrb[0].mxu0
      %v861 = vadd.f32 0.0, %v860
      %v862 = vpop.f32.mrb[0].mxu0
      %863 = vdwg.mxu0
      %v864 = vld [vmem:[%s5] sm:$0x1]
      %v866 = vlaneseq
      %v867 = vshrl.u32 %v866, 7
      %v868 = vsub.s32 0, %v867
      %v869 = vrot.slane %v864, %v868
      %v871 = vadd.f32 %v858, %v869
      %v872 = vadd.f32 %v861, %v869
      %vm873 = vcmp.gt.f32.partialorder %v871, 20.0
      %vm874 = vcmp.gt.f32.partialorder %v872, 20.0
      %v875 = vmin.f32 %v871, 20.0
      %v876 = vmin.f32 %v872, 20.0
      %v877 = vmul.f32 %v875, 1.442695
      %v878 = vpow.pop %v877
      %v879 = vmul.f32 %v876, 1.442695
      %v880 = vpow.pop %v879
      %v881 = vadd.f32 %v878, 1.0
      %v882 = vadd.f32 %v880, 1.0
      %v883 = vlog2.pop %v881
      %v884 = vmul.f32 %v883, 0.6931472
      %v885 = vlog2.pop %v882
      %v886 = vmul.f32 %v885, 0.6931472
      %v887 = vsel %vm873, %v871, %v884
      %v888 = vsel %vm874, %v872, %v886
      %889 = vst.msk [vmem:[#allocation3] sm:$0xff] %vm722, %v785
      %890 = vst.msk [vmem:[#allocation3 + $0x8] sm:$0xff] %vm722, %v786
      %891 = vst.msk [vmem:[#allocation4] sm:$0xff] %vm722, %v887
      %892 = vst.msk [vmem:[#allocation4 + $0x8] sm:$0xff] %vm722, %v888
      %895 = vrot.lane.b32.xlu0 %v858, 64
      %v896 = vpop.permute.xlu0 %895
      %897 = vrot.lane.b32.xlu0 %v861, 64
      %v898 = vpop.permute.xlu0 %897
      %vm901 = vcmask 130048
      %902 = vst.msk [vmem:[#allocation5] sm:$0xff] %vm901, %v896
      %903 = vst.msk [vmem:[#allocation5 + $0x8] sm:$0xff] %vm901, %v898
      %v904 = vld [vmem:[%s6] sm:$0xff]
      loop: start=0, step=1, limit=2
      $region105: #{bimamba_forward.5} parent=103 // loop_pre_header
        _
      $region106: #{bimamba_forward.5} parent=103 // loop_header
        %s906 = sphi 0, %s910
        %p907 = scmp.ge.s32.totalorder %s906, 2
        %v911 = vphi 0.0, %v1171
      $region107: #{bimamba_forward.5} parent=103 // loop_header_branch
        %909 = sbr.rel (%p907) target = $region111
      $region108: #{bimamba_forward.5} parent=103 // loop_body
        %s912 = smul.u32 %s906, 8
        %s913 = scalar_lea.vmem [#allocation3], %s912
        %v914 = vld [vmem:[%s913] sm:$0xff]
        %s915 = scalar_lea.vmem [#allocation4], %s912
        %v916 = vld [vmem:[%s915] sm:$0xff]
        %s917 = scalar_lea.vmem [#allocation5], %s912
        %v918 = vld [vmem:[%s917] sm:$0xff]
        %v919 = vmul.f32 %v916, %v914
        %v920 = vlaneseq
        %v921 = vshrl.u32 %v920, 7
        %v922 = vsub.s32 0, %v921
        %v923 = vrot.slane %v916, %v922
        %v924 = vmul.f32 %v923, %v904
        %v925 = vmul.f32 %v924, 1.442695
        %v926 = vpow.pop %v925
        %v927 = vlaneseq
        %v928 = vshrl.u32 %v927, 7
        %v929 = vsub.s32 0, %v928
        %v930 = vrot.slane %v918, %v929
        %932 = vbcast.lane.b32.xlu0 %v930, 256
        %v933 = vpop.permute.xlu0 %932
        %v934 = vlaneseq
        %v935 = vshrl.u32 %v934, 7
        %v936 = vsub.s32 0, %v935
        %v937 = vrot.slane %v919, %v936
        %v938 = vmul.f32 %v933, %v937
        %v939 = vmul.f32 %v926, %v911
        %v940 = vadd.f32 %v939, %v938
        %s942 = sor.u32 256, 8
        %943 = vbcast.lane.b32.xlu0 %v930, %s942
        %v944 = vpop.permute.xlu0 %943
        %v945 = vmul.f32 %v944, %v940
        %v946 = vsel %vm722, %v945, 0.0
        %v947 = vrot.slane %v946, 4
        %v948 = vadd.f32 %v946, %v947
        %v949 = vrot.slane %v948, 2
        %v950 = vadd.f32 %v948, %v949
        %v951 = vrot.slane %v950, 1
        %v952 = vadd.f32 %v950, %v951
        %v953 = vlaneseq
        %v954 = vshrl.u32 %v953, 7
        %v955 = vsub.s32 1, %v954
        %v956 = vrot.slane %v916, %v955
        %v957 = vmul.f32 %v956, %v904
        %v958 = vmul.f32 %v957, 1.442695
        %v959 = vpow.pop %v958
        %v960 = vlaneseq
        %v961 = vshrl.u32 %v960, 7
        %v962 = vsub.s32 1, %v961
        %v963 = vrot.slane %v918, %v962
        %965 = vbcast.lane.b32.xlu0 %v963, 256
        %v966 = vpop.permute.xlu0 %965
        %v967 = vlaneseq
        %v968 = vshrl.u32 %v967, 7
        %v969 = vsub.s32 1, %v968
        %v970 = vrot.slane %v919, %v969
        %v971 = vmul.f32 %v966, %v970
        %v972 = vmul.f32 %v959, %v940
        %v973 = vadd.f32 %v972, %v971
        %s975 = sor.u32 256, 8
        %976 = vbcast.lane.b32.xlu0 %v963, %s975
        %v977 = vpop.permute.xlu0 %976
        %v978 = vmul.f32 %v977, %v973
        %v979 = vsel %vm722, %v978, 0.0
        %v980 = vrot.slane %v979, 4
        %v981 = vadd.f32 %v979, %v980
        %v982 = vrot.slane %v981, 2
        %v983 = vadd.f32 %v981, %v982
        %v984 = vrot.slane %v983, 1
        %v985 = vadd.f32 %v983, %v984
        %v986 = vlaneseq
        %v987 = vshrl.u32 %v986, 7
        %v988 = vsub.s32 2, %v987
        %v989 = vrot.slane %v916, %v988
        %v990 = vmul.f32 %v989, %v904
        %v991 = vmul.f32 %v990, 1.442695
        %v992 = vpow.pop %v991
        %v993 = vlaneseq
        %v994 = vshrl.u32 %v993, 7
        %v995 = vsub.s32 2, %v994
        %v996 = vrot.slane %v918, %v995
        %998 = vbcast.lane.b32.xlu0 %v996, 256
        %v999 = vpop.permute.xlu0 %998
        %v1000 = vlaneseq
        %v1001 = vshrl.u32 %v1000, 7
        %v1002 = vsub.s32 2, %v1001
        %v1003 = vrot.slane %v919, %v1002
        %v1004 = vmul.f32 %v999, %v1003
        %v1005 = vmul.f32 %v992, %v973
        %v1006 = vadd.f32 %v1005, %v1004
        %s1008 = sor.u32 256, 8
        %1009 = vbcast.lane.b32.xlu0 %v996, %s1008
        %v1010 = vpop.permute.xlu0 %1009
        %v1011 = vmul.f32 %v1010, %v1006
        %v1012 = vsel %vm722, %v1011, 0.0
        %v1013 = vrot.slane %v1012, 4
        %v1014 = vadd.f32 %v1012, %v1013
        %v1015 = vrot.slane %v1014, 2
        %v1016 = vadd.f32 %v1014, %v1015
        %v1017 = vrot.slane %v1016, 1
        %v1018 = vadd.f32 %v1016, %v1017
        %v1019 = vlaneseq
        %v1020 = vshrl.u32 %v1019, 7
        %v1021 = vsub.s32 3, %v1020
        %v1022 = vrot.slane %v916, %v1021
        %v1023 = vmul.f32 %v1022, %v904
        %v1024 = vmul.f32 %v1023, 1.442695
        %v1025 = vpow.pop %v1024
        %v1026 = vlaneseq
        %v1027 = vshrl.u32 %v1026, 7
        %v1028 = vsub.s32 3, %v1027
        %v1029 = vrot.slane %v918, %v1028
        %1031 = vbcast.lane.b32.xlu0 %v1029, 256
        %v1032 = vpop.permute.xlu0 %1031
        %v1033 = vlaneseq
        %v1034 = vshrl.u32 %v1033, 7
        %v1035 = vsub.s32 3, %v1034
        %v1036 = vrot.slane %v919, %v1035
        %v1037 = vmul.f32 %v1032, %v1036
        %v1038 = vmul.f32 %v1025, %v1006
        %v1039 = vadd.f32 %v1038, %v1037
        %s1041 = sor.u32 256, 8
        %1042 = vbcast.lane.b32.xlu0 %v1029, %s1041
        %v1043 = vpop.permute.xlu0 %1042
        %v1044 = vmul.f32 %v1043, %v1039
        %v1045 = vsel %vm722, %v1044, 0.0
        %v1046 = vrot.slane %v1045, 4
        %v1047 = vadd.f32 %v1045, %v1046
        %v1048 = vrot.slane %v1047, 2
        %v1049 = vadd.f32 %v1047, %v1048
        %v1050 = vrot.slane %v1049, 1
        %v1051 = vadd.f32 %v1049, %v1050
        %v1052 = vlaneseq
        %v1053 = vshrl.u32 %v1052, 7
        %v1054 = vsub.s32 4, %v1053
        %v1055 = vrot.slane %v916, %v1054
        %v1056 = vmul.f32 %v1055, %v904
        %v1057 = vmul.f32 %v1056, 1.442695
        %v1058 = vpow.pop %v1057
        %v1059 = vlaneseq
        %v1060 = vshrl.u32 %v1059, 7
        %v1061 = vsub.s32 4, %v1060
        %v1062 = vrot.slane %v918, %v1061
        %1064 = vbcast.lane.b32.xlu0 %v1062, 256
        %v1065 = vpop.permute.xlu0 %1064
        %v1066 = vlaneseq
        %v1067 = vshrl.u32 %v1066, 7
        %v1068 = vsub.s32 4, %v1067
        %v1069 = vrot.slane %v919, %v1068
        %v1070 = vmul.f32 %v1065, %v1069
        %v1071 = vmul.f32 %v1058, %v1039
        %v1072 = vadd.f32 %v1071, %v1070
        %s1074 = sor.u32 256, 8
        %1075 = vbcast.lane.b32.xlu0 %v1062, %s1074
        %v1076 = vpop.permute.xlu0 %1075
        %v1077 = vmul.f32 %v1076, %v1072
        %v1078 = vsel %vm722, %v1077, 0.0
        %v1079 = vrot.slane %v1078, 4
        %v1080 = vadd.f32 %v1078, %v1079
        %v1081 = vrot.slane %v1080, 2
        %v1082 = vadd.f32 %v1080, %v1081
        %v1083 = vrot.slane %v1082, 1
        %v1084 = vadd.f32 %v1082, %v1083
        %v1085 = vlaneseq
        %v1086 = vshrl.u32 %v1085, 7
        %v1087 = vsub.s32 5, %v1086
        %v1088 = vrot.slane %v916, %v1087
        %v1089 = vmul.f32 %v1088, %v904
        %v1090 = vmul.f32 %v1089, 1.442695
        %v1091 = vpow.pop %v1090
        %v1092 = vlaneseq
        %v1093 = vshrl.u32 %v1092, 7
        %v1094 = vsub.s32 5, %v1093
        %v1095 = vrot.slane %v918, %v1094
        %1097 = vbcast.lane.b32.xlu0 %v1095, 256
        %v1098 = vpop.permute.xlu0 %1097
        %v1099 = vlaneseq
        %v1100 = vshrl.u32 %v1099, 7
        %v1101 = vsub.s32 5, %v1100
        %v1102 = vrot.slane %v919, %v1101
        %v1103 = vmul.f32 %v1098, %v1102
        %v1104 = vmul.f32 %v1091, %v1072
        %v1105 = vadd.f32 %v1104, %v1103
        %s1107 = sor.u32 256, 8
        %1108 = vbcast.lane.b32.xlu0 %v1095, %s1107
        %v1109 = vpop.permute.xlu0 %1108
        %v1110 = vmul.f32 %v1109, %v1105
        %v1111 = vsel %vm722, %v1110, 0.0
        %v1112 = vrot.slane %v1111, 4
        %v1113 = vadd.f32 %v1111, %v1112
        %v1114 = vrot.slane %v1113, 2
        %v1115 = vadd.f32 %v1113, %v1114
        %v1116 = vrot.slane %v1115, 1
        %v1117 = vadd.f32 %v1115, %v1116
        %v1118 = vlaneseq
        %v1119 = vshrl.u32 %v1118, 7
        %v1120 = vsub.s32 6, %v1119
        %v1121 = vrot.slane %v916, %v1120
        %v1122 = vmul.f32 %v1121, %v904
        %v1123 = vmul.f32 %v1122, 1.442695
        %v1124 = vpow.pop %v1123
        %v1125 = vlaneseq
        %v1126 = vshrl.u32 %v1125, 7
        %v1127 = vsub.s32 6, %v1126
        %v1128 = vrot.slane %v918, %v1127
        %1130 = vbcast.lane.b32.xlu0 %v1128, 256
        %v1131 = vpop.permute.xlu0 %1130
        %v1132 = vlaneseq
        %v1133 = vshrl.u32 %v1132, 7
        %v1134 = vsub.s32 6, %v1133
        %v1135 = vrot.slane %v919, %v1134
        %v1136 = vmul.f32 %v1131, %v1135
        %v1137 = vmul.f32 %v1124, %v1105
        %v1138 = vadd.f32 %v1137, %v1136
        %s1140 = sor.u32 256, 8
        %1141 = vbcast.lane.b32.xlu0 %v1128, %s1140
        %v1142 = vpop.permute.xlu0 %1141
        %v1143 = vmul.f32 %v1142, %v1138
        %v1144 = vsel %vm722, %v1143, 0.0
        %v1145 = vrot.slane %v1144, 4
        %v1146 = vadd.f32 %v1144, %v1145
        %v1147 = vrot.slane %v1146, 2
        %v1148 = vadd.f32 %v1146, %v1147
        %v1149 = vrot.slane %v1148, 1
        %v1150 = vadd.f32 %v1148, %v1149
        %v1151 = vlaneseq
        %v1152 = vshrl.u32 %v1151, 7
        %v1153 = vsub.s32 7, %v1152
        %v1154 = vrot.slane %v916, %v1153
        %v1155 = vmul.f32 %v1154, %v904
        %v1156 = vmul.f32 %v1155, 1.442695
        %v1157 = vpow.pop %v1156
        %v1158 = vlaneseq
        %v1159 = vshrl.u32 %v1158, 7
        %v1160 = vsub.s32 7, %v1159
        %v1161 = vrot.slane %v918, %v1160
        %1163 = vbcast.lane.b32.xlu0 %v1161, 256
        %v1164 = vpop.permute.xlu0 %1163
        %v1165 = vlaneseq
        %v1166 = vshrl.u32 %v1165, 7
        %v1167 = vsub.s32 7, %v1166
        %v1168 = vrot.slane %v919, %v1167
        %v1169 = vmul.f32 %v1164, %v1168
        %v1170 = vmul.f32 %v1157, %v1138
        %v1171 = vadd.f32 %v1170, %v1169
        %s1173 = sor.u32 256, 8
        %1174 = vbcast.lane.b32.xlu0 %v1161, %s1173
        %v1175 = vpop.permute.xlu0 %1174
        %v1176 = vmul.f32 %v1175, %v1171
        %v1177 = vsel %vm722, %v1176, 0.0
        %v1178 = vrot.slane %v1177, 4
        %v1179 = vadd.f32 %v1177, %v1178
        %v1180 = vrot.slane %v1179, 2
        %v1181 = vadd.f32 %v1179, %v1180
        %v1182 = vrot.slane %v1181, 1
        %v1183 = vadd.f32 %v1181, %v1182
        %vm1184 = vcmask 1040384
        %v1185 = vsel %vm1184, %v952, %v985
        %vm1186 = vcmask 1041408
        %v1187 = vsel %vm1186, %v1185, %v1018
        %vm1188 = vcmask 1042432
        %v1189 = vsel %vm1188, %v1187, %v1051
        %vm1190 = vcmask 1043456
        %v1191 = vsel %vm1190, %v1189, %v1084
        %vm1192 = vcmask 1044480
        %v1193 = vsel %vm1192, %v1191, %v1117
        %vm1194 = vcmask 1045504
        %v1195 = vsel %vm1194, %v1193, %v1150
        %vm1196 = vcmask 1046528
        %v1197 = vsel %vm1196, %v1195, %v1183
        %s1198 = scalar_lea.vmem [#allocation6], %s912
        %1199 = vst.msk [vmem:[%s1198] sm:$0xff] %vm722, %v1197
      $region109: #{bimamba_forward.5} parent=103 // loop_footer
        %s910 = sadd.s32 1, %s906
      $region110: #{bimamba_forward.5} parent=103 // loop_footer_branch
        %905 = sbr.rel target = $region106
      $region111: #{bimamba_forward.5} parent=103 // loop_exit
        _
      %v1200 = vld [vmem:[#allocation6] sm:$0xff]
      %v1201 = vld [vmem:[#allocation6 + $0x8] sm:$0xff]
      %v1202 = vld [vmem:[#allocation3] sm:$0xff]
      %v1203 = vld [vmem:[#allocation3 + $0x8] sm:$0xff]
      %v1204 = vld [vmem:[%s7] sm:$0x1]
      %v1206 = vlaneseq
      %v1207 = vshrl.u32 %v1206, 7
      %v1208 = vsub.s32 0, %v1207
      %v1209 = vrot.slane %v1204, %v1208
      %v1211 = vmul.f32 %v1202, %v1209
      %v1212 = vmul.f32 %v1203, %v1209
      %v1213 = vadd.f32 %v1200, %v1211
      %v1214 = vadd.f32 %v1201, %v1212
      %v1215 = vsub.f32 0.0, %v716
      %v1216 = vsub.f32 0.0, %v719
      %v1217 = vmul.f32 %v1215, 1.442695
      %v1218 = vpow.pop %v1217
      %v1219 = vmul.f32 %v1216, 1.442695
      %v1220 = vpow.pop %v1219
      %v1221 = vadd.f32 %v1218, 1.0
      %v1222 = vadd.f32 %v1220, 1.0
      %v1223 = vrcp.pop %v1221
      %v1224 = vrcp.pop %v1222
      %v1225 = vmul.f32 %v716, %v1223
      %v1226 = vmul.f32 %v719, %v1224
      %1229 = vrot.lane.b32.xlu0 %v1225, 64
      %v1230 = vpop.permute.xlu0 %1229
      %1231 = vrot.lane.b32.xlu0 %v1226, 64
      %v1232 = vpop.permute.xlu0 %1231
      %v1235 = vmul.f32 %v1213, %v1230
      %v1236 = vmul.f32 %v1214, %v1232
      %v1237 = vpack.c.bf16 %v1236, %v1235
      %v1238 = vld [vmem:[%s8] sm:$0xf]
      %v1239 = vld [vmem:[%s8 + $0x4] sm:$0xf]
      %v1240 = vld [vmem:[%s8 + $0x8] sm:$0xf]
      %v1241 = vld [vmem:[%s8 + $0xc] sm:$0xf]
      %v1242 = vld [vmem:[%s8 + $0x10] sm:$0xf]
      %v1243 = vld [vmem:[%s8 + $0x14] sm:$0xf]
      %v1244 = vld [vmem:[%s8 + $0x18] sm:$0xf]
      %v1245 = vld [vmem:[%s8 + $0x1c] sm:$0xf]
      %v1254 = vunpack.c.l.b16 %v1238
      %v1255 = vunpack.c.l.b16 %v1239
      %v1256 = vunpack.c.l.b16 %v1240
      %v1257 = vunpack.c.l.b16 %v1241
      %v1258 = vunpack.c.l.b16 %v1242
      %v1259 = vunpack.c.l.b16 %v1243
      %v1260 = vunpack.c.l.b16 %v1244
      %v1261 = vunpack.c.l.b16 %v1245
      %v1262 = vpack.c.b16 %v1255, %v1254
      %v1263 = vpack.c.b16 %v1257, %v1256
      %v1264 = vpack.c.b16 %v1259, %v1258
      %v1265 = vpack.c.b16 %v1261, %v1260
      %v1271 = vsel %vm722, %v1237, 0
      %1273 = vmatprep.subr.bf16.mxu0 0
      %1274 = vmatpush1.bf16.msra.mxu0 %v1262
      %1275 = vmatprep.subr.bf16.mxu0 0
      %1276 = vmatpush1.bf16.msra.mxu0 %v1263
      %1277 = vmatprep.subr.bf16.mxu0 0
      %1278 = vmatpush1.bf16.msra.mxu0 %v1264
      %1279 = vmatprep.subr.bf16.mxu0 0
      %1280 = vmatpush1.bf16.msra.mxu0 %v1265
      %1281 = vmatprep.subr.bf16.mxu0 0
      %1282 = vmatpush1.bf16.msra.mxu0 0
      %1283 = vmatprep.subr.bf16.mxu0 0
      %1284 = vmatpush1.bf16.msra.mxu0 0
      %1285 = vmatprep.subr.bf16.mxu0 0
      %1286 = vmatpush1.bf16.msra.mxu0 0
      %1287 = vmatprep.subr.bf16.mxu0 0
      %1288 = vmatpush1.bf16.msra.mxu0 0
      %1289 = vmatprep.subr.bf16.mxu0 0
      %1290 = vmatpush1.bf16.msra.mxu0 0
      %1291 = vmatprep.subr.bf16.mxu0 0
      %1292 = vmatpush1.bf16.msra.mxu0 0
      %1293 = vmatprep.subr.bf16.mxu0 0
      %1294 = vmatpush1.bf16.msra.mxu0 0
      %1295 = vmatprep.subr.bf16.mxu0 0
      %1296 = vmatpush1.bf16.msra.mxu0 0
      %1297 = vmatprep.subr.bf16.mxu0 0
      %1298 = vmatpush1.bf16.msra.mxu0 0
      %1299 = vmatprep.subr.bf16.mxu0 0
      %1300 = vmatpush1.bf16.msra.mxu0 0
      %1301 = vmatprep.subr.bf16.mxu0 0
      %1302 = vmatpush1.bf16.msra.mxu0 0
      %1303 = vmatprep.subr.bf16.mxu0 0
      %1304 = vmatpush1.bf16.msra.mxu0 0
      %1305 = vmatprep.mubr.bf16.mxu0 0
      %1306 = vmatmul.mubr.bf16.gmra.mrb[0].mxu0 %v1271
      %v1307 = vpop.f32.mrb[0].mxu0
      %v1308 = vadd.f32 %v658, %v1307
      %v1309 = vpop.f32.mrb[0].mxu0
      %v1310 = vpop.f32.mrb[0].mxu0
      %v1311 = vadd.f32 %v659, %v1310
      %v1312 = vpop.f32.mrb[0].mxu0
      %1313 = vdwg.mxu0
      %v1314 = vld [vmem:[%s17] sm:$0x1]
      %v1315 = vld [vmem:[%s18] sm:$0x1]
      %v1316 = vsel %vm677, %v1308, 0.0
      %1317 = vadd.xlane.f32.xlu0 %v1316
      %v1318 = vpop.xlane.xlu0 %1317
      %v1319 = vsel %vm677, %v1311, 0.0
      %1320 = vadd.xlane.f32.xlu0 %v1319
      %v1321 = vpop.xlane.xlu0 %1320
      %v1322 = vrcp.pop 32.0
      %v1323 = vmul.f32 %v1318, %v1322
      %v1324 = vmul.f32 %v1321, %v1322
      %v1325 = vsub.f32 %v1308, %v1323
      %v1326 = vsub.f32 %v1311, %v1324
      %v1327 = vmul.f32 %v1325, %v1325
      %v1328 = vmul.f32 %v1326, %v1326
      %v1329 = vsel %vm677, %v1327, 0.0
      %1330 = vadd.xlane.f32.xlu0 %v1329
      %v1331 = vpop.xlane.xlu0 %1330
      %v1332 = vsel %vm677, %v1328, 0.0
      %1333 = vadd.xlane.f32.xlu0 %v1332
      %v1334 = vpop.xlane.xlu0 %1333
      %v1335 = vmul.f32 %v1331, %v1322
      %v1336 = vmul.f32 %v1334, %v1322
      %v1337 = vadd.f32 %v1335, 1e-05
      %v1338 = vadd.f32 %v1336, 1e-05
      %v1339 = vrsqrt.pop %v1337
      %v1340 = vrsqrt.pop %v1338
      %v1341 = vmul.f32 %v1325, %v1339
      %v1342 = vmul.f32 %v1326, %v1340
      %v1344 = vlaneseq
      %v1345 = vshrl.u32 %v1344, 7
      %v1346 = vsub.s32 0, %v1345
      %v1347 = vrot.slane %v1314, %v1346
      %v1349 = vmul.f32 %v1341, %v1347
      %v1350 = vmul.f32 %v1342, %v1347
      %v1352 = vlaneseq
      %v1353 = vshrl.u32 %v1352, 7
      %v1354 = vsub.s32 0, %v1353
      %v1355 = vrot.slane %v1315, %v1354
      %v1357 = vadd.f32 %v1349, %v1355
      %v1358 = vadd.f32 %v1350, %v1355
      %1359 = vst.msk [vmem:[%s656] sm:$0xff] %vm677, %v1357
      %1360 = vst.msk [vmem:[%s656 + $0x8] sm:$0xff] %vm677, %v1358
      %v1361 = vld [vmem:[%s9] sm:$0xf]
      %v1362 = vld [vmem:[%s9 + $0x4] sm:$0xf]
      %v1363 = vld [vmem:[%s9 + $0x8] sm:$0xf]
      %v1364 = vld [vmem:[%s9 + $0xc] sm:$0xf]
      %v1369 = vunpack.c.l.b16 %v1361
      %v1370 = vunpack.c.l.b16 %v1362
      %v1371 = vunpack.c.l.b16 %v1363
      %v1372 = vunpack.c.l.b16 %v1364
      %v1373 = vpack.c.b16 %v1370, %v1369
      %v1374 = vpack.c.b16 %v1372, %v1371
      %1377 = vmatprep.subr.bf16.mxu0 0
      %1378 = vmatpush1.bf16.msra.mxu0 %v1373
      %1379 = vmatprep.subr.bf16.mxu0 0
      %1380 = vmatpush1.bf16.msra.mxu0 %v1374
      %1381 = vmatprep.subr.bf16.mxu0 0
      %1382 = vmatpush1.bf16.msra.mxu0 0
      %1383 = vmatprep.subr.bf16.mxu0 0
      %1384 = vmatpush1.bf16.msra.mxu0 0
      %1385 = vmatprep.subr.bf16.mxu0 0
      %1386 = vmatpush1.bf16.msra.mxu0 0
      %1387 = vmatprep.subr.bf16.mxu0 0
      %1388 = vmatpush1.bf16.msra.mxu0 0
      %1389 = vmatprep.subr.bf16.mxu0 0
      %1390 = vmatpush1.bf16.msra.mxu0 0
      %1391 = vmatprep.subr.bf16.mxu0 0
      %1392 = vmatpush1.bf16.msra.mxu0 0
      %1393 = vmatprep.subr.bf16.mxu0 0
      %1394 = vmatpush1.bf16.msra.mxu0 0
      %1395 = vmatprep.subr.bf16.mxu0 0
      %1396 = vmatpush1.bf16.msra.mxu0 0
      %1397 = vmatprep.subr.bf16.mxu0 0
      %1398 = vmatpush1.bf16.msra.mxu0 0
      %1399 = vmatprep.subr.bf16.mxu0 0
      %1400 = vmatpush1.bf16.msra.mxu0 0
      %1401 = vmatprep.subr.bf16.mxu0 0
      %1402 = vmatpush1.bf16.msra.mxu0 0
      %1403 = vmatprep.subr.bf16.mxu0 0
      %1404 = vmatpush1.bf16.msra.mxu0 0
      %1405 = vmatprep.subr.bf16.mxu0 0
      %1406 = vmatpush1.bf16.msra.mxu0 0
      %1407 = vmatprep.subr.bf16.mxu0 0
      %1408 = vmatpush1.bf16.msra.mxu0 0
      %1409 = vmatprep.mubr.bf16.mxu0 0
      %1410 = vmatmul.mubr.bf16.gmra.mrb[0].mxu0 %v679
      %v1411 = vpop.f32.mrb[0].mxu0
      %v1412 = vadd.f32 0.0, %v1411
      %v1413 = vpop.f32.mrb[0].mxu0
      %v1414 = vpop.f32.mrb[0].mxu0
      %v1415 = vadd.f32 0.0, %v1414
      %v1416 = vpop.f32.mrb[0].mxu0
      %1417 = vdwg.mxu0
      %1418 = vst.msk [vmem:[#allocation2] sm:$0xff] %vm722, 0.0
      %1419 = vst.msk [vmem:[#allocation2 + $0x18] sm:$0xff] %vm722, 0.0
      %1420 = vst.msk [vmem:[#allocation2 + $0x8] sm:$0xff] %vm722, %v1412
      %1421 = vst.msk [vmem:[#allocation2 + $0x10] sm:$0xff] %vm722, %v1415
      %v1422 = vld [vmem:[%s10] sm:$0xf]
      %v1423 = vld [vmem:[#allocation2 + $0xb] sm:$0xff]
      %v1424 = vld [vmem:[#allocation2 + $0x13] sm:$0xff]
      %v1425 = vlaneseq
      %v1426 = vshrl.u32 %v1425, 7
      %v1427 = vsub.s32 0, %v1426
      %v1428 = vrot.slane %v1422, %v1427
      %v1429 = vmul.f32 %v1423, %v1428
      %v1430 = vmul.f32 %v1424, %v1428
      %v1431 = vld [vmem:[#allocation2 + $0xa] sm:$0xff]
      %v1432 = vld [vmem:[#allocation2 + $0x12] sm:$0xff]
      %v1433 = vlaneseq
      %v1434 = vshrl.u32 %v1433, 7
      %v1435 = vsub.s32 1, %v1434
      %v1436 = vrot.slane %v1422, %v1435
      %v1437 = vmul.f32 %v1431, %v1436
      %v1438 = vmul.f32 %v1432, %v1436
      %v1439 = vadd.f32 %v1429, %v1437
      %v1440 = vadd.f32 %v1430, %v1438
      %v1441 = vld [vmem:[#allocation2 + $0x9] sm:$0xff]
      %v1442 = vld [vmem:[#allocation2 + $0x11] sm:$0xff]
      %v1443 = vlaneseq
      %v1444 = vshrl.u32 %v1443, 7
      %v1445 = vsub.s32 2, %v1444
      %v1446 = vrot.slane %v1422, %v1445
      %v1447 = vmul.f32 %v1441, %v1446
      %v1448 = vmul.f32 %v1442, %v1446
      %v1449 = vadd.f32 %v1439, %v1447
      %v1450 = vadd.f32 %v1440, %v1448
      %v1451 = vld [vmem:[#allocation2 + $0x8] sm:$0xff]
      %v1452 = vld [vmem:[#allocation2 + $0x10] sm:$0xff]
      %v1453 = vlaneseq
      %v1454 = vshrl.u32 %v1453, 7
      %v1455 = vsub.s32 3, %v1454
      %v1456 = vrot.slane %v1422, %v1455
      %v1457 = vmul.f32 %v1451, %v1456
      %v1458 = vmul.f32 %v1452, %v1456
      %v1459 = vadd.f32 %v1449, %v1457
      %v1460 = vadd.f32 %v1450, %v1458
      %v1461 = vld [vmem:[%s11] sm:$0x1]
      %v1463 = vlaneseq
      %v1464 = vshrl.u32 %v1463, 7
      %v1465 = vsub.s32 0, %v1464
      %v1466 = vrot.slane %v1461, %v1465
      %v1468 = vadd.f32 %v1459, %v1466
      %v1469 = vadd.f32 %v1460, %v1466
      %v1470 = vsub.f32 0.0, %v1468
      %v1471 = vsub.f32 0.0, %v1469
      %v1472 = vmul.f32 %v1470, 1.442695
      %v1473 = vpow.pop %v1472
      %v1474 = vmul.f32 %v1471, 1.442695
      %v1475 = vpow.pop %v1474
      %v1476 = vadd.f32 %v1473, 1.0
      %v1477 = vadd.f32 %v1475, 1.0
      %v1478 = vrcp.pop %v1476
      %v1479 = vrcp.pop %v1477
      %v1480 = vmul.f32 %v1468, %v1478
      %v1481 = vmul.f32 %v1469, %v1479
      %v1482 = vpack.c.bf16 %v1481, %v1480
      %v1483 = vld [vmem:[%s12] sm:$0xf]
      %v1484 = vld [vmem:[%s12 + $0x4] sm:$0xf]
      %v1485 = vld [vmem:[%s12 + $0x8] sm:$0xf]
      %v1486 = vld [vmem:[%s12 + $0xc] sm:$0xf]
      %v1487 = vld [vmem:[%s12 + $0x10] sm:$0xf]
      %v1488 = vld [vmem:[%s12 + $0x14] sm:$0xf]
      %v1489 = vld [vmem:[%s12 + $0x18] sm:$0xf]
      %v1490 = vld [vmem:[%s12 + $0x1c] sm:$0xf]
      %v1499 = vunpack.c.l.b16 %v1483
      %v1500 = vunpack.c.l.b16 %v1484
      %v1501 = vunpack.c.l.b16 %v1485
      %v1502 = vunpack.c.l.b16 %v1486
      %v1503 = vunpack.c.l.b16 %v1487
      %v1504 = vunpack.c.l.b16 %v1488
      %v1505 = vunpack.c.l.b16 %v1489
      %v1506 = vunpack.c.l.b16 %v1490
      %v1507 = vpack.c.b16 %v1500, %v1499
      %v1508 = vpack.c.b16 %v1502, %v1501
      %v1509 = vpack.c.b16 %v1504, %v1503
      %v1510 = vpack.c.b16 %v1506, %v1505
      %v1516 = vsel %vm722, %v1482, 0
      %1518 = vmatprep.subr.bf16.mxu0 0
      %1519 = vmatpush1.bf16.msra.mxu0 %v1507
      %1520 = vmatprep.subr.bf16.mxu0 0
      %1521 = vmatpush1.bf16.msra.mxu0 %v1508
      %1522 = vmatprep.subr.bf16.mxu0 0
      %1523 = vmatpush1.bf16.msra.mxu0 %v1509
      %1524 = vmatprep.subr.bf16.mxu0 0
      %1525 = vmatpush1.bf16.msra.mxu0 %v1510
      %1526 = vmatprep.subr.bf16.mxu0 0
      %1527 = vmatpush1.bf16.msra.mxu0 0
      %1528 = vmatprep.subr.bf16.mxu0 0
      %1529 = vmatpush1.bf16.msra.mxu0 0
      %1530 = vmatprep.subr.bf16.mxu0 0
      %1531 = vmatpush1.bf16.msra.mxu0 0
      %1532 = vmatprep.subr.bf16.mxu0 0
      %1533 = vmatpush1.bf16.msra.mxu0 0
      %1534 = vmatprep.subr.bf16.mxu0 0
      %1535 = vmatpush1.bf16.msra.mxu0 0
      %1536 = vmatprep.subr.bf16.mxu0 0
      %1537 = vmatpush1.bf16.msra.mxu0 0
      %1538 = vmatprep.subr.bf16.mxu0 0
      %1539 = vmatpush1.bf16.msra.mxu0 0
      %1540 = vmatprep.subr.bf16.mxu0 0
      %1541 = vmatpush1.bf16.msra.mxu0 0
      %1542 = vmatprep.subr.bf16.mxu0 0
      %1543 = vmatpush1.bf16.msra.mxu0 0
      %1544 = vmatprep.subr.bf16.mxu0 0
      %1545 = vmatpush1.bf16.msra.mxu0 0
      %1546 = vmatprep.subr.bf16.mxu0 0
      %1547 = vmatpush1.bf16.msra.mxu0 0
      %1548 = vmatprep.subr.bf16.mxu0 0
      %1549 = vmatpush1.bf16.msra.mxu0 0
      %1550 = vmatprep.mubr.bf16.mxu0 0
      %1551 = vmatmul.mubr.bf16.gmra.mrb[0].mxu0 %v1516
      %v1552 = vpop.f32.mrb[0].mxu0
      %v1553 = vadd.f32 0.0, %v1552
      %v1554 = vpop.f32.mrb[0].mxu0
      %v1555 = vpop.f32.mrb[0].mxu0
      %v1556 = vadd.f32 0.0, %v1555
      %v1557 = vpop.f32.mrb[0].mxu0
      %1558 = vdwg.mxu0
      %v1559 = vld [vmem:[%s13] sm:$0x1]
      %v1561 = vlaneseq
      %v1562 = vshrl.u32 %v1561, 7
      %v1563 = vsub.s32 0, %v1562
      %v1564 = vrot.slane %v1559, %v1563
      %v1566 = vadd.f32 %v1553, %v1564
      %v1567 = vadd.f32 %v1556, %v1564
      %vm1568 = vcmp.gt.f32.partialorder %v1566, 20.0
      %vm1569 = vcmp.gt.f32.partialorder %v1567, 20.0
      %v1570 = vmin.f32 %v1566, 20.0
      %v1571 = vmin.f32 %v1567, 20.0
      %v1572 = vmul.f32 %v1570, 1.442695
      %v1573 = vpow.pop %v1572
      %v1574 = vmul.f32 %v1571, 1.442695
      %v1575 = vpow.pop %v1574
      %v1576 = vadd.f32 %v1573, 1.0
      %v1577 = vadd.f32 %v1575, 1.0
      %v1578 = vlog2.pop %v1576
      %v1579 = vmul.f32 %v1578, 0.6931472
      %v1580 = vlog2.pop %v1577
      %v1581 = vmul.f32 %v1580, 0.6931472
      %v1582 = vsel %vm1568, %v1566, %v1579
      %v1583 = vsel %vm1569, %v1567, %v1581
      %1584 = vst.msk [vmem:[#allocation3] sm:$0xff] %vm722, %v1480
      %1585 = vst.msk [vmem:[#allocation3 + $0x8] sm:$0xff] %vm722, %v1481
      %1586 = vst.msk [vmem:[#allocation4] sm:$0xff] %vm722, %v1582
      %1587 = vst.msk [vmem:[#allocation4 + $0x8] sm:$0xff] %vm722, %v1583
      %1590 = vrot.lane.b32.xlu0 %v1553, 64
      %v1591 = vpop.permute.xlu0 %1590
      %1592 = vrot.lane.b32.xlu0 %v1556, 64
      %v1593 = vpop.permute.xlu0 %1592
      %1596 = vst.msk [vmem:[#allocation5] sm:$0xff] %vm901, %v1591
      %1597 = vst.msk [vmem:[#allocation5 + $0x8] sm:$0xff] %vm901, %v1593
      %v1598 = vld [vmem:[%s14] sm:$0xff]
      loop: start=0, step=1, limit=2
      $region112: #{bimamba_forward.5} parent=103 // loop_pre_header
        _
      $region113: #{bimamba_forward.5} parent=103 // loop_header
        %s1600 = sphi 0, %s1604
        %p1601 = scmp.ge.s32.totalorder %s1600, 2
        %v1605 = vphi 0.0, %v1866
      $region114: #{bimamba_forward.5} parent=103 // loop_header_branch
        %1603 = sbr.rel (%p1601) target = $region118
      $region115: #{bimamba_forward.5} parent=103 // loop_body
        %s1606 = ssub.s32 1, %s1600
        %s1607 = smul.u32 %s1606, 8
        %s1608 = scalar_lea.vmem [#allocation3], %s1607
        %v1609 = vld [vmem:[%s1608] sm:$0xff]
        %s1610 = scalar_lea.vmem [#allocation4], %s1607
        %v1611 = vld [vmem:[%s1610] sm:$0xff]
        %s1612 = scalar_lea.vmem [#allocation5], %s1607
        %v1613 = vld [vmem:[%s1612] sm:$0xff]
        %v1614 = vmul.f32 %v1611, %v1609
        %v1615 = vlaneseq
        %v1616 = vshrl.u32 %v1615, 7
        %v1617 = vsub.s32 7, %v1616
        %v1618 = vrot.slane %v1611, %v1617
        %v1619 = vmul.f32 %v1618, %v1598
        %v1620 = vmul.f32 %v1619, 1.442695
        %v1621 = vpow.pop %v1620
        %v1622 = vlaneseq
        %v1623 = vshrl.u32 %v1622, 7
        %v1624 = vsub.s32 7, %v1623
        %v1625 = vrot.slane %v1613, %v1624
        %1627 = vbcast.lane.b32.xlu0 %v1625, 256
        %v1628 = vpop.permute.xlu0 %1627
        %v1629 = vlaneseq
        %v1630 = vshrl.u32 %v1629, 7
        %v1631 = vsub.s32 7, %v1630
        %v1632 = vrot.slane %v1614, %v1631
        %v1633 = vmul.f32 %v1628, %v1632
        %v1634 = vmul.f32 %v1621, %v1605
        %v1635 = vadd.f32 %v1634, %v1633
        %s1637 = sor.u32 256, 8
        %1638 = vbcast.lane.b32.xlu0 %v1625, %s1637
        %v1639 = vpop.permute.xlu0 %1638
        %v1640 = vmul.f32 %v1639, %v1635
        %v1641 = vsel %vm722, %v1640, 0.0
        %v1642 = vrot.slane %v1641, 4
        %v1643 = vadd.f32 %v1641, %v1642
        %v1644 = vrot.slane %v1643, 2
        %v1645 = vadd.f32 %v1643, %v1644
        %v1646 = vrot.slane %v1645, 1
        %v1647 = vadd.f32 %v1645, %v1646
        %v1648 = vlaneseq
        %v1649 = vshrl.u32 %v1648, 7
        %v1650 = vsub.s32 6, %v1649
        %v1651 = vrot.slane %v1611, %v1650
        %v1652 = vmul.f32 %v1651, %v1598
        %v1653 = vmul.f32 %v1652, 1.442695
        %v1654 = vpow.pop %v1653
        %v1655 = vlaneseq
        %v1656 = vshrl.u32 %v1655, 7
        %v1657 = vsub.s32 6, %v1656
        %v1658 = vrot.slane %v1613, %v1657
        %1660 = vbcast.lane.b32.xlu0 %v1658, 256
        %v1661 = vpop.permute.xlu0 %1660
        %v1662 = vlaneseq
        %v1663 = vshrl.u32 %v1662, 7
        %v1664 = vsub.s32 6, %v1663
        %v1665 = vrot.slane %v1614, %v1664
        %v1666 = vmul.f32 %v1661, %v1665
        %v1667 = vmul.f32 %v1654, %v1635
        %v1668 = vadd.f32 %v1667, %v1666
        %s1670 = sor.u32 256, 8
        %1671 = vbcast.lane.b32.xlu0 %v1658, %s1670
        %v1672 = vpop.permute.xlu0 %1671
        %v1673 = vmul.f32 %v1672, %v1668
        %v1674 = vsel %vm722, %v1673, 0.0
        %v1675 = vrot.slane %v1674, 4
        %v1676 = vadd.f32 %v1674, %v1675
        %v1677 = vrot.slane %v1676, 2
        %v1678 = vadd.f32 %v1676, %v1677
        %v1679 = vrot.slane %v1678, 1
        %v1680 = vadd.f32 %v1678, %v1679
        %v1681 = vlaneseq
        %v1682 = vshrl.u32 %v1681, 7
        %v1683 = vsub.s32 5, %v1682
        %v1684 = vrot.slane %v1611, %v1683
        %v1685 = vmul.f32 %v1684, %v1598
        %v1686 = vmul.f32 %v1685, 1.442695
        %v1687 = vpow.pop %v1686
        %v1688 = vlaneseq
        %v1689 = vshrl.u32 %v1688, 7
        %v1690 = vsub.s32 5, %v1689
        %v1691 = vrot.slane %v1613, %v1690
        %1693 = vbcast.lane.b32.xlu0 %v1691, 256
        %v1694 = vpop.permute.xlu0 %1693
        %v1695 = vlaneseq
        %v1696 = vshrl.u32 %v1695, 7
        %v1697 = vsub.s32 5, %v1696
        %v1698 = vrot.slane %v1614, %v1697
        %v1699 = vmul.f32 %v1694, %v1698
        %v1700 = vmul.f32 %v1687, %v1668
        %v1701 = vadd.f32 %v1700, %v1699
        %s1703 = sor.u32 256, 8
        %1704 = vbcast.lane.b32.xlu0 %v1691, %s1703
        %v1705 = vpop.permute.xlu0 %1704
        %v1706 = vmul.f32 %v1705, %v1701
        %v1707 = vsel %vm722, %v1706, 0.0
        %v1708 = vrot.slane %v1707, 4
        %v1709 = vadd.f32 %v1707, %v1708
        %v1710 = vrot.slane %v1709, 2
        %v1711 = vadd.f32 %v1709, %v1710
        %v1712 = vrot.slane %v1711, 1
        %v1713 = vadd.f32 %v1711, %v1712
        %v1714 = vlaneseq
        %v1715 = vshrl.u32 %v1714, 7
        %v1716 = vsub.s32 4, %v1715
        %v1717 = vrot.slane %v1611, %v1716
        %v1718 = vmul.f32 %v1717, %v1598
        %v1719 = vmul.f32 %v1718, 1.442695
        %v1720 = vpow.pop %v1719
        %v1721 = vlaneseq
        %v1722 = vshrl.u32 %v1721, 7
        %v1723 = vsub.s32 4, %v1722
        %v1724 = vrot.slane %v1613, %v1723
        %1726 = vbcast.lane.b32.xlu0 %v1724, 256
        %v1727 = vpop.permute.xlu0 %1726
        %v1728 = vlaneseq
        %v1729 = vshrl.u32 %v1728, 7
        %v1730 = vsub.s32 4, %v1729
        %v1731 = vrot.slane %v1614, %v1730
        %v1732 = vmul.f32 %v1727, %v1731
        %v1733 = vmul.f32 %v1720, %v1701
        %v1734 = vadd.f32 %v1733, %v1732
        %s1736 = sor.u32 256, 8
        %1737 = vbcast.lane.b32.xlu0 %v1724, %s1736
        %v1738 = vpop.permute.xlu0 %1737
        %v1739 = vmul.f32 %v1738, %v1734
        %v1740 = vsel %vm722, %v1739, 0.0
        %v1741 = vrot.slane %v1740, 4
        %v1742 = vadd.f32 %v1740, %v1741
        %v1743 = vrot.slane %v1742, 2
        %v1744 = vadd.f32 %v1742, %v1743
        %v1745 = vrot.slane %v1744, 1
        %v1746 = vadd.f32 %v1744, %v1745
        %v1747 = vlaneseq
        %v1748 = vshrl.u32 %v1747, 7
        %v1749 = vsub.s32 3, %v1748
        %v1750 = vrot.slane %v1611, %v1749
        %v1751 = vmul.f32 %v1750, %v1598
        %v1752 = vmul.f32 %v1751, 1.442695
        %v1753 = vpow.pop %v1752
        %v1754 = vlaneseq
        %v1755 = vshrl.u32 %v1754, 7
        %v1756 = vsub.s32 3, %v1755
        %v1757 = vrot.slane %v1613, %v1756
        %1759 = vbcast.lane.b32.xlu0 %v1757, 256
        %v1760 = vpop.permute.xlu0 %1759
        %v1761 = vlaneseq
        %v1762 = vshrl.u32 %v1761, 7
        %v1763 = vsub.s32 3, %v1762
        %v1764 = vrot.slane %v1614, %v1763
        %v1765 = vmul.f32 %v1760, %v1764
        %v1766 = vmul.f32 %v1753, %v1734
        %v1767 = vadd.f32 %v1766, %v1765
        %s1769 = sor.u32 256, 8
        %1770 = vbcast.lane.b32.xlu0 %v1757, %s1769
        %v1771 = vpop.permute.xlu0 %1770
        %v1772 = vmul.f32 %v1771, %v1767
        %v1773 = vsel %vm722, %v1772, 0.0
        %v1774 = vrot.slane %v1773, 4
        %v1775 = vadd.f32 %v1773, %v1774
        %v1776 = vrot.slane %v1775, 2
        %v1777 = vadd.f32 %v1775, %v1776
        %v1778 = vrot.slane %v1777, 1
        %v1779 = vadd.f32 %v1777, %v1778
        %v1780 = vlaneseq
        %v1781 = vshrl.u32 %v1780, 7
        %v1782 = vsub.s32 2, %v1781
        %v1783 = vrot.slane %v1611, %v1782
        %v1784 = vmul.f32 %v1783, %v1598
        %v1785 = vmul.f32 %v1784, 1.442695
        %v1786 = vpow.pop %v1785
        %v1787 = vlaneseq
        %v1788 = vshrl.u32 %v1787, 7
        %v1789 = vsub.s32 2, %v1788
        %v1790 = vrot.slane %v1613, %v1789
        %1792 = vbcast.lane.b32.xlu0 %v1790, 256
        %v1793 = vpop.permute.xlu0 %1792
        %v1794 = vlaneseq
        %v1795 = vshrl.u32 %v1794, 7
        %v1796 = vsub.s32 2, %v1795
        %v1797 = vrot.slane %v1614, %v1796
        %v1798 = vmul.f32 %v1793, %v1797
        %v1799 = vmul.f32 %v1786, %v1767
        %v1800 = vadd.f32 %v1799, %v1798
        %s1802 = sor.u32 256, 8
        %1803 = vbcast.lane.b32.xlu0 %v1790, %s1802
        %v1804 = vpop.permute.xlu0 %1803
        %v1805 = vmul.f32 %v1804, %v1800
        %v1806 = vsel %vm722, %v1805, 0.0
        %v1807 = vrot.slane %v1806, 4
        %v1808 = vadd.f32 %v1806, %v1807
        %v1809 = vrot.slane %v1808, 2
        %v1810 = vadd.f32 %v1808, %v1809
        %v1811 = vrot.slane %v1810, 1
        %v1812 = vadd.f32 %v1810, %v1811
        %v1813 = vlaneseq
        %v1814 = vshrl.u32 %v1813, 7
        %v1815 = vsub.s32 1, %v1814
        %v1816 = vrot.slane %v1611, %v1815
        %v1817 = vmul.f32 %v1816, %v1598
        %v1818 = vmul.f32 %v1817, 1.442695
        %v1819 = vpow.pop %v1818
        %v1820 = vlaneseq
        %v1821 = vshrl.u32 %v1820, 7
        %v1822 = vsub.s32 1, %v1821
        %v1823 = vrot.slane %v1613, %v1822
        %1825 = vbcast.lane.b32.xlu0 %v1823, 256
        %v1826 = vpop.permute.xlu0 %1825
        %v1827 = vlaneseq
        %v1828 = vshrl.u32 %v1827, 7
        %v1829 = vsub.s32 1, %v1828
        %v1830 = vrot.slane %v1614, %v1829
        %v1831 = vmul.f32 %v1826, %v1830
        %v1832 = vmul.f32 %v1819, %v1800
        %v1833 = vadd.f32 %v1832, %v1831
        %s1835 = sor.u32 256, 8
        %1836 = vbcast.lane.b32.xlu0 %v1823, %s1835
        %v1837 = vpop.permute.xlu0 %1836
        %v1838 = vmul.f32 %v1837, %v1833
        %v1839 = vsel %vm722, %v1838, 0.0
        %v1840 = vrot.slane %v1839, 4
        %v1841 = vadd.f32 %v1839, %v1840
        %v1842 = vrot.slane %v1841, 2
        %v1843 = vadd.f32 %v1841, %v1842
        %v1844 = vrot.slane %v1843, 1
        %v1845 = vadd.f32 %v1843, %v1844
        %v1846 = vlaneseq
        %v1847 = vshrl.u32 %v1846, 7
        %v1848 = vsub.s32 0, %v1847
        %v1849 = vrot.slane %v1611, %v1848
        %v1850 = vmul.f32 %v1849, %v1598
        %v1851 = vmul.f32 %v1850, 1.442695
        %v1852 = vpow.pop %v1851
        %v1853 = vlaneseq
        %v1854 = vshrl.u32 %v1853, 7
        %v1855 = vsub.s32 0, %v1854
        %v1856 = vrot.slane %v1613, %v1855
        %1858 = vbcast.lane.b32.xlu0 %v1856, 256
        %v1859 = vpop.permute.xlu0 %1858
        %v1860 = vlaneseq
        %v1861 = vshrl.u32 %v1860, 7
        %v1862 = vsub.s32 0, %v1861
        %v1863 = vrot.slane %v1614, %v1862
        %v1864 = vmul.f32 %v1859, %v1863
        %v1865 = vmul.f32 %v1852, %v1833
        %v1866 = vadd.f32 %v1865, %v1864
        %s1868 = sor.u32 256, 8
        %1869 = vbcast.lane.b32.xlu0 %v1856, %s1868
        %v1870 = vpop.permute.xlu0 %1869
        %v1871 = vmul.f32 %v1870, %v1866
        %v1872 = vsel %vm722, %v1871, 0.0
        %v1873 = vrot.slane %v1872, 4
        %v1874 = vadd.f32 %v1872, %v1873
        %v1875 = vrot.slane %v1874, 2
        %v1876 = vadd.f32 %v1874, %v1875
        %v1877 = vrot.slane %v1876, 1
        %v1878 = vadd.f32 %v1876, %v1877
        %vm1879 = vcmask 1040384
        %v1880 = vsel %vm1879, %v1878, %v1845
        %vm1881 = vcmask 1041408
        %v1882 = vsel %vm1881, %v1880, %v1812
        %vm1883 = vcmask 1042432
        %v1884 = vsel %vm1883, %v1882, %v1779
        %vm1885 = vcmask 1043456
        %v1886 = vsel %vm1885, %v1884, %v1746
        %vm1887 = vcmask 1044480
        %v1888 = vsel %vm1887, %v1886, %v1713
        %vm1889 = vcmask 1045504
        %v1890 = vsel %vm1889, %v1888, %v1680
        %vm1891 = vcmask 1046528
        %v1892 = vsel %vm1891, %v1890, %v1647
        %s1893 = scalar_lea.vmem [#allocation6], %s1607
        %1894 = vst.msk [vmem:[%s1893] sm:$0xff] %vm722, %v1892
      $region116: #{bimamba_forward.5} parent=103 // loop_footer
        %s1604 = sadd.s32 1, %s1600
      $region117: #{bimamba_forward.5} parent=103 // loop_footer_branch
        %1599 = sbr.rel target = $region113
      $region118: #{bimamba_forward.5} parent=103 // loop_exit
        _
      %v1895 = vld [vmem:[#allocation6] sm:$0xff]
      %v1896 = vld [vmem:[#allocation6 + $0x8] sm:$0xff]
      %v1897 = vld [vmem:[#allocation3] sm:$0xff]
      %v1898 = vld [vmem:[#allocation3 + $0x8] sm:$0xff]
      %v1899 = vld [vmem:[%s15] sm:$0x1]
      %v1901 = vlaneseq
      %v1902 = vshrl.u32 %v1901, 7
      %v1903 = vsub.s32 0, %v1902
      %v1904 = vrot.slane %v1899, %v1903
      %v1906 = vmul.f32 %v1897, %v1904
      %v1907 = vmul.f32 %v1898, %v1904
      %v1908 = vadd.f32 %v1895, %v1906
      %v1909 = vadd.f32 %v1896, %v1907
      %v1910 = vsub.f32 0.0, %v1412
      %v1911 = vsub.f32 0.0, %v1415
      %v1912 = vmul.f32 %v1910, 1.442695
      %v1913 = vpow.pop %v1912
      %v1914 = vmul.f32 %v1911, 1.442695
      %v1915 = vpow.pop %v1914
      %v1916 = vadd.f32 %v1913, 1.0
      %v1917 = vadd.f32 %v1915, 1.0
      %v1918 = vrcp.pop %v1916
      %v1919 = vrcp.pop %v1917
      %v1920 = vmul.f32 %v1412, %v1918
      %v1921 = vmul.f32 %v1415, %v1919
      %1924 = vrot.lane.b32.xlu0 %v1920, 64
      %v1925 = vpop.permute.xlu0 %1924
      %1926 = vrot.lane.b32.xlu0 %v1921, 64
      %v1927 = vpop.permute.xlu0 %1926
      %v1930 = vmul.f32 %v1908, %v1925
      %v1931 = vmul.f32 %v1909, %v1927
      %v1932 = vpack.c.bf16 %v1931, %v1930
      %v1933 = vld [vmem:[%s16] sm:$0xf]
      %v1934 = vld [vmem:[%s16 + $0x4] sm:$0xf]
      %v1935 = vld [vmem:[%s16 + $0x8] sm:$0xf]
      %v1936 = vld [vmem:[%s16 + $0xc] sm:$0xf]
      %v1937 = vld [vmem:[%s16 + $0x10] sm:$0xf]
      %v1938 = vld [vmem:[%s16 + $0x14] sm:$0xf]
      %v1939 = vld [vmem:[%s16 + $0x18] sm:$0xf]
      %v1940 = vld [vmem:[%s16 + $0x1c] sm:$0xf]
      %v1941 = vld [vmem:[%s656] sm:$0xff]
      %v1942 = vld [vmem:[%s656 + $0x8] sm:$0xff]
      %v1951 = vunpack.c.l.b16 %v1933
      %v1952 = vunpack.c.l.b16 %v1934
      %v1953 = vunpack.c.l.b16 %v1935
      %v1954 = vunpack.c.l.b16 %v1936
      %v1955 = vunpack.c.l.b16 %v1937
      %v1956 = vunpack.c.l.b16 %v1938
      %v1957 = vunpack.c.l.b16 %v1939
      %v1958 = vunpack.c.l.b16 %v1940
      %v1959 = vpack.c.b16 %v1952, %v1951
      %v1960 = vpack.c.b16 %v1954, %v1953
      %v1961 = vpack.c.b16 %v1956, %v1955
      %v1962 = vpack.c.b16 %v1958, %v1957
      %v1968 = vsel %vm722, %v1932, 0
      %1970 = vmatprep.subr.bf16.mxu0 0
      %1971 = vmatpush1.bf16.msra.mxu0 %v1959
      %1972 = vmatprep.subr.bf16.mxu0 0
      %1973 = vmatpush1.bf16.msra.mxu0 %v1960
      %1974 = vmatprep.subr.bf16.mxu0 0
      %1975 = vmatpush1.bf16.msra.mxu0 %v1961
      %1976 = vmatprep.subr.bf16.mxu0 0
      %1977 = vmatpush1.bf16.msra.mxu0 %v1962
      %1978 = vmatprep.subr.bf16.mxu0 0
      %1979 = vmatpush1.bf16.msra.mxu0 0
      %1980 = vmatprep.subr.bf16.mxu0 0
      %1981 = vmatpush1.bf16.msra.mxu0 0
      %1982 = vmatprep.subr.bf16.mxu0 0
      %1983 = vmatpush1.bf16.msra.mxu0 0
      %1984 = vmatprep.subr.bf16.mxu0 0
      %1985 = vmatpush1.bf16.msra.mxu0 0
      %1986 = vmatprep.subr.bf16.mxu0 0
      %1987 = vmatpush1.bf16.msra.mxu0 0
      %1988 = vmatprep.subr.bf16.mxu0 0
      %1989 = vmatpush1.bf16.msra.mxu0 0
      %1990 = vmatprep.subr.bf16.mxu0 0
      %1991 = vmatpush1.bf16.msra.mxu0 0
      %1992 = vmatprep.subr.bf16.mxu0 0
      %1993 = vmatpush1.bf16.msra.mxu0 0
      %1994 = vmatprep.subr.bf16.mxu0 0
      %1995 = vmatpush1.bf16.msra.mxu0 0
      %1996 = vmatprep.subr.bf16.mxu0 0
      %1997 = vmatpush1.bf16.msra.mxu0 0
      %1998 = vmatprep.subr.bf16.mxu0 0
      %1999 = vmatpush1.bf16.msra.mxu0 0
      %2000 = vmatprep.subr.bf16.mxu0 0
      %2001 = vmatpush1.bf16.msra.mxu0 0
      %2002 = vmatprep.mubr.bf16.mxu0 0
      %2003 = vmatmul.mubr.bf16.gmra.mrb[0].mxu0 %v1968
      %v2004 = vpop.f32.mrb[0].mxu0
      %v2005 = vadd.f32 %v658, %v2004
      %v2006 = vpop.f32.mrb[0].mxu0
      %v2007 = vpop.f32.mrb[0].mxu0
      %v2008 = vadd.f32 %v659, %v2007
      %v2009 = vpop.f32.mrb[0].mxu0
      %2010 = vdwg.mxu0
      %v2011 = vld [vmem:[%s19] sm:$0x1]
      %v2012 = vld [vmem:[%s20] sm:$0x1]
      %v2013 = vsel %vm677, %v2005, 0.0
      %2014 = vadd.xlane.f32.xlu0 %v2013
      %v2015 = vpop.xlane.xlu0 %2014
      %v2016 = vsel %vm677, %v2008, 0.0
      %2017 = vadd.xlane.f32.xlu0 %v2016
      %v2018 = vpop.xlane.xlu0 %2017
      %v2019 = vmul.f32 %v2015, %v1322
      %v2020 = vmul.f32 %v2018, %v1322
      %v2021 = vsub.f32 %v2005, %v2019
      %v2022 = vsub.f32 %v2008, %v2020
      %v2023 = vmul.f32 %v2021, %v2021
      %v2024 = vmul.f32 %v2022, %v2022
      %v2025 = vsel %vm677, %v2023, 0.0
      %2026 = vadd.xlane.f32.xlu0 %v2025
      %v2027 = vpop.xlane.xlu0 %2026
      %v2028 = vsel %vm677, %v2024, 0.0
      %2029 = vadd.xlane.f32.xlu0 %v2028
      %v2030 = vpop.xlane.xlu0 %2029
      %v2031 = vmul.f32 %v2027, %v1322
      %v2032 = vmul.f32 %v2030, %v1322
      %v2033 = vadd.f32 %v2031, 1e-05
      %v2034 = vadd.f32 %v2032, 1e-05
      %v2035 = vrsqrt.pop %v2033
      %v2036 = vrsqrt.pop %v2034
      %v2037 = vmul.f32 %v2021, %v2035
      %v2038 = vmul.f32 %v2022, %v2036
      %v2040 = vlaneseq
      %v2041 = vshrl.u32 %v2040, 7
      %v2042 = vsub.s32 0, %v2041
      %v2043 = vrot.slane %v2011, %v2042
      %v2045 = vmul.f32 %v2037, %v2043
      %v2046 = vmul.f32 %v2038, %v2043
      %v2048 = vlaneseq
      %v2049 = vshrl.u32 %v2048, 7
      %v2050 = vsub.s32 0, %v2049
      %v2051 = vrot.slane %v2012, %v2050
      %v2053 = vadd.f32 %v2045, %v2051
      %v2054 = vadd.f32 %v2046, %v2051
      %v2055 = vadd.f32 %v1941, %v2053
      %v2056 = vadd.f32 %v1942, %v2054
      %2057 = vst.msk [vmem:[%s656] sm:$0xff] %vm677, %v2055
      %2058 = vst.msk [vmem:[%s656 + $0x8] sm:$0xff] %vm677, %v2056
      %p2059 = scmp.lt.s32.totalorder %s32, 1
      %s2060 = scalar_select %p2059, %s32, 1
      %s2061 = smul.addr %s2060, 2
      %s2062 = smul.addr %s2061, 8
      %s2063 = scalar_lea.vmem %s21, %s2062
      // Predicated region
      $region119: #{bimamba_forward.5} parent=103 // pred_check
        %p2064 = pneg %p496
      $region120: #{bimamba_forward.5} parent=103 // pred_check_branch
        %2066 = sbr.rel (%p2064) target = $region122
      $region121: #{bimamba_forward.5} parent=103 // pred_region
        _
      $region122: #{bimamba_forward.5} parent=103 // pred_fallthru
        _
    $region104: #{bimamba_forward.5} parent=5 // pred_fallthru
      _
    %p2067 = scmp.le.s32.totalorder 2, %s27
    // Predicated region
    $region123: #{bimamba_forward.5} parent=5 // pred_check
      %p2068 = pneg %p2067
    $region124: #{bimamba_forward.5} parent=5 // pred_check_branch
      %2070 = sbr.rel (%p2068) target = $region126
    $region125: #{bimamba_forward.5} parent=5 // pred_region
      %s2071 = ssub.s32 %s27, 2
      // Predicated region
      $region127: #{bimamba_forward.5} parent=125 // pred_check
        %p2072 = pneg %p502
      $region128: #{bimamba_forward.5} parent=125 // pred_check_branch
        %2074 = sbr.rel (%p2072) target = $region130
      $region129: #{bimamba_forward.5} parent=125 // pred_region
        %p2075 = scmp.lt.s32.totalorder %s33, 1
        %s2076 = scalar_select %p2075, %s33, 1
        %s2077 = smul.addr %s2076, 2
        %s2078 = smul.addr %s2077, 8
        %s2079 = scalar_lea.vmem %s21, %s2078
      $region130: #{bimamba_forward.5} parent=125 // pred_fallthru
        _
    $region126: #{bimamba_forward.5} parent=5 // pred_fallthru
      _
  $region6: #{bimamba_forward.5} parent=0 // loop_footer
    %s31 = sadd.s32 1, %s27
  $region7: #{bimamba_forward.5} parent=0 // loop_footer_branch
    %26 = sbr.rel target = $region3
  $region8: #{bimamba_forward.5} parent=0 // loop_exit
    _

// kernel: bimamba_forward.6
$region0: #{bimamba_forward.6}
  #allocation0 [shape = 'u32[]', space=smem, size = 0x4, offset = 0x4, fixed_abs, tag = 'smem constant byte address 0x4 - core index']
  #allocation1 [shape = 'u32[144,128]{1,0:T(1,128)}', space=vmem, size = 0x12000, scoped, tag = 'internal scratch']
  #allocation2 [shape = 'f32[1,32,64]{2,1,0:T(8,128)}', space=vmem, size = 0x4000, scoped, tag = 'scratch operand']
  #allocation3 [shape = 'f32[1,16,64]{2,1,0:T(8,128)}', space=vmem, size = 0x2000, scoped, tag = 'scratch operand']
  #allocation4 [shape = 'f32[1,16,64]{2,1,0:T(8,128)}', space=vmem, size = 0x2000, scoped, tag = 'scratch operand']
  #allocation5 [shape = 'f32[1,16,16]{2,1,0:T(8,128)}', space=vmem, size = 0x2000, scoped, tag = 'scratch operand']
  #allocation6 [shape = 'f32[1,16,64]{2,1,0:T(8,128)}', space=vmem, size = 0x2000, scoped, tag = 'scratch operand']
  %s0 = inlined_call_operand.vmem [shape: f32[2,16,32], index: 0, kind: input, shape index: {}]
  %s1 = inlined_call_operand.vmem [shape: bf16[32,128], index: 1, kind: input, shape index: {}]
  %s2 = inlined_call_operand.vmem [shape: f32[4,64], index: 2, kind: input, shape index: {}]
  %s3 = inlined_call_operand.vmem [shape: f32[1,64], index: 3, kind: input, shape index: {}]
  %s4 = inlined_call_operand.vmem [shape: bf16[64,80], index: 4, kind: input, shape index: {}]
  %s5 = inlined_call_operand.vmem [shape: f32[1,64], index: 5, kind: input, shape index: {}]
  %s6 = inlined_call_operand.vmem [shape: f32[8,64], index: 6, kind: input, shape index: {}]
  %s7 = inlined_call_operand.vmem [shape: f32[1,64], index: 7, kind: input, shape index: {}]
  %s8 = inlined_call_operand.vmem [shape: bf16[64,32], index: 8, kind: input, shape index: {}]
  %s9 = inlined_call_operand.vmem [shape: bf16[32,128], index: 9, kind: input, shape index: {}]
  %s10 = inlined_call_operand.vmem [shape: f32[4,64], index: 10, kind: input, shape index: {}]
  %s11 = inlined_call_operand.vmem [shape: f32[1,64], index: 11, kind: input, shape index: {}]
  %s12 = inlined_call_operand.vmem [shape: bf16[64,80], index: 12, kind: input, shape index: {}]
  %s13 = inlined_call_operand.vmem [shape: f32[1,64], index: 13, kind: input, shape index: {}]
  %s14 = inlined_call_operand.vmem [shape: f32[8,64], index: 14, kind: input, shape index: {}]
  %s15 = inlined_call_operand.vmem [shape: f32[1,64], index: 15, kind: input, shape index: {}]
  %s16 = inlined_call_operand.vmem [shape: bf16[64,32], index: 16, kind: input, shape index: {}]
  %s17 = inlined_call_operand.vmem [shape: f32[1,32], index: 17, kind: input, shape index: {}]
  %s18 = inlined_call_operand.vmem [shape: f32[1,32], index: 18, kind: input, shape index: {}]
  %s19 = inlined_call_operand.vmem [shape: f32[1,32], index: 19, kind: input, shape index: {}]
  %s20 = inlined_call_operand.hbm [shape: f32[1,32], index: 20, kind: input, shape index: {}]
  %s21 = inlined_call_operand.vmem [shape: f32[2,16,32], index: 21, kind: output, shape index: {}]
  %s22 = sld [smem:[#allocation0]]
  $region135: #{bimamba_forward.6} parent=0
    _
  %s24 = ssub.s32 1, %s22
  %s25 = scalar_select 0, %s24, %s22
  $region1: #{bimamba_forward.6} parent=0
    #allocation7 [shape = 'u8[512]{0}', space=vmem, size = 0x400, scoped, tag = 'input window, operand 20, single buffered']
    #allocation8 [shape = 's32[2]{0}', space=sflag, size = 0x8, scoped, tag = 'scoped memory for bimamba_forward.6']
    %26 = vsyncpa [#allocation8], 0
    loop: start=0, step=1, limit=4
    $region2: #{bimamba_forward.6} parent=1 // loop_pre_header
      _
    $region3: #{bimamba_forward.6} parent=1 // loop_header
      %s28 = sphi 0, %s32
      %p29 = scmp.ge.s32.totalorder %s28, 4
      %s38 = sphi 0, %s40
      %s41 = sphi 0, %s38
      %s42 = sphi 0, %s41
      %s58 = sphi 0, %s42
      %s62 = sphi 0, %s62
      %s64 = sphi 0, %s62
      %s65 = sphi 0, %s64
      %s79 = sphi 0, %s65
      %s83 = sphi 0, %s83
      %s85 = sphi 0, %s83
      %s86 = sphi 0, %s85
      %s100 = sphi 0, %s86
      %s104 = sphi 0, %s104
      %s106 = sphi 0, %s104
      %s107 = sphi 0, %s106
      %s121 = sphi 0, %s107
      %s125 = sphi 0, %s125
      %s127 = sphi 0, %s125
      %s128 = sphi 0, %s127
      %s142 = sphi 0, %s128
      %s146 = sphi 0, %s146
      %s148 = sphi 0, %s146
      %s149 = sphi 0, %s148
      %s163 = sphi 0, %s149
      %s167 = sphi 0, %s167
      %s169 = sphi 0, %s167
      %s170 = sphi 0, %s169
      %s184 = sphi 0, %s170
      %s188 = sphi 0, %s188
      %s190 = sphi 0, %s188
      %s191 = sphi 0, %s190
      %s205 = sphi 0, %s191
      %s209 = sphi 0, %s209
      %s211 = sphi 0, %s209
      %s212 = sphi 0, %s211
      %s226 = sphi 0, %s212
      %s230 = sphi 0, %s230
      %s232 = sphi 0, %s230
      %s233 = sphi 0, %s232
      %s247 = sphi 0, %s233
      %s251 = sphi 0, %s251
      %s253 = sphi 0, %s251
      %s254 = sphi 0, %s253
      %s268 = sphi 0, %s254
      %s272 = sphi 0, %s272
      %s274 = sphi 0, %s272
      %s275 = sphi 0, %s274
      %s289 = sphi 0, %s275
      %s293 = sphi 0, %s293
      %s295 = sphi 0, %s293
      %s296 = sphi 0, %s295
      %s310 = sphi 0, %s296
      %s314 = sphi 0, %s314
      %s316 = sphi 0, %s314
      %s317 = sphi 0, %s316
      %s331 = sphi 0, %s317
      %s335 = sphi 0, %s335
      %s337 = sphi 0, %s335
      %s338 = sphi 0, %s337
      %s352 = sphi 0, %s338
      %s356 = sphi 0, %s356
      %s358 = sphi 0, %s356
      %s359 = sphi 0, %s358
      %s373 = sphi 0, %s359
      %s377 = sphi 0, %s377
      %s379 = sphi 0, %s377
      %s380 = sphi 0, %s379
      %s394 = sphi 0, %s380
      %s398 = sphi 0, %s398
      %s400 = sphi 0, %s398
      %s401 = sphi 0, %s400
      %s415 = sphi 0, %s401
      %s419 = sphi 0, %s419
      %s421 = sphi 0, %s419
      %s422 = sphi 0, %s421
      %s436 = sphi 0, %s422
      %s440 = sphi 0, %s440
      %s442 = sphi 0, %s440
      %s443 = sphi 0, %s442
      %s457 = sphi 0, %s443
      %s461 = sphi 0, %s461
      %s463 = sphi 0, %s461
      %s464 = sphi 0, %s463
      %s478 = sphi 0, %s464
      %s484 = sphi 0, %s486
      %s487 = sphi 0, %s484
      %s488 = sphi 0, %s487
      %s504 = sphi 0, %s488
    $region4: #{bimamba_forward.6} parent=1 // loop_header_branch
      %31 = sbr.rel (%p29) target = $region8
    $region5: #{bimamba_forward.6} parent=1 // loop_body
      %s33 = ssub.s32 %s28, 1
      %s34 = ssub.s32 %s28, 2
      %s35 = sadd.s32 %s28, 1
      %s36 = ssub.s32 %s28, %s35
      %p37 = scmp.eq.s32.totalorder %s36, 0
      %s39 = sadd.s32 %s38, 1
      %s40 = scalar_select %p37, %s38, %s39
      %p43 = pneg %p37
      %p44 = scmp.eq.s32.totalorder %s28, 1
      %p45 = por %p43, %p44
      %p46 = scmp.ne.s32.totalorder %s38, %s41
      %p47 = scmp.eq.s32.totalorder %s28, 0
      %p48 = por %p46, %p47
      %p49 = scmp.ne.s32.totalorder %s38, %s41
      %p50 = scmp.eq.s32.totalorder %s33, 1
      %p51 = por %p49, %p50
      %p52 = scmp.ne.s32.totalorder %s41, %s42
      %p53 = scmp.eq.s32.totalorder %s33, 0
      %p54 = por %p52, %p53
      %p55 = scmp.ne.s32.totalorder %s41, %s42
      %p56 = scmp.eq.s32.totalorder %s34, 1
      %p57 = por %p55, %p56
      %p59 = scmp.ne.s32.totalorder %s42, %s58
      %p60 = scmp.eq.s32.totalorder %s34, 0
      %p61 = por %p59, %p60
      %s63 = sadd.s32 %s62, 1
      %p66 = scmp.eq.s32.totalorder %s28, 1
      %p67 = scmp.ne.s32.totalorder %s62, %s64
      %p68 = scmp.eq.s32.totalorder %s28, 0
      %p69 = por %p67, %p68
      %p70 = scmp.ne.s32.totalorder %s62, %s64
      %p71 = scmp.eq.s32.totalorder %s33, 1
      %p72 = por %p70, %p71
      %p73 = scmp.ne.s32.totalorder %s64, %s65
      %p74 = scmp.eq.s32.totalorder %s33, 0
      %p75 = por %p73, %p74
      %p76 = scmp.ne.s32.totalorder %s64, %s65
      %p77 = scmp.eq.s32.totalorder %s34, 1
      %p78 = por %p76, %p77
      %p80 = scmp.ne.s32.totalorder %s65, %s79
      %p81 = scmp.eq.s32.totalorder %s34, 0
      %p82 = por %p80, %p81
      %s84 = sadd.s32 %s83, 1
      %p87 = scmp.eq.s32.totalorder %s28, 1
      %p88 = scmp.ne.s32.totalorder %s83, %s85
      %p89 = scmp.eq.s32.totalorder %s28, 0
      %p90 = por %p88, %p89
      %p91 = scmp.ne.s32.totalorder %s83, %s85
      %p92 = scmp.eq.s32.totalorder %s33, 1
      %p93 = por %p91, %p92
      %p94 = scmp.ne.s32.totalorder %s85, %s86
      %p95 = scmp.eq.s32.totalorder %s33, 0
      %p96 = por %p94, %p95
      %p97 = scmp.ne.s32.totalorder %s85, %s86
      %p98 = scmp.eq.s32.totalorder %s34, 1
      %p99 = por %p97, %p98
      %p101 = scmp.ne.s32.totalorder %s86, %s100
      %p102 = scmp.eq.s32.totalorder %s34, 0
      %p103 = por %p101, %p102
      %s105 = sadd.s32 %s104, 1
      %p108 = scmp.eq.s32.totalorder %s28, 1
      %p109 = scmp.ne.s32.totalorder %s104, %s106
      %p110 = scmp.eq.s32.totalorder %s28, 0
      %p111 = por %p109, %p110
      %p112 = scmp.ne.s32.totalorder %s104, %s106
      %p113 = scmp.eq.s32.totalorder %s33, 1
      %p114 = por %p112, %p113
      %p115 = scmp.ne.s32.totalorder %s106, %s107
      %p116 = scmp.eq.s32.totalorder %s33, 0
      %p117 = por %p115, %p116
      %p118 = scmp.ne.s32.totalorder %s106, %s107
      %p119 = scmp.eq.s32.totalorder %s34, 1
      %p120 = por %p118, %p119
      %p122 = scmp.ne.s32.totalorder %s107, %s121
      %p123 = scmp.eq.s32.totalorder %s34, 0
      %p124 = por %p122, %p123
      %s126 = sadd.s32 %s125, 1
      %p129 = scmp.eq.s32.totalorder %s28, 1
      %p130 = scmp.ne.s32.totalorder %s125, %s127
      %p131 = scmp.eq.s32.totalorder %s28, 0
      %p132 = por %p130, %p131
      %p133 = scmp.ne.s32.totalorder %s125, %s127
      %p134 = scmp.eq.s32.totalorder %s33, 1
      %p135 = por %p133, %p134
      %p136 = scmp.ne.s32.totalorder %s127, %s128
      %p137 = scmp.eq.s32.totalorder %s33, 0
      %p138 = por %p136, %p137
      %p139 = scmp.ne.s32.totalorder %s127, %s128
      %p140 = scmp.eq.s32.totalorder %s34, 1
      %p141 = por %p139, %p140
      %p143 = scmp.ne.s32.totalorder %s128, %s142
      %p144 = scmp.eq.s32.totalorder %s34, 0
      %p145 = por %p143, %p144
      %s147 = sadd.s32 %s146, 1
      %p150 = scmp.eq.s32.totalorder %s28, 1
      %p151 = scmp.ne.s32.totalorder %s146, %s148
      %p152 = scmp.eq.s32.totalorder %s28, 0
      %p153 = por %p151, %p152
      %p154 = scmp.ne.s32.totalorder %s146, %s148
      %p155 = scmp.eq.s32.totalorder %s33, 1
      %p156 = por %p154, %p155
      %p157 = scmp.ne.s32.totalorder %s148, %s149
      %p158 = scmp.eq.s32.totalorder %s33, 0
      %p159 = por %p157, %p158
      %p160 = scmp.ne.s32.totalorder %s148, %s149
      %p161 = scmp.eq.s32.totalorder %s34, 1
      %p162 = por %p160, %p161
      %p164 = scmp.ne.s32.totalorder %s149, %s163
      %p165 = scmp.eq.s32.totalorder %s34, 0
      %p166 = por %p164, %p165
      %s168 = sadd.s32 %s167, 1
      %p171 = scmp.eq.s32.totalorder %s28, 1
      %p172 = scmp.ne.s32.totalorder %s167, %s169
      %p173 = scmp.eq.s32.totalorder %s28, 0
      %p174 = por %p172, %p173
      %p175 = scmp.ne.s32.totalorder %s167, %s169
      %p176 = scmp.eq.s32.totalorder %s33, 1
      %p177 = por %p175, %p176
      %p178 = scmp.ne.s32.totalorder %s169, %s170
      %p179 = scmp.eq.s32.totalorder %s33, 0
      %p180 = por %p178, %p179
      %p181 = scmp.ne.s32.totalorder %s169, %s170
      %p182 = scmp.eq.s32.totalorder %s34, 1
      %p183 = por %p181, %p182
      %p185 = scmp.ne.s32.totalorder %s170, %s184
      %p186 = scmp.eq.s32.totalorder %s34, 0
      %p187 = por %p185, %p186
      %s189 = sadd.s32 %s188, 1
      %p192 = scmp.eq.s32.totalorder %s28, 1
      %p193 = scmp.ne.s32.totalorder %s188, %s190
      %p194 = scmp.eq.s32.totalorder %s28, 0
      %p195 = por %p193, %p194
      %p196 = scmp.ne.s32.totalorder %s188, %s190
      %p197 = scmp.eq.s32.totalorder %s33, 1
      %p198 = por %p196, %p197
      %p199 = scmp.ne.s32.totalorder %s190, %s191
      %p200 = scmp.eq.s32.totalorder %s33, 0
      %p201 = por %p199, %p200
      %p202 = scmp.ne.s32.totalorder %s190, %s191
      %p203 = scmp.eq.s32.totalorder %s34, 1
      %p204 = por %p202, %p203
      %p206 = scmp.ne.s32.totalorder %s191, %s205
      %p207 = scmp.eq.s32.totalorder %s34, 0
      %p208 = por %p206, %p207
      %s210 = sadd.s32 %s209, 1
      %p213 = scmp.eq.s32.totalorder %s28, 1
      %p214 = scmp.ne.s32.totalorder %s209, %s211
      %p215 = scmp.eq.s32.totalorder %s28, 0
      %p216 = por %p214, %p215
      %p217 = scmp.ne.s32.totalorder %s209, %s211
      %p218 = scmp.eq.s32.totalorder %s33, 1
      %p219 = por %p217, %p218
      %p220 = scmp.ne.s32.totalorder %s211, %s212
      %p221 = scmp.eq.s32.totalorder %s33, 0
      %p222 = por %p220, %p221
      %p223 = scmp.ne.s32.totalorder %s211, %s212
      %p224 = scmp.eq.s32.totalorder %s34, 1
      %p225 = por %p223, %p224
      %p227 = scmp.ne.s32.totalorder %s212, %s226
      %p228 = scmp.eq.s32.totalorder %s34, 0
      %p229 = por %p227, %p228
      %s231 = sadd.s32 %s230, 1
      %p234 = scmp.eq.s32.totalorder %s28, 1
      %p235 = scmp.ne.s32.totalorder %s230, %s232
      %p236 = scmp.eq.s32.totalorder %s28, 0
      %p237 = por %p235, %p236
      %p238 = scmp.ne.s32.totalorder %s230, %s232
      %p239 = scmp.eq.s32.totalorder %s33, 1
      %p240 = por %p238, %p239
      %p241 = scmp.ne.s32.totalorder %s232, %s233
      %p242 = scmp.eq.s32.totalorder %s33, 0
      %p243 = por %p241, %p242
      %p244 = scmp.ne.s32.totalorder %s232, %s233
      %p245 = scmp.eq.s32.totalorder %s34, 1
      %p246 = por %p244, %p245
      %p248 = scmp.ne.s32.totalorder %s233, %s247
      %p249 = scmp.eq.s32.totalorder %s34, 0
      %p250 = por %p248, %p249
      %s252 = sadd.s32 %s251, 1
      %p255 = scmp.eq.s32.totalorder %s28, 1
      %p256 = scmp.ne.s32.totalorder %s251, %s253
      %p257 = scmp.eq.s32.totalorder %s28, 0
      %p258 = por %p256, %p257
      %p259 = scmp.ne.s32.totalorder %s251, %s253
      %p260 = scmp.eq.s32.totalorder %s33, 1
      %p261 = por %p259, %p260
      %p262 = scmp.ne.s32.totalorder %s253, %s254
      %p263 = scmp.eq.s32.totalorder %s33, 0
      %p264 = por %p262, %p263
      %p265 = scmp.ne.s32.totalorder %s253, %s254
      %p266 = scmp.eq.s32.totalorder %s34, 1
      %p267 = por %p265, %p266
      %p269 = scmp.ne.s32.totalorder %s254, %s268
      %p270 = scmp.eq.s32.totalorder %s34, 0
      %p271 = por %p269, %p270
      %s273 = sadd.s32 %s272, 1
      %p276 = scmp.eq.s32.totalorder %s28, 1
      %p277 = scmp.ne.s32.totalorder %s272, %s274
      %p278 = scmp.eq.s32.totalorder %s28, 0
      %p279 = por %p277, %p278
      %p280 = scmp.ne.s32.totalorder %s272, %s274
      %p281 = scmp.eq.s32.totalorder %s33, 1
      %p282 = por %p280, %p281
      %p283 = scmp.ne.s32.totalorder %s274, %s275
      %p284 = scmp.eq.s32.totalorder %s33, 0
      %p285 = por %p283, %p284
      %p286 = scmp.ne.s32.totalorder %s274, %s275
      %p287 = scmp.eq.s32.totalorder %s34, 1
      %p288 = por %p286, %p287
      %p290 = scmp.ne.s32.totalorder %s275, %s289
      %p291 = scmp.eq.s32.totalorder %s34, 0
      %p292 = por %p290, %p291
      %s294 = sadd.s32 %s293, 1
      %p297 = scmp.eq.s32.totalorder %s28, 1
      %p298 = scmp.ne.s32.totalorder %s293, %s295
      %p299 = scmp.eq.s32.totalorder %s28, 0
      %p300 = por %p298, %p299
      %p301 = scmp.ne.s32.totalorder %s293, %s295
      %p302 = scmp.eq.s32.totalorder %s33, 1
      %p303 = por %p301, %p302
      %p304 = scmp.ne.s32.totalorder %s295, %s296
      %p305 = scmp.eq.s32.totalorder %s33, 0
      %p306 = por %p304, %p305
      %p307 = scmp.ne.s32.totalorder %s295, %s296
      %p308 = scmp.eq.s32.totalorder %s34, 1
      %p309 = por %p307, %p308
      %p311 = scmp.ne.s32.totalorder %s296, %s310
      %p312 = scmp.eq.s32.totalorder %s34, 0
      %p313 = por %p311, %p312
      %s315 = sadd.s32 %s314, 1
      %p318 = scmp.eq.s32.totalorder %s28, 1
      %p319 = scmp.ne.s32.totalorder %s314, %s316
      %p320 = scmp.eq.s32.totalorder %s28, 0
      %p321 = por %p319, %p320
      %p322 = scmp.ne.s32.totalorder %s314, %s316
      %p323 = scmp.eq.s32.totalorder %s33, 1
      %p324 = por %p322, %p323
      %p325 = scmp.ne.s32.totalorder %s316, %s317
      %p326 = scmp.eq.s32.totalorder %s33, 0
      %p327 = por %p325, %p326
      %p328 = scmp.ne.s32.totalorder %s316, %s317
      %p329 = scmp.eq.s32.totalorder %s34, 1
      %p330 = por %p328, %p329
      %p332 = scmp.ne.s32.totalorder %s317, %s331
      %p333 = scmp.eq.s32.totalorder %s34, 0
      %p334 = por %p332, %p333
      %s336 = sadd.s32 %s335, 1
      %p339 = scmp.eq.s32.totalorder %s28, 1
      %p340 = scmp.ne.s32.totalorder %s335, %s337
      %p341 = scmp.eq.s32.totalorder %s28, 0
      %p342 = por %p340, %p341
      %p343 = scmp.ne.s32.totalorder %s335, %s337
      %p344 = scmp.eq.s32.totalorder %s33, 1
      %p345 = por %p343, %p344
      %p346 = scmp.ne.s32.totalorder %s337, %s338
      %p347 = scmp.eq.s32.totalorder %s33, 0
      %p348 = por %p346, %p347
      %p349 = scmp.ne.s32.totalorder %s337, %s338
      %p350 = scmp.eq.s32.totalorder %s34, 1
      %p351 = por %p349, %p350
      %p353 = scmp.ne.s32.totalorder %s338, %s352
      %p354 = scmp.eq.s32.totalorder %s34, 0
      %p355 = por %p353, %p354
      %s357 = sadd.s32 %s356, 1
      %p360 = scmp.eq.s32.totalorder %s28, 1
      %p361 = scmp.ne.s32.totalorder %s356, %s358
      %p362 = scmp.eq.s32.totalorder %s28, 0
      %p363 = por %p361, %p362
      %p364 = scmp.ne.s32.totalorder %s356, %s358
      %p365 = scmp.eq.s32.totalorder %s33, 1
      %p366 = por %p364, %p365
      %p367 = scmp.ne.s32.totalorder %s358, %s359
      %p368 = scmp.eq.s32.totalorder %s33, 0
      %p369 = por %p367, %p368
      %p370 = scmp.ne.s32.totalorder %s358, %s359
      %p371 = scmp.eq.s32.totalorder %s34, 1
      %p372 = por %p370, %p371
      %p374 = scmp.ne.s32.totalorder %s359, %s373
      %p375 = scmp.eq.s32.totalorder %s34, 0
      %p376 = por %p374, %p375
      %s378 = sadd.s32 %s377, 1
      %p381 = scmp.eq.s32.totalorder %s28, 1
      %p382 = scmp.ne.s32.totalorder %s377, %s379
      %p383 = scmp.eq.s32.totalorder %s28, 0
      %p384 = por %p382, %p383
      %p385 = scmp.ne.s32.totalorder %s377, %s379
      %p386 = scmp.eq.s32.totalorder %s33, 1
      %p387 = por %p385, %p386
      %p388 = scmp.ne.s32.totalorder %s379, %s380
      %p389 = scmp.eq.s32.totalorder %s33, 0
      %p390 = por %p388, %p389
      %p391 = scmp.ne.s32.totalorder %s379, %s380
      %p392 = scmp.eq.s32.totalorder %s34, 1
      %p393 = por %p391, %p392
      %p395 = scmp.ne.s32.totalorder %s380, %s394
      %p396 = scmp.eq.s32.totalorder %s34, 0
      %p397 = por %p395, %p396
      %s399 = sadd.s32 %s398, 1
      %p402 = scmp.eq.s32.totalorder %s28, 1
      %p403 = scmp.ne.s32.totalorder %s398, %s400
      %p404 = scmp.eq.s32.totalorder %s28, 0
      %p405 = por %p403, %p404
      %p406 = scmp.ne.s32.totalorder %s398, %s400
      %p407 = scmp.eq.s32.totalorder %s33, 1
      %p408 = por %p406, %p407
      %p409 = scmp.ne.s32.totalorder %s400, %s401
      %p410 = scmp.eq.s32.totalorder %s33, 0
      %p411 = por %p409, %p410
      %p412 = scmp.ne.s32.totalorder %s400, %s401
      %p413 = scmp.eq.s32.totalorder %s34, 1
      %p414 = por %p412, %p413
      %p416 = scmp.ne.s32.totalorder %s401, %s415
      %p417 = scmp.eq.s32.totalorder %s34, 0
      %p418 = por %p416, %p417
      %s420 = sadd.s32 %s419, 1
      %p423 = scmp.eq.s32.totalorder %s28, 1
      %p424 = scmp.ne.s32.totalorder %s419, %s421
      %p425 = scmp.eq.s32.totalorder %s28, 0
      %p426 = por %p424, %p425
      %p427 = scmp.ne.s32.totalorder %s419, %s421
      %p428 = scmp.eq.s32.totalorder %s33, 1
      %p429 = por %p427, %p428
      %p430 = scmp.ne.s32.totalorder %s421, %s422
      %p431 = scmp.eq.s32.totalorder %s33, 0
      %p432 = por %p430, %p431
      %p433 = scmp.ne.s32.totalorder %s421, %s422
      %p434 = scmp.eq.s32.totalorder %s34, 1
      %p435 = por %p433, %p434
      %p437 = scmp.ne.s32.totalorder %s422, %s436
      %p438 = scmp.eq.s32.totalorder %s34, 0
      %p439 = por %p437, %p438
      %s441 = sadd.s32 %s440, 1
      %p444 = scmp.eq.s32.totalorder %s28, 1
      %p445 = scmp.ne.s32.totalorder %s440, %s442
      %p446 = scmp.eq.s32.totalorder %s28, 0
      %p447 = por %p445, %p446
      %p448 = scmp.ne.s32.totalorder %s440, %s442
      %p449 = scmp.eq.s32.totalorder %s33, 1
      %p450 = por %p448, %p449
      %p451 = scmp.ne.s32.totalorder %s442, %s443
      %p452 = scmp.eq.s32.totalorder %s33, 0
      %p453 = por %p451, %p452
      %p454 = scmp.ne.s32.totalorder %s442, %s443
      %p455 = scmp.eq.s32.totalorder %s34, 1
      %p456 = por %p454, %p455
      %p458 = scmp.ne.s32.totalorder %s443, %s457
      %p459 = scmp.eq.s32.totalorder %s34, 0
      %p460 = por %p458, %p459
      %s462 = sadd.s32 %s461, 1
      %p465 = scmp.eq.s32.totalorder %s28, 1
      %p466 = scmp.ne.s32.totalorder %s461, %s463
      %p467 = scmp.eq.s32.totalorder %s28, 0
      %p468 = por %p466, %p467
      %p469 = scmp.ne.s32.totalorder %s461, %s463
      %p470 = scmp.eq.s32.totalorder %s33, 1
      %p471 = por %p469, %p470
      %p472 = scmp.ne.s32.totalorder %s463, %s464
      %p473 = scmp.eq.s32.totalorder %s33, 0
      %p474 = por %p472, %p473
      %p475 = scmp.ne.s32.totalorder %s463, %s464
      %p476 = scmp.eq.s32.totalorder %s34, 1
      %p477 = por %p475, %p476
      %p479 = scmp.ne.s32.totalorder %s464, %s478
      %p480 = scmp.eq.s32.totalorder %s34, 0
      %p481 = por %p479, %p480
      %s482 = ssub.s32 %s28, %s35
      %p483 = scmp.eq.s32.totalorder %s482, 0
      %s485 = sadd.s32 %s484, 1
      %s486 = scalar_select %p483, %s484, %s485
      %p489 = pneg %p483
      %p490 = scmp.eq.s32.totalorder %s28, 1
      %p491 = por %p489, %p490
      %p492 = scmp.ne.s32.totalorder %s484, %s487
      %p493 = scmp.eq.s32.totalorder %s28, 0
      %p494 = por %p492, %p493
      %p495 = scmp.ne.s32.totalorder %s484, %s487
      %p496 = scmp.eq.s32.totalorder %s33, 1
      %p497 = por %p495, %p496
      %p498 = scmp.ne.s32.totalorder %s487, %s488
      %p499 = scmp.eq.s32.totalorder %s33, 0
      %p500 = por %p498, %p499
      %p501 = scmp.ne.s32.totalorder %s487, %s488
      %p502 = scmp.eq.s32.totalorder %s34, 1
      %p503 = por %p501, %p502
      %p505 = scmp.ne.s32.totalorder %s488, %s504
      %p506 = scmp.eq.s32.totalorder %s34, 0
      %p507 = por %p505, %p506
      %p508 = scmp.le.s32.totalorder 1, %s28
      %p509 = scmp.lt.s32.totalorder %s28, 3
      %p510 = pnand %p508, %p509
      %p511 = pneg %p510
      // Predicated region
      $region9: #{bimamba_forward.6} parent=5 // pred_check
        _
      $region10: #{bimamba_forward.6} parent=5 // pred_check_branch
        %513 = sbr.rel (%p510) target = $region12
      $region11: #{bimamba_forward.6} parent=5 // pred_region
        %s514 = ssub.s32 %s28, 1
        // Predicated region
        $region13: #{bimamba_forward.6} parent=11 // pred_check
          %p515 = pneg %p75
        $region14: #{bimamba_forward.6} parent=11 // pred_check_branch
          %517 = sbr.rel (%p515) target = $region16
        $region15: #{bimamba_forward.6} parent=11 // pred_region
          _
        $region16: #{bimamba_forward.6} parent=11 // pred_fallthru
          _
        // Predicated region
        $region17: #{bimamba_forward.6} parent=11 // pred_check
          %p518 = pneg %p96
        $region18: #{bimamba_forward.6} parent=11 // pred_check_branch
          %520 = sbr.rel (%p518) target = $region20
        $region19: #{bimamba_forward.6} parent=11 // pred_region
          _
        $region20: #{bimamba_forward.6} parent=11 // pred_fallthru
          _
        // Predicated region
        $region21: #{bimamba_forward.6} parent=11 // pred_check
          %p521 = pneg %p117
        $region22: #{bimamba_forward.6} parent=11 // pred_check_branch
          %523 = sbr.rel (%p521) target = $region24
        $region23: #{bimamba_forward.6} parent=11 // pred_region
          _
        $region24: #{bimamba_forward.6} parent=11 // pred_fallthru
          _
        // Predicated region
        $region25: #{bimamba_forward.6} parent=11 // pred_check
          %p524 = pneg %p138
        $region26: #{bimamba_forward.6} parent=11 // pred_check_branch
          %526 = sbr.rel (%p524) target = $region28
        $region27: #{bimamba_forward.6} parent=11 // pred_region
          _
        $region28: #{bimamba_forward.6} parent=11 // pred_fallthru
          _
        // Predicated region
        $region29: #{bimamba_forward.6} parent=11 // pred_check
          %p527 = pneg %p159
        $region30: #{bimamba_forward.6} parent=11 // pred_check_branch
          %529 = sbr.rel (%p527) target = $region32
        $region31: #{bimamba_forward.6} parent=11 // pred_region
          _
        $region32: #{bimamba_forward.6} parent=11 // pred_fallthru
          _
        // Predicated region
        $region33: #{bimamba_forward.6} parent=11 // pred_check
          %p530 = pneg %p180
        $region34: #{bimamba_forward.6} parent=11 // pred_check_branch
          %532 = sbr.rel (%p530) target = $region36
        $region35: #{bimamba_forward.6} parent=11 // pred_region
          _
        $region36: #{bimamba_forward.6} parent=11 // pred_fallthru
          _
        // Predicated region
        $region37: #{bimamba_forward.6} parent=11 // pred_check
          %p533 = pneg %p201
        $region38: #{bimamba_forward.6} parent=11 // pred_check_branch
          %535 = sbr.rel (%p533) target = $region40
        $region39: #{bimamba_forward.6} parent=11 // pred_region
          _
        $region40: #{bimamba_forward.6} parent=11 // pred_fallthru
          _
        // Predicated region
        $region41: #{bimamba_forward.6} parent=11 // pred_check
          %p536 = pneg %p222
        $region42: #{bimamba_forward.6} parent=11 // pred_check_branch
          %538 = sbr.rel (%p536) target = $region44
        $region43: #{bimamba_forward.6} parent=11 // pred_region
          _
        $region44: #{bimamba_forward.6} parent=11 // pred_fallthru
          _
        // Predicated region
        $region45: #{bimamba_forward.6} parent=11 // pred_check
          %p539 = pneg %p243
        $region46: #{bimamba_forward.6} parent=11 // pred_check_branch
          %541 = sbr.rel (%p539) target = $region48
        $region47: #{bimamba_forward.6} parent=11 // pred_region
          _
        $region48: #{bimamba_forward.6} parent=11 // pred_fallthru
          _
        // Predicated region
        $region49: #{bimamba_forward.6} parent=11 // pred_check
          %p542 = pneg %p264
        $region50: #{bimamba_forward.6} parent=11 // pred_check_branch
          %544 = sbr.rel (%p542) target = $region52
        $region51: #{bimamba_forward.6} parent=11 // pred_region
          _
        $region52: #{bimamba_forward.6} parent=11 // pred_fallthru
          _
        // Predicated region
        $region53: #{bimamba_forward.6} parent=11 // pred_check
          %p545 = pneg %p285
        $region54: #{bimamba_forward.6} parent=11 // pred_check_branch
          %547 = sbr.rel (%p545) target = $region56
        $region55: #{bimamba_forward.6} parent=11 // pred_region
          _
        $region56: #{bimamba_forward.6} parent=11 // pred_fallthru
          _
        // Predicated region
        $region57: #{bimamba_forward.6} parent=11 // pred_check
          %p548 = pneg %p306
        $region58: #{bimamba_forward.6} parent=11 // pred_check_branch
          %550 = sbr.rel (%p548) target = $region60
        $region59: #{bimamba_forward.6} parent=11 // pred_region
          _
        $region60: #{bimamba_forward.6} parent=11 // pred_fallthru
          _
        // Predicated region
        $region61: #{bimamba_forward.6} parent=11 // pred_check
          %p551 = pneg %p327
        $region62: #{bimamba_forward.6} parent=11 // pred_check_branch
          %553 = sbr.rel (%p551) target = $region64
        $region63: #{bimamba_forward.6} parent=11 // pred_region
          _
        $region64: #{bimamba_forward.6} parent=11 // pred_fallthru
          _
        // Predicated region
        $region65: #{bimamba_forward.6} parent=11 // pred_check
          %p554 = pneg %p348
        $region66: #{bimamba_forward.6} parent=11 // pred_check_branch
          %556 = sbr.rel (%p554) target = $region68
        $region67: #{bimamba_forward.6} parent=11 // pred_region
          _
        $region68: #{bimamba_forward.6} parent=11 // pred_fallthru
          _
        // Predicated region
        $region69: #{bimamba_forward.6} parent=11 // pred_check
          %p557 = pneg %p369
        $region70: #{bimamba_forward.6} parent=11 // pred_check_branch
          %559 = sbr.rel (%p557) target = $region72
        $region71: #{bimamba_forward.6} parent=11 // pred_region
          _
        $region72: #{bimamba_forward.6} parent=11 // pred_fallthru
          _
        // Predicated region
        $region73: #{bimamba_forward.6} parent=11 // pred_check
          %p560 = pneg %p390
        $region74: #{bimamba_forward.6} parent=11 // pred_check_branch
          %562 = sbr.rel (%p560) target = $region76
        $region75: #{bimamba_forward.6} parent=11 // pred_region
          _
        $region76: #{bimamba_forward.6} parent=11 // pred_fallthru
          _
        // Predicated region
        $region77: #{bimamba_forward.6} parent=11 // pred_check
          %p563 = pneg %p411
        $region78: #{bimamba_forward.6} parent=11 // pred_check_branch
          %565 = sbr.rel (%p563) target = $region80
        $region79: #{bimamba_forward.6} parent=11 // pred_region
          _
        $region80: #{bimamba_forward.6} parent=11 // pred_fallthru
          _
        // Predicated region
        $region81: #{bimamba_forward.6} parent=11 // pred_check
          %p566 = pneg %p432
        $region82: #{bimamba_forward.6} parent=11 // pred_check_branch
          %568 = sbr.rel (%p566) target = $region84
        $region83: #{bimamba_forward.6} parent=11 // pred_region
          _
        $region84: #{bimamba_forward.6} parent=11 // pred_fallthru
          _
        // Predicated region
        $region85: #{bimamba_forward.6} parent=11 // pred_check
          %p569 = pneg %p453
        $region86: #{bimamba_forward.6} parent=11 // pred_check_branch
          %571 = sbr.rel (%p569) target = $region88
        $region87: #{bimamba_forward.6} parent=11 // pred_region
          _
        $region88: #{bimamba_forward.6} parent=11 // pred_fallthru
          _
        // Predicated region
        $region89: #{bimamba_forward.6} parent=11 // pred_check
          %p572 = pneg %p474
        $region90: #{bimamba_forward.6} parent=11 // pred_check_branch
          %574 = sbr.rel (%p572) target = $region92
        $region91: #{bimamba_forward.6} parent=11 // pred_region
          %s576 = ssub.s32 16, 16
          %577 = vsyncadd [#allocation8], %s576
          %s579 = sshll.u32 [#allocation7], 4
          %s580 = int_to_ptr.vmem [resolvable:$true] %s579
          %582 = dma.hbm_to_vmem [thread:$0]  %s20, 16, %s580, [#allocation8]
        $region92: #{bimamba_forward.6} parent=11 // pred_fallthru
          _
      $region12: #{bimamba_forward.6} parent=5 // pred_fallthru
        _
      %p583 = scmp.lt.s32.totalorder %s28, 2
      // Predicated region
      $region93: #{bimamba_forward.6} parent=5 // pred_check
        %p584 = pneg %p583
      $region94: #{bimamba_forward.6} parent=5 // pred_check_branch
        %586 = sbr.rel (%p584) target = $region96
      $region95: #{bimamba_forward.6} parent=5 // pred_region
        // Predicated region
        $region97: #{bimamba_forward.6} parent=95 // pred_check
          %p587 = pneg %p48
        $region98: #{bimamba_forward.6} parent=95 // pred_check_branch
          %589 = sbr.rel (%p587) target = $region100
        $region99: #{bimamba_forward.6} parent=95 // pred_region
          %p590 = scmp.lt.s32.totalorder %s28, 1
          %s591 = scalar_select %p590, %s28, 1
          %s592 = smul.addr %s591, 2
          %s593 = smul.addr %s592, 8
          %s594 = scalar_lea.vmem %s0, %s593
        $region100: #{bimamba_forward.6} parent=95 // pred_fallthru
          _
      $region96: #{bimamba_forward.6} parent=5 // pred_fallthru
        _
      %p595 = scmp.le.s32.totalorder 1, %s28
      %p596 = scmp.lt.s32.totalorder %s28, 3
      %p597 = pnand %p595, %p596
      %p598 = pneg %p597
      // Predicated region
      $region101: #{bimamba_forward.6} parent=5 // pred_check
        _
      $region102: #{bimamba_forward.6} parent=5 // pred_check_branch
        %600 = sbr.rel (%p597) target = $region104
      $region103: #{bimamba_forward.6} parent=5 // pred_region
        %s601 = ssub.s32 %s28, 1
        // Predicated region
        $region105: #{bimamba_forward.6} parent=103 // pred_check
          %p602 = pneg %p474
        $region106: #{bimamba_forward.6} parent=103 // pred_check_branch
          %604 = sbr.rel (%p602) target = $region108
        $region107: #{bimamba_forward.6} parent=103 // pred_region
          %605 = dma.done [#allocation8], 16
        $region108: #{bimamba_forward.6} parent=103 // pred_fallthru
          _
        %p606 = scmp.lt.s32.totalorder %s33, 1
        %s607 = scalar_select %p606, %s33, 1
        %s608 = smul.addr %s607, 2
        %s609 = smul.addr %s608, 8
        %s610 = scalar_lea.vmem %s0, %s609
        %p611 = pneg %p54
        %p612 = pneg %p51
        %p613 = pneg %p75
        %p614 = pneg %p72
        %p615 = pneg %p96
        %p616 = pneg %p93
        %p617 = pneg %p117
        %p618 = pneg %p114
        %p619 = pneg %p138
        %p620 = pneg %p135
        %p621 = pneg %p159
        %p622 = pneg %p156
        %p623 = pneg %p180
        %p624 = pneg %p177
        %p625 = pneg %p201
        %p626 = pneg %p198
        %p627 = pneg %p222
        %p628 = pneg %p219
        %p629 = pneg %p243
        %p630 = pneg %p240
        %p631 = pneg %p264
        %p632 = pneg %p261
        %p633 = pneg %p285
        %p634 = pneg %p282
        %p635 = pneg %p306
        %p636 = pneg %p303
        %p637 = pneg %p327
        %p638 = pneg %p324
        %p639 = pneg %p348
        %p640 = pneg %p345
        %p641 = pneg %p369
        %p642 = pneg %p366
        %p643 = pneg %p390
        %p644 = pneg %p387
        %p645 = pneg %p411
        %p646 = pneg %p408
        %p647 = pneg %p432
        %p648 = pneg %p429
        %p649 = pneg %p453
        %p650 = pneg %p450
        %p651 = pneg %p474
        %p652 = pneg %p471
        %p653 = pneg %p500
        %p654 = pneg %p497
        %p655 = scmp.lt.s32.totalorder %s33, 1
        %s656 = scalar_select %p655, %s33, 1
        %s657 = smul.addr %s656, 2
        %s658 = smul.addr %s657, 8
        %s659 = scalar_lea.vmem %s21, %s658
        %p660 = scmp.lt.s32.totalorder %s33, 1
        %s661 = scalar_select %p660, %s33, 1
        %s662 = smul.addr %s661, 2
        %s663 = smul.addr %s662, 8
        %s664 = scalar_lea.vmem %s0, %s663
        %p665 = scmp.lt.s32.totalorder %s33, 1
        %s666 = scalar_select %p665, %s33, 1
        %s667 = smul.addr %s666, 2
        %s668 = smul.addr %s667, 8
        %s669 = scalar_lea.vmem %s21, %s668
        %v671 = vld [vmem:[%s664] sm:$0xff]
        %v672 = vld [vmem:[%s664 + $0x8] sm:$0xff]
        %v673 = vpack.c.bf16 %v672, %v671
        %v674 = vld [vmem:[%s1] sm:$0xf]
        %v675 = vld [vmem:[%s1 + $0x4] sm:$0xf]
        %v676 = vld [vmem:[%s1 + $0x8] sm:$0xf]
        %v677 = vld [vmem:[%s1 + $0xc] sm:$0xf]
        %v682 = vunpack.c.l.b16 %v674
        %v683 = vunpack.c.l.b16 %v675
        %v684 = vunpack.c.l.b16 %v676
        %v685 = vunpack.c.l.b16 %v677
        %v686 = vpack.c.b16 %v683, %v682
        %v687 = vpack.c.b16 %v685, %v684
        %vm690 = vcmask 261120
        %v692 = vsel %vm690, %v673, 0
        %694 = vmatprep.subr.bf16.mxu0 0
        %695 = vmatpush1.bf16.msra.mxu0 %v686
        %696 = vmatprep.subr.bf16.mxu0 0
        %697 = vmatpush1.bf16.msra.mxu0 %v687
        %698 = vmatprep.subr.bf16.mxu0 0
        %699 = vmatpush1.bf16.msra.mxu0 0
        %700 = vmatprep.subr.bf16.mxu0 0
        %701 = vmatpush1.bf16.msra.mxu0 0
        %702 = vmatprep.subr.bf16.mxu0 0
        %703 = vmatpush1.bf16.msra.mxu0 0
        %704 = vmatprep.subr.bf16.mxu0 0
        %705 = vmatpush1.bf16.msra.mxu0 0
        %706 = vmatprep.subr.bf16.mxu0 0
        %707 = vmatpush1.bf16.msra.mxu0 0
        %708 = vmatprep.subr.bf16.mxu0 0
        %709 = vmatpush1.bf16.msra.mxu0 0
        %710 = vmatprep.subr.bf16.mxu0 0
        %711 = vmatpush1.bf16.msra.mxu0 0
        %712 = vmatprep.subr.bf16.mxu0 0
        %713 = vmatpush1.bf16.msra.mxu0 0
        %714 = vmatprep.subr.bf16.mxu0 0
        %715 = vmatpush1.bf16.msra.mxu0 0
        %716 = vmatprep.subr.bf16.mxu0 0
        %717 = vmatpush1.bf16.msra.mxu0 0
        %718 = vmatprep.subr.bf16.mxu0 0
        %719 = vmatpush1.bf16.msra.mxu0 0
        %720 = vmatprep.subr.bf16.mxu0 0
        %721 = vmatpush1.bf16.msra.mxu0 0
        %722 = vmatprep.subr.bf16.mxu0 0
        %723 = vmatpush1.bf16.msra.mxu0 0
        %724 = vmatprep.subr.bf16.mxu0 0
        %725 = vmatpush1.bf16.msra.mxu0 0
        %726 = vmatprep.mubr.bf16.mxu0 0
        %727 = vmatmul.mubr.bf16.gmra.mrb[0].mxu0 %v692
        %v728 = vpop.f32.mrb[0].mxu0
        %v729 = vadd.f32 0.0, %v728
        %v730 = vpop.f32.mrb[0].mxu0
        %v731 = vpop.f32.mrb[0].mxu0
        %v732 = vadd.f32 0.0, %v731
        %v733 = vpop.f32.mrb[0].mxu0
        %734 = vdwg.mxu0
        %vm735 = vcmask 523264
        %736 = vst.msk [vmem:[#allocation2] sm:$0xff] %vm735, 0.0
        %737 = vst.msk [vmem:[#allocation2 + $0x18] sm:$0xff] %vm735, 0.0
        %738 = vst.msk [vmem:[#allocation2 + $0x8] sm:$0xff] %vm735, %v729
        %739 = vst.msk [vmem:[#allocation2 + $0x10] sm:$0xff] %vm735, %v732
        %v740 = vld [vmem:[%s2] sm:$0xf]
        %v741 = vld [vmem:[#allocation2 + $0x5] sm:$0xff]
        %v742 = vld [vmem:[#allocation2 + $0xd] sm:$0xff]
        %v743 = vlaneseq
        %v744 = vshrl.u32 %v743, 7
        %v745 = vsub.s32 0, %v744
        %v746 = vrot.slane %v740, %v745
        %v747 = vmul.f32 %v741, %v746
        %v748 = vmul.f32 %v742, %v746
        %v749 = vld [vmem:[#allocation2 + $0x6] sm:$0xff]
        %v750 = vld [vmem:[#allocation2 + $0xe] sm:$0xff]
        %v751 = vlaneseq
        %v752 = vshrl.u32 %v751, 7
        %v753 = vsub.s32 1, %v752
        %v754 = vrot.slane %v740, %v753
        %v755 = vmul.f32 %v749, %v754
        %v756 = vmul.f32 %v750, %v754
        %v757 = vadd.f32 %v747, %v755
        %v758 = vadd.f32 %v748, %v756
        %v759 = vld [vmem:[#allocation2 + $0x7] sm:$0xff]
        %v760 = vld [vmem:[#allocation2 + $0xf] sm:$0xff]
        %v761 = vlaneseq
        %v762 = vshrl.u32 %v761, 7
        %v763 = vsub.s32 2, %v762
        %v764 = vrot.slane %v740, %v763
        %v765 = vmul.f32 %v759, %v764
        %v766 = vmul.f32 %v760, %v764
        %v767 = vadd.f32 %v757, %v765
        %v768 = vadd.f32 %v758, %v766
        %v769 = vld [vmem:[#allocation2 + $0x8] sm:$0xff]
        %v770 = vld [vmem:[#allocation2 + $0x10] sm:$0xff]
        %v771 = vlaneseq
        %v772 = vshrl.u32 %v771, 7
        %v773 = vsub.s32 3, %v772
        %v774 = vrot.slane %v740, %v773
        %v775 = vmul.f32 %v769, %v774
        %v776 = vmul.f32 %v770, %v774
        %v777 = vadd.f32 %v767, %v775
        %v778 = vadd.f32 %v768, %v776
        %v779 = vld [vmem:[%s3] sm:$0x1]
        %v781 = vlaneseq
        %v782 = vshrl.u32 %v781, 7
        %v783 = vsub.s32 0, %v782
        %v784 = vrot.slane %v779, %v783
        %v786 = vadd.f32 %v777, %v784
        %v787 = vadd.f32 %v778, %v784
        %v788 = vsub.f32 0.0, %v786
        %v789 = vsub.f32 0.0, %v787
        %v790 = vmul.f32 %v788, 1.442695
        %v791 = vpow.pop %v790
        %v792 = vmul.f32 %v789, 1.442695
        %v793 = vpow.pop %v792
        %v794 = vadd.f32 %v791, 1.0
        %v795 = vadd.f32 %v793, 1.0
        %v796 = vrcp.pop %v794
        %v797 = vrcp.pop %v795
        %v798 = vmul.f32 %v786, %v796
        %v799 = vmul.f32 %v787, %v797
        %v800 = vpack.c.bf16 %v799, %v798
        %v801 = vld [vmem:[%s4] sm:$0xf]
        %v802 = vld [vmem:[%s4 + $0x4] sm:$0xf]
        %v803 = vld [vmem:[%s4 + $0x8] sm:$0xf]
        %v804 = vld [vmem:[%s4 + $0xc] sm:$0xf]
        %v805 = vld [vmem:[%s4 + $0x10] sm:$0xf]
        %v806 = vld [vmem:[%s4 + $0x14] sm:$0xf]
        %v807 = vld [vmem:[%s4 + $0x18] sm:$0xf]
        %v808 = vld [vmem:[%s4 + $0x1c] sm:$0xf]
        %v817 = vunpack.c.l.b16 %v801
        %v818 = vunpack.c.l.b16 %v802
        %v819 = vunpack.c.l.b16 %v803
        %v820 = vunpack.c.l.b16 %v804
        %v821 = vunpack.c.l.b16 %v805
        %v822 = vunpack.c.l.b16 %v806
        %v823 = vunpack.c.l.b16 %v807
        %v824 = vunpack.c.l.b16 %v808
        %v825 = vpack.c.b16 %v818, %v817
        %v826 = vpack.c.b16 %v820, %v819
        %v827 = vpack.c.b16 %v822, %v821
        %v828 = vpack.c.b16 %v824, %v823
        %v834 = vsel %vm735, %v800, 0
        %836 = vmatprep.subr.bf16.mxu0 0
        %837 = vmatpush1.bf16.msra.mxu0 %v825
        %838 = vmatprep.subr.bf16.mxu0 0
        %839 = vmatpush1.bf16.msra.mxu0 %v826
        %840 = vmatprep.subr.bf16.mxu0 0
        %841 = vmatpush1.bf16.msra.mxu0 %v827
        %842 = vmatprep.subr.bf16.mxu0 0
        %843 = vmatpush1.bf16.msra.mxu0 %v828
        %844 = vmatprep.subr.bf16.mxu0 0
        %845 = vmatpush1.bf16.msra.mxu0 0
        %846 = vmatprep.subr.bf16.mxu0 0
        %847 = vmatpush1.bf16.msra.mxu0 0
        %848 = vmatprep.subr.bf16.mxu0 0
        %849 = vmatpush1.bf16.msra.mxu0 0
        %850 = vmatprep.subr.bf16.mxu0 0
        %851 = vmatpush1.bf16.msra.mxu0 0
        %852 = vmatprep.subr.bf16.mxu0 0
        %853 = vmatpush1.bf16.msra.mxu0 0
        %854 = vmatprep.subr.bf16.mxu0 0
        %855 = vmatpush1.bf16.msra.mxu0 0
        %856 = vmatprep.subr.bf16.mxu0 0
        %857 = vmatpush1.bf16.msra.mxu0 0
        %858 = vmatprep.subr.bf16.mxu0 0
        %859 = vmatpush1.bf16.msra.mxu0 0
        %860 = vmatprep.subr.bf16.mxu0 0
        %861 = vmatpush1.bf16.msra.mxu0 0
        %862 = vmatprep.subr.bf16.mxu0 0
        %863 = vmatpush1.bf16.msra.mxu0 0
        %864 = vmatprep.subr.bf16.mxu0 0
        %865 = vmatpush1.bf16.msra.mxu0 0
        %866 = vmatprep.subr.bf16.mxu0 0
        %867 = vmatpush1.bf16.msra.mxu0 0
        %868 = vmatprep.mubr.bf16.mxu0 0
        %869 = vmatmul.mubr.bf16.gmra.mrb[0].mxu0 %v834
        %v870 = vpop.f32.mrb[0].mxu0
        %v871 = vadd.f32 0.0, %v870
        %v872 = vpop.f32.mrb[0].mxu0
        %v873 = vpop.f32.mrb[0].mxu0
        %v874 = vadd.f32 0.0, %v873
        %v875 = vpop.f32.mrb[0].mxu0
        %876 = vdwg.mxu0
        %v877 = vld [vmem:[%s5] sm:$0x1]
        %v879 = vlaneseq
        %v880 = vshrl.u32 %v879, 7
        %v881 = vsub.s32 0, %v880
        %v882 = vrot.slane %v877, %v881
        %v884 = vadd.f32 %v871, %v882
        %v885 = vadd.f32 %v874, %v882
        %vm886 = vcmp.gt.f32.partialorder %v884, 20.0
        %vm887 = vcmp.gt.f32.partialorder %v885, 20.0
        %v888 = vmin.f32 %v884, 20.0
        %v889 = vmin.f32 %v885, 20.0
        %v890 = vmul.f32 %v888, 1.442695
        %v891 = vpow.pop %v890
        %v892 = vmul.f32 %v889, 1.442695
        %v893 = vpow.pop %v892
        %v894 = vadd.f32 %v891, 1.0
        %v895 = vadd.f32 %v893, 1.0
        %v896 = vlog2.pop %v894
        %v897 = vmul.f32 %v896, 0.6931472
        %v898 = vlog2.pop %v895
        %v899 = vmul.f32 %v898, 0.6931472
        %v900 = vsel %vm886, %v884, %v897
        %v901 = vsel %vm887, %v885, %v899
        %902 = vst.msk [vmem:[#allocation3] sm:$0xff] %vm735, %v798
        %903 = vst.msk [vmem:[#allocation3 + $0x8] sm:$0xff] %vm735, %v799
        %904 = vst.msk [vmem:[#allocation4] sm:$0xff] %vm735, %v900
        %905 = vst.msk [vmem:[#allocation4 + $0x8] sm:$0xff] %vm735, %v901
        %908 = vrot.lane.b32.xlu0 %v871, 64
        %v909 = vpop.permute.xlu0 %908
        %910 = vrot.lane.b32.xlu0 %v874, 64
        %v911 = vpop.permute.xlu0 %910
        %vm914 = vcmask 130048
        %915 = vst.msk [vmem:[#allocation5] sm:$0xff] %vm914, %v909
        %916 = vst.msk [vmem:[#allocation5 + $0x8] sm:$0xff] %vm914, %v911
        %v917 = vld [vmem:[%s6] sm:$0xff]
        loop: start=0, step=1, limit=2
        $region109: #{bimamba_forward.6} parent=103 // loop_pre_header
          _
        $region110: #{bimamba_forward.6} parent=103 // loop_header
          %s919 = sphi 0, %s923
          %p920 = scmp.ge.s32.totalorder %s919, 2
          %v924 = vphi 0.0, %v1184
        $region111: #{bimamba_forward.6} parent=103 // loop_header_branch
          %922 = sbr.rel (%p920) target = $region115
        $region112: #{bimamba_forward.6} parent=103 // loop_body
          %s925 = smul.u32 %s919, 8
          %s926 = scalar_lea.vmem [#allocation3], %s925
          %v927 = vld [vmem:[%s926] sm:$0xff]
          %s928 = scalar_lea.vmem [#allocation4], %s925
          %v929 = vld [vmem:[%s928] sm:$0xff]
          %s930 = scalar_lea.vmem [#allocation5], %s925
          %v931 = vld [vmem:[%s930] sm:$0xff]
          %v932 = vmul.f32 %v929, %v927
          %v933 = vlaneseq
          %v934 = vshrl.u32 %v933, 7
          %v935 = vsub.s32 0, %v934
          %v936 = vrot.slane %v929, %v935
          %v937 = vmul.f32 %v936, %v917
          %v938 = vmul.f32 %v937, 1.442695
          %v939 = vpow.pop %v938
          %v940 = vlaneseq
          %v941 = vshrl.u32 %v940, 7
          %v942 = vsub.s32 0, %v941
          %v943 = vrot.slane %v931, %v942
          %945 = vbcast.lane.b32.xlu0 %v943, 256
          %v946 = vpop.permute.xlu0 %945
          %v947 = vlaneseq
          %v948 = vshrl.u32 %v947, 7
          %v949 = vsub.s32 0, %v948
          %v950 = vrot.slane %v932, %v949
          %v951 = vmul.f32 %v946, %v950
          %v952 = vmul.f32 %v939, %v924
          %v953 = vadd.f32 %v952, %v951
          %s955 = sor.u32 256, 8
          %956 = vbcast.lane.b32.xlu0 %v943, %s955
          %v957 = vpop.permute.xlu0 %956
          %v958 = vmul.f32 %v957, %v953
          %v959 = vsel %vm735, %v958, 0.0
          %v960 = vrot.slane %v959, 4
          %v961 = vadd.f32 %v959, %v960
          %v962 = vrot.slane %v961, 2
          %v963 = vadd.f32 %v961, %v962
          %v964 = vrot.slane %v963, 1
          %v965 = vadd.f32 %v963, %v964
          %v966 = vlaneseq
          %v967 = vshrl.u32 %v966, 7
          %v968 = vsub.s32 1, %v967
          %v969 = vrot.slane %v929, %v968
          %v970 = vmul.f32 %v969, %v917
          %v971 = vmul.f32 %v970, 1.442695
          %v972 = vpow.pop %v971
          %v973 = vlaneseq
          %v974 = vshrl.u32 %v973, 7
          %v975 = vsub.s32 1, %v974
          %v976 = vrot.slane %v931, %v975
          %978 = vbcast.lane.b32.xlu0 %v976, 256
          %v979 = vpop.permute.xlu0 %978
          %v980 = vlaneseq
          %v981 = vshrl.u32 %v980, 7
          %v982 = vsub.s32 1, %v981
          %v983 = vrot.slane %v932, %v982
          %v984 = vmul.f32 %v979, %v983
          %v985 = vmul.f32 %v972, %v953
          %v986 = vadd.f32 %v985, %v984
          %s988 = sor.u32 256, 8
          %989 = vbcast.lane.b32.xlu0 %v976, %s988
          %v990 = vpop.permute.xlu0 %989
          %v991 = vmul.f32 %v990, %v986
          %v992 = vsel %vm735, %v991, 0.0
          %v993 = vrot.slane %v992, 4
          %v994 = vadd.f32 %v992, %v993
          %v995 = vrot.slane %v994, 2
          %v996 = vadd.f32 %v994, %v995
          %v997 = vrot.slane %v996, 1
          %v998 = vadd.f32 %v996, %v997
          %v999 = vlaneseq
          %v1000 = vshrl.u32 %v999, 7
          %v1001 = vsub.s32 2, %v1000
          %v1002 = vrot.slane %v929, %v1001
          %v1003 = vmul.f32 %v1002, %v917
          %v1004 = vmul.f32 %v1003, 1.442695
          %v1005 = vpow.pop %v1004
          %v1006 = vlaneseq
          %v1007 = vshrl.u32 %v1006, 7
          %v1008 = vsub.s32 2, %v1007
          %v1009 = vrot.slane %v931, %v1008
          %1011 = vbcast.lane.b32.xlu0 %v1009, 256
          %v1012 = vpop.permute.xlu0 %1011
          %v1013 = vlaneseq
          %v1014 = vshrl.u32 %v1013, 7
          %v1015 = vsub.s32 2, %v1014
          %v1016 = vrot.slane %v932, %v1015
          %v1017 = vmul.f32 %v1012, %v1016
          %v1018 = vmul.f32 %v1005, %v986
          %v1019 = vadd.f32 %v1018, %v1017
          %s1021 = sor.u32 256, 8
          %1022 = vbcast.lane.b32.xlu0 %v1009, %s1021
          %v1023 = vpop.permute.xlu0 %1022
          %v1024 = vmul.f32 %v1023, %v1019
          %v1025 = vsel %vm735, %v1024, 0.0
          %v1026 = vrot.slane %v1025, 4
          %v1027 = vadd.f32 %v1025, %v1026
          %v1028 = vrot.slane %v1027, 2
          %v1029 = vadd.f32 %v1027, %v1028
          %v1030 = vrot.slane %v1029, 1
          %v1031 = vadd.f32 %v1029, %v1030
          %v1032 = vlaneseq
          %v1033 = vshrl.u32 %v1032, 7
          %v1034 = vsub.s32 3, %v1033
          %v1035 = vrot.slane %v929, %v1034
          %v1036 = vmul.f32 %v1035, %v917
          %v1037 = vmul.f32 %v1036, 1.442695
          %v1038 = vpow.pop %v1037
          %v1039 = vlaneseq
          %v1040 = vshrl.u32 %v1039, 7
          %v1041 = vsub.s32 3, %v1040
          %v1042 = vrot.slane %v931, %v1041
          %1044 = vbcast.lane.b32.xlu0 %v1042, 256
          %v1045 = vpop.permute.xlu0 %1044
          %v1046 = vlaneseq
          %v1047 = vshrl.u32 %v1046, 7
          %v1048 = vsub.s32 3, %v1047
          %v1049 = vrot.slane %v932, %v1048
          %v1050 = vmul.f32 %v1045, %v1049
          %v1051 = vmul.f32 %v1038, %v1019
          %v1052 = vadd.f32 %v1051, %v1050
          %s1054 = sor.u32 256, 8
          %1055 = vbcast.lane.b32.xlu0 %v1042, %s1054
          %v1056 = vpop.permute.xlu0 %1055
          %v1057 = vmul.f32 %v1056, %v1052
          %v1058 = vsel %vm735, %v1057, 0.0
          %v1059 = vrot.slane %v1058, 4
          %v1060 = vadd.f32 %v1058, %v1059
          %v1061 = vrot.slane %v1060, 2
          %v1062 = vadd.f32 %v1060, %v1061
          %v1063 = vrot.slane %v1062, 1
          %v1064 = vadd.f32 %v1062, %v1063
          %v1065 = vlaneseq
          %v1066 = vshrl.u32 %v1065, 7
          %v1067 = vsub.s32 4, %v1066
          %v1068 = vrot.slane %v929, %v1067
          %v1069 = vmul.f32 %v1068, %v917
          %v1070 = vmul.f32 %v1069, 1.442695
          %v1071 = vpow.pop %v1070
          %v1072 = vlaneseq
          %v1073 = vshrl.u32 %v1072, 7
          %v1074 = vsub.s32 4, %v1073
          %v1075 = vrot.slane %v931, %v1074
          %1077 = vbcast.lane.b32.xlu0 %v1075, 256
          %v1078 = vpop.permute.xlu0 %1077
          %v1079 = vlaneseq
          %v1080 = vshrl.u32 %v1079, 7
          %v1081 = vsub.s32 4, %v1080
          %v1082 = vrot.slane %v932, %v1081
          %v1083 = vmul.f32 %v1078, %v1082
          %v1084 = vmul.f32 %v1071, %v1052
          %v1085 = vadd.f32 %v1084, %v1083
          %s1087 = sor.u32 256, 8
          %1088 = vbcast.lane.b32.xlu0 %v1075, %s1087
          %v1089 = vpop.permute.xlu0 %1088
          %v1090 = vmul.f32 %v1089, %v1085
          %v1091 = vsel %vm735, %v1090, 0.0
          %v1092 = vrot.slane %v1091, 4
          %v1093 = vadd.f32 %v1091, %v1092
          %v1094 = vrot.slane %v1093, 2
          %v1095 = vadd.f32 %v1093, %v1094
          %v1096 = vrot.slane %v1095, 1
          %v1097 = vadd.f32 %v1095, %v1096
          %v1098 = vlaneseq
          %v1099 = vshrl.u32 %v1098, 7
          %v1100 = vsub.s32 5, %v1099
          %v1101 = vrot.slane %v929, %v1100
          %v1102 = vmul.f32 %v1101, %v917
          %v1103 = vmul.f32 %v1102, 1.442695
          %v1104 = vpow.pop %v1103
          %v1105 = vlaneseq
          %v1106 = vshrl.u32 %v1105, 7
          %v1107 = vsub.s32 5, %v1106
          %v1108 = vrot.slane %v931, %v1107
          %1110 = vbcast.lane.b32.xlu0 %v1108, 256
          %v1111 = vpop.permute.xlu0 %1110
          %v1112 = vlaneseq
          %v1113 = vshrl.u32 %v1112, 7
          %v1114 = vsub.s32 5, %v1113
          %v1115 = vrot.slane %v932, %v1114
          %v1116 = vmul.f32 %v1111, %v1115
          %v1117 = vmul.f32 %v1104, %v1085
          %v1118 = vadd.f32 %v1117, %v1116
          %s1120 = sor.u32 256, 8
          %1121 = vbcast.lane.b32.xlu0 %v1108, %s1120
          %v1122 = vpop.permute.xlu0 %1121
          %v1123 = vmul.f32 %v1122, %v1118
          %v1124 = vsel %vm735, %v1123, 0.0
          %v1125 = vrot.slane %v1124, 4
          %v1126 = vadd.f32 %v1124, %v1125
          %v1127 = vrot.slane %v1126, 2
          %v1128 = vadd.f32 %v1126, %v1127
          %v1129 = vrot.slane %v1128, 1
          %v1130 = vadd.f32 %v1128, %v1129
          %v1131 = vlaneseq
          %v1132 = vshrl.u32 %v1131, 7
          %v1133 = vsub.s32 6, %v1132
          %v1134 = vrot.slane %v929, %v1133
          %v1135 = vmul.f32 %v1134, %v917
          %v1136 = vmul.f32 %v1135, 1.442695
          %v1137 = vpow.pop %v1136
          %v1138 = vlaneseq
          %v1139 = vshrl.u32 %v1138, 7
          %v1140 = vsub.s32 6, %v1139
          %v1141 = vrot.slane %v931, %v1140
          %1143 = vbcast.lane.b32.xlu0 %v1141, 256
          %v1144 = vpop.permute.xlu0 %1143
          %v1145 = vlaneseq
          %v1146 = vshrl.u32 %v1145, 7
          %v1147 = vsub.s32 6, %v1146
          %v1148 = vrot.slane %v932, %v1147
          %v1149 = vmul.f32 %v1144, %v1148
          %v1150 = vmul.f32 %v1137, %v1118
          %v1151 = vadd.f32 %v1150, %v1149
          %s1153 = sor.u32 256, 8
          %1154 = vbcast.lane.b32.xlu0 %v1141, %s1153
          %v1155 = vpop.permute.xlu0 %1154
          %v1156 = vmul.f32 %v1155, %v1151
          %v1157 = vsel %vm735, %v1156, 0.0
          %v1158 = vrot.slane %v1157, 4
          %v1159 = vadd.f32 %v1157, %v1158
          %v1160 = vrot.slane %v1159, 2
          %v1161 = vadd.f32 %v1159, %v1160
          %v1162 = vrot.slane %v1161, 1
          %v1163 = vadd.f32 %v1161, %v1162
          %v1164 = vlaneseq
          %v1165 = vshrl.u32 %v1164, 7
          %v1166 = vsub.s32 7, %v1165
          %v1167 = vrot.slane %v929, %v1166
          %v1168 = vmul.f32 %v1167, %v917
          %v1169 = vmul.f32 %v1168, 1.442695
          %v1170 = vpow.pop %v1169
          %v1171 = vlaneseq
          %v1172 = vshrl.u32 %v1171, 7
          %v1173 = vsub.s32 7, %v1172
          %v1174 = vrot.slane %v931, %v1173
          %1176 = vbcast.lane.b32.xlu0 %v1174, 256
          %v1177 = vpop.permute.xlu0 %1176
          %v1178 = vlaneseq
          %v1179 = vshrl.u32 %v1178, 7
          %v1180 = vsub.s32 7, %v1179
          %v1181 = vrot.slane %v932, %v1180
          %v1182 = vmul.f32 %v1177, %v1181
          %v1183 = vmul.f32 %v1170, %v1151
          %v1184 = vadd.f32 %v1183, %v1182
          %s1186 = sor.u32 256, 8
          %1187 = vbcast.lane.b32.xlu0 %v1174, %s1186
          %v1188 = vpop.permute.xlu0 %1187
          %v1189 = vmul.f32 %v1188, %v1184
          %v1190 = vsel %vm735, %v1189, 0.0
          %v1191 = vrot.slane %v1190, 4
          %v1192 = vadd.f32 %v1190, %v1191
          %v1193 = vrot.slane %v1192, 2
          %v1194 = vadd.f32 %v1192, %v1193
          %v1195 = vrot.slane %v1194, 1
          %v1196 = vadd.f32 %v1194, %v1195
          %vm1197 = vcmask 1040384
          %v1198 = vsel %vm1197, %v965, %v998
          %vm1199 = vcmask 1041408
          %v1200 = vsel %vm1199, %v1198, %v1031
          %vm1201 = vcmask 1042432
          %v1202 = vsel %vm1201, %v1200, %v1064
          %vm1203 = vcmask 1043456
          %v1204 = vsel %vm1203, %v1202, %v1097
          %vm1205 = vcmask 1044480
          %v1206 = vsel %vm1205, %v1204, %v1130
          %vm1207 = vcmask 1045504
          %v1208 = vsel %vm1207, %v1206, %v1163
          %vm1209 = vcmask 1046528
          %v1210 = vsel %vm1209, %v1208, %v1196
          %s1211 = scalar_lea.vmem [#allocation6], %s925
          %1212 = vst.msk [vmem:[%s1211] sm:$0xff] %vm735, %v1210
        $region113: #{bimamba_forward.6} parent=103 // loop_footer
          %s923 = sadd.s32 1, %s919
        $region114: #{bimamba_forward.6} parent=103 // loop_footer_branch
          %918 = sbr.rel target = $region110
        $region115: #{bimamba_forward.6} parent=103 // loop_exit
          _
        %v1213 = vld [vmem:[#allocation6] sm:$0xff]
        %v1214 = vld [vmem:[#allocation6 + $0x8] sm:$0xff]
        %v1215 = vld [vmem:[#allocation3] sm:$0xff]
        %v1216 = vld [vmem:[#allocation3 + $0x8] sm:$0xff]
        %v1217 = vld [vmem:[%s7] sm:$0x1]
        %v1219 = vlaneseq
        %v1220 = vshrl.u32 %v1219, 7
        %v1221 = vsub.s32 0, %v1220
        %v1222 = vrot.slane %v1217, %v1221
        %v1224 = vmul.f32 %v1215, %v1222
        %v1225 = vmul.f32 %v1216, %v1222
        %v1226 = vadd.f32 %v1213, %v1224
        %v1227 = vadd.f32 %v1214, %v1225
        %v1228 = vsub.f32 0.0, %v729
        %v1229 = vsub.f32 0.0, %v732
        %v1230 = vmul.f32 %v1228, 1.442695
        %v1231 = vpow.pop %v1230
        %v1232 = vmul.f32 %v1229, 1.442695
        %v1233 = vpow.pop %v1232
        %v1234 = vadd.f32 %v1231, 1.0
        %v1235 = vadd.f32 %v1233, 1.0
        %v1236 = vrcp.pop %v1234
        %v1237 = vrcp.pop %v1235
        %v1238 = vmul.f32 %v729, %v1236
        %v1239 = vmul.f32 %v732, %v1237
        %1242 = vrot.lane.b32.xlu0 %v1238, 64
        %v1243 = vpop.permute.xlu0 %1242
        %1244 = vrot.lane.b32.xlu0 %v1239, 64
        %v1245 = vpop.permute.xlu0 %1244
        %v1248 = vmul.f32 %v1226, %v1243
        %v1249 = vmul.f32 %v1227, %v1245
        %v1250 = vpack.c.bf16 %v1249, %v1248
        %v1251 = vld [vmem:[%s8] sm:$0xf]
        %v1252 = vld [vmem:[%s8 + $0x4] sm:$0xf]
        %v1253 = vld [vmem:[%s8 + $0x8] sm:$0xf]
        %v1254 = vld [vmem:[%s8 + $0xc] sm:$0xf]
        %v1255 = vld [vmem:[%s8 + $0x10] sm:$0xf]
        %v1256 = vld [vmem:[%s8 + $0x14] sm:$0xf]
        %v1257 = vld [vmem:[%s8 + $0x18] sm:$0xf]
        %v1258 = vld [vmem:[%s8 + $0x1c] sm:$0xf]
        %v1267 = vunpack.c.l.b16 %v1251
        %v1268 = vunpack.c.l.b16 %v1252
        %v1269 = vunpack.c.l.b16 %v1253
        %v1270 = vunpack.c.l.b16 %v1254
        %v1271 = vunpack.c.l.b16 %v1255
        %v1272 = vunpack.c.l.b16 %v1256
        %v1273 = vunpack.c.l.b16 %v1257
        %v1274 = vunpack.c.l.b16 %v1258
        %v1275 = vpack.c.b16 %v1268, %v1267
        %v1276 = vpack.c.b16 %v1270, %v1269
        %v1277 = vpack.c.b16 %v1272, %v1271
        %v1278 = vpack.c.b16 %v1274, %v1273
        %v1284 = vsel %vm735, %v1250, 0
        %1286 = vmatprep.subr.bf16.mxu0 0
        %1287 = vmatpush1.bf16.msra.mxu0 %v1275
        %1288 = vmatprep.subr.bf16.mxu0 0
        %1289 = vmatpush1.bf16.msra.mxu0 %v1276
        %1290 = vmatprep.subr.bf16.mxu0 0
        %1291 = vmatpush1.bf16.msra.mxu0 %v1277
        %1292 = vmatprep.subr.bf16.mxu0 0
        %1293 = vmatpush1.bf16.msra.mxu0 %v1278
        %1294 = vmatprep.subr.bf16.mxu0 0
        %1295 = vmatpush1.bf16.msra.mxu0 0
        %1296 = vmatprep.subr.bf16.mxu0 0
        %1297 = vmatpush1.bf16.msra.mxu0 0
        %1298 = vmatprep.subr.bf16.mxu0 0
        %1299 = vmatpush1.bf16.msra.mxu0 0
        %1300 = vmatprep.subr.bf16.mxu0 0
        %1301 = vmatpush1.bf16.msra.mxu0 0
        %1302 = vmatprep.subr.bf16.mxu0 0
        %1303 = vmatpush1.bf16.msra.mxu0 0
        %1304 = vmatprep.subr.bf16.mxu0 0
        %1305 = vmatpush1.bf16.msra.mxu0 0
        %1306 = vmatprep.subr.bf16.mxu0 0
        %1307 = vmatpush1.bf16.msra.mxu0 0
        %1308 = vmatprep.subr.bf16.mxu0 0
        %1309 = vmatpush1.bf16.msra.mxu0 0
        %1310 = vmatprep.subr.bf16.mxu0 0
        %1311 = vmatpush1.bf16.msra.mxu0 0
        %1312 = vmatprep.subr.bf16.mxu0 0
        %1313 = vmatpush1.bf16.msra.mxu0 0
        %1314 = vmatprep.subr.bf16.mxu0 0
        %1315 = vmatpush1.bf16.msra.mxu0 0
        %1316 = vmatprep.subr.bf16.mxu0 0
        %1317 = vmatpush1.bf16.msra.mxu0 0
        %1318 = vmatprep.mubr.bf16.mxu0 0
        %1319 = vmatmul.mubr.bf16.gmra.mrb[0].mxu0 %v1284
        %v1320 = vpop.f32.mrb[0].mxu0
        %v1321 = vadd.f32 %v671, %v1320
        %v1322 = vpop.f32.mrb[0].mxu0
        %v1323 = vpop.f32.mrb[0].mxu0
        %v1324 = vadd.f32 %v672, %v1323
        %v1325 = vpop.f32.mrb[0].mxu0
        %1326 = vdwg.mxu0
        %v1327 = vld [vmem:[%s17] sm:$0x1]
        %v1328 = vld [vmem:[%s18] sm:$0x1]
        %v1329 = vsel %vm690, %v1321, 0.0
        %1330 = vadd.xlane.f32.xlu0 %v1329
        %v1331 = vpop.xlane.xlu0 %1330
        %v1332 = vsel %vm690, %v1324, 0.0
        %1333 = vadd.xlane.f32.xlu0 %v1332
        %v1334 = vpop.xlane.xlu0 %1333
        %v1335 = vrcp.pop 32.0
        %v1336 = vmul.f32 %v1331, %v1335
        %v1337 = vmul.f32 %v1334, %v1335
        %v1338 = vsub.f32 %v1321, %v1336
        %v1339 = vsub.f32 %v1324, %v1337
        %v1340 = vmul.f32 %v1338, %v1338
        %v1341 = vmul.f32 %v1339, %v1339
        %v1342 = vsel %vm690, %v1340, 0.0
        %1343 = vadd.xlane.f32.xlu0 %v1342
        %v1344 = vpop.xlane.xlu0 %1343
        %v1345 = vsel %vm690, %v1341, 0.0
        %1346 = vadd.xlane.f32.xlu0 %v1345
        %v1347 = vpop.xlane.xlu0 %1346
        %v1348 = vmul.f32 %v1344, %v1335
        %v1349 = vmul.f32 %v1347, %v1335
        %v1350 = vadd.f32 %v1348, 1e-05
        %v1351 = vadd.f32 %v1349, 1e-05
        %v1352 = vrsqrt.pop %v1350
        %v1353 = vrsqrt.pop %v1351
        %v1354 = vmul.f32 %v1338, %v1352
        %v1355 = vmul.f32 %v1339, %v1353
        %v1357 = vlaneseq
        %v1358 = vshrl.u32 %v1357, 7
        %v1359 = vsub.s32 0, %v1358
        %v1360 = vrot.slane %v1327, %v1359
        %v1362 = vmul.f32 %v1354, %v1360
        %v1363 = vmul.f32 %v1355, %v1360
        %v1365 = vlaneseq
        %v1366 = vshrl.u32 %v1365, 7
        %v1367 = vsub.s32 0, %v1366
        %v1368 = vrot.slane %v1328, %v1367
        %v1370 = vadd.f32 %v1362, %v1368
        %v1371 = vadd.f32 %v1363, %v1368
        %1372 = vst.msk [vmem:[%s669] sm:$0xff] %vm690, %v1370
        %1373 = vst.msk [vmem:[%s669 + $0x8] sm:$0xff] %vm690, %v1371
        %v1374 = vld [vmem:[%s9] sm:$0xf]
        %v1375 = vld [vmem:[%s9 + $0x4] sm:$0xf]
        %v1376 = vld [vmem:[%s9 + $0x8] sm:$0xf]
        %v1377 = vld [vmem:[%s9 + $0xc] sm:$0xf]
        %v1382 = vunpack.c.l.b16 %v1374
        %v1383 = vunpack.c.l.b16 %v1375
        %v1384 = vunpack.c.l.b16 %v1376
        %v1385 = vunpack.c.l.b16 %v1377
        %v1386 = vpack.c.b16 %v1383, %v1382
        %v1387 = vpack.c.b16 %v1385, %v1384
        %1390 = vmatprep.subr.bf16.mxu0 0
        %1391 = vmatpush1.bf16.msra.mxu0 %v1386
        %1392 = vmatprep.subr.bf16.mxu0 0
        %1393 = vmatpush1.bf16.msra.mxu0 %v1387
        %1394 = vmatprep.subr.bf16.mxu0 0
        %1395 = vmatpush1.bf16.msra.mxu0 0
        %1396 = vmatprep.subr.bf16.mxu0 0
        %1397 = vmatpush1.bf16.msra.mxu0 0
        %1398 = vmatprep.subr.bf16.mxu0 0
        %1399 = vmatpush1.bf16.msra.mxu0 0
        %1400 = vmatprep.subr.bf16.mxu0 0
        %1401 = vmatpush1.bf16.msra.mxu0 0
        %1402 = vmatprep.subr.bf16.mxu0 0
        %1403 = vmatpush1.bf16.msra.mxu0 0
        %1404 = vmatprep.subr.bf16.mxu0 0
        %1405 = vmatpush1.bf16.msra.mxu0 0
        %1406 = vmatprep.subr.bf16.mxu0 0
        %1407 = vmatpush1.bf16.msra.mxu0 0
        %1408 = vmatprep.subr.bf16.mxu0 0
        %1409 = vmatpush1.bf16.msra.mxu0 0
        %1410 = vmatprep.subr.bf16.mxu0 0
        %1411 = vmatpush1.bf16.msra.mxu0 0
        %1412 = vmatprep.subr.bf16.mxu0 0
        %1413 = vmatpush1.bf16.msra.mxu0 0
        %1414 = vmatprep.subr.bf16.mxu0 0
        %1415 = vmatpush1.bf16.msra.mxu0 0
        %1416 = vmatprep.subr.bf16.mxu0 0
        %1417 = vmatpush1.bf16.msra.mxu0 0
        %1418 = vmatprep.subr.bf16.mxu0 0
        %1419 = vmatpush1.bf16.msra.mxu0 0
        %1420 = vmatprep.subr.bf16.mxu0 0
        %1421 = vmatpush1.bf16.msra.mxu0 0
        %1422 = vmatprep.mubr.bf16.mxu0 0
        %1423 = vmatmul.mubr.bf16.gmra.mrb[0].mxu0 %v692
        %v1424 = vpop.f32.mrb[0].mxu0
        %v1425 = vadd.f32 0.0, %v1424
        %v1426 = vpop.f32.mrb[0].mxu0
        %v1427 = vpop.f32.mrb[0].mxu0
        %v1428 = vadd.f32 0.0, %v1427
        %v1429 = vpop.f32.mrb[0].mxu0
        %1430 = vdwg.mxu0
        %1431 = vst.msk [vmem:[#allocation2] sm:$0xff] %vm735, 0.0
        %1432 = vst.msk [vmem:[#allocation2 + $0x18] sm:$0xff] %vm735, 0.0
        %1433 = vst.msk [vmem:[#allocation2 + $0x8] sm:$0xff] %vm735, %v1425
        %1434 = vst.msk [vmem:[#allocation2 + $0x10] sm:$0xff] %vm735, %v1428
        %v1435 = vld [vmem:[%s10] sm:$0xf]
        %v1436 = vld [vmem:[#allocation2 + $0xb] sm:$0xff]
        %v1437 = vld [vmem:[#allocation2 + $0x13] sm:$0xff]
        %v1438 = vlaneseq
        %v1439 = vshrl.u32 %v1438, 7
        %v1440 = vsub.s32 0, %v1439
        %v1441 = vrot.slane %v1435, %v1440
        %v1442 = vmul.f32 %v1436, %v1441
        %v1443 = vmul.f32 %v1437, %v1441
        %v1444 = vld [vmem:[#allocation2 + $0xa] sm:$0xff]
        %v1445 = vld [vmem:[#allocation2 + $0x12] sm:$0xff]
        %v1446 = vlaneseq
        %v1447 = vshrl.u32 %v1446, 7
        %v1448 = vsub.s32 1, %v1447
        %v1449 = vrot.slane %v1435, %v1448
        %v1450 = vmul.f32 %v1444, %v1449
        %v1451 = vmul.f32 %v1445, %v1449
        %v1452 = vadd.f32 %v1442, %v1450
        %v1453 = vadd.f32 %v1443, %v1451
        %v1454 = vld [vmem:[#allocation2 + $0x9] sm:$0xff]
        %v1455 = vld [vmem:[#allocation2 + $0x11] sm:$0xff]
        %v1456 = vlaneseq
        %v1457 = vshrl.u32 %v1456, 7
        %v1458 = vsub.s32 2, %v1457
        %v1459 = vrot.slane %v1435, %v1458
        %v1460 = vmul.f32 %v1454, %v1459
        %v1461 = vmul.f32 %v1455, %v1459
        %v1462 = vadd.f32 %v1452, %v1460
        %v1463 = vadd.f32 %v1453, %v1461
        %v1464 = vld [vmem:[#allocation2 + $0x8] sm:$0xff]
        %v1465 = vld [vmem:[#allocation2 + $0x10] sm:$0xff]
        %v1466 = vlaneseq
        %v1467 = vshrl.u32 %v1466, 7
        %v1468 = vsub.s32 3, %v1467
        %v1469 = vrot.slane %v1435, %v1468
        %v1470 = vmul.f32 %v1464, %v1469
        %v1471 = vmul.f32 %v1465, %v1469
        %v1472 = vadd.f32 %v1462, %v1470
        %v1473 = vadd.f32 %v1463, %v1471
        %v1474 = vld [vmem:[%s11] sm:$0x1]
        %v1476 = vlaneseq
        %v1477 = vshrl.u32 %v1476, 7
        %v1478 = vsub.s32 0, %v1477
        %v1479 = vrot.slane %v1474, %v1478
        %v1481 = vadd.f32 %v1472, %v1479
        %v1482 = vadd.f32 %v1473, %v1479
        %v1483 = vsub.f32 0.0, %v1481
        %v1484 = vsub.f32 0.0, %v1482
        %v1485 = vmul.f32 %v1483, 1.442695
        %v1486 = vpow.pop %v1485
        %v1487 = vmul.f32 %v1484, 1.442695
        %v1488 = vpow.pop %v1487
        %v1489 = vadd.f32 %v1486, 1.0
        %v1490 = vadd.f32 %v1488, 1.0
        %v1491 = vrcp.pop %v1489
        %v1492 = vrcp.pop %v1490
        %v1493 = vmul.f32 %v1481, %v1491
        %v1494 = vmul.f32 %v1482, %v1492
        %v1495 = vpack.c.bf16 %v1494, %v1493
        %v1496 = vld [vmem:[%s12] sm:$0xf]
        %v1497 = vld [vmem:[%s12 + $0x4] sm:$0xf]
        %v1498 = vld [vmem:[%s12 + $0x8] sm:$0xf]
        %v1499 = vld [vmem:[%s12 + $0xc] sm:$0xf]
        %v1500 = vld [vmem:[%s12 + $0x10] sm:$0xf]
        %v1501 = vld [vmem:[%s12 + $0x14] sm:$0xf]
        %v1502 = vld [vmem:[%s12 + $0x18] sm:$0xf]
        %v1503 = vld [vmem:[%s12 + $0x1c] sm:$0xf]
        %v1512 = vunpack.c.l.b16 %v1496
        %v1513 = vunpack.c.l.b16 %v1497
        %v1514 = vunpack.c.l.b16 %v1498
        %v1515 = vunpack.c.l.b16 %v1499
        %v1516 = vunpack.c.l.b16 %v1500
        %v1517 = vunpack.c.l.b16 %v1501
        %v1518 = vunpack.c.l.b16 %v1502
        %v1519 = vunpack.c.l.b16 %v1503
        %v1520 = vpack.c.b16 %v1513, %v1512
        %v1521 = vpack.c.b16 %v1515, %v1514
        %v1522 = vpack.c.b16 %v1517, %v1516
        %v1523 = vpack.c.b16 %v1519, %v1518
        %v1529 = vsel %vm735, %v1495, 0
        %1531 = vmatprep.subr.bf16.mxu0 0
        %1532 = vmatpush1.bf16.msra.mxu0 %v1520
        %1533 = vmatprep.subr.bf16.mxu0 0
        %1534 = vmatpush1.bf16.msra.mxu0 %v1521
        %1535 = vmatprep.subr.bf16.mxu0 0
        %1536 = vmatpush1.bf16.msra.mxu0 %v1522
        %1537 = vmatprep.subr.bf16.mxu0 0
        %1538 = vmatpush1.bf16.msra.mxu0 %v1523
        %1539 = vmatprep.subr.bf16.mxu0 0
        %1540 = vmatpush1.bf16.msra.mxu0 0
        %1541 = vmatprep.subr.bf16.mxu0 0
        %1542 = vmatpush1.bf16.msra.mxu0 0
        %1543 = vmatprep.subr.bf16.mxu0 0
        %1544 = vmatpush1.bf16.msra.mxu0 0
        %1545 = vmatprep.subr.bf16.mxu0 0
        %1546 = vmatpush1.bf16.msra.mxu0 0
        %1547 = vmatprep.subr.bf16.mxu0 0
        %1548 = vmatpush1.bf16.msra.mxu0 0
        %1549 = vmatprep.subr.bf16.mxu0 0
        %1550 = vmatpush1.bf16.msra.mxu0 0
        %1551 = vmatprep.subr.bf16.mxu0 0
        %1552 = vmatpush1.bf16.msra.mxu0 0
        %1553 = vmatprep.subr.bf16.mxu0 0
        %1554 = vmatpush1.bf16.msra.mxu0 0
        %1555 = vmatprep.subr.bf16.mxu0 0
        %1556 = vmatpush1.bf16.msra.mxu0 0
        %1557 = vmatprep.subr.bf16.mxu0 0
        %1558 = vmatpush1.bf16.msra.mxu0 0
        %1559 = vmatprep.subr.bf16.mxu0 0
        %1560 = vmatpush1.bf16.msra.mxu0 0
        %1561 = vmatprep.subr.bf16.mxu0 0
        %1562 = vmatpush1.bf16.msra.mxu0 0
        %1563 = vmatprep.mubr.bf16.mxu0 0
        %1564 = vmatmul.mubr.bf16.gmra.mrb[0].mxu0 %v1529
        %v1565 = vpop.f32.mrb[0].mxu0
        %v1566 = vadd.f32 0.0, %v1565
        %v1567 = vpop.f32.mrb[0].mxu0
        %v1568 = vpop.f32.mrb[0].mxu0
        %v1569 = vadd.f32 0.0, %v1568
        %v1570 = vpop.f32.mrb[0].mxu0
        %1571 = vdwg.mxu0
        %v1572 = vld [vmem:[%s13] sm:$0x1]
        %v1574 = vlaneseq
        %v1575 = vshrl.u32 %v1574, 7
        %v1576 = vsub.s32 0, %v1575
        %v1577 = vrot.slane %v1572, %v1576
        %v1579 = vadd.f32 %v1566, %v1577
        %v1580 = vadd.f32 %v1569, %v1577
        %vm1581 = vcmp.gt.f32.partialorder %v1579, 20.0
        %vm1582 = vcmp.gt.f32.partialorder %v1580, 20.0
        %v1583 = vmin.f32 %v1579, 20.0
        %v1584 = vmin.f32 %v1580, 20.0
        %v1585 = vmul.f32 %v1583, 1.442695
        %v1586 = vpow.pop %v1585
        %v1587 = vmul.f32 %v1584, 1.442695
        %v1588 = vpow.pop %v1587
        %v1589 = vadd.f32 %v1586, 1.0
        %v1590 = vadd.f32 %v1588, 1.0
        %v1591 = vlog2.pop %v1589
        %v1592 = vmul.f32 %v1591, 0.6931472
        %v1593 = vlog2.pop %v1590
        %v1594 = vmul.f32 %v1593, 0.6931472
        %v1595 = vsel %vm1581, %v1579, %v1592
        %v1596 = vsel %vm1582, %v1580, %v1594
        %1597 = vst.msk [vmem:[#allocation3] sm:$0xff] %vm735, %v1493
        %1598 = vst.msk [vmem:[#allocation3 + $0x8] sm:$0xff] %vm735, %v1494
        %1599 = vst.msk [vmem:[#allocation4] sm:$0xff] %vm735, %v1595
        %1600 = vst.msk [vmem:[#allocation4 + $0x8] sm:$0xff] %vm735, %v1596
        %1603 = vrot.lane.b32.xlu0 %v1566, 64
        %v1604 = vpop.permute.xlu0 %1603
        %1605 = vrot.lane.b32.xlu0 %v1569, 64
        %v1606 = vpop.permute.xlu0 %1605
        %1609 = vst.msk [vmem:[#allocation5] sm:$0xff] %vm914, %v1604
        %1610 = vst.msk [vmem:[#allocation5 + $0x8] sm:$0xff] %vm914, %v1606
        %v1611 = vld [vmem:[%s14] sm:$0xff]
        loop: start=0, step=1, limit=2
        $region116: #{bimamba_forward.6} parent=103 // loop_pre_header
          _
        $region117: #{bimamba_forward.6} parent=103 // loop_header
          %s1613 = sphi 0, %s1617
          %p1614 = scmp.ge.s32.totalorder %s1613, 2
          %v1618 = vphi 0.0, %v1879
        $region118: #{bimamba_forward.6} parent=103 // loop_header_branch
          %1616 = sbr.rel (%p1614) target = $region122
        $region119: #{bimamba_forward.6} parent=103 // loop_body
          %s1619 = ssub.s32 1, %s1613
          %s1620 = smul.u32 %s1619, 8
          %s1621 = scalar_lea.vmem [#allocation3], %s1620
          %v1622 = vld [vmem:[%s1621] sm:$0xff]
          %s1623 = scalar_lea.vmem [#allocation4], %s1620
          %v1624 = vld [vmem:[%s1623] sm:$0xff]
          %s1625 = scalar_lea.vmem [#allocation5], %s1620
          %v1626 = vld [vmem:[%s1625] sm:$0xff]
          %v1627 = vmul.f32 %v1624, %v1622
          %v1628 = vlaneseq
          %v1629 = vshrl.u32 %v1628, 7
          %v1630 = vsub.s32 7, %v1629
          %v1631 = vrot.slane %v1624, %v1630
          %v1632 = vmul.f32 %v1631, %v1611
          %v1633 = vmul.f32 %v1632, 1.442695
          %v1634 = vpow.pop %v1633
          %v1635 = vlaneseq
          %v1636 = vshrl.u32 %v1635, 7
          %v1637 = vsub.s32 7, %v1636
          %v1638 = vrot.slane %v1626, %v1637
          %1640 = vbcast.lane.b32.xlu0 %v1638, 256
          %v1641 = vpop.permute.xlu0 %1640
          %v1642 = vlaneseq
          %v1643 = vshrl.u32 %v1642, 7
          %v1644 = vsub.s32 7, %v1643
          %v1645 = vrot.slane %v1627, %v1644
          %v1646 = vmul.f32 %v1641, %v1645
          %v1647 = vmul.f32 %v1634, %v1618
          %v1648 = vadd.f32 %v1647, %v1646
          %s1650 = sor.u32 256, 8
          %1651 = vbcast.lane.b32.xlu0 %v1638, %s1650
          %v1652 = vpop.permute.xlu0 %1651
          %v1653 = vmul.f32 %v1652, %v1648
          %v1654 = vsel %vm735, %v1653, 0.0
          %v1655 = vrot.slane %v1654, 4
          %v1656 = vadd.f32 %v1654, %v1655
          %v1657 = vrot.slane %v1656, 2
          %v1658 = vadd.f32 %v1656, %v1657
          %v1659 = vrot.slane %v1658, 1
          %v1660 = vadd.f32 %v1658, %v1659
          %v1661 = vlaneseq
          %v1662 = vshrl.u32 %v1661, 7
          %v1663 = vsub.s32 6, %v1662
          %v1664 = vrot.slane %v1624, %v1663
          %v1665 = vmul.f32 %v1664, %v1611
          %v1666 = vmul.f32 %v1665, 1.442695
          %v1667 = vpow.pop %v1666
          %v1668 = vlaneseq
          %v1669 = vshrl.u32 %v1668, 7
          %v1670 = vsub.s32 6, %v1669
          %v1671 = vrot.slane %v1626, %v1670
          %1673 = vbcast.lane.b32.xlu0 %v1671, 256
          %v1674 = vpop.permute.xlu0 %1673
          %v1675 = vlaneseq
          %v1676 = vshrl.u32 %v1675, 7
          %v1677 = vsub.s32 6, %v1676
          %v1678 = vrot.slane %v1627, %v1677
          %v1679 = vmul.f32 %v1674, %v1678
          %v1680 = vmul.f32 %v1667, %v1648
          %v1681 = vadd.f32 %v1680, %v1679
          %s1683 = sor.u32 256, 8
          %1684 = vbcast.lane.b32.xlu0 %v1671, %s1683
          %v1685 = vpop.permute.xlu0 %1684
          %v1686 = vmul.f32 %v1685, %v1681
          %v1687 = vsel %vm735, %v1686, 0.0
          %v1688 = vrot.slane %v1687, 4
          %v1689 = vadd.f32 %v1687, %v1688
          %v1690 = vrot.slane %v1689, 2
          %v1691 = vadd.f32 %v1689, %v1690
          %v1692 = vrot.slane %v1691, 1
          %v1693 = vadd.f32 %v1691, %v1692
          %v1694 = vlaneseq
          %v1695 = vshrl.u32 %v1694, 7
          %v1696 = vsub.s32 5, %v1695
          %v1697 = vrot.slane %v1624, %v1696
          %v1698 = vmul.f32 %v1697, %v1611
          %v1699 = vmul.f32 %v1698, 1.442695
          %v1700 = vpow.pop %v1699
          %v1701 = vlaneseq
          %v1702 = vshrl.u32 %v1701, 7
          %v1703 = vsub.s32 5, %v1702
          %v1704 = vrot.slane %v1626, %v1703
          %1706 = vbcast.lane.b32.xlu0 %v1704, 256
          %v1707 = vpop.permute.xlu0 %1706
          %v1708 = vlaneseq
          %v1709 = vshrl.u32 %v1708, 7
          %v1710 = vsub.s32 5, %v1709
          %v1711 = vrot.slane %v1627, %v1710
          %v1712 = vmul.f32 %v1707, %v1711
          %v1713 = vmul.f32 %v1700, %v1681
          %v1714 = vadd.f32 %v1713, %v1712
          %s1716 = sor.u32 256, 8
          %1717 = vbcast.lane.b32.xlu0 %v1704, %s1716
          %v1718 = vpop.permute.xlu0 %1717
          %v1719 = vmul.f32 %v1718, %v1714
          %v1720 = vsel %vm735, %v1719, 0.0
          %v1721 = vrot.slane %v1720, 4
          %v1722 = vadd.f32 %v1720, %v1721
          %v1723 = vrot.slane %v1722, 2
          %v1724 = vadd.f32 %v1722, %v1723
          %v1725 = vrot.slane %v1724, 1
          %v1726 = vadd.f32 %v1724, %v1725
          %v1727 = vlaneseq
          %v1728 = vshrl.u32 %v1727, 7
          %v1729 = vsub.s32 4, %v1728
          %v1730 = vrot.slane %v1624, %v1729
          %v1731 = vmul.f32 %v1730, %v1611
          %v1732 = vmul.f32 %v1731, 1.442695
          %v1733 = vpow.pop %v1732
          %v1734 = vlaneseq
          %v1735 = vshrl.u32 %v1734, 7
          %v1736 = vsub.s32 4, %v1735
          %v1737 = vrot.slane %v1626, %v1736
          %1739 = vbcast.lane.b32.xlu0 %v1737, 256
          %v1740 = vpop.permute.xlu0 %1739
          %v1741 = vlaneseq
          %v1742 = vshrl.u32 %v1741, 7
          %v1743 = vsub.s32 4, %v1742
          %v1744 = vrot.slane %v1627, %v1743
          %v1745 = vmul.f32 %v1740, %v1744
          %v1746 = vmul.f32 %v1733, %v1714
          %v1747 = vadd.f32 %v1746, %v1745
          %s1749 = sor.u32 256, 8
          %1750 = vbcast.lane.b32.xlu0 %v1737, %s1749
          %v1751 = vpop.permute.xlu0 %1750
          %v1752 = vmul.f32 %v1751, %v1747
          %v1753 = vsel %vm735, %v1752, 0.0
          %v1754 = vrot.slane %v1753, 4
          %v1755 = vadd.f32 %v1753, %v1754
          %v1756 = vrot.slane %v1755, 2
          %v1757 = vadd.f32 %v1755, %v1756
          %v1758 = vrot.slane %v1757, 1
          %v1759 = vadd.f32 %v1757, %v1758
          %v1760 = vlaneseq
          %v1761 = vshrl.u32 %v1760, 7
          %v1762 = vsub.s32 3, %v1761
          %v1763 = vrot.slane %v1624, %v1762
          %v1764 = vmul.f32 %v1763, %v1611
          %v1765 = vmul.f32 %v1764, 1.442695
          %v1766 = vpow.pop %v1765
          %v1767 = vlaneseq
          %v1768 = vshrl.u32 %v1767, 7
          %v1769 = vsub.s32 3, %v1768
          %v1770 = vrot.slane %v1626, %v1769
          %1772 = vbcast.lane.b32.xlu0 %v1770, 256
          %v1773 = vpop.permute.xlu0 %1772
          %v1774 = vlaneseq
          %v1775 = vshrl.u32 %v1774, 7
          %v1776 = vsub.s32 3, %v1775
          %v1777 = vrot.slane %v1627, %v1776
          %v1778 = vmul.f32 %v1773, %v1777
          %v1779 = vmul.f32 %v1766, %v1747
          %v1780 = vadd.f32 %v1779, %v1778
          %s1782 = sor.u32 256, 8
          %1783 = vbcast.lane.b32.xlu0 %v1770, %s1782
          %v1784 = vpop.permute.xlu0 %1783
          %v1785 = vmul.f32 %v1784, %v1780
          %v1786 = vsel %vm735, %v1785, 0.0
          %v1787 = vrot.slane %v1786, 4
          %v1788 = vadd.f32 %v1786, %v1787
          %v1789 = vrot.slane %v1788, 2
          %v1790 = vadd.f32 %v1788, %v1789
          %v1791 = vrot.slane %v1790, 1
          %v1792 = vadd.f32 %v1790, %v1791
          %v1793 = vlaneseq
          %v1794 = vshrl.u32 %v1793, 7
          %v1795 = vsub.s32 2, %v1794
          %v1796 = vrot.slane %v1624, %v1795
          %v1797 = vmul.f32 %v1796, %v1611
          %v1798 = vmul.f32 %v1797, 1.442695
          %v1799 = vpow.pop %v1798
          %v1800 = vlaneseq
          %v1801 = vshrl.u32 %v1800, 7
          %v1802 = vsub.s32 2, %v1801
          %v1803 = vrot.slane %v1626, %v1802
          %1805 = vbcast.lane.b32.xlu0 %v1803, 256
          %v1806 = vpop.permute.xlu0 %1805
          %v1807 = vlaneseq
          %v1808 = vshrl.u32 %v1807, 7
          %v1809 = vsub.s32 2, %v1808
          %v1810 = vrot.slane %v1627, %v1809
          %v1811 = vmul.f32 %v1806, %v1810
          %v1812 = vmul.f32 %v1799, %v1780
          %v1813 = vadd.f32 %v1812, %v1811
          %s1815 = sor.u32 256, 8
          %1816 = vbcast.lane.b32.xlu0 %v1803, %s1815
          %v1817 = vpop.permute.xlu0 %1816
          %v1818 = vmul.f32 %v1817, %v1813
          %v1819 = vsel %vm735, %v1818, 0.0
          %v1820 = vrot.slane %v1819, 4
          %v1821 = vadd.f32 %v1819, %v1820
          %v1822 = vrot.slane %v1821, 2
          %v1823 = vadd.f32 %v1821, %v1822
          %v1824 = vrot.slane %v1823, 1
          %v1825 = vadd.f32 %v1823, %v1824
          %v1826 = vlaneseq
          %v1827 = vshrl.u32 %v1826, 7
          %v1828 = vsub.s32 1, %v1827
          %v1829 = vrot.slane %v1624, %v1828
          %v1830 = vmul.f32 %v1829, %v1611
          %v1831 = vmul.f32 %v1830, 1.442695
          %v1832 = vpow.pop %v1831
          %v1833 = vlaneseq
          %v1834 = vshrl.u32 %v1833, 7
          %v1835 = vsub.s32 1, %v1834
          %v1836 = vrot.slane %v1626, %v1835
          %1838 = vbcast.lane.b32.xlu0 %v1836, 256
          %v1839 = vpop.permute.xlu0 %1838
          %v1840 = vlaneseq
          %v1841 = vshrl.u32 %v1840, 7
          %v1842 = vsub.s32 1, %v1841
          %v1843 = vrot.slane %v1627, %v1842
          %v1844 = vmul.f32 %v1839, %v1843
          %v1845 = vmul.f32 %v1832, %v1813
          %v1846 = vadd.f32 %v1845, %v1844
          %s1848 = sor.u32 256, 8
          %1849 = vbcast.lane.b32.xlu0 %v1836, %s1848
          %v1850 = vpop.permute.xlu0 %1849
          %v1851 = vmul.f32 %v1850, %v1846
          %v1852 = vsel %vm735, %v1851, 0.0
          %v1853 = vrot.slane %v1852, 4
          %v1854 = vadd.f32 %v1852, %v1853
          %v1855 = vrot.slane %v1854, 2
          %v1856 = vadd.f32 %v1854, %v1855
          %v1857 = vrot.slane %v1856, 1
          %v1858 = vadd.f32 %v1856, %v1857
          %v1859 = vlaneseq
          %v1860 = vshrl.u32 %v1859, 7
          %v1861 = vsub.s32 0, %v1860
          %v1862 = vrot.slane %v1624, %v1861
          %v1863 = vmul.f32 %v1862, %v1611
          %v1864 = vmul.f32 %v1863, 1.442695
          %v1865 = vpow.pop %v1864
          %v1866 = vlaneseq
          %v1867 = vshrl.u32 %v1866, 7
          %v1868 = vsub.s32 0, %v1867
          %v1869 = vrot.slane %v1626, %v1868
          %1871 = vbcast.lane.b32.xlu0 %v1869, 256
          %v1872 = vpop.permute.xlu0 %1871
          %v1873 = vlaneseq
          %v1874 = vshrl.u32 %v1873, 7
          %v1875 = vsub.s32 0, %v1874
          %v1876 = vrot.slane %v1627, %v1875
          %v1877 = vmul.f32 %v1872, %v1876
          %v1878 = vmul.f32 %v1865, %v1846
          %v1879 = vadd.f32 %v1878, %v1877
          %s1881 = sor.u32 256, 8
          %1882 = vbcast.lane.b32.xlu0 %v1869, %s1881
          %v1883 = vpop.permute.xlu0 %1882
          %v1884 = vmul.f32 %v1883, %v1879
          %v1885 = vsel %vm735, %v1884, 0.0
          %v1886 = vrot.slane %v1885, 4
          %v1887 = vadd.f32 %v1885, %v1886
          %v1888 = vrot.slane %v1887, 2
          %v1889 = vadd.f32 %v1887, %v1888
          %v1890 = vrot.slane %v1889, 1
          %v1891 = vadd.f32 %v1889, %v1890
          %vm1892 = vcmask 1040384
          %v1893 = vsel %vm1892, %v1891, %v1858
          %vm1894 = vcmask 1041408
          %v1895 = vsel %vm1894, %v1893, %v1825
          %vm1896 = vcmask 1042432
          %v1897 = vsel %vm1896, %v1895, %v1792
          %vm1898 = vcmask 1043456
          %v1899 = vsel %vm1898, %v1897, %v1759
          %vm1900 = vcmask 1044480
          %v1901 = vsel %vm1900, %v1899, %v1726
          %vm1902 = vcmask 1045504
          %v1903 = vsel %vm1902, %v1901, %v1693
          %vm1904 = vcmask 1046528
          %v1905 = vsel %vm1904, %v1903, %v1660
          %s1906 = scalar_lea.vmem [#allocation6], %s1620
          %1907 = vst.msk [vmem:[%s1906] sm:$0xff] %vm735, %v1905
        $region120: #{bimamba_forward.6} parent=103 // loop_footer
          %s1617 = sadd.s32 1, %s1613
        $region121: #{bimamba_forward.6} parent=103 // loop_footer_branch
          %1612 = sbr.rel target = $region117
        $region122: #{bimamba_forward.6} parent=103 // loop_exit
          _
        %v1908 = vld [vmem:[#allocation6] sm:$0xff]
        %v1909 = vld [vmem:[#allocation6 + $0x8] sm:$0xff]
        %v1910 = vld [vmem:[#allocation3] sm:$0xff]
        %v1911 = vld [vmem:[#allocation3 + $0x8] sm:$0xff]
        %v1912 = vld [vmem:[%s15] sm:$0x1]
        %v1914 = vlaneseq
        %v1915 = vshrl.u32 %v1914, 7
        %v1916 = vsub.s32 0, %v1915
        %v1917 = vrot.slane %v1912, %v1916
        %v1919 = vmul.f32 %v1910, %v1917
        %v1920 = vmul.f32 %v1911, %v1917
        %v1921 = vadd.f32 %v1908, %v1919
        %v1922 = vadd.f32 %v1909, %v1920
        %v1923 = vsub.f32 0.0, %v1425
        %v1924 = vsub.f32 0.0, %v1428
        %v1925 = vmul.f32 %v1923, 1.442695
        %v1926 = vpow.pop %v1925
        %v1927 = vmul.f32 %v1924, 1.442695
        %v1928 = vpow.pop %v1927
        %v1929 = vadd.f32 %v1926, 1.0
        %v1930 = vadd.f32 %v1928, 1.0
        %v1931 = vrcp.pop %v1929
        %v1932 = vrcp.pop %v1930
        %v1933 = vmul.f32 %v1425, %v1931
        %v1934 = vmul.f32 %v1428, %v1932
        %1937 = vrot.lane.b32.xlu0 %v1933, 64
        %v1938 = vpop.permute.xlu0 %1937
        %1939 = vrot.lane.b32.xlu0 %v1934, 64
        %v1940 = vpop.permute.xlu0 %1939
        %v1943 = vmul.f32 %v1921, %v1938
        %v1944 = vmul.f32 %v1922, %v1940
        %v1945 = vpack.c.bf16 %v1944, %v1943
        %v1946 = vld [vmem:[%s16] sm:$0xf]
        %v1947 = vld [vmem:[%s16 + $0x4] sm:$0xf]
        %v1948 = vld [vmem:[%s16 + $0x8] sm:$0xf]
        %v1949 = vld [vmem:[%s16 + $0xc] sm:$0xf]
        %v1950 = vld [vmem:[%s16 + $0x10] sm:$0xf]
        %v1951 = vld [vmem:[%s16 + $0x14] sm:$0xf]
        %v1952 = vld [vmem:[%s16 + $0x18] sm:$0xf]
        %v1953 = vld [vmem:[%s16 + $0x1c] sm:$0xf]
        %v1954 = vld [vmem:[%s669] sm:$0xff]
        %v1955 = vld [vmem:[%s669 + $0x8] sm:$0xff]
        %v1964 = vunpack.c.l.b16 %v1946
        %v1965 = vunpack.c.l.b16 %v1947
        %v1966 = vunpack.c.l.b16 %v1948
        %v1967 = vunpack.c.l.b16 %v1949
        %v1968 = vunpack.c.l.b16 %v1950
        %v1969 = vunpack.c.l.b16 %v1951
        %v1970 = vunpack.c.l.b16 %v1952
        %v1971 = vunpack.c.l.b16 %v1953
        %v1972 = vpack.c.b16 %v1965, %v1964
        %v1973 = vpack.c.b16 %v1967, %v1966
        %v1974 = vpack.c.b16 %v1969, %v1968
        %v1975 = vpack.c.b16 %v1971, %v1970
        %v1981 = vsel %vm735, %v1945, 0
        %1983 = vmatprep.subr.bf16.mxu0 0
        %1984 = vmatpush1.bf16.msra.mxu0 %v1972
        %1985 = vmatprep.subr.bf16.mxu0 0
        %1986 = vmatpush1.bf16.msra.mxu0 %v1973
        %1987 = vmatprep.subr.bf16.mxu0 0
        %1988 = vmatpush1.bf16.msra.mxu0 %v1974
        %1989 = vmatprep.subr.bf16.mxu0 0
        %1990 = vmatpush1.bf16.msra.mxu0 %v1975
        %1991 = vmatprep.subr.bf16.mxu0 0
        %1992 = vmatpush1.bf16.msra.mxu0 0
        %1993 = vmatprep.subr.bf16.mxu0 0
        %1994 = vmatpush1.bf16.msra.mxu0 0
        %1995 = vmatprep.subr.bf16.mxu0 0
        %1996 = vmatpush1.bf16.msra.mxu0 0
        %1997 = vmatprep.subr.bf16.mxu0 0
        %1998 = vmatpush1.bf16.msra.mxu0 0
        %1999 = vmatprep.subr.bf16.mxu0 0
        %2000 = vmatpush1.bf16.msra.mxu0 0
        %2001 = vmatprep.subr.bf16.mxu0 0
        %2002 = vmatpush1.bf16.msra.mxu0 0
        %2003 = vmatprep.subr.bf16.mxu0 0
        %2004 = vmatpush1.bf16.msra.mxu0 0
        %2005 = vmatprep.subr.bf16.mxu0 0
        %2006 = vmatpush1.bf16.msra.mxu0 0
        %2007 = vmatprep.subr.bf16.mxu0 0
        %2008 = vmatpush1.bf16.msra.mxu0 0
        %2009 = vmatprep.subr.bf16.mxu0 0
        %2010 = vmatpush1.bf16.msra.mxu0 0
        %2011 = vmatprep.subr.bf16.mxu0 0
        %2012 = vmatpush1.bf16.msra.mxu0 0
        %2013 = vmatprep.subr.bf16.mxu0 0
        %2014 = vmatpush1.bf16.msra.mxu0 0
        %2015 = vmatprep.mubr.bf16.mxu0 0
        %2016 = vmatmul.mubr.bf16.gmra.mrb[0].mxu0 %v1981
        %v2017 = vpop.f32.mrb[0].mxu0
        %v2018 = vadd.f32 %v671, %v2017
        %v2019 = vpop.f32.mrb[0].mxu0
        %v2020 = vpop.f32.mrb[0].mxu0
        %v2021 = vadd.f32 %v672, %v2020
        %v2022 = vpop.f32.mrb[0].mxu0
        %2023 = vdwg.mxu0
        %v2024 = vld [vmem:[%s19] sm:$0x1]
        %v2025 = vld [vmem:[#allocation7] sm:$0x1]
        %v2026 = vsel %vm690, %v2018, 0.0
        %2027 = vadd.xlane.f32.xlu0 %v2026
        %v2028 = vpop.xlane.xlu0 %2027
        %v2029 = vsel %vm690, %v2021, 0.0
        %2030 = vadd.xlane.f32.xlu0 %v2029
        %v2031 = vpop.xlane.xlu0 %2030
        %v2032 = vmul.f32 %v2028, %v1335
        %v2033 = vmul.f32 %v2031, %v1335
        %v2034 = vsub.f32 %v2018, %v2032
        %v2035 = vsub.f32 %v2021, %v2033
        %v2036 = vmul.f32 %v2034, %v2034
        %v2037 = vmul.f32 %v2035, %v2035
        %v2038 = vsel %vm690, %v2036, 0.0
        %2039 = vadd.xlane.f32.xlu0 %v2038
        %v2040 = vpop.xlane.xlu0 %2039
        %v2041 = vsel %vm690, %v2037, 0.0
        %2042 = vadd.xlane.f32.xlu0 %v2041
        %v2043 = vpop.xlane.xlu0 %2042
        %v2044 = vmul.f32 %v2040, %v1335
        %v2045 = vmul.f32 %v2043, %v1335
        %v2046 = vadd.f32 %v2044, 1e-05
        %v2047 = vadd.f32 %v2045, 1e-05
        %v2048 = vrsqrt.pop %v2046
        %v2049 = vrsqrt.pop %v2047
        %v2050 = vmul.f32 %v2034, %v2048
        %v2051 = vmul.f32 %v2035, %v2049
        %v2053 = vlaneseq
        %v2054 = vshrl.u32 %v2053, 7
        %v2055 = vsub.s32 0, %v2054
        %v2056 = vrot.slane %v2024, %v2055
        %v2058 = vmul.f32 %v2050, %v2056
        %v2059 = vmul.f32 %v2051, %v2056
        %v2061 = vlaneseq
        %v2062 = vshrl.u32 %v2061, 7
        %v2063 = vsub.s32 0, %v2062
        %v2064 = vrot.slane %v2025, %v2063
        %v2066 = vadd.f32 %v2058, %v2064
        %v2067 = vadd.f32 %v2059, %v2064
        %v2068 = vadd.f32 %v1954, %v2066
        %v2069 = vadd.f32 %v1955, %v2067
        %2070 = vst.msk [vmem:[%s669] sm:$0xff] %vm690, %v2068
        %2071 = vst.msk [vmem:[%s669 + $0x8] sm:$0xff] %vm690, %v2069
        %p2072 = scmp.lt.s32.totalorder %s33, 1
        %s2073 = scalar_select %p2072, %s33, 1
        %s2074 = smul.addr %s2073, 2
        %s2075 = smul.addr %s2074, 8
        %s2076 = scalar_lea.vmem %s21, %s2075
        // Predicated region
        $region123: #{bimamba_forward.6} parent=103 // pred_check
          %p2077 = pneg %p497
        $region124: #{bimamba_forward.6} parent=103 // pred_check_branch
          %2079 = sbr.rel (%p2077) target = $region126
        $region125: #{bimamba_forward.6} parent=103 // pred_region
          _
        $region126: #{bimamba_forward.6} parent=103 // pred_fallthru
          _
      $region104: #{bimamba_forward.6} parent=5 // pred_fallthru
        _
      %p2080 = scmp.le.s32.totalorder 2, %s28
      // Predicated region
      $region127: #{bimamba_forward.6} parent=5 // pred_check
        %p2081 = pneg %p2080
      $region128: #{bimamba_forward.6} parent=5 // pred_check_branch
        %2083 = sbr.rel (%p2081) target = $region130
      $region129: #{bimamba_forward.6} parent=5 // pred_region
        %s2084 = ssub.s32 %s28, 2
        // Predicated region
        $region131: #{bimamba_forward.6} parent=129 // pred_check
          %p2085 = pneg %p503
        $region132: #{bimamba_forward.6} parent=129 // pred_check_branch
          %2087 = sbr.rel (%p2085) target = $region134
        $region133: #{bimamba_forward.6} parent=129 // pred_region
          %p2088 = scmp.lt.s32.totalorder %s34, 1
          %s2089 = scalar_select %p2088, %s34, 1
          %s2090 = smul.addr %s2089, 2
          %s2091 = smul.addr %s2090, 8
          %s2092 = scalar_lea.vmem %s21, %s2091
        $region134: #{bimamba_forward.6} parent=129 // pred_fallthru
          _
      $region130: #{bimamba_forward.6} parent=5 // pred_fallthru
        _
    $region6: #{bimamba_forward.6} parent=1 // loop_footer
      %s32 = sadd.s32 1, %s28
    $region7: #{bimamba_forward.6} parent=1 // loop_footer_branch
      %27 = sbr.rel target = $region3
    $region8: #{bimamba_forward.6} parent=1 // loop_exit
      _
    %2093 = vsyncpa [#allocation8], 1
    %s2094 = scalar_lea.sflag [#allocation8], 1
    %2095 = vsyncpa %s2094, 1

</llo_original>
